<compile_context>
chip_gen: v6e
topology: v6e:2x2x1
jax: 0.10.0
libtpu: 0.0.40
codegen_flags: <defaults>
</compile_context>

<pallas_src>
import functools

import jax
import jax.numpy as jnp
from jax import lax
from jax.experimental import pallas as pl
from jax.experimental.pallas import tpu as pltpu

# ----------------------- synthetic CLIP-ViT config -----------------------
IMG = 32                               # image size
PATCH = 8                              # patch size
WIDTH = 32                             # transformer width D
HEADS = 4
HEAD_DIM = WIDTH // HEADS
LAYERS = 2
N_PATCH = (IMG // PATCH) ** 2          # 16
T = N_PATCH + 1                        # 17 tokens (cls + patches)
T_PAD = ((T + 7) // 8) * 8             # 24: tokens padded to the f32 sublane tile
PATCH_K = 3 * PATCH * PATCH            # 192
LN_EPS = 1e-5
ATTN_SCALE = 1.0 / float(HEAD_DIM) ** 0.5


def _layer_norm(x, g, b):
    mu = jnp.mean(x, axis=-1, keepdims=True)
    var = jnp.mean((x - mu) ** 2, axis=-1, keepdims=True)
    return (x - mu) * lax.rsqrt(var + LN_EPS) * g + b


# ----------------------- the fused encoder kernel -----------------------
def _encoder_kernel(patches_ref, convw_ref, poscls_ref,
                    lnpre_g_ref, lnpre_b_ref,
                    wq_ref, wk_ref, wv_ref, bq_ref, bk_ref, bv_ref,
                    wo_ref, bo_ref,
                    ln1g_ref, ln1b_ref, ln2g_ref, ln2b_ref,
                    w1_ref, b1_ref, w2_ref, b2_ref,
                    lnpost_g_ref, lnpost_b_ref,
                    out_ref, *, n_img):
    flat = n_img * T_PAD               # rows of the flattened token stream
    bf16 = jnp.bfloat16

    # ---- patch embedding for every image in ONE MXU matmul (bf16 x bf16 -> f32)
    # patches rows per image: [cls slot (zeros), 16 patches, 7 pad rows]; the
    # class token + positional embedding are folded into poscls (pad rows = 0).
    tok = jnp.dot(patches_ref[...], convw_ref[...],
                  preferred_element_type=jnp.float32)              # (flat, D)
    x = tok.reshape(n_img, T_PAD, WIDTH) + poscls_ref[...]         # (n_img,T_PAD,D)

    # ---- ln_pre ----
    x = _layer_norm(x, lnpre_g_ref[...], lnpre_b_ref[...])

    # masks, hoisted out of the layer loop
    key_mask = lax.broadcasted_iota(jnp.int32, (1, 1, T_PAD), 2) < T
    col = lax.broadcasted_iota(jnp.int32, (T_PAD, WIDTH), 1)
    # block-diagonal (head row-block h keeps feature columns of head h)
    bd_mask = jnp.concatenate(
        [(col >= h * HEAD_DIM) & (col < (h + 1) * HEAD_DIM) for h in range(HEADS)],
        axis=0)                                                    # (HEADS*T_PAD, D)

    # ---- transformer blocks; activations stay resident in VMEM/vregs ----
    # (static unroll; switch to lax.fori_loop only if LAYERS grows beyond ~2)
    for l in range(LAYERS):
        # -- multi-head self attention, heads merged (no lane slicing) --
        h = _layer_norm(x, ln1g_ref[l], ln1b_ref[l]).reshape(flat, WIDTH)
        hb = h.astype(bf16)
        q = (jnp.dot(hb, wq_ref[l], preferred_element_type=jnp.float32)
             + bq_ref[l]).reshape(n_img, T_PAD, WIDTH)             # scale pre-folded
        k = (jnp.dot(hb, wk_ref[l], preferred_element_type=jnp.float32)
             + bk_ref[l]).reshape(n_img, T_PAD, WIDTH)
        v = (jnp.dot(hb, wv_ref[l], preferred_element_type=jnp.float32)
             + bv_ref[l]).reshape(n_img, T_PAD, WIDTH)

        # Stack queries head-major along the row axis and zero the feature
        # columns not belonging to that head; contracting against full-width K
        # then equals per-head q_h . k_h.  ONE batched einsum + ONE softmax
        # replaces the old 4x unrolled per-head loop.
        q_exp = jnp.where(bd_mask, jnp.concatenate([q] * HEADS, axis=1), 0.0)
        s = jnp.einsum('bqd,bkd->bqk', q_exp.astype(bf16), k.astype(bf16),
                       preferred_element_type=jnp.float32)         # (n,H*T_PAD,T_PAD)
        s = jnp.where(key_mask, s, -1e30)                          # mask padded keys
        s = s - jnp.max(s, axis=-1, keepdims=True)
        p = jnp.exp(s)
        p = p * pl.reciprocal(jnp.sum(p, axis=-1, keepdims=True), approx=True)
        o = jnp.einsum('bqk,bkd->bqd', p.astype(bf16), v.astype(bf16),
                       preferred_element_type=jnp.float32)         # (n,H*T_PAD,D)
        # block-diagonal select: head h's row block keeps head h's columns,
        # then the HEADS row blocks are summed back into (n, T_PAD, D).
        o = jnp.where(bd_mask, o, 0.0)
        a = o[:, 0:T_PAD]
        for hh in range(1, HEADS):
            a = a + o[:, hh * T_PAD:(hh + 1) * T_PAD]
        a = a.reshape(flat, WIDTH)
        attn = jnp.dot(a.astype(bf16), wo_ref[l],
                       preferred_element_type=jnp.float32) + bo_ref[l]
        x = x + attn.reshape(n_img, T_PAD, WIDTH)

        # -- MLP (QuickGELU, as in CLIP); elementwise math stays f32 --
        h2 = _layer_norm(x, ln2g_ref[l], ln2b_ref[l]).reshape(flat, WIDTH)
        m = jnp.dot(h2.astype(bf16), w1_ref[l],
                    preferred_element_type=jnp.float32) + b1_ref[l]
        m = m * jax.nn.sigmoid(1.702 * m)
        m = jnp.dot(m.astype(bf16), w2_ref[l],
                    preferred_element_type=jnp.float32) + b2_ref[l]
        x = x + m.reshape(n_img, T_PAD, WIDTH)

    # ---- ln_post; store the FULL padded slab (aligned full-tile stores).
    # The 17-of-24 token crop happens in the wrapper (free in XLA).
    out_ref[...] = _layer_norm(x, lnpost_g_ref[...], lnpost_b_ref[...])


def _const_spec(arr):
    nd = arr.ndim
    return pl.BlockSpec(arr.shape, lambda *_: (0,) * nd)   # weights stay resident


def _encode_images(patches, p, num_blocks):
    n_img = patches.shape[0] // T_PAD
    n_img_blk = n_img // num_blocks
    flat_blk = n_img_blk * T_PAD
    kernel = functools.partial(_encoder_kernel, n_img=n_img_blk)

    weights = [p['conv_w'], p['pos_cls_pad'],
               p['ln_pre_g'], p['ln_pre_b'],
               p['wq'], p['wk'], p['wv'], p['bq'], p['bk'], p['bv'],
               p['wo'], p['bo'],
               p['ln1g'], p['ln1b'], p['ln2g'], p['ln2b'],
               p['w1'], p['b1'], p['w2'], p['b2'],
               p['ln_post_g'], p['ln_post_b']]

    return pl.pallas_call(
        kernel,
        out_shape=jax.ShapeDtypeStruct((n_img, T_PAD, WIDTH), jnp.float32),
        grid=(num_blocks,),
        in_specs=[pl.BlockSpec((flat_blk, PATCH_K), lambda i: (i, 0))]
                 + [_const_spec(w) for w in weights],
        out_specs=pl.BlockSpec((n_img_blk, T_PAD, WIDTH), lambda i: (i, 0, 0)),
        compiler_params=pltpu.CompilerParams(
            dimension_semantics=("parallel",)),
    )(patches, *weights)


# ----------------------- glue: patch extraction (pure layout) -----------------------
def _patch_rows(imgs):
    # imgs: (N, 3, H, W) NCHW -> (N*T_PAD, PATCH_K) bf16 rows; per image:
    # row 0 = zeros (cls slot), rows 1..16 = flattened patches, rows 17..23 = pad.
    n = imgs.shape[0]
    hp = IMG // PATCH
    pr = imgs.reshape(n, 3, hp, PATCH, hp, PATCH)
    pr = pr.transpose(0, 2, 4, 1, 3, 5).reshape(n, N_PATCH, PATCH_K)
    pr = jnp.pad(pr, ((0, 0), (1, T_PAD - 1 - N_PATCH), (0, 0)))
    return pr.reshape(n * T_PAD, PATCH_K).astype(jnp.bfloat16)


# ----------------------- parameter construction (deterministic) -----------------------
def make_params(key):
    ks = iter(jax.random.split(key, 16))
    sd = 0.02
    bf = jnp.bfloat16

    def nrm(shape):
        return sd * jax.random.normal(next(ks), shape, jnp.float32)

    class_emb = nrm((1, WIDTH))
    pos_emb = nrm((T, WIDTH))
    # class token + positional embedding folded into one padded table:
    # row 0 = class_emb + pos[0], rows 1..16 = pos[1:], rows 17..23 = 0.
    pos_cls_pad = jnp.concatenate(
        [pos_emb[0:1] + class_emb, pos_emb[1:],
         jnp.zeros((T_PAD - T, WIDTH), jnp.float32)], axis=0)

    # qkv weight pre-split into q/k/v with the attention scale folded into wq.
    wqkv = nrm((LAYERS, WIDTH, 3 * WIDTH))
    wq = wqkv[:, :, 0 * WIDTH:1 * WIDTH] * ATTN_SCALE
    wk = wqkv[:, :, 1 * WIDTH:2 * WIDTH]
    wv = wqkv[:, :, 2 * WIDTH:3 * WIDTH]

    return {
        # conv1 patch-embedding weight, stored as (3*P*P, D), bf16 for the MXU.
        'conv_w': nrm((PATCH_K, WIDTH)).astype(bf),
        'pos_cls_pad': pos_cls_pad,
        'ln_pre_g': jnp.ones((1, WIDTH), jnp.float32),
        'ln_pre_b': jnp.zeros((1, WIDTH), jnp.float32),
        'ln_post_g': jnp.ones((1, WIDTH), jnp.float32),
        'ln_post_b': jnp.zeros((1, WIDTH), jnp.float32),
        # per-layer weights stacked along a leading layer axis; matmul weights bf16
        'wq': wq.astype(bf), 'wk': wk.astype(bf), 'wv': wv.astype(bf),
        'bq': jnp.zeros((LAYERS, 1, WIDTH), jnp.float32),
        'bk': jnp.zeros((LAYERS, 1, WIDTH), jnp.float32),
        'bv': jnp.zeros((LAYERS, 1, WIDTH), jnp.float32),
        'wo': nrm((LAYERS, WIDTH, WIDTH)).astype(bf),
        'bo': jnp.zeros((LAYERS, 1, WIDTH), jnp.float32),
        'ln1g': jnp.ones((LAYERS, 1, WIDTH), jnp.float32),
        'ln1b': jnp.zeros((LAYERS, 1, WIDTH), jnp.float32),
        'ln2g': jnp.ones((LAYERS, 1, WIDTH), jnp.float32),
        'ln2b': jnp.zeros((LAYERS, 1, WIDTH), jnp.float32),
        'w1': nrm((LAYERS, WIDTH, 4 * WIDTH)).astype(bf),
        'b1': jnp.zeros((LAYERS, 1, 4 * WIDTH), jnp.float32),
        'w2': nrm((LAYERS, 4 * WIDTH, WIDTH)).astype(bf),
        'b2': jnp.zeros((LAYERS, 1, WIDTH), jnp.float32),
    }


# ----------------------- forward -----------------------
def _default_num_blocks():
    # v7x has 2 TensorCores per chip: shard the image batch across them with a
    # "parallel" grid axis.  On v5e/v6e (1 TC) a >1 grid only adds per-step
    # overhead, so keep a single grid step there.
    try:
        kind = jax.devices()[0].device_kind.lower()
    except Exception:
        return 1
    return 2 if ("v7" in kind or "tpu7" in kind) else 1


@functools.partial(jax.jit, static_argnames=("num_blocks",))
def _forward_impl(imageA, imageB, params, num_blocks):
    imgs = jnp.concatenate([imageA, imageB], axis=0).astype(jnp.float32)  # (2B,3,H,W)
    feats = _encode_images(_patch_rows(imgs), params, num_blocks)         # (2B,T_PAD,D)
    feats = feats[:, :T, :]        # crop the pad rows outside the kernel (free)
    b = imageA.shape[0]
    return feats[:b], feats[b:]


def encoder_forward(imageA, imageB, params):
    """Pallas equivalent of the encoder forward: returns (img_feat_A, img_feat_B)."""
    n_img = 2 * imageA.shape[0]
    nb = _default_num_blocks()
    if n_img % nb != 0:
        nb = 1
    return _forward_impl(imageA, imageB, params, num_blocks=nb)


if __name__ == "__main__":
    key = jax.random.PRNGKey(0)
    ka, kb = jax.random.split(key)
    # B=4 image pairs (still small) fills the matmul M dimension better than B=2;
    # the fused kernel scales to larger B without any HBM round-trips.
    B = 4
    imageA = jax.random.normal(ka, (B, 3, IMG, IMG), jnp.float32)
    imageB = jax.random.normal(kb, (B, 3, IMG, IMG), jnp.float32)

    params = make_params(jax.random.PRNGKey(42))

    feat_A, feat_B = encoder_forward(imageA, imageB, params)
    jax.block_until_ready((feat_A, feat_B))

    assert feat_A.shape == (B, T, WIDTH) and feat_B.shape == (B, T, WIDTH)
    assert jnp.all(jnp.isfinite(feat_A)) and jnp.all(jnp.isfinite(feat_B))
    print("KERNEL_OK")
</pallas_src>

<mosaic_0001>
module attributes {stable_mosaic.version = 11 : i64} {
  func.func @_encoder_kernel(%arg0: i32, %arg1: memref<192x192xbf16, #tpu.memory_space<vmem>>, %arg2: memref<192x32xbf16, #tpu.memory_space<vmem>>, %arg3: memref<24x32xf32, #tpu.memory_space<vmem>>, %arg4: memref<1x32xf32, #tpu.memory_space<vmem>>, %arg5: memref<1x32xf32, #tpu.memory_space<vmem>>, %arg6: memref<2x32x32xbf16, #tpu.memory_space<vmem>>, %arg7: memref<2x32x32xbf16, #tpu.memory_space<vmem>>, %arg8: memref<2x32x32xbf16, #tpu.memory_space<vmem>>, %arg9: memref<2x1x32xf32, #tpu.memory_space<vmem>>, %arg10: memref<2x1x32xf32, #tpu.memory_space<vmem>>, %arg11: memref<2x1x32xf32, #tpu.memory_space<vmem>>, %arg12: memref<2x32x32xbf16, #tpu.memory_space<vmem>>, %arg13: memref<2x1x32xf32, #tpu.memory_space<vmem>>, %arg14: memref<2x1x32xf32, #tpu.memory_space<vmem>>, %arg15: memref<2x1x32xf32, #tpu.memory_space<vmem>>, %arg16: memref<2x1x32xf32, #tpu.memory_space<vmem>>, %arg17: memref<2x1x32xf32, #tpu.memory_space<vmem>>, %arg18: memref<2x32x128xbf16, #tpu.memory_space<vmem>>, %arg19: memref<2x1x128xf32, #tpu.memory_space<vmem>>, %arg20: memref<2x128x32xbf16, #tpu.memory_space<vmem>>, %arg21: memref<2x1x32xf32, #tpu.memory_space<vmem>>, %arg22: memref<1x32xf32, #tpu.memory_space<vmem>>, %arg23: memref<1x32xf32, #tpu.memory_space<vmem>>, %arg24: memref<8x24x32xf32, #tpu.memory_space<vmem>>) attributes {dimension_semantics = [#tpu.dimension_semantics<parallel>], iteration_bounds = array<i64: 1>, scalar_prefetch = 0 : i64, scratch_operands = 0 : i64, tpu.core_type = #tpu.core_type<tc>, window_params = [{transform_indices = @transform_0, window_bounds = array<i64: 192, 192>}, {pipeline_mode = #tpu.pipeline_mode<synchronous>, transform_indices = @transform_1, window_bounds = array<i64: 192, 32>}, {pipeline_mode = #tpu.pipeline_mode<synchronous>, transform_indices = @transform_2, window_bounds = array<i64: 24, 32>}, {pipeline_mode = #tpu.pipeline_mode<synchronous>, transform_indices = @transform_3, window_bounds = array<i64: 1, 32>}, {pipeline_mode = #tpu.pipeline_mode<synchronous>, transform_indices = @transform_4, window_bounds = array<i64: 1, 32>}, {pipeline_mode = #tpu.pipeline_mode<synchronous>, transform_indices = @transform_5, window_bounds = array<i64: 2, 32, 32>}, {pipeline_mode = #tpu.pipeline_mode<synchronous>, transform_indices = @transform_6, window_bounds = array<i64: 2, 32, 32>}, {pipeline_mode = #tpu.pipeline_mode<synchronous>, transform_indices = @transform_7, window_bounds = array<i64: 2, 32, 32>}, {pipeline_mode = #tpu.pipeline_mode<synchronous>, transform_indices = @transform_8, window_bounds = array<i64: 2, 1, 32>}, {pipeline_mode = #tpu.pipeline_mode<synchronous>, transform_indices = @transform_9, window_bounds = array<i64: 2, 1, 32>}, {pipeline_mode = #tpu.pipeline_mode<synchronous>, transform_indices = @transform_10, window_bounds = array<i64: 2, 1, 32>}, {pipeline_mode = #tpu.pipeline_mode<synchronous>, transform_indices = @transform_11, window_bounds = array<i64: 2, 32, 32>}, {pipeline_mode = #tpu.pipeline_mode<synchronous>, transform_indices = @transform_12, window_bounds = array<i64: 2, 1, 32>}, {pipeline_mode = #tpu.pipeline_mode<synchronous>, transform_indices = @transform_13, window_bounds = array<i64: 2, 1, 32>}, {pipeline_mode = #tpu.pipeline_mode<synchronous>, transform_indices = @transform_14, window_bounds = array<i64: 2, 1, 32>}, {pipeline_mode = #tpu.pipeline_mode<synchronous>, transform_indices = @transform_15, window_bounds = array<i64: 2, 1, 32>}, {pipeline_mode = #tpu.pipeline_mode<synchronous>, transform_indices = @transform_16, window_bounds = array<i64: 2, 1, 32>}, {pipeline_mode = #tpu.pipeline_mode<synchronous>, transform_indices = @transform_17, window_bounds = array<i64: 2, 32, 128>}, {pipeline_mode = #tpu.pipeline_mode<synchronous>, transform_indices = @transform_18, window_bounds = array<i64: 2, 1, 128>}, {pipeline_mode = #tpu.pipeline_mode<synchronous>, transform_indices = @transform_19, window_bounds = array<i64: 2, 128, 32>}, {pipeline_mode = #tpu.pipeline_mode<synchronous>, transform_indices = @transform_20, window_bounds = array<i64: 2, 1, 32>}, {pipeline_mode = #tpu.pipeline_mode<synchronous>, transform_indices = @transform_21, window_bounds = array<i64: 1, 32>}, {pipeline_mode = #tpu.pipeline_mode<synchronous>, transform_indices = @transform_22, window_bounds = array<i64: 1, 32>}, {transform_indices = @transform_23, window_bounds = array<i64: 8, 24, 32>}]} {
    %c0 = arith.constant 0 : index
    %c0_0 = arith.constant 0 : index
    %0 = vector.load %arg1[%c0, %c0_0] : memref<192x192xbf16, #tpu.memory_space<vmem>>, vector<192x192xbf16>
    %c0_1 = arith.constant 0 : index
    %c0_2 = arith.constant 0 : index
    %1 = vector.load %arg2[%c0_1, %c0_2] : memref<192x32xbf16, #tpu.memory_space<vmem>>, vector<192x32xbf16>
    %cst = arith.constant dense<0.000000e+00> : vector<192x32xf32>
    %2 = tpu.matmul %0, %1, %cst {dimension_numbers = #tpu.dot_dimension_numbers<[1], [0], [0], [1], [0, 0, 1, 1], [], []>} : vector<192x192xbf16>, vector<192x32xbf16>, vector<192x32xf32> -> vector<192x32xf32>
    %3 = vector.shape_cast %2 : vector<192x32xf32> to vector<8x24x32xf32>
    %c0_3 = arith.constant 0 : index
    %c0_4 = arith.constant 0 : index
    %4 = vector.load %arg3[%c0_3, %c0_4] : memref<24x32xf32, #tpu.memory_space<vmem>>, vector<24x32xf32>
    %5 = vector.shape_cast %4 : vector<24x32xf32> to vector<1x24x32xf32>
    %6 = vector.broadcast %5 : vector<1x24x32xf32> to vector<8x24x32xf32>
    %7 = arith.addf %3, %6 : vector<8x24x32xf32>
    %c0_5 = arith.constant 0 : index
    %c0_6 = arith.constant 0 : index
    %8 = vector.load %arg4[%c0_5, %c0_6] : memref<1x32xf32, #tpu.memory_space<vmem>>, vector<1x32xf32>
    %c0_7 = arith.constant 0 : index
    %c0_8 = arith.constant 0 : index
    %9 = vector.load %arg5[%c0_7, %c0_8] : memref<1x32xf32, #tpu.memory_space<vmem>>, vector<1x32xf32>
    %cst_9 = arith.constant dense<0.000000e+00> : vector<8x24xf32>
    %10 = vector.multi_reduction <add>, %7, %cst_9 [2] : vector<8x24x32xf32> to vector<8x24xf32>
    %11 = vector.shape_cast %10 : vector<8x24xf32> to vector<8x24x1xf32>
    %cst_10 = arith.constant 3.200000e+01 : f32
    %12 = vector.broadcast %cst_10 : f32 to vector<8x24x1xf32>
    %13 = arith.divf %11, %12 : vector<8x24x1xf32>
    %14 = vector.broadcast %13 : vector<8x24x1xf32> to vector<8x24x32xf32>
    %15 = arith.subf %7, %14 : vector<8x24x32xf32>
    %16 = arith.mulf %15, %15 : vector<8x24x32xf32>
    %cst_11 = arith.constant dense<0.000000e+00> : vector<8x24xf32>
    %17 = vector.multi_reduction <add>, %16, %cst_11 [2] : vector<8x24x32xf32> to vector<8x24xf32>
    %18 = vector.shape_cast %17 : vector<8x24xf32> to vector<8x24x1xf32>
    %cst_12 = arith.constant 3.200000e+01 : f32
    %19 = vector.broadcast %cst_12 : f32 to vector<8x24x1xf32>
    %20 = arith.divf %18, %19 : vector<8x24x1xf32>
    %21 = vector.broadcast %13 : vector<8x24x1xf32> to vector<8x24x32xf32>
    %22 = arith.subf %7, %21 : vector<8x24x32xf32>
    %cst_13 = arith.constant 9.99999974E-6 : f32
    %23 = vector.broadcast %cst_13 : f32 to vector<8x24x1xf32>
    %24 = arith.addf %20, %23 : vector<8x24x1xf32>
    %25 = math.rsqrt %24 : vector<8x24x1xf32>
    %26 = vector.broadcast %25 : vector<8x24x1xf32> to vector<8x24x32xf32>
    %27 = arith.mulf %22, %26 : vector<8x24x32xf32>
    %28 = vector.shape_cast %8 : vector<1x32xf32> to vector<1x1x32xf32>
    %29 = vector.broadcast %28 : vector<1x1x32xf32> to vector<8x24x32xf32>
    %30 = arith.mulf %27, %29 : vector<8x24x32xf32>
    %31 = vector.shape_cast %9 : vector<1x32xf32> to vector<1x1x32xf32>
    %32 = vector.broadcast %31 : vector<1x1x32xf32> to vector<8x24x32xf32>
    %33 = arith.addf %30, %32 : vector<8x24x32xf32>
    %34 = tpu.iota {dimensions = array<i32: 2>} : vector<1x1x24xi32>
    %c17_i32 = arith.constant 17 : i32
    %35 = vector.broadcast %c17_i32 : i32 to vector<1x1x24xi32>
    %36 = arith.cmpi slt, %34, %35 : vector<1x1x24xi32>
    %37 = tpu.iota {dimensions = array<i32: 1>} : vector<24x32xi32>
    %c0_i32 = arith.constant 0 : i32
    %38 = vector.broadcast %c0_i32 : i32 to vector<24x32xi32>
    %39 = arith.cmpi sge, %37, %38 : vector<24x32xi32>
    %c8_i32 = arith.constant 8 : i32
    %40 = vector.broadcast %c8_i32 : i32 to vector<24x32xi32>
    %41 = arith.cmpi slt, %37, %40 : vector<24x32xi32>
    %42 = arith.andi %39, %41 : vector<24x32xi1>
    %c8_i32_14 = arith.constant 8 : i32
    %43 = vector.broadcast %c8_i32_14 : i32 to vector<24x32xi32>
    %44 = arith.cmpi sge, %37, %43 : vector<24x32xi32>
    %c16_i32 = arith.constant 16 : i32
    %45 = vector.broadcast %c16_i32 : i32 to vector<24x32xi32>
    %46 = arith.cmpi slt, %37, %45 : vector<24x32xi32>
    %47 = arith.andi %44, %46 : vector<24x32xi1>
    %c16_i32_15 = arith.constant 16 : i32
    %48 = vector.broadcast %c16_i32_15 : i32 to vector<24x32xi32>
    %49 = arith.cmpi sge, %37, %48 : vector<24x32xi32>
    %c24_i32 = arith.constant 24 : i32
    %50 = vector.broadcast %c24_i32 : i32 to vector<24x32xi32>
    %51 = arith.cmpi slt, %37, %50 : vector<24x32xi32>
    %52 = arith.andi %49, %51 : vector<24x32xi1>
    %c24_i32_16 = arith.constant 24 : i32
    %53 = vector.broadcast %c24_i32_16 : i32 to vector<24x32xi32>
    %54 = arith.cmpi sge, %37, %53 : vector<24x32xi32>
    %c32_i32 = arith.constant 32 : i32
    %55 = vector.broadcast %c32_i32 : i32 to vector<24x32xi32>
    %56 = arith.cmpi slt, %37, %55 : vector<24x32xi32>
    %57 = arith.andi %54, %56 : vector<24x32xi1>
    %58 = tpu.concatenate %42, %47, %52, %57 in 0 : vector<24x32xi1>, vector<24x32xi1>, vector<24x32xi1>, vector<24x32xi1> -> vector<96x32xi1>
    %c0_17 = arith.constant 0 : index
    %c0_18 = arith.constant 0 : index
    %c0_19 = arith.constant 0 : index
    %59 = vector.load %arg14[%c0_17, %c0_18, %c0_19] : memref<2x1x32xf32, #tpu.memory_space<vmem>>, vector<1x1x32xf32>
    %60 = vector.shape_cast %59 : vector<1x1x32xf32> to vector<1x32xf32>
    %c0_20 = arith.constant 0 : index
    %c0_21 = arith.constant 0 : index
    %c0_22 = arith.constant 0 : index
    %61 = vector.load %arg15[%c0_20, %c0_21, %c0_22] : memref<2x1x32xf32, #tpu.memory_space<vmem>>, vector<1x1x32xf32>
    %62 = vector.shape_cast %61 : vector<1x1x32xf32> to vector<1x32xf32>
    %cst_23 = arith.constant dense<0.000000e+00> : vector<8x24xf32>
    %63 = vector.multi_reduction <add>, %33, %cst_23 [2] : vector<8x24x32xf32> to vector<8x24xf32>
    %64 = vector.shape_cast %63 : vector<8x24xf32> to vector<8x24x1xf32>
    %cst_24 = arith.constant 3.200000e+01 : f32
    %65 = vector.broadcast %cst_24 : f32 to vector<8x24x1xf32>
    %66 = arith.divf %64, %65 : vector<8x24x1xf32>
    %67 = vector.broadcast %66 : vector<8x24x1xf32> to vector<8x24x32xf32>
    %68 = arith.subf %33, %67 : vector<8x24x32xf32>
    %69 = arith.mulf %68, %68 : vector<8x24x32xf32>
    %cst_25 = arith.constant dense<0.000000e+00> : vector<8x24xf32>
    %70 = vector.multi_reduction <add>, %69, %cst_25 [2] : vector<8x24x32xf32> to vector<8x24xf32>
    %71 = vector.shape_cast %70 : vector<8x24xf32> to vector<8x24x1xf32>
    %cst_26 = arith.constant 3.200000e+01 : f32
    %72 = vector.broadcast %cst_26 : f32 to vector<8x24x1xf32>
    %73 = arith.divf %71, %72 : vector<8x24x1xf32>
    %74 = vector.broadcast %66 : vector<8x24x1xf32> to vector<8x24x32xf32>
    %75 = arith.subf %33, %74 : vector<8x24x32xf32>
    %cst_27 = arith.constant 9.99999974E-6 : f32
    %76 = vector.broadcast %cst_27 : f32 to vector<8x24x1xf32>
    %77 = arith.addf %73, %76 : vector<8x24x1xf32>
    %78 = math.rsqrt %77 : vector<8x24x1xf32>
    %79 = vector.broadcast %78 : vector<8x24x1xf32> to vector<8x24x32xf32>
    %80 = arith.mulf %75, %79 : vector<8x24x32xf32>
    %81 = vector.shape_cast %60 : vector<1x32xf32> to vector<1x1x32xf32>
    %82 = vector.broadcast %81 : vector<1x1x32xf32> to vector<8x24x32xf32>
    %83 = arith.mulf %80, %82 : vector<8x24x32xf32>
    %84 = vector.shape_cast %62 : vector<1x32xf32> to vector<1x1x32xf32>
    %85 = vector.broadcast %84 : vector<1x1x32xf32> to vector<8x24x32xf32>
    %86 = arith.addf %83, %85 : vector<8x24x32xf32>
    %87 = vector.shape_cast %86 : vector<8x24x32xf32> to vector<192x32xf32>
    %88 = arith.truncf %87 : vector<192x32xf32> to vector<192x32xbf16>
    %c0_28 = arith.constant 0 : index
    %c0_29 = arith.constant 0 : index
    %c0_30 = arith.constant 0 : index
    %89 = vector.load %arg6[%c0_28, %c0_29, %c0_30] : memref<2x32x32xbf16, #tpu.memory_space<vmem>>, vector<1x32x32xbf16>
    %90 = vector.shape_cast %89 : vector<1x32x32xbf16> to vector<32x32xbf16>
    %cst_31 = arith.constant dense<0.000000e+00> : vector<192x32xf32>
    %91 = tpu.matmul %88, %90, %cst_31 {dimension_numbers = #tpu.dot_dimension_numbers<[1], [0], [0], [1], [0, 0, 1, 1], [], []>} : vector<192x32xbf16>, vector<32x32xbf16>, vector<192x32xf32> -> vector<192x32xf32>
    %c0_32 = arith.constant 0 : index
    %c0_33 = arith.constant 0 : index
    %c0_34 = arith.constant 0 : index
    %92 = vector.load %arg9[%c0_32, %c0_33, %c0_34] : memref<2x1x32xf32, #tpu.memory_space<vmem>>, vector<1x1x32xf32>
    %93 = vector.shape_cast %92 : vector<1x1x32xf32> to vector<1x32xf32>
    %94 = vector.broadcast %93 : vector<1x32xf32> to vector<192x32xf32>
    %95 = arith.addf %91, %94 : vector<192x32xf32>
    %96 = vector.shape_cast %95 : vector<192x32xf32> to vector<8x24x32xf32>
    %c0_35 = arith.constant 0 : index
    %c0_36 = arith.constant 0 : index
    %c0_37 = arith.constant 0 : index
    %97 = vector.load %arg7[%c0_35, %c0_36, %c0_37] : memref<2x32x32xbf16, #tpu.memory_space<vmem>>, vector<1x32x32xbf16>
    %98 = vector.shape_cast %97 : vector<1x32x32xbf16> to vector<32x32xbf16>
    %cst_38 = arith.constant dense<0.000000e+00> : vector<192x32xf32>
    %99 = tpu.matmul %88, %98, %cst_38 {dimension_numbers = #tpu.dot_dimension_numbers<[1], [0], [0], [1], [0, 0, 1, 1], [], []>} : vector<192x32xbf16>, vector<32x32xbf16>, vector<192x32xf32> -> vector<192x32xf32>
    %c0_39 = arith.constant 0 : index
    %c0_40 = arith.constant 0 : index
    %c0_41 = arith.constant 0 : index
    %100 = vector.load %arg10[%c0_39, %c0_40, %c0_41] : memref<2x1x32xf32, #tpu.memory_space<vmem>>, vector<1x1x32xf32>
    %101 = vector.shape_cast %100 : vector<1x1x32xf32> to vector<1x32xf32>
    %102 = vector.broadcast %101 : vector<1x32xf32> to vector<192x32xf32>
    %103 = arith.addf %99, %102 : vector<192x32xf32>
    %104 = vector.shape_cast %103 : vector<192x32xf32> to vector<8x24x32xf32>
    %c0_42 = arith.constant 0 : index
    %c0_43 = arith.constant 0 : index
    %c0_44 = arith.constant 0 : index
    %105 = vector.load %arg8[%c0_42, %c0_43, %c0_44] : memref<2x32x32xbf16, #tpu.memory_space<vmem>>, vector<1x32x32xbf16>
    %106 = vector.shape_cast %105 : vector<1x32x32xbf16> to vector<32x32xbf16>
    %cst_45 = arith.constant dense<0.000000e+00> : vector<192x32xf32>
    %107 = tpu.matmul %88, %106, %cst_45 {dimension_numbers = #tpu.dot_dimension_numbers<[1], [0], [0], [1], [0, 0, 1, 1], [], []>} : vector<192x32xbf16>, vector<32x32xbf16>, vector<192x32xf32> -> vector<192x32xf32>
    %c0_46 = arith.constant 0 : index
    %c0_47 = arith.constant 0 : index
    %c0_48 = arith.constant 0 : index
    %108 = vector.load %arg11[%c0_46, %c0_47, %c0_48] : memref<2x1x32xf32, #tpu.memory_space<vmem>>, vector<1x1x32xf32>
    %109 = vector.shape_cast %108 : vector<1x1x32xf32> to vector<1x32xf32>
    %110 = vector.broadcast %109 : vector<1x32xf32> to vector<192x32xf32>
    %111 = arith.addf %107, %110 : vector<192x32xf32>
    %112 = vector.shape_cast %111 : vector<192x32xf32> to vector<8x24x32xf32>
    %113 = tpu.concatenate %96, %96, %96, %96 in 1 : vector<8x24x32xf32>, vector<8x24x32xf32>, vector<8x24x32xf32>, vector<8x24x32xf32> -> vector<8x96x32xf32>
    %cst_49 = arith.constant 0.000000e+00 : f32
    %114 = vector.shape_cast %58 : vector<96x32xi1> to vector<1x96x32xi1>
    %115 = vector.broadcast %114 : vector<1x96x32xi1> to vector<8x96x32xi1>
    %116 = vector.broadcast %cst_49 : f32 to vector<8x96x32xf32>
    %117 = arith.select %115, %113, %116 : vector<8x96x32xi1>, vector<8x96x32xf32>
    %118 = arith.truncf %117 : vector<8x96x32xf32> to vector<8x96x32xbf16>
    %119 = arith.truncf %104 : vector<8x24x32xf32> to vector<8x24x32xbf16>
    "tpu.trace_start"() <{level = 10 : i32, message = "bqd,bkd->bqk"}> : () -> ()
    %cst_50 = arith.constant dense<0.000000e+00> : vector<8x96x24xf32>
    %120 = tpu.matmul %118, %119, %cst_50 {dimension_numbers = #tpu.dot_dimension_numbers<[2], [2], [1], [1], [0, 0, 0, 1, 1, 1], [0], [0]>} : vector<8x96x32xbf16>, vector<8x24x32xbf16>, vector<8x96x24xf32> -> vector<8x96x24xf32>
    %cst_51 = arith.constant -1.000000e+30 : f32
    "tpu.trace_stop"() : () -> ()
    %121 = vector.shape_cast %36 : vector<1x1x24xi1> to vector<1x1x24xi1>
    %122 = vector.broadcast %121 : vector<1x1x24xi1> to vector<8x96x24xi1>
    %123 = vector.broadcast %cst_51 : f32 to vector<8x96x24xf32>
    %124 = arith.select %122, %120, %123 : vector<8x96x24xi1>, vector<8x96x24xf32>
    %cst_52 = arith.constant dense<0xFF800000> : vector<8x96xf32>
    %125 = vector.multi_reduction <maximumf>, %124, %cst_52 [2] : vector<8x96x24xf32> to vector<8x96xf32>
    %126 = vector.shape_cast %125 : vector<8x96xf32> to vector<8x96x1xf32>
    %127 = vector.broadcast %126 : vector<8x96x1xf32> to vector<8x96x24xf32>
    %128 = arith.subf %124, %127 : vector<8x96x24xf32>
    %129 = math.exp %128 : vector<8x96x24xf32>
    %cst_53 = arith.constant dense<0.000000e+00> : vector<8x96xf32>
    %130 = vector.multi_reduction <add>, %129, %cst_53 [2] : vector<8x96x24xf32> to vector<8x96xf32>
    %131 = vector.shape_cast %130 : vector<8x96xf32> to vector<8x96x1xf32>
    %132 = tpu.reciprocal %131 {approx = true} : vector<8x96x1xf32> -> vector<8x96x1xf32>
    %133 = vector.broadcast %132 : vector<8x96x1xf32> to vector<8x96x24xf32>
    %134 = arith.mulf %129, %133 : vector<8x96x24xf32>
    %135 = arith.truncf %134 : vector<8x96x24xf32> to vector<8x96x24xbf16>
    %136 = arith.truncf %112 : vector<8x24x32xf32> to vector<8x24x32xbf16>
    "tpu.trace_start"() <{level = 10 : i32, message = "bqk,bkd->bqd"}> : () -> ()
    %cst_54 = arith.constant dense<0.000000e+00> : vector<8x96x32xf32>
    %137 = tpu.matmul %135, %136, %cst_54 {dimension_numbers = #tpu.dot_dimension_numbers<[2], [1], [1], [2], [0, 0, 0, 1, 1, 2], [0], [0]>} : vector<8x96x24xbf16>, vector<8x24x32xbf16>, vector<8x96x32xf32> -> vector<8x96x32xf32>
    %cst_55 = arith.constant 0.000000e+00 : f32
    "tpu.trace_stop"() : () -> ()
    %138 = vector.shape_cast %58 : vector<96x32xi1> to vector<1x96x32xi1>
    %139 = vector.broadcast %138 : vector<1x96x32xi1> to vector<8x96x32xi1>
    %140 = vector.broadcast %cst_55 : f32 to vector<8x96x32xf32>
    %141 = arith.select %139, %137, %140 : vector<8x96x32xi1>, vector<8x96x32xf32>
    %142 = vector.extract_strided_slice %141 {offsets = [0, 0, 0], sizes = [8, 24, 32], strides = [1, 1, 1]} : vector<8x96x32xf32> to vector<8x24x32xf32>
    %143 = vector.extract_strided_slice %141 {offsets = [0, 24, 0], sizes = [8, 24, 32], strides = [1, 1, 1]} : vector<8x96x32xf32> to vector<8x24x32xf32>
    %144 = arith.addf %142, %143 : vector<8x24x32xf32>
    %145 = vector.extract_strided_slice %141 {offsets = [0, 48, 0], sizes = [8, 24, 32], strides = [1, 1, 1]} : vector<8x96x32xf32> to vector<8x24x32xf32>
    %146 = arith.addf %144, %145 : vector<8x24x32xf32>
    %147 = vector.extract_strided_slice %141 {offsets = [0, 72, 0], sizes = [8, 24, 32], strides = [1, 1, 1]} : vector<8x96x32xf32> to vector<8x24x32xf32>
    %148 = arith.addf %146, %147 : vector<8x24x32xf32>
    %149 = vector.shape_cast %148 : vector<8x24x32xf32> to vector<192x32xf32>
    %150 = arith.truncf %149 : vector<192x32xf32> to vector<192x32xbf16>
    %c0_56 = arith.constant 0 : index
    %c0_57 = arith.constant 0 : index
    %c0_58 = arith.constant 0 : index
    %151 = vector.load %arg12[%c0_56, %c0_57, %c0_58] : memref<2x32x32xbf16, #tpu.memory_space<vmem>>, vector<1x32x32xbf16>
    %152 = vector.shape_cast %151 : vector<1x32x32xbf16> to vector<32x32xbf16>
    %cst_59 = arith.constant dense<0.000000e+00> : vector<192x32xf32>
    %153 = tpu.matmul %150, %152, %cst_59 {dimension_numbers = #tpu.dot_dimension_numbers<[1], [0], [0], [1], [0, 0, 1, 1], [], []>} : vector<192x32xbf16>, vector<32x32xbf16>, vector<192x32xf32> -> vector<192x32xf32>
    %c0_60 = arith.constant 0 : index
    %c0_61 = arith.constant 0 : index
    %c0_62 = arith.constant 0 : index
    %154 = vector.load %arg13[%c0_60, %c0_61, %c0_62] : memref<2x1x32xf32, #tpu.memory_space<vmem>>, vector<1x1x32xf32>
    %155 = vector.shape_cast %154 : vector<1x1x32xf32> to vector<1x32xf32>
    %156 = vector.broadcast %155 : vector<1x32xf32> to vector<192x32xf32>
    %157 = arith.addf %153, %156 : vector<192x32xf32>
    %158 = vector.shape_cast %157 : vector<192x32xf32> to vector<8x24x32xf32>
    %159 = arith.addf %33, %158 : vector<8x24x32xf32>
    %c0_63 = arith.constant 0 : index
    %c0_64 = arith.constant 0 : index
    %c0_65 = arith.constant 0 : index
    %160 = vector.load %arg16[%c0_63, %c0_64, %c0_65] : memref<2x1x32xf32, #tpu.memory_space<vmem>>, vector<1x1x32xf32>
    %161 = vector.shape_cast %160 : vector<1x1x32xf32> to vector<1x32xf32>
    %c0_66 = arith.constant 0 : index
    %c0_67 = arith.constant 0 : index
    %c0_68 = arith.constant 0 : index
    %162 = vector.load %arg17[%c0_66, %c0_67, %c0_68] : memref<2x1x32xf32, #tpu.memory_space<vmem>>, vector<1x1x32xf32>
    %163 = vector.shape_cast %162 : vector<1x1x32xf32> to vector<1x32xf32>
    %cst_69 = arith.constant dense<0.000000e+00> : vector<8x24xf32>
    %164 = vector.multi_reduction <add>, %159, %cst_69 [2] : vector<8x24x32xf32> to vector<8x24xf32>
    %165 = vector.shape_cast %164 : vector<8x24xf32> to vector<8x24x1xf32>
    %cst_70 = arith.constant 3.200000e+01 : f32
    %166 = vector.broadcast %cst_70 : f32 to vector<8x24x1xf32>
    %167 = arith.divf %165, %166 : vector<8x24x1xf32>
    %168 = vector.broadcast %167 : vector<8x24x1xf32> to vector<8x24x32xf32>
    %169 = arith.subf %159, %168 : vector<8x24x32xf32>
    %170 = arith.mulf %169, %169 : vector<8x24x32xf32>
    %cst_71 = arith.constant dense<0.000000e+00> : vector<8x24xf32>
    %171 = vector.multi_reduction <add>, %170, %cst_71 [2] : vector<8x24x32xf32> to vector<8x24xf32>
    %172 = vector.shape_cast %171 : vector<8x24xf32> to vector<8x24x1xf32>
    %cst_72 = arith.constant 3.200000e+01 : f32
    %173 = vector.broadcast %cst_72 : f32 to vector<8x24x1xf32>
    %174 = arith.divf %172, %173 : vector<8x24x1xf32>
    %175 = vector.broadcast %167 : vector<8x24x1xf32> to vector<8x24x32xf32>
    %176 = arith.subf %159, %175 : vector<8x24x32xf32>
    %cst_73 = arith.constant 9.99999974E-6 : f32
    %177 = vector.broadcast %cst_73 : f32 to vector<8x24x1xf32>
    %178 = arith.addf %174, %177 : vector<8x24x1xf32>
    %179 = math.rsqrt %178 : vector<8x24x1xf32>
    %180 = vector.broadcast %179 : vector<8x24x1xf32> to vector<8x24x32xf32>
    %181 = arith.mulf %176, %180 : vector<8x24x32xf32>
    %182 = vector.shape_cast %161 : vector<1x32xf32> to vector<1x1x32xf32>
    %183 = vector.broadcast %182 : vector<1x1x32xf32> to vector<8x24x32xf32>
    %184 = arith.mulf %181, %183 : vector<8x24x32xf32>
    %185 = vector.shape_cast %163 : vector<1x32xf32> to vector<1x1x32xf32>
    %186 = vector.broadcast %185 : vector<1x1x32xf32> to vector<8x24x32xf32>
    %187 = arith.addf %184, %186 : vector<8x24x32xf32>
    %188 = vector.shape_cast %187 : vector<8x24x32xf32> to vector<192x32xf32>
    %189 = arith.truncf %188 : vector<192x32xf32> to vector<192x32xbf16>
    %c0_74 = arith.constant 0 : index
    %c0_75 = arith.constant 0 : index
    %c0_76 = arith.constant 0 : index
    %190 = vector.load %arg18[%c0_74, %c0_75, %c0_76] : memref<2x32x128xbf16, #tpu.memory_space<vmem>>, vector<1x32x128xbf16>
    %191 = vector.shape_cast %190 : vector<1x32x128xbf16> to vector<32x128xbf16>
    %cst_77 = arith.constant dense<0.000000e+00> : vector<192x128xf32>
    %192 = tpu.matmul %189, %191, %cst_77 {dimension_numbers = #tpu.dot_dimension_numbers<[1], [0], [0], [1], [0, 0, 1, 1], [], []>} : vector<192x32xbf16>, vector<32x128xbf16>, vector<192x128xf32> -> vector<192x128xf32>
    %c0_78 = arith.constant 0 : index
    %c0_79 = arith.constant 0 : index
    %c0_80 = arith.constant 0 : index
    %193 = vector.load %arg19[%c0_78, %c0_79, %c0_80] : memref<2x1x128xf32, #tpu.memory_space<vmem>>, vector<1x1x128xf32>
    %194 = vector.shape_cast %193 : vector<1x1x128xf32> to vector<1x128xf32>
    %195 = vector.broadcast %194 : vector<1x128xf32> to vector<192x128xf32>
    %196 = arith.addf %192, %195 : vector<192x128xf32>
    %cst_81 = arith.constant 1.702000e+00 : f32
    %197 = vector.broadcast %cst_81 : f32 to vector<192x128xf32>
    %198 = arith.mulf %197, %196 : vector<192x128xf32>
    %199 = arith.negf %198 : vector<192x128xf32>
    %200 = math.exp %199 : vector<192x128xf32>
    %cst_82 = arith.constant 1.000000e+00 : f32
    %201 = vector.broadcast %cst_82 : f32 to vector<192x128xf32>
    %202 = arith.addf %201, %200 : vector<192x128xf32>
    %203 = arith.divf %201, %202 : vector<192x128xf32>
    %204 = arith.mulf %196, %203 : vector<192x128xf32>
    %205 = arith.truncf %204 : vector<192x128xf32> to vector<192x128xbf16>
    %c0_83 = arith.constant 0 : index
    %c0_84 = arith.constant 0 : index
    %c0_85 = arith.constant 0 : index
    %206 = vector.load %arg20[%c0_83, %c0_84, %c0_85] : memref<2x128x32xbf16, #tpu.memory_space<vmem>>, vector<1x128x32xbf16>
    %207 = vector.shape_cast %206 : vector<1x128x32xbf16> to vector<128x32xbf16>
    %cst_86 = arith.constant dense<0.000000e+00> : vector<192x32xf32>
    %208 = tpu.matmul %205, %207, %cst_86 {dimension_numbers = #tpu.dot_dimension_numbers<[1], [0], [0], [1], [0, 0, 1, 1], [], []>} : vector<192x128xbf16>, vector<128x32xbf16>, vector<192x32xf32> -> vector<192x32xf32>
    %c0_87 = arith.constant 0 : index
    %c0_88 = arith.constant 0 : index
    %c0_89 = arith.constant 0 : index
    %209 = vector.load %arg21[%c0_87, %c0_88, %c0_89] : memref<2x1x32xf32, #tpu.memory_space<vmem>>, vector<1x1x32xf32>
    %210 = vector.shape_cast %209 : vector<1x1x32xf32> to vector<1x32xf32>
    %211 = vector.broadcast %210 : vector<1x32xf32> to vector<192x32xf32>
    %212 = arith.addf %208, %211 : vector<192x32xf32>
    %213 = vector.shape_cast %212 : vector<192x32xf32> to vector<8x24x32xf32>
    %214 = arith.addf %159, %213 : vector<8x24x32xf32>
    %c1 = arith.constant 1 : index
    %c0_90 = arith.constant 0 : index
    %c0_91 = arith.constant 0 : index
    %215 = vector.load %arg14[%c1, %c0_90, %c0_91] : memref<2x1x32xf32, #tpu.memory_space<vmem>>, vector<1x1x32xf32>
    %216 = vector.shape_cast %215 : vector<1x1x32xf32> to vector<1x32xf32>
    %c1_92 = arith.constant 1 : index
    %c0_93 = arith.constant 0 : index
    %c0_94 = arith.constant 0 : index
    %217 = vector.load %arg15[%c1_92, %c0_93, %c0_94] : memref<2x1x32xf32, #tpu.memory_space<vmem>>, vector<1x1x32xf32>
    %218 = vector.shape_cast %217 : vector<1x1x32xf32> to vector<1x32xf32>
    %cst_95 = arith.constant dense<0.000000e+00> : vector<8x24xf32>
    %219 = vector.multi_reduction <add>, %214, %cst_95 [2] : vector<8x24x32xf32> to vector<8x24xf32>
    %220 = vector.shape_cast %219 : vector<8x24xf32> to vector<8x24x1xf32>
    %cst_96 = arith.constant 3.200000e+01 : f32
    %221 = vector.broadcast %cst_96 : f32 to vector<8x24x1xf32>
    %222 = arith.divf %220, %221 : vector<8x24x1xf32>
    %223 = vector.broadcast %222 : vector<8x24x1xf32> to vector<8x24x32xf32>
    %224 = arith.subf %214, %223 : vector<8x24x32xf32>
    %225 = arith.mulf %224, %224 : vector<8x24x32xf32>
    %cst_97 = arith.constant dense<0.000000e+00> : vector<8x24xf32>
    %226 = vector.multi_reduction <add>, %225, %cst_97 [2] : vector<8x24x32xf32> to vector<8x24xf32>
    %227 = vector.shape_cast %226 : vector<8x24xf32> to vector<8x24x1xf32>
    %cst_98 = arith.constant 3.200000e+01 : f32
    %228 = vector.broadcast %cst_98 : f32 to vector<8x24x1xf32>
    %229 = arith.divf %227, %228 : vector<8x24x1xf32>
    %230 = vector.broadcast %222 : vector<8x24x1xf32> to vector<8x24x32xf32>
    %231 = arith.subf %214, %230 : vector<8x24x32xf32>
    %cst_99 = arith.constant 9.99999974E-6 : f32
    %232 = vector.broadcast %cst_99 : f32 to vector<8x24x1xf32>
    %233 = arith.addf %229, %232 : vector<8x24x1xf32>
    %234 = math.rsqrt %233 : vector<8x24x1xf32>
    %235 = vector.broadcast %234 : vector<8x24x1xf32> to vector<8x24x32xf32>
    %236 = arith.mulf %231, %235 : vector<8x24x32xf32>
    %237 = vector.shape_cast %216 : vector<1x32xf32> to vector<1x1x32xf32>
    %238 = vector.broadcast %237 : vector<1x1x32xf32> to vector<8x24x32xf32>
    %239 = arith.mulf %236, %238 : vector<8x24x32xf32>
    %240 = vector.shape_cast %218 : vector<1x32xf32> to vector<1x1x32xf32>
    %241 = vector.broadcast %240 : vector<1x1x32xf32> to vector<8x24x32xf32>
    %242 = arith.addf %239, %241 : vector<8x24x32xf32>
    %243 = vector.shape_cast %242 : vector<8x24x32xf32> to vector<192x32xf32>
    %244 = arith.truncf %243 : vector<192x32xf32> to vector<192x32xbf16>
    %c1_100 = arith.constant 1 : index
    %c0_101 = arith.constant 0 : index
    %c0_102 = arith.constant 0 : index
    %245 = vector.load %arg6[%c1_100, %c0_101, %c0_102] : memref<2x32x32xbf16, #tpu.memory_space<vmem>>, vector<1x32x32xbf16>
    %246 = vector.shape_cast %245 : vector<1x32x32xbf16> to vector<32x32xbf16>
    %cst_103 = arith.constant dense<0.000000e+00> : vector<192x32xf32>
    %247 = tpu.matmul %244, %246, %cst_103 {dimension_numbers = #tpu.dot_dimension_numbers<[1], [0], [0], [1], [0, 0, 1, 1], [], []>} : vector<192x32xbf16>, vector<32x32xbf16>, vector<192x32xf32> -> vector<192x32xf32>
    %c1_104 = arith.constant 1 : index
    %c0_105 = arith.constant 0 : index
    %c0_106 = arith.constant 0 : index
    %248 = vector.load %arg9[%c1_104, %c0_105, %c0_106] : memref<2x1x32xf32, #tpu.memory_space<vmem>>, vector<1x1x32xf32>
    %249 = vector.shape_cast %248 : vector<1x1x32xf32> to vector<1x32xf32>
    %250 = vector.broadcast %249 : vector<1x32xf32> to vector<192x32xf32>
    %251 = arith.addf %247, %250 : vector<192x32xf32>
    %252 = vector.shape_cast %251 : vector<192x32xf32> to vector<8x24x32xf32>
    %c1_107 = arith.constant 1 : index
    %c0_108 = arith.constant 0 : index
    %c0_109 = arith.constant 0 : index
    %253 = vector.load %arg7[%c1_107, %c0_108, %c0_109] : memref<2x32x32xbf16, #tpu.memory_space<vmem>>, vector<1x32x32xbf16>
    %254 = vector.shape_cast %253 : vector<1x32x32xbf16> to vector<32x32xbf16>
    %cst_110 = arith.constant dense<0.000000e+00> : vector<192x32xf32>
    %255 = tpu.matmul %244, %254, %cst_110 {dimension_numbers = #tpu.dot_dimension_numbers<[1], [0], [0], [1], [0, 0, 1, 1], [], []>} : vector<192x32xbf16>, vector<32x32xbf16>, vector<192x32xf32> -> vector<192x32xf32>
    %c1_111 = arith.constant 1 : index
    %c0_112 = arith.constant 0 : index
    %c0_113 = arith.constant 0 : index
    %256 = vector.load %arg10[%c1_111, %c0_112, %c0_113] : memref<2x1x32xf32, #tpu.memory_space<vmem>>, vector<1x1x32xf32>
    %257 = vector.shape_cast %256 : vector<1x1x32xf32> to vector<1x32xf32>
    %258 = vector.broadcast %257 : vector<1x32xf32> to vector<192x32xf32>
    %259 = arith.addf %255, %258 : vector<192x32xf32>
    %260 = vector.shape_cast %259 : vector<192x32xf32> to vector<8x24x32xf32>
    %c1_114 = arith.constant 1 : index
    %c0_115 = arith.constant 0 : index
    %c0_116 = arith.constant 0 : index
    %261 = vector.load %arg8[%c1_114, %c0_115, %c0_116] : memref<2x32x32xbf16, #tpu.memory_space<vmem>>, vector<1x32x32xbf16>
    %262 = vector.shape_cast %261 : vector<1x32x32xbf16> to vector<32x32xbf16>
    %cst_117 = arith.constant dense<0.000000e+00> : vector<192x32xf32>
    %263 = tpu.matmul %244, %262, %cst_117 {dimension_numbers = #tpu.dot_dimension_numbers<[1], [0], [0], [1], [0, 0, 1, 1], [], []>} : vector<192x32xbf16>, vector<32x32xbf16>, vector<192x32xf32> -> vector<192x32xf32>
    %c1_118 = arith.constant 1 : index
    %c0_119 = arith.constant 0 : index
    %c0_120 = arith.constant 0 : index
    %264 = vector.load %arg11[%c1_118, %c0_119, %c0_120] : memref<2x1x32xf32, #tpu.memory_space<vmem>>, vector<1x1x32xf32>
    %265 = vector.shape_cast %264 : vector<1x1x32xf32> to vector<1x32xf32>
    %266 = vector.broadcast %265 : vector<1x32xf32> to vector<192x32xf32>
    %267 = arith.addf %263, %266 : vector<192x32xf32>
    %268 = vector.shape_cast %267 : vector<192x32xf32> to vector<8x24x32xf32>
    %269 = tpu.concatenate %252, %252, %252, %252 in 1 : vector<8x24x32xf32>, vector<8x24x32xf32>, vector<8x24x32xf32>, vector<8x24x32xf32> -> vector<8x96x32xf32>
    %cst_121 = arith.constant 0.000000e+00 : f32
    %270 = vector.shape_cast %58 : vector<96x32xi1> to vector<1x96x32xi1>
    %271 = vector.broadcast %270 : vector<1x96x32xi1> to vector<8x96x32xi1>
    %272 = vector.broadcast %cst_121 : f32 to vector<8x96x32xf32>
    %273 = arith.select %271, %269, %272 : vector<8x96x32xi1>, vector<8x96x32xf32>
    %274 = arith.truncf %273 : vector<8x96x32xf32> to vector<8x96x32xbf16>
    %275 = arith.truncf %260 : vector<8x24x32xf32> to vector<8x24x32xbf16>
    "tpu.trace_start"() <{level = 10 : i32, message = "bqd,bkd->bqk"}> : () -> ()
    %cst_122 = arith.constant dense<0.000000e+00> : vector<8x96x24xf32>
    %276 = tpu.matmul %274, %275, %cst_122 {dimension_numbers = #tpu.dot_dimension_numbers<[2], [2], [1], [1], [0, 0, 0, 1, 1, 1], [0], [0]>} : vector<8x96x32xbf16>, vector<8x24x32xbf16>, vector<8x96x24xf32> -> vector<8x96x24xf32>
    %cst_123 = arith.constant -1.000000e+30 : f32
    "tpu.trace_stop"() : () -> ()
    %277 = vector.shape_cast %36 : vector<1x1x24xi1> to vector<1x1x24xi1>
    %278 = vector.broadcast %277 : vector<1x1x24xi1> to vector<8x96x24xi1>
    %279 = vector.broadcast %cst_123 : f32 to vector<8x96x24xf32>
    %280 = arith.select %278, %276, %279 : vector<8x96x24xi1>, vector<8x96x24xf32>
    %cst_124 = arith.constant dense<0xFF800000> : vector<8x96xf32>
    %281 = vector.multi_reduction <maximumf>, %280, %cst_124 [2] : vector<8x96x24xf32> to vector<8x96xf32>
    %282 = vector.shape_cast %281 : vector<8x96xf32> to vector<8x96x1xf32>
    %283 = vector.broadcast %282 : vector<8x96x1xf32> to vector<8x96x24xf32>
    %284 = arith.subf %280, %283 : vector<8x96x24xf32>
    %285 = math.exp %284 : vector<8x96x24xf32>
    %cst_125 = arith.constant dense<0.000000e+00> : vector<8x96xf32>
    %286 = vector.multi_reduction <add>, %285, %cst_125 [2] : vector<8x96x24xf32> to vector<8x96xf32>
    %287 = vector.shape_cast %286 : vector<8x96xf32> to vector<8x96x1xf32>
    %288 = tpu.reciprocal %287 {approx = true} : vector<8x96x1xf32> -> vector<8x96x1xf32>
    %289 = vector.broadcast %288 : vector<8x96x1xf32> to vector<8x96x24xf32>
    %290 = arith.mulf %285, %289 : vector<8x96x24xf32>
    %291 = arith.truncf %290 : vector<8x96x24xf32> to vector<8x96x24xbf16>
    %292 = arith.truncf %268 : vector<8x24x32xf32> to vector<8x24x32xbf16>
    "tpu.trace_start"() <{level = 10 : i32, message = "bqk,bkd->bqd"}> : () -> ()
    %cst_126 = arith.constant dense<0.000000e+00> : vector<8x96x32xf32>
    %293 = tpu.matmul %291, %292, %cst_126 {dimension_numbers = #tpu.dot_dimension_numbers<[2], [1], [1], [2], [0, 0, 0, 1, 1, 2], [0], [0]>} : vector<8x96x24xbf16>, vector<8x24x32xbf16>, vector<8x96x32xf32> -> vector<8x96x32xf32>
    %cst_127 = arith.constant 0.000000e+00 : f32
    "tpu.trace_stop"() : () -> ()
    %294 = vector.shape_cast %58 : vector<96x32xi1> to vector<1x96x32xi1>
    %295 = vector.broadcast %294 : vector<1x96x32xi1> to vector<8x96x32xi1>
    %296 = vector.broadcast %cst_127 : f32 to vector<8x96x32xf32>
    %297 = arith.select %295, %293, %296 : vector<8x96x32xi1>, vector<8x96x32xf32>
    %298 = vector.extract_strided_slice %297 {offsets = [0, 0, 0], sizes = [8, 24, 32], strides = [1, 1, 1]} : vector<8x96x32xf32> to vector<8x24x32xf32>
    %299 = vector.extract_strided_slice %297 {offsets = [0, 24, 0], sizes = [8, 24, 32], strides = [1, 1, 1]} : vector<8x96x32xf32> to vector<8x24x32xf32>
    %300 = arith.addf %298, %299 : vector<8x24x32xf32>
    %301 = vector.extract_strided_slice %297 {offsets = [0, 48, 0], sizes = [8, 24, 32], strides = [1, 1, 1]} : vector<8x96x32xf32> to vector<8x24x32xf32>
    %302 = arith.addf %300, %301 : vector<8x24x32xf32>
    %303 = vector.extract_strided_slice %297 {offsets = [0, 72, 0], sizes = [8, 24, 32], strides = [1, 1, 1]} : vector<8x96x32xf32> to vector<8x24x32xf32>
    %304 = arith.addf %302, %303 : vector<8x24x32xf32>
    %305 = vector.shape_cast %304 : vector<8x24x32xf32> to vector<192x32xf32>
    %306 = arith.truncf %305 : vector<192x32xf32> to vector<192x32xbf16>
    %c1_128 = arith.constant 1 : index
    %c0_129 = arith.constant 0 : index
    %c0_130 = arith.constant 0 : index
    %307 = vector.load %arg12[%c1_128, %c0_129, %c0_130] : memref<2x32x32xbf16, #tpu.memory_space<vmem>>, vector<1x32x32xbf16>
    %308 = vector.shape_cast %307 : vector<1x32x32xbf16> to vector<32x32xbf16>
    %cst_131 = arith.constant dense<0.000000e+00> : vector<192x32xf32>
    %309 = tpu.matmul %306, %308, %cst_131 {dimension_numbers = #tpu.dot_dimension_numbers<[1], [0], [0], [1], [0, 0, 1, 1], [], []>} : vector<192x32xbf16>, vector<32x32xbf16>, vector<192x32xf32> -> vector<192x32xf32>
    %c1_132 = arith.constant 1 : index
    %c0_133 = arith.constant 0 : index
    %c0_134 = arith.constant 0 : index
    %310 = vector.load %arg13[%c1_132, %c0_133, %c0_134] : memref<2x1x32xf32, #tpu.memory_space<vmem>>, vector<1x1x32xf32>
    %311 = vector.shape_cast %310 : vector<1x1x32xf32> to vector<1x32xf32>
    %312 = vector.broadcast %311 : vector<1x32xf32> to vector<192x32xf32>
    %313 = arith.addf %309, %312 : vector<192x32xf32>
    %314 = vector.shape_cast %313 : vector<192x32xf32> to vector<8x24x32xf32>
    %315 = arith.addf %214, %314 : vector<8x24x32xf32>
    %c1_135 = arith.constant 1 : index
    %c0_136 = arith.constant 0 : index
    %c0_137 = arith.constant 0 : index
    %316 = vector.load %arg16[%c1_135, %c0_136, %c0_137] : memref<2x1x32xf32, #tpu.memory_space<vmem>>, vector<1x1x32xf32>
    %317 = vector.shape_cast %316 : vector<1x1x32xf32> to vector<1x32xf32>
    %c1_138 = arith.constant 1 : index
    %c0_139 = arith.constant 0 : index
    %c0_140 = arith.constant 0 : index
    %318 = vector.load %arg17[%c1_138, %c0_139, %c0_140] : memref<2x1x32xf32, #tpu.memory_space<vmem>>, vector<1x1x32xf32>
    %319 = vector.shape_cast %318 : vector<1x1x32xf32> to vector<1x32xf32>
    %cst_141 = arith.constant dense<0.000000e+00> : vector<8x24xf32>
    %320 = vector.multi_reduction <add>, %315, %cst_141 [2] : vector<8x24x32xf32> to vector<8x24xf32>
    %321 = vector.shape_cast %320 : vector<8x24xf32> to vector<8x24x1xf32>
    %cst_142 = arith.constant 3.200000e+01 : f32
    %322 = vector.broadcast %cst_142 : f32 to vector<8x24x1xf32>
    %323 = arith.divf %321, %322 : vector<8x24x1xf32>
    %324 = vector.broadcast %323 : vector<8x24x1xf32> to vector<8x24x32xf32>
    %325 = arith.subf %315, %324 : vector<8x24x32xf32>
    %326 = arith.mulf %325, %325 : vector<8x24x32xf32>
    %cst_143 = arith.constant dense<0.000000e+00> : vector<8x24xf32>
    %327 = vector.multi_reduction <add>, %326, %cst_143 [2] : vector<8x24x32xf32> to vector<8x24xf32>
    %328 = vector.shape_cast %327 : vector<8x24xf32> to vector<8x24x1xf32>
    %cst_144 = arith.constant 3.200000e+01 : f32
    %329 = vector.broadcast %cst_144 : f32 to vector<8x24x1xf32>
    %330 = arith.divf %328, %329 : vector<8x24x1xf32>
    %331 = vector.broadcast %323 : vector<8x24x1xf32> to vector<8x24x32xf32>
    %332 = arith.subf %315, %331 : vector<8x24x32xf32>
    %cst_145 = arith.constant 9.99999974E-6 : f32
    %333 = vector.broadcast %cst_145 : f32 to vector<8x24x1xf32>
    %334 = arith.addf %330, %333 : vector<8x24x1xf32>
    %335 = math.rsqrt %334 : vector<8x24x1xf32>
    %336 = vector.broadcast %335 : vector<8x24x1xf32> to vector<8x24x32xf32>
    %337 = arith.mulf %332, %336 : vector<8x24x32xf32>
    %338 = vector.shape_cast %317 : vector<1x32xf32> to vector<1x1x32xf32>
    %339 = vector.broadcast %338 : vector<1x1x32xf32> to vector<8x24x32xf32>
    %340 = arith.mulf %337, %339 : vector<8x24x32xf32>
    %341 = vector.shape_cast %319 : vector<1x32xf32> to vector<1x1x32xf32>
    %342 = vector.broadcast %341 : vector<1x1x32xf32> to vector<8x24x32xf32>
    %343 = arith.addf %340, %342 : vector<8x24x32xf32>
    %344 = vector.shape_cast %343 : vector<8x24x32xf32> to vector<192x32xf32>
    %345 = arith.truncf %344 : vector<192x32xf32> to vector<192x32xbf16>
    %c1_146 = arith.constant 1 : index
    %c0_147 = arith.constant 0 : index
    %c0_148 = arith.constant 0 : index
    %346 = vector.load %arg18[%c1_146, %c0_147, %c0_148] : memref<2x32x128xbf16, #tpu.memory_space<vmem>>, vector<1x32x128xbf16>
    %347 = vector.shape_cast %346 : vector<1x32x128xbf16> to vector<32x128xbf16>
    %cst_149 = arith.constant dense<0.000000e+00> : vector<192x128xf32>
    %348 = tpu.matmul %345, %347, %cst_149 {dimension_numbers = #tpu.dot_dimension_numbers<[1], [0], [0], [1], [0, 0, 1, 1], [], []>} : vector<192x32xbf16>, vector<32x128xbf16>, vector<192x128xf32> -> vector<192x128xf32>
    %c1_150 = arith.constant 1 : index
    %c0_151 = arith.constant 0 : index
    %c0_152 = arith.constant 0 : index
    %349 = vector.load %arg19[%c1_150, %c0_151, %c0_152] : memref<2x1x128xf32, #tpu.memory_space<vmem>>, vector<1x1x128xf32>
    %350 = vector.shape_cast %349 : vector<1x1x128xf32> to vector<1x128xf32>
    %351 = vector.broadcast %350 : vector<1x128xf32> to vector<192x128xf32>
    %352 = arith.addf %348, %351 : vector<192x128xf32>
    %cst_153 = arith.constant 1.702000e+00 : f32
    %353 = vector.broadcast %cst_153 : f32 to vector<192x128xf32>
    %354 = arith.mulf %353, %352 : vector<192x128xf32>
    %355 = arith.negf %354 : vector<192x128xf32>
    %356 = math.exp %355 : vector<192x128xf32>
    %cst_154 = arith.constant 1.000000e+00 : f32
    %357 = vector.broadcast %cst_154 : f32 to vector<192x128xf32>
    %358 = arith.addf %357, %356 : vector<192x128xf32>
    %359 = arith.divf %357, %358 : vector<192x128xf32>
    %360 = arith.mulf %352, %359 : vector<192x128xf32>
    %361 = arith.truncf %360 : vector<192x128xf32> to vector<192x128xbf16>
    %c1_155 = arith.constant 1 : index
    %c0_156 = arith.constant 0 : index
    %c0_157 = arith.constant 0 : index
    %362 = vector.load %arg20[%c1_155, %c0_156, %c0_157] : memref<2x128x32xbf16, #tpu.memory_space<vmem>>, vector<1x128x32xbf16>
    %363 = vector.shape_cast %362 : vector<1x128x32xbf16> to vector<128x32xbf16>
    %cst_158 = arith.constant dense<0.000000e+00> : vector<192x32xf32>
    %364 = tpu.matmul %361, %363, %cst_158 {dimension_numbers = #tpu.dot_dimension_numbers<[1], [0], [0], [1], [0, 0, 1, 1], [], []>} : vector<192x128xbf16>, vector<128x32xbf16>, vector<192x32xf32> -> vector<192x32xf32>
    %c1_159 = arith.constant 1 : index
    %c0_160 = arith.constant 0 : index
    %c0_161 = arith.constant 0 : index
    %365 = vector.load %arg21[%c1_159, %c0_160, %c0_161] : memref<2x1x32xf32, #tpu.memory_space<vmem>>, vector<1x1x32xf32>
    %366 = vector.shape_cast %365 : vector<1x1x32xf32> to vector<1x32xf32>
    %367 = vector.broadcast %366 : vector<1x32xf32> to vector<192x32xf32>
    %368 = arith.addf %364, %367 : vector<192x32xf32>
    %369 = vector.shape_cast %368 : vector<192x32xf32> to vector<8x24x32xf32>
    %370 = arith.addf %315, %369 : vector<8x24x32xf32>
    %c0_162 = arith.constant 0 : index
    %c0_163 = arith.constant 0 : index
    %371 = vector.load %arg22[%c0_162, %c0_163] : memref<1x32xf32, #tpu.memory_space<vmem>>, vector<1x32xf32>
    %c0_164 = arith.constant 0 : index
    %c0_165 = arith.constant 0 : index
    %372 = vector.load %arg23[%c0_164, %c0_165] : memref<1x32xf32, #tpu.memory_space<vmem>>, vector<1x32xf32>
    %cst_166 = arith.constant dense<0.000000e+00> : vector<8x24xf32>
    %373 = vector.multi_reduction <add>, %370, %cst_166 [2] : vector<8x24x32xf32> to vector<8x24xf32>
    %374 = vector.shape_cast %373 : vector<8x24xf32> to vector<8x24x1xf32>
    %cst_167 = arith.constant 3.200000e+01 : f32
    %375 = vector.broadcast %cst_167 : f32 to vector<8x24x1xf32>
    %376 = arith.divf %374, %375 : vector<8x24x1xf32>
    %377 = vector.broadcast %376 : vector<8x24x1xf32> to vector<8x24x32xf32>
    %378 = arith.subf %370, %377 : vector<8x24x32xf32>
    %379 = arith.mulf %378, %378 : vector<8x24x32xf32>
    %cst_168 = arith.constant dense<0.000000e+00> : vector<8x24xf32>
    %380 = vector.multi_reduction <add>, %379, %cst_168 [2] : vector<8x24x32xf32> to vector<8x24xf32>
    %381 = vector.shape_cast %380 : vector<8x24xf32> to vector<8x24x1xf32>
    %cst_169 = arith.constant 3.200000e+01 : f32
    %382 = vector.broadcast %cst_169 : f32 to vector<8x24x1xf32>
    %383 = arith.divf %381, %382 : vector<8x24x1xf32>
    %384 = vector.broadcast %376 : vector<8x24x1xf32> to vector<8x24x32xf32>
    %385 = arith.subf %370, %384 : vector<8x24x32xf32>
    %cst_170 = arith.constant 9.99999974E-6 : f32
    %386 = vector.broadcast %cst_170 : f32 to vector<8x24x1xf32>
    %387 = arith.addf %383, %386 : vector<8x24x1xf32>
    %388 = math.rsqrt %387 : vector<8x24x1xf32>
    %389 = vector.broadcast %388 : vector<8x24x1xf32> to vector<8x24x32xf32>
    %390 = arith.mulf %385, %389 : vector<8x24x32xf32>
    %391 = vector.shape_cast %371 : vector<1x32xf32> to vector<1x1x32xf32>
    %392 = vector.broadcast %391 : vector<1x1x32xf32> to vector<8x24x32xf32>
    %393 = arith.mulf %390, %392 : vector<8x24x32xf32>
    %394 = vector.shape_cast %372 : vector<1x32xf32> to vector<1x1x32xf32>
    %395 = vector.broadcast %394 : vector<1x1x32xf32> to vector<8x24x32xf32>
    %396 = arith.addf %393, %395 : vector<8x24x32xf32>
    %c0_171 = arith.constant 0 : index
    %c0_172 = arith.constant 0 : index
    %c0_173 = arith.constant 0 : index
    %397 = vector.load %arg24[%c0_171, %c0_172, %c0_173] : memref<8x24x32xf32, #tpu.memory_space<vmem>>, vector<8x24x32xf32>
    tpu.vector_store %arg24[%c0_171, %c0_172, %c0_173], %396 {strides = array<i32>} : memref<8x24x32xf32, #tpu.memory_space<vmem>>, vector<8x24x32xf32>,
    return
  }
  func.func @transform_0(%arg0: i32) -> (i32, i32) {
    %c0_i32 = arith.constant 0 : i32
    %c0_i32_0 = arith.constant 0 : i32
    return %arg0, %c0_i32 : i32, i32
  }
  func.func @transform_1(%arg0: i32) -> (i32, i32) {
    %c0_i32 = arith.constant 0 : i32
    %c0_i32_0 = arith.constant 0 : i32
    %c0_i32_1 = arith.constant 0 : i32
    return %c0_i32, %c0_i32_0 : i32, i32
  }
  func.func @transform_2(%arg0: i32) -> (i32, i32) {
    %c0_i32 = arith.constant 0 : i32
    %c0_i32_0 = arith.constant 0 : i32
    %c0_i32_1 = arith.constant 0 : i32
    return %c0_i32, %c0_i32_0 : i32, i32
  }
  func.func @transform_3(%arg0: i32) -> (i32, i32) {
    %c0_i32 = arith.constant 0 : i32
    %c0_i32_0 = arith.constant 0 : i32
    %c0_i32_1 = arith.constant 0 : i32
    return %c0_i32, %c0_i32_0 : i32, i32
  }
  func.func @transform_4(%arg0: i32) -> (i32, i32) {
    %c0_i32 = arith.constant 0 : i32
    %c0_i32_0 = arith.constant 0 : i32
    %c0_i32_1 = arith.constant 0 : i32
    return %c0_i32, %c0_i32_0 : i32, i32
  }
  func.func @transform_5(%arg0: i32) -> (i32, i32, i32) {
    %c0_i32 = arith.constant 0 : i32
    %c0_i32_0 = arith.constant 0 : i32
    %c0_i32_1 = arith.constant 0 : i32
    %c0_i32_2 = arith.constant 0 : i32
    return %c0_i32, %c0_i32_0, %c0_i32_1 : i32, i32, i32
  }
  func.func @transform_6(%arg0: i32) -> (i32, i32, i32) {
    %c0_i32 = arith.constant 0 : i32
    %c0_i32_0 = arith.constant 0 : i32
    %c0_i32_1 = arith.constant 0 : i32
    %c0_i32_2 = arith.constant 0 : i32
    return %c0_i32, %c0_i32_0, %c0_i32_1 : i32, i32, i32
  }
  func.func @transform_7(%arg0: i32) -> (i32, i32, i32) {
    %c0_i32 = arith.constant 0 : i32
    %c0_i32_0 = arith.constant 0 : i32
    %c0_i32_1 = arith.constant 0 : i32
    %c0_i32_2 = arith.constant 0 : i32
    return %c0_i32, %c0_i32_0, %c0_i32_1 : i32, i32, i32
  }
  func.func @transform_8(%arg0: i32) -> (i32, i32, i32) {
    %c0_i32 = arith.constant 0 : i32
    %c0_i32_0 = arith.constant 0 : i32
    %c0_i32_1 = arith.constant 0 : i32
    %c0_i32_2 = arith.constant 0 : i32
    return %c0_i32, %c0_i32_0, %c0_i32_1 : i32, i32, i32
  }
  func.func @transform_9(%arg0: i32) -> (i32, i32, i32) {
    %c0_i32 = arith.constant 0 : i32
    %c0_i32_0 = arith.constant 0 : i32
    %c0_i32_1 = arith.constant 0 : i32
    %c0_i32_2 = arith.constant 0 : i32
    return %c0_i32, %c0_i32_0, %c0_i32_1 : i32, i32, i32
  }
  func.func @transform_10(%arg0: i32) -> (i32, i32, i32) {
    %c0_i32 = arith.constant 0 : i32
    %c0_i32_0 = arith.constant 0 : i32
    %c0_i32_1 = arith.constant 0 : i32
    %c0_i32_2 = arith.constant 0 : i32
    return %c0_i32, %c0_i32_0, %c0_i32_1 : i32, i32, i32
  }
  func.func @transform_11(%arg0: i32) -> (i32, i32, i32) {
    %c0_i32 = arith.constant 0 : i32
    %c0_i32_0 = arith.constant 0 : i32
    %c0_i32_1 = arith.constant 0 : i32
    %c0_i32_2 = arith.constant 0 : i32
    return %c0_i32, %c0_i32_0, %c0_i32_1 : i32, i32, i32
  }
  func.func @transform_12(%arg0: i32) -> (i32, i32, i32) {
    %c0_i32 = arith.constant 0 : i32
    %c0_i32_0 = arith.constant 0 : i32
    %c0_i32_1 = arith.constant 0 : i32
    %c0_i32_2 = arith.constant 0 : i32
    return %c0_i32, %c0_i32_0, %c0_i32_1 : i32, i32, i32
  }
  func.func @transform_13(%arg0: i32) -> (i32, i32, i32) {
    %c0_i32 = arith.constant 0 : i32
    %c0_i32_0 = arith.constant 0 : i32
    %c0_i32_1 = arith.constant 0 : i32
    %c0_i32_2 = arith.constant 0 : i32
    return %c0_i32, %c0_i32_0, %c0_i32_1 : i32, i32, i32
  }
  func.func @transform_14(%arg0: i32) -> (i32, i32, i32) {
    %c0_i32 = arith.constant 0 : i32
    %c0_i32_0 = arith.constant 0 : i32
    %c0_i32_1 = arith.constant 0 : i32
    %c0_i32_2 = arith.constant 0 : i32
    return %c0_i32, %c0_i32_0, %c0_i32_1 : i32, i32, i32
  }
  func.func @transform_15(%arg0: i32) -> (i32, i32, i32) {
    %c0_i32 = arith.constant 0 : i32
    %c0_i32_0 = arith.constant 0 : i32
    %c0_i32_1 = arith.constant 0 : i32
    %c0_i32_2 = arith.constant 0 : i32
    return %c0_i32, %c0_i32_0, %c0_i32_1 : i32, i32, i32
  }
  func.func @transform_16(%arg0: i32) -> (i32, i32, i32) {
    %c0_i32 = arith.constant 0 : i32
    %c0_i32_0 = arith.constant 0 : i32
    %c0_i32_1 = arith.constant 0 : i32
    %c0_i32_2 = arith.constant 0 : i32
    return %c0_i32, %c0_i32_0, %c0_i32_1 : i32, i32, i32
  }
  func.func @transform_17(%arg0: i32) -> (i32, i32, i32) {
    %c0_i32 = arith.constant 0 : i32
    %c0_i32_0 = arith.constant 0 : i32
    %c0_i32_1 = arith.constant 0 : i32
    %c0_i32_2 = arith.constant 0 : i32
    return %c0_i32, %c0_i32_0, %c0_i32_1 : i32, i32, i32
  }
  func.func @transform_18(%arg0: i32) -> (i32, i32, i32) {
    %c0_i32 = arith.constant 0 : i32
    %c0_i32_0 = arith.constant 0 : i32
    %c0_i32_1 = arith.constant 0 : i32
    %c0_i32_2 = arith.constant 0 : i32
    return %c0_i32, %c0_i32_0, %c0_i32_1 : i32, i32, i32
  }
  func.func @transform_19(%arg0: i32) -> (i32, i32, i32) {
    %c0_i32 = arith.constant 0 : i32
    %c0_i32_0 = arith.constant 0 : i32
    %c0_i32_1 = arith.constant 0 : i32
    %c0_i32_2 = arith.constant 0 : i32
    return %c0_i32, %c0_i32_0, %c0_i32_1 : i32, i32, i32
  }
  func.func @transform_20(%arg0: i32) -> (i32, i32, i32) {
    %c0_i32 = arith.constant 0 : i32
    %c0_i32_0 = arith.constant 0 : i32
    %c0_i32_1 = arith.constant 0 : i32
    %c0_i32_2 = arith.constant 0 : i32
    return %c0_i32, %c0_i32_0, %c0_i32_1 : i32, i32, i32
  }
  func.func @transform_21(%arg0: i32) -> (i32, i32) {
    %c0_i32 = arith.constant 0 : i32
    %c0_i32_0 = arith.constant 0 : i32
    %c0_i32_1 = arith.constant 0 : i32
    return %c0_i32, %c0_i32_0 : i32, i32
  }
  func.func @transform_22(%arg0: i32) -> (i32, i32) {
    %c0_i32 = arith.constant 0 : i32
    %c0_i32_0 = arith.constant 0 : i32
    %c0_i32_1 = arith.constant 0 : i32
    return %c0_i32, %c0_i32_0 : i32, i32
  }
  func.func @transform_23(%arg0: i32) -> (i32, i32, i32) {
    %c0_i32 = arith.constant 0 : i32
    %c0_i32_0 = arith.constant 0 : i32
    %c0_i32_1 = arith.constant 0 : i32
    return %arg0, %c0_i32, %c0_i32_0 : i32, i32, i32
  }
}

</mosaic_0001>

<llo_original>
// kernel: _forward_impl.1
$region0: #{_forward_impl.1}
  #allocation0 [shape = 'u32[]', space=smem, size = 0x4, offset = 0x4, fixed_abs, tag = 'smem constant byte address 0x4 - core index']
  #allocation1 [shape = 'u32[144,128]{1,0:T(1,128)}', space=vmem, size = 0x12000, scoped, tag = 'internal scratch']
  %s0 = inlined_call_operand.vmem [shape: bf16[192,192], index: 0, kind: input, shape index: {}]
  %s1 = inlined_call_operand.vmem [shape: bf16[192,32], index: 1, kind: input, shape index: {}]
  %s2 = inlined_call_operand.vmem [shape: f32[24,32], index: 2, kind: input, shape index: {}]
  %s3 = inlined_call_operand.vmem [shape: f32[1,32], index: 3, kind: input, shape index: {}]
  %s4 = inlined_call_operand.vmem [shape: f32[1,32], index: 4, kind: input, shape index: {}]
  %s5 = inlined_call_operand.vmem [shape: bf16[2,32,32], index: 5, kind: input, shape index: {}]
  %s6 = inlined_call_operand.vmem [shape: bf16[2,32,32], index: 6, kind: input, shape index: {}]
  %s7 = inlined_call_operand.vmem [shape: bf16[2,32,32], index: 7, kind: input, shape index: {}]
  %s8 = inlined_call_operand.vmem [shape: f32[2,1,32], index: 8, kind: input, shape index: {}]
  %s9 = inlined_call_operand.vmem [shape: f32[2,1,32], index: 9, kind: input, shape index: {}]
  %s10 = inlined_call_operand.vmem [shape: f32[2,1,32], index: 10, kind: input, shape index: {}]
  %s11 = inlined_call_operand.vmem [shape: bf16[2,32,32], index: 11, kind: input, shape index: {}]
  %s12 = inlined_call_operand.vmem [shape: f32[2,1,32], index: 12, kind: input, shape index: {}]
  %s13 = inlined_call_operand.vmem [shape: f32[2,1,32], index: 13, kind: input, shape index: {}]
  %s14 = inlined_call_operand.vmem [shape: f32[2,1,32], index: 14, kind: input, shape index: {}]
  %s15 = inlined_call_operand.vmem [shape: f32[2,1,32], index: 15, kind: input, shape index: {}]
  %s16 = inlined_call_operand.vmem [shape: f32[2,1,32], index: 16, kind: input, shape index: {}]
  %s17 = inlined_call_operand.vmem [shape: bf16[2,32,128], index: 17, kind: input, shape index: {}]
  %s18 = inlined_call_operand.vmem [shape: f32[2,1,128], index: 18, kind: input, shape index: {}]
  %s19 = inlined_call_operand.vmem [shape: bf16[2,128,32], index: 19, kind: input, shape index: {}]
  %s20 = inlined_call_operand.vmem [shape: f32[2,1,32], index: 20, kind: input, shape index: {}]
  %s21 = inlined_call_operand.vmem [shape: f32[1,32], index: 21, kind: input, shape index: {}]
  %s22 = inlined_call_operand.vmem [shape: f32[1,32], index: 22, kind: input, shape index: {}]
  %s23 = inlined_call_operand.vmem [shape: f32[8,24,32], index: 23, kind: output, shape index: {}]
  %s24 = sld [smem:[#allocation0]]
  $region102: #{_forward_impl.1} parent=0
    _
  %s26 = ssub.s32 1, %s24
  %s27 = scalar_select 0, %s26, %s24
  // Predicated region
  $region2: #{_forward_impl.1} parent=0 // pred_check
    _
  $region3: #{_forward_impl.1} parent=0 // pred_check_branch
    %29 = sbr.rel (0) target = $region5
  $region4: #{_forward_impl.1} parent=0 // pred_region
    _
  $region5: #{_forward_impl.1} parent=0 // pred_fallthru
    _
  // Predicated region
  $region6: #{_forward_impl.1} parent=0 // pred_check
    _
  $region7: #{_forward_impl.1} parent=0 // pred_check_branch
    %31 = sbr.rel (0) target = $region9
  $region8: #{_forward_impl.1} parent=0 // pred_region
    _
  $region9: #{_forward_impl.1} parent=0 // pred_fallthru
    _
  // Predicated region
  $region10: #{_forward_impl.1} parent=0 // pred_check
    _
  $region11: #{_forward_impl.1} parent=0 // pred_check_branch
    %33 = sbr.rel (0) target = $region13
  $region12: #{_forward_impl.1} parent=0 // pred_region
    _
  $region13: #{_forward_impl.1} parent=0 // pred_fallthru
    _
  // Predicated region
  $region14: #{_forward_impl.1} parent=0 // pred_check
    _
  $region15: #{_forward_impl.1} parent=0 // pred_check_branch
    %35 = sbr.rel (0) target = $region17
  $region16: #{_forward_impl.1} parent=0 // pred_region
    _
  $region17: #{_forward_impl.1} parent=0 // pred_fallthru
    _
  // Predicated region
  $region18: #{_forward_impl.1} parent=0 // pred_check
    _
  $region19: #{_forward_impl.1} parent=0 // pred_check_branch
    %37 = sbr.rel (0) target = $region21
  $region20: #{_forward_impl.1} parent=0 // pred_region
    _
  $region21: #{_forward_impl.1} parent=0 // pred_fallthru
    _
  // Predicated region
  $region22: #{_forward_impl.1} parent=0 // pred_check
    _
  $region23: #{_forward_impl.1} parent=0 // pred_check_branch
    %39 = sbr.rel (0) target = $region25
  $region24: #{_forward_impl.1} parent=0 // pred_region
    _
  $region25: #{_forward_impl.1} parent=0 // pred_fallthru
    _
  // Predicated region
  $region26: #{_forward_impl.1} parent=0 // pred_check
    _
  $region27: #{_forward_impl.1} parent=0 // pred_check_branch
    %41 = sbr.rel (0) target = $region29
  $region28: #{_forward_impl.1} parent=0 // pred_region
    _
  $region29: #{_forward_impl.1} parent=0 // pred_fallthru
    _
  // Predicated region
  $region30: #{_forward_impl.1} parent=0 // pred_check
    _
  $region31: #{_forward_impl.1} parent=0 // pred_check_branch
    %43 = sbr.rel (0) target = $region33
  $region32: #{_forward_impl.1} parent=0 // pred_region
    _
  $region33: #{_forward_impl.1} parent=0 // pred_fallthru
    _
  // Predicated region
  $region34: #{_forward_impl.1} parent=0 // pred_check
    _
  $region35: #{_forward_impl.1} parent=0 // pred_check_branch
    %45 = sbr.rel (0) target = $region37
  $region36: #{_forward_impl.1} parent=0 // pred_region
    _
  $region37: #{_forward_impl.1} parent=0 // pred_fallthru
    _
  // Predicated region
  $region38: #{_forward_impl.1} parent=0 // pred_check
    _
  $region39: #{_forward_impl.1} parent=0 // pred_check_branch
    %47 = sbr.rel (0) target = $region41
  $region40: #{_forward_impl.1} parent=0 // pred_region
    _
  $region41: #{_forward_impl.1} parent=0 // pred_fallthru
    _
  // Predicated region
  $region42: #{_forward_impl.1} parent=0 // pred_check
    _
  $region43: #{_forward_impl.1} parent=0 // pred_check_branch
    %49 = sbr.rel (0) target = $region45
  $region44: #{_forward_impl.1} parent=0 // pred_region
    _
  $region45: #{_forward_impl.1} parent=0 // pred_fallthru
    _
  // Predicated region
  $region46: #{_forward_impl.1} parent=0 // pred_check
    _
  $region47: #{_forward_impl.1} parent=0 // pred_check_branch
    %51 = sbr.rel (0) target = $region49
  $region48: #{_forward_impl.1} parent=0 // pred_region
    _
  $region49: #{_forward_impl.1} parent=0 // pred_fallthru
    _
  // Predicated region
  $region50: #{_forward_impl.1} parent=0 // pred_check
    _
  $region51: #{_forward_impl.1} parent=0 // pred_check_branch
    %53 = sbr.rel (0) target = $region53
  $region52: #{_forward_impl.1} parent=0 // pred_region
    _
  $region53: #{_forward_impl.1} parent=0 // pred_fallthru
    _
  // Predicated region
  $region54: #{_forward_impl.1} parent=0 // pred_check
    _
  $region55: #{_forward_impl.1} parent=0 // pred_check_branch
    %55 = sbr.rel (0) target = $region57
  $region56: #{_forward_impl.1} parent=0 // pred_region
    _
  $region57: #{_forward_impl.1} parent=0 // pred_fallthru
    _
  // Predicated region
  $region58: #{_forward_impl.1} parent=0 // pred_check
    _
  $region59: #{_forward_impl.1} parent=0 // pred_check_branch
    %57 = sbr.rel (0) target = $region61
  $region60: #{_forward_impl.1} parent=0 // pred_region
    _
  $region61: #{_forward_impl.1} parent=0 // pred_fallthru
    _
  // Predicated region
  $region62: #{_forward_impl.1} parent=0 // pred_check
    _
  $region63: #{_forward_impl.1} parent=0 // pred_check_branch
    %59 = sbr.rel (0) target = $region65
  $region64: #{_forward_impl.1} parent=0 // pred_region
    _
  $region65: #{_forward_impl.1} parent=0 // pred_fallthru
    _
  // Predicated region
  $region66: #{_forward_impl.1} parent=0 // pred_check
    _
  $region67: #{_forward_impl.1} parent=0 // pred_check_branch
    %61 = sbr.rel (0) target = $region69
  $region68: #{_forward_impl.1} parent=0 // pred_region
    _
  $region69: #{_forward_impl.1} parent=0 // pred_fallthru
    _
  // Predicated region
  $region70: #{_forward_impl.1} parent=0 // pred_check
    _
  $region71: #{_forward_impl.1} parent=0 // pred_check_branch
    %63 = sbr.rel (0) target = $region73
  $region72: #{_forward_impl.1} parent=0 // pred_region
    _
  $region73: #{_forward_impl.1} parent=0 // pred_fallthru
    _
  // Predicated region
  $region74: #{_forward_impl.1} parent=0 // pred_check
    _
  $region75: #{_forward_impl.1} parent=0 // pred_check_branch
    %65 = sbr.rel (0) target = $region77
  $region76: #{_forward_impl.1} parent=0 // pred_region
    _
  $region77: #{_forward_impl.1} parent=0 // pred_fallthru
    _
  // Predicated region
  $region78: #{_forward_impl.1} parent=0 // pred_check
    _
  $region79: #{_forward_impl.1} parent=0 // pred_check_branch
    %67 = sbr.rel (0) target = $region81
  $region80: #{_forward_impl.1} parent=0 // pred_region
    _
  $region81: #{_forward_impl.1} parent=0 // pred_fallthru
    _
  // Predicated region
  $region82: #{_forward_impl.1} parent=0 // pred_check
    _
  $region83: #{_forward_impl.1} parent=0 // pred_check_branch
    %69 = sbr.rel (0) target = $region85
  $region84: #{_forward_impl.1} parent=0 // pred_region
    _
  $region85: #{_forward_impl.1} parent=0 // pred_fallthru
    _
  // Predicated region
  $region86: #{_forward_impl.1} parent=0 // pred_check
    _
  $region87: #{_forward_impl.1} parent=0 // pred_check_branch
    %71 = sbr.rel (0) target = $region89
  $region88: #{_forward_impl.1} parent=0 // pred_region
    _
  $region89: #{_forward_impl.1} parent=0 // pred_fallthru
    _
  // Predicated region
  $region90: #{_forward_impl.1} parent=0 // pred_check
    _
  $region91: #{_forward_impl.1} parent=0 // pred_check_branch
    %73 = sbr.rel (0) target = $region93
  $region92: #{_forward_impl.1} parent=0 // pred_region
    _
  $region93: #{_forward_impl.1} parent=0 // pred_fallthru
    _
  %v75 = vld [vmem:[%s0] sm:$0xff]
  %v76 = vld [vmem:[%s0 + $0x8] sm:$0xff]
  %v77 = vld [vmem:[%s0 + $0x10] sm:$0xff]
  %v78 = vld [vmem:[%s0 + $0x18] sm:$0xff]
  %v79 = vld [vmem:[%s0 + $0x20] sm:$0xff]
  %v80 = vld [vmem:[%s0 + $0x28] sm:$0xff]
  %v81 = vld [vmem:[%s0 + $0x30] sm:$0xff]
  %v82 = vld [vmem:[%s0 + $0x38] sm:$0xff]
  %v83 = vld [vmem:[%s0 + $0x40] sm:$0xff]
  %v84 = vld [vmem:[%s0 + $0x48] sm:$0xff]
  %v85 = vld [vmem:[%s0 + $0x50] sm:$0xff]
  %v86 = vld [vmem:[%s0 + $0x58] sm:$0xff]
  %v87 = vld [vmem:[%s0 + $0x60] sm:$0xff]
  %v88 = vld [vmem:[%s0 + $0x68] sm:$0xff]
  %v89 = vld [vmem:[%s0 + $0x70] sm:$0xff]
  %v90 = vld [vmem:[%s0 + $0x78] sm:$0xff]
  %v91 = vld [vmem:[%s0 + $0x80] sm:$0xff]
  %v92 = vld [vmem:[%s0 + $0x88] sm:$0xff]
  %v93 = vld [vmem:[%s0 + $0x90] sm:$0xff]
  %v94 = vld [vmem:[%s0 + $0x98] sm:$0xff]
  %v95 = vld [vmem:[%s0 + $0xa0] sm:$0xff]
  %v96 = vld [vmem:[%s0 + $0xa8] sm:$0xff]
  %v97 = vld [vmem:[%s0 + $0xb0] sm:$0xff]
  %v98 = vld [vmem:[%s0 + $0xb8] sm:$0xff]
  %v99 = vld [vmem:[%s1] sm:$0xf]
  %v100 = vld [vmem:[%s1 + $0x4] sm:$0xf]
  %v101 = vld [vmem:[%s1 + $0x8] sm:$0xf]
  %v102 = vld [vmem:[%s1 + $0xc] sm:$0xf]
  %v103 = vld [vmem:[%s1 + $0x10] sm:$0xf]
  %v104 = vld [vmem:[%s1 + $0x14] sm:$0xf]
  %v105 = vld [vmem:[%s1 + $0x18] sm:$0xf]
  %v106 = vld [vmem:[%s1 + $0x1c] sm:$0xf]
  %v107 = vld [vmem:[%s1 + $0x20] sm:$0xf]
  %v108 = vld [vmem:[%s1 + $0x24] sm:$0xf]
  %v109 = vld [vmem:[%s1 + $0x28] sm:$0xf]
  %v110 = vld [vmem:[%s1 + $0x2c] sm:$0xf]
  %v111 = vld [vmem:[%s1 + $0x30] sm:$0xf]
  %v112 = vld [vmem:[%s1 + $0x34] sm:$0xf]
  %v113 = vld [vmem:[%s1 + $0x38] sm:$0xf]
  %v114 = vld [vmem:[%s1 + $0x3c] sm:$0xf]
  %v115 = vld [vmem:[%s1 + $0x40] sm:$0xf]
  %v116 = vld [vmem:[%s1 + $0x44] sm:$0xf]
  %v117 = vld [vmem:[%s1 + $0x48] sm:$0xf]
  %v118 = vld [vmem:[%s1 + $0x4c] sm:$0xf]
  %v119 = vld [vmem:[%s1 + $0x50] sm:$0xf]
  %v120 = vld [vmem:[%s1 + $0x54] sm:$0xf]
  %v121 = vld [vmem:[%s1 + $0x58] sm:$0xf]
  %v122 = vld [vmem:[%s1 + $0x5c] sm:$0xf]
  %v147 = vunpack.c.l.b16 %v75
  %v148 = vunpack.c.h.b16 %v75
  %v149 = vunpack.c.l.b16 %v76
  %v150 = vunpack.c.h.b16 %v76
  %v151 = vunpack.c.l.b16 %v77
  %v152 = vunpack.c.h.b16 %v77
  %v153 = vunpack.c.l.b16 %v78
  %v154 = vunpack.c.h.b16 %v78
  %v155 = vunpack.c.l.b16 %v79
  %v156 = vunpack.c.h.b16 %v79
  %v157 = vunpack.c.l.b16 %v80
  %v158 = vunpack.c.h.b16 %v80
  %v159 = vunpack.c.l.b16 %v81
  %v160 = vunpack.c.h.b16 %v81
  %v161 = vunpack.c.l.b16 %v82
  %v162 = vunpack.c.h.b16 %v82
  %v163 = vunpack.c.l.b16 %v83
  %v164 = vunpack.c.h.b16 %v83
  %v165 = vunpack.c.l.b16 %v84
  %v166 = vunpack.c.h.b16 %v84
  %v167 = vunpack.c.l.b16 %v85
  %v168 = vunpack.c.h.b16 %v85
  %v169 = vunpack.c.l.b16 %v86
  %v170 = vunpack.c.h.b16 %v86
  %v171 = vunpack.c.l.b16 %v87
  %v172 = vunpack.c.h.b16 %v87
  %v173 = vunpack.c.l.b16 %v88
  %v174 = vunpack.c.h.b16 %v88
  %v175 = vunpack.c.l.b16 %v89
  %v176 = vunpack.c.h.b16 %v89
  %v177 = vunpack.c.l.b16 %v90
  %v178 = vunpack.c.h.b16 %v90
  %v179 = vunpack.c.l.b16 %v91
  %v180 = vunpack.c.h.b16 %v91
  %v181 = vunpack.c.l.b16 %v92
  %v182 = vunpack.c.h.b16 %v92
  %v183 = vunpack.c.l.b16 %v93
  %v184 = vunpack.c.h.b16 %v93
  %v185 = vunpack.c.l.b16 %v94
  %v186 = vunpack.c.h.b16 %v94
  %v187 = vunpack.c.l.b16 %v95
  %v188 = vunpack.c.h.b16 %v95
  %v189 = vunpack.c.l.b16 %v96
  %v190 = vunpack.c.h.b16 %v96
  %v191 = vunpack.c.l.b16 %v97
  %v192 = vunpack.c.h.b16 %v97
  %v193 = vunpack.c.l.b16 %v98
  %v194 = vunpack.c.h.b16 %v98
  %v195 = vpack.c.b16 %v149, %v147
  %v196 = vpack.c.b16 %v150, %v148
  %v197 = vpack.c.b16 %v153, %v151
  %v198 = vpack.c.b16 %v154, %v152
  %v199 = vpack.c.b16 %v157, %v155
  %v200 = vpack.c.b16 %v158, %v156
  %v201 = vpack.c.b16 %v161, %v159
  %v202 = vpack.c.b16 %v162, %v160
  %v203 = vpack.c.b16 %v165, %v163
  %v204 = vpack.c.b16 %v166, %v164
  %v205 = vpack.c.b16 %v169, %v167
  %v206 = vpack.c.b16 %v170, %v168
  %v207 = vpack.c.b16 %v173, %v171
  %v208 = vpack.c.b16 %v174, %v172
  %v209 = vpack.c.b16 %v177, %v175
  %v210 = vpack.c.b16 %v178, %v176
  %v211 = vpack.c.b16 %v181, %v179
  %v212 = vpack.c.b16 %v182, %v180
  %v213 = vpack.c.b16 %v185, %v183
  %v214 = vpack.c.b16 %v186, %v184
  %v215 = vpack.c.b16 %v189, %v187
  %v216 = vpack.c.b16 %v190, %v188
  %v217 = vpack.c.b16 %v193, %v191
  %v218 = vpack.c.b16 %v194, %v192
  %v255 = vunpack.c.l.b16 %v99
  %v256 = vunpack.c.l.b16 %v100
  %v257 = vunpack.c.l.b16 %v101
  %v258 = vunpack.c.l.b16 %v102
  %v259 = vunpack.c.l.b16 %v103
  %v260 = vunpack.c.l.b16 %v104
  %v261 = vunpack.c.l.b16 %v105
  %v262 = vunpack.c.l.b16 %v106
  %v263 = vunpack.c.l.b16 %v107
  %v264 = vunpack.c.l.b16 %v108
  %v265 = vunpack.c.l.b16 %v109
  %v266 = vunpack.c.l.b16 %v110
  %v267 = vunpack.c.l.b16 %v111
  %v268 = vunpack.c.l.b16 %v112
  %v269 = vunpack.c.l.b16 %v113
  %v270 = vunpack.c.l.b16 %v114
  %v271 = vunpack.c.l.b16 %v115
  %v272 = vunpack.c.l.b16 %v116
  %v273 = vunpack.c.l.b16 %v117
  %v274 = vunpack.c.l.b16 %v118
  %v275 = vunpack.c.l.b16 %v119
  %v276 = vunpack.c.l.b16 %v120
  %v277 = vunpack.c.l.b16 %v121
  %v278 = vunpack.c.l.b16 %v122
  %v279 = vpack.c.b16 %v256, %v255
  %v280 = vpack.c.b16 %v258, %v257
  %v281 = vpack.c.b16 %v260, %v259
  %v282 = vpack.c.b16 %v262, %v261
  %v283 = vpack.c.b16 %v264, %v263
  %v284 = vpack.c.b16 %v266, %v265
  %v285 = vpack.c.b16 %v268, %v267
  %v286 = vpack.c.b16 %v270, %v269
  %v287 = vpack.c.b16 %v272, %v271
  %v288 = vpack.c.b16 %v274, %v273
  %v289 = vpack.c.b16 %v276, %v275
  %v290 = vpack.c.b16 %v278, %v277
  %vm303 = vcmask 523264
  %v305 = vsel %vm303, %v196, 0
  %v308 = vsel %vm303, %v198, 0
  %v311 = vsel %vm303, %v200, 0
  %v314 = vsel %vm303, %v202, 0
  %v317 = vsel %vm303, %v204, 0
  %v320 = vsel %vm303, %v206, 0
  %v323 = vsel %vm303, %v208, 0
  %v326 = vsel %vm303, %v210, 0
  %v329 = vsel %vm303, %v212, 0
  %v332 = vsel %vm303, %v214, 0
  %v335 = vsel %vm303, %v216, 0
  %v338 = vsel %vm303, %v218, 0
  %340 = vmatprep.subr.bf16.mxu0 0
  %341 = vmatpush1.bf16.msra.mxu0 %v286
  %342 = vmatprep.subr.bf16.mxu0 0
  %343 = vmatpush1.bf16.msra.mxu0 %v285
  %344 = vmatprep.subr.bf16.mxu0 0
  %345 = vmatpush1.bf16.msra.mxu0 %v284
  %346 = vmatprep.subr.bf16.mxu0 0
  %347 = vmatpush1.bf16.msra.mxu0 %v283
  %348 = vmatprep.subr.bf16.mxu0 0
  %349 = vmatpush1.bf16.msra.mxu0 %v282
  %350 = vmatprep.subr.bf16.mxu0 0
  %351 = vmatpush1.bf16.msra.mxu0 %v281
  %352 = vmatprep.subr.bf16.mxu0 0
  %353 = vmatpush1.bf16.msra.mxu0 %v280
  %354 = vmatprep.subr.bf16.mxu0 0
  %355 = vmatpush1.bf16.msra.mxu0 %v279
  %356 = vmatprep.subr.bf16.mxu0 0
  %357 = vmatpush2.bf16.msra.mxu0 0
  %358 = vmatprep.subr.bf16.mxu0 0
  %359 = vmatpush2.bf16.msra.mxu0 0
  %360 = vmatprep.subr.bf16.mxu0 0
  %361 = vmatpush2.bf16.msra.mxu0 0
  %362 = vmatprep.subr.bf16.mxu0 0
  %363 = vmatpush2.bf16.msra.mxu0 0
  %364 = vmatprep.subr.bf16.mxu0 0
  %365 = vmatpush2.bf16.msra.mxu0 %v290
  %366 = vmatprep.subr.bf16.mxu0 0
  %367 = vmatpush2.bf16.msra.mxu0 %v289
  %368 = vmatprep.subr.bf16.mxu0 0
  %369 = vmatpush2.bf16.msra.mxu0 %v288
  %370 = vmatprep.subr.bf16.mxu0 0
  %371 = vmatpush2.bf16.msra.mxu0 %v287
  %372 = vmatprep.mubr.bf16.mxu0 %v305
  %373 = vmatmul.mubr.bf16.gmra.mxu0 %v195
  %v374 = vpop.f32.mrf.mxu0
  %v375 = vadd.f32 0.0, %v374
  %v376 = vpop.f32.mrf.mxu0
  %v377 = vpop.f32.mrf.mxu0
  %v378 = vadd.f32 0.0, %v377
  %v379 = vpop.f32.mrf.mxu0
  %380 = vmatprep.mubr.bf16.mxu0 %v308
  %381 = vmatmul.mubr.bf16.gmra.mxu0 %v197
  %v382 = vpop.f32.mrf.mxu0
  %v383 = vadd.f32 0.0, %v382
  %v384 = vpop.f32.mrf.mxu0
  %v385 = vpop.f32.mrf.mxu0
  %v386 = vadd.f32 0.0, %v385
  %v387 = vpop.f32.mrf.mxu0
  %388 = vmatprep.mubr.bf16.mxu0 %v311
  %389 = vmatmul.mubr.bf16.gmra.mxu0 %v199
  %v390 = vpop.f32.mrf.mxu0
  %v391 = vadd.f32 0.0, %v390
  %v392 = vpop.f32.mrf.mxu0
  %v393 = vpop.f32.mrf.mxu0
  %v394 = vadd.f32 0.0, %v393
  %v395 = vpop.f32.mrf.mxu0
  %396 = vmatprep.mubr.bf16.mxu0 %v314
  %397 = vmatmul.mubr.bf16.gmra.mxu0 %v201
  %v398 = vpop.f32.mrf.mxu0
  %v399 = vadd.f32 0.0, %v398
  %v400 = vpop.f32.mrf.mxu0
  %v401 = vpop.f32.mrf.mxu0
  %v402 = vadd.f32 0.0, %v401
  %v403 = vpop.f32.mrf.mxu0
  %404 = vmatprep.mubr.bf16.mxu0 %v317
  %405 = vmatmul.mubr.bf16.gmra.mxu0 %v203
  %v406 = vpop.f32.mrf.mxu0
  %v407 = vadd.f32 0.0, %v406
  %v408 = vpop.f32.mrf.mxu0
  %v409 = vpop.f32.mrf.mxu0
  %v410 = vadd.f32 0.0, %v409
  %v411 = vpop.f32.mrf.mxu0
  %412 = vmatprep.mubr.bf16.mxu0 %v320
  %413 = vmatmul.mubr.bf16.gmra.mxu0 %v205
  %v414 = vpop.f32.mrf.mxu0
  %v415 = vadd.f32 0.0, %v414
  %v416 = vpop.f32.mrf.mxu0
  %v417 = vpop.f32.mrf.mxu0
  %v418 = vadd.f32 0.0, %v417
  %v419 = vpop.f32.mrf.mxu0
  %420 = vmatprep.mubr.bf16.mxu0 %v323
  %421 = vmatmul.mubr.bf16.gmra.mxu0 %v207
  %v422 = vpop.f32.mrf.mxu0
  %v423 = vadd.f32 0.0, %v422
  %v424 = vpop.f32.mrf.mxu0
  %v425 = vpop.f32.mrf.mxu0
  %v426 = vadd.f32 0.0, %v425
  %v427 = vpop.f32.mrf.mxu0
  %428 = vmatprep.mubr.bf16.mxu0 %v326
  %429 = vmatmul.mubr.bf16.gmra.mxu0 %v209
  %v430 = vpop.f32.mrf.mxu0
  %v431 = vadd.f32 0.0, %v430
  %v432 = vpop.f32.mrf.mxu0
  %v433 = vpop.f32.mrf.mxu0
  %v434 = vadd.f32 0.0, %v433
  %v435 = vpop.f32.mrf.mxu0
  %436 = vmatprep.mubr.bf16.mxu0 %v329
  %437 = vmatmul.mubr.bf16.gmra.mxu0 %v211
  %v438 = vpop.f32.mrf.mxu0
  %v439 = vadd.f32 0.0, %v438
  %v440 = vpop.f32.mrf.mxu0
  %v441 = vpop.f32.mrf.mxu0
  %v442 = vadd.f32 0.0, %v441
  %v443 = vpop.f32.mrf.mxu0
  %444 = vmatprep.mubr.bf16.mxu0 %v332
  %445 = vmatmul.mubr.bf16.gmra.mxu0 %v213
  %v446 = vpop.f32.mrf.mxu0
  %v447 = vadd.f32 0.0, %v446
  %v448 = vpop.f32.mrf.mxu0
  %v449 = vpop.f32.mrf.mxu0
  %v450 = vadd.f32 0.0, %v449
  %v451 = vpop.f32.mrf.mxu0
  %452 = vmatprep.mubr.bf16.mxu0 %v335
  %453 = vmatmul.mubr.bf16.gmra.mxu0 %v215
  %v454 = vpop.f32.mrf.mxu0
  %v455 = vadd.f32 0.0, %v454
  %v456 = vpop.f32.mrf.mxu0
  %v457 = vpop.f32.mrf.mxu0
  %v458 = vadd.f32 0.0, %v457
  %v459 = vpop.f32.mrf.mxu0
  %460 = vmatprep.mubr.bf16.mxu0 %v338
  %461 = vmatmul.mubr.bf16.gmra.mxu0 %v217
  %v462 = vpop.f32.mrf.mxu0
  %v463 = vadd.f32 0.0, %v462
  %v464 = vpop.f32.mrf.mxu0
  %v465 = vpop.f32.mrf.mxu0
  %v466 = vadd.f32 0.0, %v465
  %v467 = vpop.f32.mrf.mxu0
  %468 = vdwg.mxu0
  %v469 = vld [vmem:[%s2] sm:$0xff]
  %v470 = vld [vmem:[%s2 + $0x8] sm:$0xff]
  %v471 = vld [vmem:[%s2 + $0x10] sm:$0xff]
  %v472 = vadd.f32 %v375, %v469
  %v473 = vadd.f32 %v378, %v470
  %v474 = vadd.f32 %v383, %v471
  %v475 = vadd.f32 %v386, %v469
  %v476 = vadd.f32 %v391, %v470
  %v477 = vadd.f32 %v394, %v471
  %v478 = vadd.f32 %v399, %v469
  %v479 = vadd.f32 %v402, %v470
  %v480 = vadd.f32 %v407, %v471
  %v481 = vadd.f32 %v410, %v469
  %v482 = vadd.f32 %v415, %v470
  %v483 = vadd.f32 %v418, %v471
  %v484 = vadd.f32 %v423, %v469
  %v485 = vadd.f32 %v426, %v470
  %v486 = vadd.f32 %v431, %v471
  %v487 = vadd.f32 %v434, %v469
  %v488 = vadd.f32 %v439, %v470
  %v489 = vadd.f32 %v442, %v471
  %v490 = vadd.f32 %v447, %v469
  %v491 = vadd.f32 %v450, %v470
  %v492 = vadd.f32 %v455, %v471
  %v493 = vadd.f32 %v458, %v469
  %v494 = vadd.f32 %v463, %v470
  %v495 = vadd.f32 %v466, %v471
  %v496 = vld [vmem:[%s3] sm:$0x1]
  %v497 = vld [vmem:[%s4] sm:$0x1]
  %vm498 = vcmask 261120
  %v499 = vsel %vm498, %v472, 0.0
  %500 = vadd.xlane.f32.xlu0 %v499
  %v501 = vpop.xlane.xlu0 %500
  %v502 = vsel %vm498, %v473, 0.0
  %503 = vadd.xlane.f32.xlu0 %v502
  %v504 = vpop.xlane.xlu0 %503
  %v505 = vsel %vm498, %v474, 0.0
  %506 = vadd.xlane.f32.xlu0 %v505
  %v507 = vpop.xlane.xlu0 %506
  %v508 = vsel %vm498, %v475, 0.0
  %509 = vadd.xlane.f32.xlu0 %v508
  %v510 = vpop.xlane.xlu0 %509
  %v511 = vsel %vm498, %v476, 0.0
  %512 = vadd.xlane.f32.xlu0 %v511
  %v513 = vpop.xlane.xlu0 %512
  %v514 = vsel %vm498, %v477, 0.0
  %515 = vadd.xlane.f32.xlu0 %v514
  %v516 = vpop.xlane.xlu0 %515
  %v517 = vsel %vm498, %v478, 0.0
  %518 = vadd.xlane.f32.xlu0 %v517
  %v519 = vpop.xlane.xlu0 %518
  %v520 = vsel %vm498, %v479, 0.0
  %521 = vadd.xlane.f32.xlu0 %v520
  %v522 = vpop.xlane.xlu0 %521
  %v523 = vsel %vm498, %v480, 0.0
  %524 = vadd.xlane.f32.xlu0 %v523
  %v525 = vpop.xlane.xlu0 %524
  %v526 = vsel %vm498, %v481, 0.0
  %527 = vadd.xlane.f32.xlu0 %v526
  %v528 = vpop.xlane.xlu0 %527
  %v529 = vsel %vm498, %v482, 0.0
  %530 = vadd.xlane.f32.xlu0 %v529
  %v531 = vpop.xlane.xlu0 %530
  %v532 = vsel %vm498, %v483, 0.0
  %533 = vadd.xlane.f32.xlu0 %v532
  %v534 = vpop.xlane.xlu0 %533
  %v535 = vsel %vm498, %v484, 0.0
  %536 = vadd.xlane.f32.xlu0 %v535
  %v537 = vpop.xlane.xlu0 %536
  %v538 = vsel %vm498, %v485, 0.0
  %539 = vadd.xlane.f32.xlu0 %v538
  %v540 = vpop.xlane.xlu0 %539
  %v541 = vsel %vm498, %v486, 0.0
  %542 = vadd.xlane.f32.xlu0 %v541
  %v543 = vpop.xlane.xlu0 %542
  %v544 = vsel %vm498, %v487, 0.0
  %545 = vadd.xlane.f32.xlu0 %v544
  %v546 = vpop.xlane.xlu0 %545
  %v547 = vsel %vm498, %v488, 0.0
  %548 = vadd.xlane.f32.xlu0 %v547
  %v549 = vpop.xlane.xlu0 %548
  %v550 = vsel %vm498, %v489, 0.0
  %551 = vadd.xlane.f32.xlu0 %v550
  %v552 = vpop.xlane.xlu0 %551
  %v553 = vsel %vm498, %v490, 0.0
  %554 = vadd.xlane.f32.xlu0 %v553
  %v555 = vpop.xlane.xlu0 %554
  %v556 = vsel %vm498, %v491, 0.0
  %557 = vadd.xlane.f32.xlu0 %v556
  %v558 = vpop.xlane.xlu0 %557
  %v559 = vsel %vm498, %v492, 0.0
  %560 = vadd.xlane.f32.xlu0 %v559
  %v561 = vpop.xlane.xlu0 %560
  %v562 = vsel %vm498, %v493, 0.0
  %563 = vadd.xlane.f32.xlu0 %v562
  %v564 = vpop.xlane.xlu0 %563
  %v565 = vsel %vm498, %v494, 0.0
  %566 = vadd.xlane.f32.xlu0 %v565
  %v567 = vpop.xlane.xlu0 %566
  %v568 = vsel %vm498, %v495, 0.0
  %569 = vadd.xlane.f32.xlu0 %v568
  %v570 = vpop.xlane.xlu0 %569
  %v571 = vrcp.pop 32.0
  %v572 = vmul.f32 %v501, %v571
  %v573 = vmul.f32 %v504, %v571
  %v574 = vmul.f32 %v507, %v571
  %v575 = vmul.f32 %v510, %v571
  %v576 = vmul.f32 %v513, %v571
  %v577 = vmul.f32 %v516, %v571
  %v578 = vmul.f32 %v519, %v571
  %v579 = vmul.f32 %v522, %v571
  %v580 = vmul.f32 %v525, %v571
  %v581 = vmul.f32 %v528, %v571
  %v582 = vmul.f32 %v531, %v571
  %v583 = vmul.f32 %v534, %v571
  %v584 = vmul.f32 %v537, %v571
  %v585 = vmul.f32 %v540, %v571
  %v586 = vmul.f32 %v543, %v571
  %v587 = vmul.f32 %v546, %v571
  %v588 = vmul.f32 %v549, %v571
  %v589 = vmul.f32 %v552, %v571
  %v590 = vmul.f32 %v555, %v571
  %v591 = vmul.f32 %v558, %v571
  %v592 = vmul.f32 %v561, %v571
  %v593 = vmul.f32 %v564, %v571
  %v594 = vmul.f32 %v567, %v571
  %v595 = vmul.f32 %v570, %v571
  %v596 = vsub.f32 %v472, %v572
  %v597 = vsub.f32 %v473, %v573
  %v598 = vsub.f32 %v474, %v574
  %v599 = vsub.f32 %v475, %v575
  %v600 = vsub.f32 %v476, %v576
  %v601 = vsub.f32 %v477, %v577
  %v602 = vsub.f32 %v478, %v578
  %v603 = vsub.f32 %v479, %v579
  %v604 = vsub.f32 %v480, %v580
  %v605 = vsub.f32 %v481, %v581
  %v606 = vsub.f32 %v482, %v582
  %v607 = vsub.f32 %v483, %v583
  %v608 = vsub.f32 %v484, %v584
  %v609 = vsub.f32 %v485, %v585
  %v610 = vsub.f32 %v486, %v586
  %v611 = vsub.f32 %v487, %v587
  %v612 = vsub.f32 %v488, %v588
  %v613 = vsub.f32 %v489, %v589
  %v614 = vsub.f32 %v490, %v590
  %v615 = vsub.f32 %v491, %v591
  %v616 = vsub.f32 %v492, %v592
  %v617 = vsub.f32 %v493, %v593
  %v618 = vsub.f32 %v494, %v594
  %v619 = vsub.f32 %v495, %v595
  %v620 = vmul.f32 %v596, %v596
  %v621 = vmul.f32 %v597, %v597
  %v622 = vmul.f32 %v598, %v598
  %v623 = vmul.f32 %v599, %v599
  %v624 = vmul.f32 %v600, %v600
  %v625 = vmul.f32 %v601, %v601
  %v626 = vmul.f32 %v602, %v602
  %v627 = vmul.f32 %v603, %v603
  %v628 = vmul.f32 %v604, %v604
  %v629 = vmul.f32 %v605, %v605
  %v630 = vmul.f32 %v606, %v606
  %v631 = vmul.f32 %v607, %v607
  %v632 = vmul.f32 %v608, %v608
  %v633 = vmul.f32 %v609, %v609
  %v634 = vmul.f32 %v610, %v610
  %v635 = vmul.f32 %v611, %v611
  %v636 = vmul.f32 %v612, %v612
  %v637 = vmul.f32 %v613, %v613
  %v638 = vmul.f32 %v614, %v614
  %v639 = vmul.f32 %v615, %v615
  %v640 = vmul.f32 %v616, %v616
  %v641 = vmul.f32 %v617, %v617
  %v642 = vmul.f32 %v618, %v618
  %v643 = vmul.f32 %v619, %v619
  %v644 = vsel %vm498, %v620, 0.0
  %645 = vadd.xlane.f32.xlu0 %v644
  %v646 = vpop.xlane.xlu0 %645
  %v647 = vsel %vm498, %v621, 0.0
  %648 = vadd.xlane.f32.xlu0 %v647
  %v649 = vpop.xlane.xlu0 %648
  %v650 = vsel %vm498, %v622, 0.0
  %651 = vadd.xlane.f32.xlu0 %v650
  %v652 = vpop.xlane.xlu0 %651
  %v653 = vsel %vm498, %v623, 0.0
  %654 = vadd.xlane.f32.xlu0 %v653
  %v655 = vpop.xlane.xlu0 %654
  %v656 = vsel %vm498, %v624, 0.0
  %657 = vadd.xlane.f32.xlu0 %v656
  %v658 = vpop.xlane.xlu0 %657
  %v659 = vsel %vm498, %v625, 0.0
  %660 = vadd.xlane.f32.xlu0 %v659
  %v661 = vpop.xlane.xlu0 %660
  %v662 = vsel %vm498, %v626, 0.0
  %663 = vadd.xlane.f32.xlu0 %v662
  %v664 = vpop.xlane.xlu0 %663
  %v665 = vsel %vm498, %v627, 0.0
  %666 = vadd.xlane.f32.xlu0 %v665
  %v667 = vpop.xlane.xlu0 %666
  %v668 = vsel %vm498, %v628, 0.0
  %669 = vadd.xlane.f32.xlu0 %v668
  %v670 = vpop.xlane.xlu0 %669
  %v671 = vsel %vm498, %v629, 0.0
  %672 = vadd.xlane.f32.xlu0 %v671
  %v673 = vpop.xlane.xlu0 %672
  %v674 = vsel %vm498, %v630, 0.0
  %675 = vadd.xlane.f32.xlu0 %v674
  %v676 = vpop.xlane.xlu0 %675
  %v677 = vsel %vm498, %v631, 0.0
  %678 = vadd.xlane.f32.xlu0 %v677
  %v679 = vpop.xlane.xlu0 %678
  %v680 = vsel %vm498, %v632, 0.0
  %681 = vadd.xlane.f32.xlu0 %v680
  %v682 = vpop.xlane.xlu0 %681
  %v683 = vsel %vm498, %v633, 0.0
  %684 = vadd.xlane.f32.xlu0 %v683
  %v685 = vpop.xlane.xlu0 %684
  %v686 = vsel %vm498, %v634, 0.0
  %687 = vadd.xlane.f32.xlu0 %v686
  %v688 = vpop.xlane.xlu0 %687
  %v689 = vsel %vm498, %v635, 0.0
  %690 = vadd.xlane.f32.xlu0 %v689
  %v691 = vpop.xlane.xlu0 %690
  %v692 = vsel %vm498, %v636, 0.0
  %693 = vadd.xlane.f32.xlu0 %v692
  %v694 = vpop.xlane.xlu0 %693
  %v695 = vsel %vm498, %v637, 0.0
  %696 = vadd.xlane.f32.xlu0 %v695
  %v697 = vpop.xlane.xlu0 %696
  %v698 = vsel %vm498, %v638, 0.0
  %699 = vadd.xlane.f32.xlu0 %v698
  %v700 = vpop.xlane.xlu0 %699
  %v701 = vsel %vm498, %v639, 0.0
  %702 = vadd.xlane.f32.xlu0 %v701
  %v703 = vpop.xlane.xlu0 %702
  %v704 = vsel %vm498, %v640, 0.0
  %705 = vadd.xlane.f32.xlu0 %v704
  %v706 = vpop.xlane.xlu0 %705
  %v707 = vsel %vm498, %v641, 0.0
  %708 = vadd.xlane.f32.xlu0 %v707
  %v709 = vpop.xlane.xlu0 %708
  %v710 = vsel %vm498, %v642, 0.0
  %711 = vadd.xlane.f32.xlu0 %v710
  %v712 = vpop.xlane.xlu0 %711
  %v713 = vsel %vm498, %v643, 0.0
  %714 = vadd.xlane.f32.xlu0 %v713
  %v715 = vpop.xlane.xlu0 %714
  %v716 = vmul.f32 %v646, %v571
  %v717 = vmul.f32 %v649, %v571
  %v718 = vmul.f32 %v652, %v571
  %v719 = vmul.f32 %v655, %v571
  %v720 = vmul.f32 %v658, %v571
  %v721 = vmul.f32 %v661, %v571
  %v722 = vmul.f32 %v664, %v571
  %v723 = vmul.f32 %v667, %v571
  %v724 = vmul.f32 %v670, %v571
  %v725 = vmul.f32 %v673, %v571
  %v726 = vmul.f32 %v676, %v571
  %v727 = vmul.f32 %v679, %v571
  %v728 = vmul.f32 %v682, %v571
  %v729 = vmul.f32 %v685, %v571
  %v730 = vmul.f32 %v688, %v571
  %v731 = vmul.f32 %v691, %v571
  %v732 = vmul.f32 %v694, %v571
  %v733 = vmul.f32 %v697, %v571
  %v734 = vmul.f32 %v700, %v571
  %v735 = vmul.f32 %v703, %v571
  %v736 = vmul.f32 %v706, %v571
  %v737 = vmul.f32 %v709, %v571
  %v738 = vmul.f32 %v712, %v571
  %v739 = vmul.f32 %v715, %v571
  %v740 = vadd.f32 %v716, 1e-05
  %v741 = vadd.f32 %v717, 1e-05
  %v742 = vadd.f32 %v718, 1e-05
  %v743 = vadd.f32 %v719, 1e-05
  %v744 = vadd.f32 %v720, 1e-05
  %v745 = vadd.f32 %v721, 1e-05
  %v746 = vadd.f32 %v722, 1e-05
  %v747 = vadd.f32 %v723, 1e-05
  %v748 = vadd.f32 %v724, 1e-05
  %v749 = vadd.f32 %v725, 1e-05
  %v750 = vadd.f32 %v726, 1e-05
  %v751 = vadd.f32 %v727, 1e-05
  %v752 = vadd.f32 %v728, 1e-05
  %v753 = vadd.f32 %v729, 1e-05
  %v754 = vadd.f32 %v730, 1e-05
  %v755 = vadd.f32 %v731, 1e-05
  %v756 = vadd.f32 %v732, 1e-05
  %v757 = vadd.f32 %v733, 1e-05
  %v758 = vadd.f32 %v734, 1e-05
  %v759 = vadd.f32 %v735, 1e-05
  %v760 = vadd.f32 %v736, 1e-05
  %v761 = vadd.f32 %v737, 1e-05
  %v762 = vadd.f32 %v738, 1e-05
  %v763 = vadd.f32 %v739, 1e-05
  %v764 = vrsqrt.pop %v740
  %v765 = vrsqrt.pop %v741
  %v766 = vrsqrt.pop %v742
  %v767 = vrsqrt.pop %v743
  %v768 = vrsqrt.pop %v744
  %v769 = vrsqrt.pop %v745
  %v770 = vrsqrt.pop %v746
  %v771 = vrsqrt.pop %v747
  %v772 = vrsqrt.pop %v748
  %v773 = vrsqrt.pop %v749
  %v774 = vrsqrt.pop %v750
  %v775 = vrsqrt.pop %v751
  %v776 = vrsqrt.pop %v752
  %v777 = vrsqrt.pop %v753
  %v778 = vrsqrt.pop %v754
  %v779 = vrsqrt.pop %v755
  %v780 = vrsqrt.pop %v756
  %v781 = vrsqrt.pop %v757
  %v782 = vrsqrt.pop %v758
  %v783 = vrsqrt.pop %v759
  %v784 = vrsqrt.pop %v760
  %v785 = vrsqrt.pop %v761
  %v786 = vrsqrt.pop %v762
  %v787 = vrsqrt.pop %v763
  %v788 = vmul.f32 %v596, %v764
  %v789 = vmul.f32 %v597, %v765
  %v790 = vmul.f32 %v598, %v766
  %v791 = vmul.f32 %v599, %v767
  %v792 = vmul.f32 %v600, %v768
  %v793 = vmul.f32 %v601, %v769
  %v794 = vmul.f32 %v602, %v770
  %v795 = vmul.f32 %v603, %v771
  %v796 = vmul.f32 %v604, %v772
  %v797 = vmul.f32 %v605, %v773
  %v798 = vmul.f32 %v606, %v774
  %v799 = vmul.f32 %v607, %v775
  %v800 = vmul.f32 %v608, %v776
  %v801 = vmul.f32 %v609, %v777
  %v802 = vmul.f32 %v610, %v778
  %v803 = vmul.f32 %v611, %v779
  %v804 = vmul.f32 %v612, %v780
  %v805 = vmul.f32 %v613, %v781
  %v806 = vmul.f32 %v614, %v782
  %v807 = vmul.f32 %v615, %v783
  %v808 = vmul.f32 %v616, %v784
  %v809 = vmul.f32 %v617, %v785
  %v810 = vmul.f32 %v618, %v786
  %v811 = vmul.f32 %v619, %v787
  %v813 = vlaneseq
  %v814 = vshrl.u32 %v813, 7
  %v815 = vsub.s32 0, %v814
  %v816 = vrot.slane %v496, %v815
  %v818 = vmul.f32 %v788, %v816
  %v819 = vmul.f32 %v789, %v816
  %v820 = vmul.f32 %v790, %v816
  %v821 = vmul.f32 %v791, %v816
  %v822 = vmul.f32 %v792, %v816
  %v823 = vmul.f32 %v793, %v816
  %v824 = vmul.f32 %v794, %v816
  %v825 = vmul.f32 %v795, %v816
  %v826 = vmul.f32 %v796, %v816
  %v827 = vmul.f32 %v797, %v816
  %v828 = vmul.f32 %v798, %v816
  %v829 = vmul.f32 %v799, %v816
  %v830 = vmul.f32 %v800, %v816
  %v831 = vmul.f32 %v801, %v816
  %v832 = vmul.f32 %v802, %v816
  %v833 = vmul.f32 %v803, %v816
  %v834 = vmul.f32 %v804, %v816
  %v835 = vmul.f32 %v805, %v816
  %v836 = vmul.f32 %v806, %v816
  %v837 = vmul.f32 %v807, %v816
  %v838 = vmul.f32 %v808, %v816
  %v839 = vmul.f32 %v809, %v816
  %v840 = vmul.f32 %v810, %v816
  %v841 = vmul.f32 %v811, %v816
  %v843 = vlaneseq
  %v844 = vshrl.u32 %v843, 7
  %v845 = vsub.s32 0, %v844
  %v846 = vrot.slane %v497, %v845
  %v848 = vadd.f32 %v818, %v846
  %v849 = vadd.f32 %v819, %v846
  %v850 = vadd.f32 %v820, %v846
  %v851 = vadd.f32 %v821, %v846
  %v852 = vadd.f32 %v822, %v846
  %v853 = vadd.f32 %v823, %v846
  %v854 = vadd.f32 %v824, %v846
  %v855 = vadd.f32 %v825, %v846
  %v856 = vadd.f32 %v826, %v846
  %v857 = vadd.f32 %v827, %v846
  %v858 = vadd.f32 %v828, %v846
  %v859 = vadd.f32 %v829, %v846
  %v860 = vadd.f32 %v830, %v846
  %v861 = vadd.f32 %v831, %v846
  %v862 = vadd.f32 %v832, %v846
  %v863 = vadd.f32 %v833, %v846
  %v864 = vadd.f32 %v834, %v846
  %v865 = vadd.f32 %v835, %v846
  %v866 = vadd.f32 %v836, %v846
  %v867 = vadd.f32 %v837, %v846
  %v868 = vadd.f32 %v838, %v846
  %v869 = vadd.f32 %v839, %v846
  %v870 = vadd.f32 %v840, %v846
  %v871 = vadd.f32 %v841, %v846
  %v872 = vlaneseq
  %v873 = vand.u32 %v872, 127
  %vm874 = vcmp.lt.s32.totalorder %v873, 17
  %vm875 = vcmp.ge.s32.totalorder %v873, 0
  %vm876 = vcmp.lt.s32.totalorder %v873, 8
  %vm877 = vmand %vm875, %vm876
  %vm878 = vcmp.ge.s32.totalorder %v873, 8
  %vm879 = vcmp.lt.s32.totalorder %v873, 16
  %vm880 = vmand %vm878, %vm879
  %vm881 = vcmp.ge.s32.totalorder %v873, 16
  %vm882 = vcmp.lt.s32.totalorder %v873, 24
  %vm883 = vmand %vm881, %vm882
  %vm884 = vcmp.ge.s32.totalorder %v873, 24
  %vm885 = vcmp.lt.s32.totalorder %v873, 32
  %vm886 = vmand %vm884, %vm885
  %v887 = vld [vmem:[%s13] sm:$0x1]
  %v888 = vld [vmem:[%s14] sm:$0x1]
  %v889 = vsel %vm498, %v848, 0.0
  %890 = vadd.xlane.f32.xlu0 %v889
  %v891 = vpop.xlane.xlu0 %890
  %v892 = vsel %vm498, %v849, 0.0
  %893 = vadd.xlane.f32.xlu0 %v892
  %v894 = vpop.xlane.xlu0 %893
  %v895 = vsel %vm498, %v850, 0.0
  %896 = vadd.xlane.f32.xlu0 %v895
  %v897 = vpop.xlane.xlu0 %896
  %v898 = vsel %vm498, %v851, 0.0
  %899 = vadd.xlane.f32.xlu0 %v898
  %v900 = vpop.xlane.xlu0 %899
  %v901 = vsel %vm498, %v852, 0.0
  %902 = vadd.xlane.f32.xlu0 %v901
  %v903 = vpop.xlane.xlu0 %902
  %v904 = vsel %vm498, %v853, 0.0
  %905 = vadd.xlane.f32.xlu0 %v904
  %v906 = vpop.xlane.xlu0 %905
  %v907 = vsel %vm498, %v854, 0.0
  %908 = vadd.xlane.f32.xlu0 %v907
  %v909 = vpop.xlane.xlu0 %908
  %v910 = vsel %vm498, %v855, 0.0
  %911 = vadd.xlane.f32.xlu0 %v910
  %v912 = vpop.xlane.xlu0 %911
  %v913 = vsel %vm498, %v856, 0.0
  %914 = vadd.xlane.f32.xlu0 %v913
  %v915 = vpop.xlane.xlu0 %914
  %v916 = vsel %vm498, %v857, 0.0
  %917 = vadd.xlane.f32.xlu0 %v916
  %v918 = vpop.xlane.xlu0 %917
  %v919 = vsel %vm498, %v858, 0.0
  %920 = vadd.xlane.f32.xlu0 %v919
  %v921 = vpop.xlane.xlu0 %920
  %v922 = vsel %vm498, %v859, 0.0
  %923 = vadd.xlane.f32.xlu0 %v922
  %v924 = vpop.xlane.xlu0 %923
  %v925 = vsel %vm498, %v860, 0.0
  %926 = vadd.xlane.f32.xlu0 %v925
  %v927 = vpop.xlane.xlu0 %926
  %v928 = vsel %vm498, %v861, 0.0
  %929 = vadd.xlane.f32.xlu0 %v928
  %v930 = vpop.xlane.xlu0 %929
  %v931 = vsel %vm498, %v862, 0.0
  %932 = vadd.xlane.f32.xlu0 %v931
  %v933 = vpop.xlane.xlu0 %932
  %v934 = vsel %vm498, %v863, 0.0
  %935 = vadd.xlane.f32.xlu0 %v934
  %v936 = vpop.xlane.xlu0 %935
  %v937 = vsel %vm498, %v864, 0.0
  %938 = vadd.xlane.f32.xlu0 %v937
  %v939 = vpop.xlane.xlu0 %938
  %v940 = vsel %vm498, %v865, 0.0
  %941 = vadd.xlane.f32.xlu0 %v940
  %v942 = vpop.xlane.xlu0 %941
  %v943 = vsel %vm498, %v866, 0.0
  %944 = vadd.xlane.f32.xlu0 %v943
  %v945 = vpop.xlane.xlu0 %944
  %v946 = vsel %vm498, %v867, 0.0
  %947 = vadd.xlane.f32.xlu0 %v946
  %v948 = vpop.xlane.xlu0 %947
  %v949 = vsel %vm498, %v868, 0.0
  %950 = vadd.xlane.f32.xlu0 %v949
  %v951 = vpop.xlane.xlu0 %950
  %v952 = vsel %vm498, %v869, 0.0
  %953 = vadd.xlane.f32.xlu0 %v952
  %v954 = vpop.xlane.xlu0 %953
  %v955 = vsel %vm498, %v870, 0.0
  %956 = vadd.xlane.f32.xlu0 %v955
  %v957 = vpop.xlane.xlu0 %956
  %v958 = vsel %vm498, %v871, 0.0
  %959 = vadd.xlane.f32.xlu0 %v958
  %v960 = vpop.xlane.xlu0 %959
  %v961 = vmul.f32 %v891, %v571
  %v962 = vmul.f32 %v894, %v571
  %v963 = vmul.f32 %v897, %v571
  %v964 = vmul.f32 %v900, %v571
  %v965 = vmul.f32 %v903, %v571
  %v966 = vmul.f32 %v906, %v571
  %v967 = vmul.f32 %v909, %v571
  %v968 = vmul.f32 %v912, %v571
  %v969 = vmul.f32 %v915, %v571
  %v970 = vmul.f32 %v918, %v571
  %v971 = vmul.f32 %v921, %v571
  %v972 = vmul.f32 %v924, %v571
  %v973 = vmul.f32 %v927, %v571
  %v974 = vmul.f32 %v930, %v571
  %v975 = vmul.f32 %v933, %v571
  %v976 = vmul.f32 %v936, %v571
  %v977 = vmul.f32 %v939, %v571
  %v978 = vmul.f32 %v942, %v571
  %v979 = vmul.f32 %v945, %v571
  %v980 = vmul.f32 %v948, %v571
  %v981 = vmul.f32 %v951, %v571
  %v982 = vmul.f32 %v954, %v571
  %v983 = vmul.f32 %v957, %v571
  %v984 = vmul.f32 %v960, %v571
  %v985 = vsub.f32 %v848, %v961
  %v986 = vsub.f32 %v849, %v962
  %v987 = vsub.f32 %v850, %v963
  %v988 = vsub.f32 %v851, %v964
  %v989 = vsub.f32 %v852, %v965
  %v990 = vsub.f32 %v853, %v966
  %v991 = vsub.f32 %v854, %v967
  %v992 = vsub.f32 %v855, %v968
  %v993 = vsub.f32 %v856, %v969
  %v994 = vsub.f32 %v857, %v970
  %v995 = vsub.f32 %v858, %v971
  %v996 = vsub.f32 %v859, %v972
  %v997 = vsub.f32 %v860, %v973
  %v998 = vsub.f32 %v861, %v974
  %v999 = vsub.f32 %v862, %v975
  %v1000 = vsub.f32 %v863, %v976
  %v1001 = vsub.f32 %v864, %v977
  %v1002 = vsub.f32 %v865, %v978
  %v1003 = vsub.f32 %v866, %v979
  %v1004 = vsub.f32 %v867, %v980
  %v1005 = vsub.f32 %v868, %v981
  %v1006 = vsub.f32 %v869, %v982
  %v1007 = vsub.f32 %v870, %v983
  %v1008 = vsub.f32 %v871, %v984
  %v1009 = vmul.f32 %v985, %v985
  %v1010 = vmul.f32 %v986, %v986
  %v1011 = vmul.f32 %v987, %v987
  %v1012 = vmul.f32 %v988, %v988
  %v1013 = vmul.f32 %v989, %v989
  %v1014 = vmul.f32 %v990, %v990
  %v1015 = vmul.f32 %v991, %v991
  %v1016 = vmul.f32 %v992, %v992
  %v1017 = vmul.f32 %v993, %v993
  %v1018 = vmul.f32 %v994, %v994
  %v1019 = vmul.f32 %v995, %v995
  %v1020 = vmul.f32 %v996, %v996
  %v1021 = vmul.f32 %v997, %v997
  %v1022 = vmul.f32 %v998, %v998
  %v1023 = vmul.f32 %v999, %v999
  %v1024 = vmul.f32 %v1000, %v1000
  %v1025 = vmul.f32 %v1001, %v1001
  %v1026 = vmul.f32 %v1002, %v1002
  %v1027 = vmul.f32 %v1003, %v1003
  %v1028 = vmul.f32 %v1004, %v1004
  %v1029 = vmul.f32 %v1005, %v1005
  %v1030 = vmul.f32 %v1006, %v1006
  %v1031 = vmul.f32 %v1007, %v1007
  %v1032 = vmul.f32 %v1008, %v1008
  %v1033 = vsel %vm498, %v1009, 0.0
  %1034 = vadd.xlane.f32.xlu0 %v1033
  %v1035 = vpop.xlane.xlu0 %1034
  %v1036 = vsel %vm498, %v1010, 0.0
  %1037 = vadd.xlane.f32.xlu0 %v1036
  %v1038 = vpop.xlane.xlu0 %1037
  %v1039 = vsel %vm498, %v1011, 0.0
  %1040 = vadd.xlane.f32.xlu0 %v1039
  %v1041 = vpop.xlane.xlu0 %1040
  %v1042 = vsel %vm498, %v1012, 0.0
  %1043 = vadd.xlane.f32.xlu0 %v1042
  %v1044 = vpop.xlane.xlu0 %1043
  %v1045 = vsel %vm498, %v1013, 0.0
  %1046 = vadd.xlane.f32.xlu0 %v1045
  %v1047 = vpop.xlane.xlu0 %1046
  %v1048 = vsel %vm498, %v1014, 0.0
  %1049 = vadd.xlane.f32.xlu0 %v1048
  %v1050 = vpop.xlane.xlu0 %1049
  %v1051 = vsel %vm498, %v1015, 0.0
  %1052 = vadd.xlane.f32.xlu0 %v1051
  %v1053 = vpop.xlane.xlu0 %1052
  %v1054 = vsel %vm498, %v1016, 0.0
  %1055 = vadd.xlane.f32.xlu0 %v1054
  %v1056 = vpop.xlane.xlu0 %1055
  %v1057 = vsel %vm498, %v1017, 0.0
  %1058 = vadd.xlane.f32.xlu0 %v1057
  %v1059 = vpop.xlane.xlu0 %1058
  %v1060 = vsel %vm498, %v1018, 0.0
  %1061 = vadd.xlane.f32.xlu0 %v1060
  %v1062 = vpop.xlane.xlu0 %1061
  %v1063 = vsel %vm498, %v1019, 0.0
  %1064 = vadd.xlane.f32.xlu0 %v1063
  %v1065 = vpop.xlane.xlu0 %1064
  %v1066 = vsel %vm498, %v1020, 0.0
  %1067 = vadd.xlane.f32.xlu0 %v1066
  %v1068 = vpop.xlane.xlu0 %1067
  %v1069 = vsel %vm498, %v1021, 0.0
  %1070 = vadd.xlane.f32.xlu0 %v1069
  %v1071 = vpop.xlane.xlu0 %1070
  %v1072 = vsel %vm498, %v1022, 0.0
  %1073 = vadd.xlane.f32.xlu0 %v1072
  %v1074 = vpop.xlane.xlu0 %1073
  %v1075 = vsel %vm498, %v1023, 0.0
  %1076 = vadd.xlane.f32.xlu0 %v1075
  %v1077 = vpop.xlane.xlu0 %1076
  %v1078 = vsel %vm498, %v1024, 0.0
  %1079 = vadd.xlane.f32.xlu0 %v1078
  %v1080 = vpop.xlane.xlu0 %1079
  %v1081 = vsel %vm498, %v1025, 0.0
  %1082 = vadd.xlane.f32.xlu0 %v1081
  %v1083 = vpop.xlane.xlu0 %1082
  %v1084 = vsel %vm498, %v1026, 0.0
  %1085 = vadd.xlane.f32.xlu0 %v1084
  %v1086 = vpop.xlane.xlu0 %1085
  %v1087 = vsel %vm498, %v1027, 0.0
  %1088 = vadd.xlane.f32.xlu0 %v1087
  %v1089 = vpop.xlane.xlu0 %1088
  %v1090 = vsel %vm498, %v1028, 0.0
  %1091 = vadd.xlane.f32.xlu0 %v1090
  %v1092 = vpop.xlane.xlu0 %1091
  %v1093 = vsel %vm498, %v1029, 0.0
  %1094 = vadd.xlane.f32.xlu0 %v1093
  %v1095 = vpop.xlane.xlu0 %1094
  %v1096 = vsel %vm498, %v1030, 0.0
  %1097 = vadd.xlane.f32.xlu0 %v1096
  %v1098 = vpop.xlane.xlu0 %1097
  %v1099 = vsel %vm498, %v1031, 0.0
  %1100 = vadd.xlane.f32.xlu0 %v1099
  %v1101 = vpop.xlane.xlu0 %1100
  %v1102 = vsel %vm498, %v1032, 0.0
  %1103 = vadd.xlane.f32.xlu0 %v1102
  %v1104 = vpop.xlane.xlu0 %1103
  %v1105 = vmul.f32 %v1035, %v571
  %v1106 = vmul.f32 %v1038, %v571
  %v1107 = vmul.f32 %v1041, %v571
  %v1108 = vmul.f32 %v1044, %v571
  %v1109 = vmul.f32 %v1047, %v571
  %v1110 = vmul.f32 %v1050, %v571
  %v1111 = vmul.f32 %v1053, %v571
  %v1112 = vmul.f32 %v1056, %v571
  %v1113 = vmul.f32 %v1059, %v571
  %v1114 = vmul.f32 %v1062, %v571
  %v1115 = vmul.f32 %v1065, %v571
  %v1116 = vmul.f32 %v1068, %v571
  %v1117 = vmul.f32 %v1071, %v571
  %v1118 = vmul.f32 %v1074, %v571
  %v1119 = vmul.f32 %v1077, %v571
  %v1120 = vmul.f32 %v1080, %v571
  %v1121 = vmul.f32 %v1083, %v571
  %v1122 = vmul.f32 %v1086, %v571
  %v1123 = vmul.f32 %v1089, %v571
  %v1124 = vmul.f32 %v1092, %v571
  %v1125 = vmul.f32 %v1095, %v571
  %v1126 = vmul.f32 %v1098, %v571
  %v1127 = vmul.f32 %v1101, %v571
  %v1128 = vmul.f32 %v1104, %v571
  %v1129 = vadd.f32 %v1105, 1e-05
  %v1130 = vadd.f32 %v1106, 1e-05
  %v1131 = vadd.f32 %v1107, 1e-05
  %v1132 = vadd.f32 %v1108, 1e-05
  %v1133 = vadd.f32 %v1109, 1e-05
  %v1134 = vadd.f32 %v1110, 1e-05
  %v1135 = vadd.f32 %v1111, 1e-05
  %v1136 = vadd.f32 %v1112, 1e-05
  %v1137 = vadd.f32 %v1113, 1e-05
  %v1138 = vadd.f32 %v1114, 1e-05
  %v1139 = vadd.f32 %v1115, 1e-05
  %v1140 = vadd.f32 %v1116, 1e-05
  %v1141 = vadd.f32 %v1117, 1e-05
  %v1142 = vadd.f32 %v1118, 1e-05
  %v1143 = vadd.f32 %v1119, 1e-05
  %v1144 = vadd.f32 %v1120, 1e-05
  %v1145 = vadd.f32 %v1121, 1e-05
  %v1146 = vadd.f32 %v1122, 1e-05
  %v1147 = vadd.f32 %v1123, 1e-05
  %v1148 = vadd.f32 %v1124, 1e-05
  %v1149 = vadd.f32 %v1125, 1e-05
  %v1150 = vadd.f32 %v1126, 1e-05
  %v1151 = vadd.f32 %v1127, 1e-05
  %v1152 = vadd.f32 %v1128, 1e-05
  %v1153 = vrsqrt.pop %v1129
  %v1154 = vrsqrt.pop %v1130
  %v1155 = vrsqrt.pop %v1131
  %v1156 = vrsqrt.pop %v1132
  %v1157 = vrsqrt.pop %v1133
  %v1158 = vrsqrt.pop %v1134
  %v1159 = vrsqrt.pop %v1135
  %v1160 = vrsqrt.pop %v1136
  %v1161 = vrsqrt.pop %v1137
  %v1162 = vrsqrt.pop %v1138
  %v1163 = vrsqrt.pop %v1139
  %v1164 = vrsqrt.pop %v1140
  %v1165 = vrsqrt.pop %v1141
  %v1166 = vrsqrt.pop %v1142
  %v1167 = vrsqrt.pop %v1143
  %v1168 = vrsqrt.pop %v1144
  %v1169 = vrsqrt.pop %v1145
  %v1170 = vrsqrt.pop %v1146
  %v1171 = vrsqrt.pop %v1147
  %v1172 = vrsqrt.pop %v1148
  %v1173 = vrsqrt.pop %v1149
  %v1174 = vrsqrt.pop %v1150
  %v1175 = vrsqrt.pop %v1151
  %v1176 = vrsqrt.pop %v1152
  %v1177 = vmul.f32 %v985, %v1153
  %v1178 = vmul.f32 %v986, %v1154
  %v1179 = vmul.f32 %v987, %v1155
  %v1180 = vmul.f32 %v988, %v1156
  %v1181 = vmul.f32 %v989, %v1157
  %v1182 = vmul.f32 %v990, %v1158
  %v1183 = vmul.f32 %v991, %v1159
  %v1184 = vmul.f32 %v992, %v1160
  %v1185 = vmul.f32 %v993, %v1161
  %v1186 = vmul.f32 %v994, %v1162
  %v1187 = vmul.f32 %v995, %v1163
  %v1188 = vmul.f32 %v996, %v1164
  %v1189 = vmul.f32 %v997, %v1165
  %v1190 = vmul.f32 %v998, %v1166
  %v1191 = vmul.f32 %v999, %v1167
  %v1192 = vmul.f32 %v1000, %v1168
  %v1193 = vmul.f32 %v1001, %v1169
  %v1194 = vmul.f32 %v1002, %v1170
  %v1195 = vmul.f32 %v1003, %v1171
  %v1196 = vmul.f32 %v1004, %v1172
  %v1197 = vmul.f32 %v1005, %v1173
  %v1198 = vmul.f32 %v1006, %v1174
  %v1199 = vmul.f32 %v1007, %v1175
  %v1200 = vmul.f32 %v1008, %v1176
  %v1202 = vlaneseq
  %v1203 = vshrl.u32 %v1202, 7
  %v1204 = vsub.s32 0, %v1203
  %v1205 = vrot.slane %v887, %v1204
  %v1207 = vmul.f32 %v1177, %v1205
  %v1208 = vmul.f32 %v1178, %v1205
  %v1209 = vmul.f32 %v1179, %v1205
  %v1210 = vmul.f32 %v1180, %v1205
  %v1211 = vmul.f32 %v1181, %v1205
  %v1212 = vmul.f32 %v1182, %v1205
  %v1213 = vmul.f32 %v1183, %v1205
  %v1214 = vmul.f32 %v1184, %v1205
  %v1215 = vmul.f32 %v1185, %v1205
  %v1216 = vmul.f32 %v1186, %v1205
  %v1217 = vmul.f32 %v1187, %v1205
  %v1218 = vmul.f32 %v1188, %v1205
  %v1219 = vmul.f32 %v1189, %v1205
  %v1220 = vmul.f32 %v1190, %v1205
  %v1221 = vmul.f32 %v1191, %v1205
  %v1222 = vmul.f32 %v1192, %v1205
  %v1223 = vmul.f32 %v1193, %v1205
  %v1224 = vmul.f32 %v1194, %v1205
  %v1225 = vmul.f32 %v1195, %v1205
  %v1226 = vmul.f32 %v1196, %v1205
  %v1227 = vmul.f32 %v1197, %v1205
  %v1228 = vmul.f32 %v1198, %v1205
  %v1229 = vmul.f32 %v1199, %v1205
  %v1230 = vmul.f32 %v1200, %v1205
  %v1232 = vlaneseq
  %v1233 = vshrl.u32 %v1232, 7
  %v1234 = vsub.s32 0, %v1233
  %v1235 = vrot.slane %v888, %v1234
  %v1237 = vadd.f32 %v1207, %v1235
  %v1238 = vadd.f32 %v1208, %v1235
  %v1239 = vadd.f32 %v1209, %v1235
  %v1240 = vadd.f32 %v1210, %v1235
  %v1241 = vadd.f32 %v1211, %v1235
  %v1242 = vadd.f32 %v1212, %v1235
  %v1243 = vadd.f32 %v1213, %v1235
  %v1244 = vadd.f32 %v1214, %v1235
  %v1245 = vadd.f32 %v1215, %v1235
  %v1246 = vadd.f32 %v1216, %v1235
  %v1247 = vadd.f32 %v1217, %v1235
  %v1248 = vadd.f32 %v1218, %v1235
  %v1249 = vadd.f32 %v1219, %v1235
  %v1250 = vadd.f32 %v1220, %v1235
  %v1251 = vadd.f32 %v1221, %v1235
  %v1252 = vadd.f32 %v1222, %v1235
  %v1253 = vadd.f32 %v1223, %v1235
  %v1254 = vadd.f32 %v1224, %v1235
  %v1255 = vadd.f32 %v1225, %v1235
  %v1256 = vadd.f32 %v1226, %v1235
  %v1257 = vadd.f32 %v1227, %v1235
  %v1258 = vadd.f32 %v1228, %v1235
  %v1259 = vadd.f32 %v1229, %v1235
  %v1260 = vadd.f32 %v1230, %v1235
  %v1261 = vpack.c.bf16 %v1238, %v1237
  %v1262 = vpack.c.bf16 %v1240, %v1239
  %v1263 = vpack.c.bf16 %v1242, %v1241
  %v1264 = vpack.c.bf16 %v1244, %v1243
  %v1265 = vpack.c.bf16 %v1246, %v1245
  %v1266 = vpack.c.bf16 %v1248, %v1247
  %v1267 = vpack.c.bf16 %v1250, %v1249
  %v1268 = vpack.c.bf16 %v1252, %v1251
  %v1269 = vpack.c.bf16 %v1254, %v1253
  %v1270 = vpack.c.bf16 %v1256, %v1255
  %v1271 = vpack.c.bf16 %v1258, %v1257
  %v1272 = vpack.c.bf16 %v1260, %v1259
  %v1273 = vld [vmem:[%s5] sm:$0xf]
  %v1274 = vld [vmem:[%s5 + $0x4] sm:$0xf]
  %v1275 = vld [vmem:[%s5 + $0x8] sm:$0xf]
  %v1276 = vld [vmem:[%s5 + $0xc] sm:$0xf]
  %v1277 = vld [vmem:[%s8] sm:$0x1]
  %v1279 = vlaneseq
  %v1280 = vshrl.u32 %v1279, 7
  %v1281 = vsub.s32 0, %v1280
  %v1282 = vrot.slane %v1277, %v1281
  %v1288 = vunpack.c.l.b16 %v1273
  %v1289 = vunpack.c.l.b16 %v1274
  %v1290 = vunpack.c.l.b16 %v1275
  %v1291 = vunpack.c.l.b16 %v1276
  %v1292 = vpack.c.b16 %v1289, %v1288
  %v1293 = vpack.c.b16 %v1291, %v1290
  %v1297 = vsel %vm498, %v1261, 0
  %v1300 = vsel %vm498, %v1262, 0
  %v1303 = vsel %vm498, %v1263, 0
  %v1306 = vsel %vm498, %v1264, 0
  %v1309 = vsel %vm498, %v1265, 0
  %v1312 = vsel %vm498, %v1266, 0
  %v1315 = vsel %vm498, %v1267, 0
  %v1318 = vsel %vm498, %v1268, 0
  %v1321 = vsel %vm498, %v1269, 0
  %v1324 = vsel %vm498, %v1270, 0
  %v1327 = vsel %vm498, %v1271, 0
  %v1330 = vsel %vm498, %v1272, 0
  %1332 = vmatprep.subr.bf16.mxu0 0
  %1333 = vmatpush1.bf16.msra.mxu0 0
  %1334 = vmatprep.subr.bf16.mxu0 0
  %1335 = vmatpush1.bf16.msra.mxu0 0
  %1336 = vmatprep.subr.bf16.mxu0 0
  %1337 = vmatpush1.bf16.msra.mxu0 0
  %1338 = vmatprep.subr.bf16.mxu0 0
  %1339 = vmatpush1.bf16.msra.mxu0 0
  %1340 = vmatprep.subr.bf16.mxu0 0
  %1341 = vmatpush1.bf16.msra.mxu0 0
  %1342 = vmatprep.subr.bf16.mxu0 0
  %1343 = vmatpush1.bf16.msra.mxu0 0
  %1344 = vmatprep.subr.bf16.mxu0 0
  %1345 = vmatpush1.bf16.msra.mxu0 %v1293
  %1346 = vmatprep.subr.bf16.mxu0 0
  %1347 = vmatpush1.bf16.msra.mxu0 %v1292
  %1348 = vmatprep.subr.bf16.mxu0 0
  %1349 = vmatpush2.bf16.msra.mxu0 0
  %1350 = vmatprep.subr.bf16.mxu0 0
  %1351 = vmatpush2.bf16.msra.mxu0 0
  %1352 = vmatprep.subr.bf16.mxu0 0
  %1353 = vmatpush2.bf16.msra.mxu0 0
  %1354 = vmatprep.subr.bf16.mxu0 0
  %1355 = vmatpush2.bf16.msra.mxu0 0
  %1356 = vmatprep.subr.bf16.mxu0 0
  %1357 = vmatpush2.bf16.msra.mxu0 0
  %1358 = vmatprep.subr.bf16.mxu0 0
  %1359 = vmatpush2.bf16.msra.mxu0 0
  %1360 = vmatprep.subr.bf16.mxu0 0
  %1361 = vmatpush2.bf16.msra.mxu0 0
  %1362 = vmatprep.subr.bf16.mxu0 0
  %1363 = vmatpush2.bf16.msra.mxu0 0
  %1364 = vmatprep.mubr.bf16.mxu0 0
  %1365 = vmatmul.mubr.bf16.gmra.mxu0 %v1297
  %v1366 = vpop.f32.mrf.mxu0
  %v1367 = vadd.f32 %v1282, %v1366
  %v1368 = vpop.f32.mrf.mxu0
  %v1369 = vpop.f32.mrf.mxu0
  %v1370 = vadd.f32 %v1282, %v1369
  %v1371 = vpop.f32.mrf.mxu0
  %1372 = vmatprep.mubr.bf16.mxu0 0
  %1373 = vmatmul.mubr.bf16.gmra.mxu0 %v1300
  %v1374 = vpop.f32.mrf.mxu0
  %v1375 = vadd.f32 %v1282, %v1374
  %v1376 = vpop.f32.mrf.mxu0
  %v1377 = vpop.f32.mrf.mxu0
  %v1378 = vadd.f32 %v1282, %v1377
  %v1379 = vpop.f32.mrf.mxu0
  %1380 = vmatprep.mubr.bf16.mxu0 0
  %1381 = vmatmul.mubr.bf16.gmra.mxu0 %v1303
  %v1382 = vpop.f32.mrf.mxu0
  %v1383 = vadd.f32 %v1282, %v1382
  %v1384 = vpop.f32.mrf.mxu0
  %v1385 = vpop.f32.mrf.mxu0
  %v1386 = vadd.f32 %v1282, %v1385
  %v1387 = vpop.f32.mrf.mxu0
  %1388 = vmatprep.mubr.bf16.mxu0 0
  %1389 = vmatmul.mubr.bf16.gmra.mxu0 %v1306
  %v1390 = vpop.f32.mrf.mxu0
  %v1391 = vadd.f32 %v1282, %v1390
  %v1392 = vpop.f32.mrf.mxu0
  %v1393 = vpop.f32.mrf.mxu0
  %v1394 = vadd.f32 %v1282, %v1393
  %v1395 = vpop.f32.mrf.mxu0
  %1396 = vmatprep.mubr.bf16.mxu0 0
  %1397 = vmatmul.mubr.bf16.gmra.mxu0 %v1309
  %v1398 = vpop.f32.mrf.mxu0
  %v1399 = vadd.f32 %v1282, %v1398
  %v1400 = vpop.f32.mrf.mxu0
  %v1401 = vpop.f32.mrf.mxu0
  %v1402 = vadd.f32 %v1282, %v1401
  %v1403 = vpop.f32.mrf.mxu0
  %1404 = vmatprep.mubr.bf16.mxu0 0
  %1405 = vmatmul.mubr.bf16.gmra.mxu0 %v1312
  %v1406 = vpop.f32.mrf.mxu0
  %v1407 = vadd.f32 %v1282, %v1406
  %v1408 = vpop.f32.mrf.mxu0
  %v1409 = vpop.f32.mrf.mxu0
  %v1410 = vadd.f32 %v1282, %v1409
  %v1411 = vpop.f32.mrf.mxu0
  %1412 = vmatprep.mubr.bf16.mxu0 0
  %1413 = vmatmul.mubr.bf16.gmra.mxu0 %v1315
  %v1414 = vpop.f32.mrf.mxu0
  %v1415 = vadd.f32 %v1282, %v1414
  %v1416 = vpop.f32.mrf.mxu0
  %v1417 = vpop.f32.mrf.mxu0
  %v1418 = vadd.f32 %v1282, %v1417
  %v1419 = vpop.f32.mrf.mxu0
  %1420 = vmatprep.mubr.bf16.mxu0 0
  %1421 = vmatmul.mubr.bf16.gmra.mxu0 %v1318
  %v1422 = vpop.f32.mrf.mxu0
  %v1423 = vadd.f32 %v1282, %v1422
  %v1424 = vpop.f32.mrf.mxu0
  %v1425 = vpop.f32.mrf.mxu0
  %v1426 = vadd.f32 %v1282, %v1425
  %v1427 = vpop.f32.mrf.mxu0
  %1428 = vmatprep.mubr.bf16.mxu0 0
  %1429 = vmatmul.mubr.bf16.gmra.mxu0 %v1321
  %v1430 = vpop.f32.mrf.mxu0
  %v1431 = vadd.f32 %v1282, %v1430
  %v1432 = vpop.f32.mrf.mxu0
  %v1433 = vpop.f32.mrf.mxu0
  %v1434 = vadd.f32 %v1282, %v1433
  %v1435 = vpop.f32.mrf.mxu0
  %1436 = vmatprep.mubr.bf16.mxu0 0
  %1437 = vmatmul.mubr.bf16.gmra.mxu0 %v1324
  %v1438 = vpop.f32.mrf.mxu0
  %v1439 = vadd.f32 %v1282, %v1438
  %v1440 = vpop.f32.mrf.mxu0
  %v1441 = vpop.f32.mrf.mxu0
  %v1442 = vadd.f32 %v1282, %v1441
  %v1443 = vpop.f32.mrf.mxu0
  %1444 = vmatprep.mubr.bf16.mxu0 0
  %1445 = vmatmul.mubr.bf16.gmra.mxu0 %v1327
  %v1446 = vpop.f32.mrf.mxu0
  %v1447 = vadd.f32 %v1282, %v1446
  %v1448 = vpop.f32.mrf.mxu0
  %v1449 = vpop.f32.mrf.mxu0
  %v1450 = vadd.f32 %v1282, %v1449
  %v1451 = vpop.f32.mrf.mxu0
  %1452 = vmatprep.mubr.bf16.mxu0 0
  %1453 = vmatmul.mubr.bf16.gmra.mxu0 %v1330
  %v1454 = vpop.f32.mrf.mxu0
  %v1455 = vadd.f32 %v1282, %v1454
  %v1456 = vpop.f32.mrf.mxu0
  %v1457 = vpop.f32.mrf.mxu0
  %v1458 = vadd.f32 %v1282, %v1457
  %v1459 = vpop.f32.mrf.mxu0
  %1460 = vdwg.mxu0
  %v1461 = vld [vmem:[%s6] sm:$0xf]
  %v1462 = vld [vmem:[%s6 + $0x4] sm:$0xf]
  %v1463 = vld [vmem:[%s6 + $0x8] sm:$0xf]
  %v1464 = vld [vmem:[%s6 + $0xc] sm:$0xf]
  %v1465 = vld [vmem:[%s9] sm:$0x1]
  %v1467 = vlaneseq
  %v1468 = vshrl.u32 %v1467, 7
  %v1469 = vsub.s32 0, %v1468
  %v1470 = vrot.slane %v1465, %v1469
  %v1476 = vunpack.c.l.b16 %v1461
  %v1477 = vunpack.c.l.b16 %v1462
  %v1478 = vunpack.c.l.b16 %v1463
  %v1479 = vunpack.c.l.b16 %v1464
  %v1480 = vpack.c.b16 %v1477, %v1476
  %v1481 = vpack.c.b16 %v1479, %v1478
  %1484 = vmatprep.subr.bf16.mxu0 0
  %1485 = vmatpush1.bf16.msra.mxu0 0
  %1486 = vmatprep.subr.bf16.mxu0 0
  %1487 = vmatpush1.bf16.msra.mxu0 0
  %1488 = vmatprep.subr.bf16.mxu0 0
  %1489 = vmatpush1.bf16.msra.mxu0 0
  %1490 = vmatprep.subr.bf16.mxu0 0
  %1491 = vmatpush1.bf16.msra.mxu0 0
  %1492 = vmatprep.subr.bf16.mxu0 0
  %1493 = vmatpush1.bf16.msra.mxu0 0
  %1494 = vmatprep.subr.bf16.mxu0 0
  %1495 = vmatpush1.bf16.msra.mxu0 0
  %1496 = vmatprep.subr.bf16.mxu0 0
  %1497 = vmatpush1.bf16.msra.mxu0 %v1481
  %1498 = vmatprep.subr.bf16.mxu0 0
  %1499 = vmatpush1.bf16.msra.mxu0 %v1480
  %1500 = vmatprep.subr.bf16.mxu0 0
  %1501 = vmatpush2.bf16.msra.mxu0 0
  %1502 = vmatprep.subr.bf16.mxu0 0
  %1503 = vmatpush2.bf16.msra.mxu0 0
  %1504 = vmatprep.subr.bf16.mxu0 0
  %1505 = vmatpush2.bf16.msra.mxu0 0
  %1506 = vmatprep.subr.bf16.mxu0 0
  %1507 = vmatpush2.bf16.msra.mxu0 0
  %1508 = vmatprep.subr.bf16.mxu0 0
  %1509 = vmatpush2.bf16.msra.mxu0 0
  %1510 = vmatprep.subr.bf16.mxu0 0
  %1511 = vmatpush2.bf16.msra.mxu0 0
  %1512 = vmatprep.subr.bf16.mxu0 0
  %1513 = vmatpush2.bf16.msra.mxu0 0
  %1514 = vmatprep.subr.bf16.mxu0 0
  %1515 = vmatpush2.bf16.msra.mxu0 0
  %1516 = vmatprep.mubr.bf16.mxu0 0
  %1517 = vmatmul.mubr.bf16.gmra.mxu0 %v1297
  %v1518 = vpop.f32.mrf.mxu0
  %v1519 = vadd.f32 %v1470, %v1518
  %v1520 = vpop.f32.mrf.mxu0
  %v1521 = vpop.f32.mrf.mxu0
  %v1522 = vadd.f32 %v1470, %v1521
  %v1523 = vpop.f32.mrf.mxu0
  %1524 = vmatprep.mubr.bf16.mxu0 0
  %1525 = vmatmul.mubr.bf16.gmra.mxu0 %v1300
  %v1526 = vpop.f32.mrf.mxu0
  %v1527 = vadd.f32 %v1470, %v1526
  %v1528 = vpop.f32.mrf.mxu0
  %v1529 = vpop.f32.mrf.mxu0
  %v1530 = vadd.f32 %v1470, %v1529
  %v1531 = vpop.f32.mrf.mxu0
  %1532 = vmatprep.mubr.bf16.mxu0 0
  %1533 = vmatmul.mubr.bf16.gmra.mxu0 %v1303
  %v1534 = vpop.f32.mrf.mxu0
  %v1535 = vadd.f32 %v1470, %v1534
  %v1536 = vpop.f32.mrf.mxu0
  %v1537 = vpop.f32.mrf.mxu0
  %v1538 = vadd.f32 %v1470, %v1537
  %v1539 = vpop.f32.mrf.mxu0
  %1540 = vmatprep.mubr.bf16.mxu0 0
  %1541 = vmatmul.mubr.bf16.gmra.mxu0 %v1306
  %v1542 = vpop.f32.mrf.mxu0
  %v1543 = vadd.f32 %v1470, %v1542
  %v1544 = vpop.f32.mrf.mxu0
  %v1545 = vpop.f32.mrf.mxu0
  %v1546 = vadd.f32 %v1470, %v1545
  %v1547 = vpop.f32.mrf.mxu0
  %1548 = vmatprep.mubr.bf16.mxu0 0
  %1549 = vmatmul.mubr.bf16.gmra.mxu0 %v1309
  %v1550 = vpop.f32.mrf.mxu0
  %v1551 = vadd.f32 %v1470, %v1550
  %v1552 = vpop.f32.mrf.mxu0
  %v1553 = vpop.f32.mrf.mxu0
  %v1554 = vadd.f32 %v1470, %v1553
  %v1555 = vpop.f32.mrf.mxu0
  %1556 = vmatprep.mubr.bf16.mxu0 0
  %1557 = vmatmul.mubr.bf16.gmra.mxu0 %v1312
  %v1558 = vpop.f32.mrf.mxu0
  %v1559 = vadd.f32 %v1470, %v1558
  %v1560 = vpop.f32.mrf.mxu0
  %v1561 = vpop.f32.mrf.mxu0
  %v1562 = vadd.f32 %v1470, %v1561
  %v1563 = vpop.f32.mrf.mxu0
  %1564 = vmatprep.mubr.bf16.mxu0 0
  %1565 = vmatmul.mubr.bf16.gmra.mxu0 %v1315
  %v1566 = vpop.f32.mrf.mxu0
  %v1567 = vadd.f32 %v1470, %v1566
  %v1568 = vpop.f32.mrf.mxu0
  %v1569 = vpop.f32.mrf.mxu0
  %v1570 = vadd.f32 %v1470, %v1569
  %v1571 = vpop.f32.mrf.mxu0
  %1572 = vmatprep.mubr.bf16.mxu0 0
  %1573 = vmatmul.mubr.bf16.gmra.mxu0 %v1318
  %v1574 = vpop.f32.mrf.mxu0
  %v1575 = vadd.f32 %v1470, %v1574
  %v1576 = vpop.f32.mrf.mxu0
  %v1577 = vpop.f32.mrf.mxu0
  %v1578 = vadd.f32 %v1470, %v1577
  %v1579 = vpop.f32.mrf.mxu0
  %1580 = vmatprep.mubr.bf16.mxu0 0
  %1581 = vmatmul.mubr.bf16.gmra.mxu0 %v1321
  %v1582 = vpop.f32.mrf.mxu0
  %v1583 = vadd.f32 %v1470, %v1582
  %v1584 = vpop.f32.mrf.mxu0
  %v1585 = vpop.f32.mrf.mxu0
  %v1586 = vadd.f32 %v1470, %v1585
  %v1587 = vpop.f32.mrf.mxu0
  %1588 = vmatprep.mubr.bf16.mxu0 0
  %1589 = vmatmul.mubr.bf16.gmra.mxu0 %v1324
  %v1590 = vpop.f32.mrf.mxu0
  %v1591 = vadd.f32 %v1470, %v1590
  %v1592 = vpop.f32.mrf.mxu0
  %v1593 = vpop.f32.mrf.mxu0
  %v1594 = vadd.f32 %v1470, %v1593
  %v1595 = vpop.f32.mrf.mxu0
  %1596 = vmatprep.mubr.bf16.mxu0 0
  %1597 = vmatmul.mubr.bf16.gmra.mxu0 %v1327
  %v1598 = vpop.f32.mrf.mxu0
  %v1599 = vadd.f32 %v1470, %v1598
  %v1600 = vpop.f32.mrf.mxu0
  %v1601 = vpop.f32.mrf.mxu0
  %v1602 = vadd.f32 %v1470, %v1601
  %v1603 = vpop.f32.mrf.mxu0
  %1604 = vmatprep.mubr.bf16.mxu0 0
  %1605 = vmatmul.mubr.bf16.gmra.mxu0 %v1330
  %v1606 = vpop.f32.mrf.mxu0
  %v1607 = vadd.f32 %v1470, %v1606
  %v1608 = vpop.f32.mrf.mxu0
  %v1609 = vpop.f32.mrf.mxu0
  %v1610 = vadd.f32 %v1470, %v1609
  %v1611 = vpop.f32.mrf.mxu0
  %1612 = vdwg.mxu0
  %v1613 = vld [vmem:[%s7] sm:$0xf]
  %v1614 = vld [vmem:[%s7 + $0x4] sm:$0xf]
  %v1615 = vld [vmem:[%s7 + $0x8] sm:$0xf]
  %v1616 = vld [vmem:[%s7 + $0xc] sm:$0xf]
  %v1617 = vld [vmem:[%s10] sm:$0x1]
  %v1619 = vlaneseq
  %v1620 = vshrl.u32 %v1619, 7
  %v1621 = vsub.s32 0, %v1620
  %v1622 = vrot.slane %v1617, %v1621
  %v1628 = vunpack.c.l.b16 %v1613
  %v1629 = vunpack.c.l.b16 %v1614
  %v1630 = vunpack.c.l.b16 %v1615
  %v1631 = vunpack.c.l.b16 %v1616
  %v1632 = vpack.c.b16 %v1629, %v1628
  %v1633 = vpack.c.b16 %v1631, %v1630
  %1636 = vmatprep.subr.bf16.mxu0 0
  %1637 = vmatpush1.bf16.msra.mxu0 0
  %1638 = vmatprep.subr.bf16.mxu0 0
  %1639 = vmatpush1.bf16.msra.mxu0 0
  %1640 = vmatprep.subr.bf16.mxu0 0
  %1641 = vmatpush1.bf16.msra.mxu0 0
  %1642 = vmatprep.subr.bf16.mxu0 0
  %1643 = vmatpush1.bf16.msra.mxu0 0
  %1644 = vmatprep.subr.bf16.mxu0 0
  %1645 = vmatpush1.bf16.msra.mxu0 0
  %1646 = vmatprep.subr.bf16.mxu0 0
  %1647 = vmatpush1.bf16.msra.mxu0 0
  %1648 = vmatprep.subr.bf16.mxu0 0
  %1649 = vmatpush1.bf16.msra.mxu0 %v1633
  %1650 = vmatprep.subr.bf16.mxu0 0
  %1651 = vmatpush1.bf16.msra.mxu0 %v1632
  %1652 = vmatprep.subr.bf16.mxu0 0
  %1653 = vmatpush2.bf16.msra.mxu0 0
  %1654 = vmatprep.subr.bf16.mxu0 0
  %1655 = vmatpush2.bf16.msra.mxu0 0
  %1656 = vmatprep.subr.bf16.mxu0 0
  %1657 = vmatpush2.bf16.msra.mxu0 0
  %1658 = vmatprep.subr.bf16.mxu0 0
  %1659 = vmatpush2.bf16.msra.mxu0 0
  %1660 = vmatprep.subr.bf16.mxu0 0
  %1661 = vmatpush2.bf16.msra.mxu0 0
  %1662 = vmatprep.subr.bf16.mxu0 0
  %1663 = vmatpush2.bf16.msra.mxu0 0
  %1664 = vmatprep.subr.bf16.mxu0 0
  %1665 = vmatpush2.bf16.msra.mxu0 0
  %1666 = vmatprep.subr.bf16.mxu0 0
  %1667 = vmatpush2.bf16.msra.mxu0 0
  %1668 = vmatprep.mubr.bf16.mxu0 0
  %1669 = vmatmul.mubr.bf16.gmra.mxu0 %v1297
  %v1670 = vpop.f32.mrf.mxu0
  %v1671 = vadd.f32 %v1622, %v1670
  %v1672 = vpop.f32.mrf.mxu0
  %v1673 = vpop.f32.mrf.mxu0
  %v1674 = vadd.f32 %v1622, %v1673
  %v1675 = vpop.f32.mrf.mxu0
  %1676 = vmatprep.mubr.bf16.mxu0 0
  %1677 = vmatmul.mubr.bf16.gmra.mxu0 %v1300
  %v1678 = vpop.f32.mrf.mxu0
  %v1679 = vadd.f32 %v1622, %v1678
  %v1680 = vpop.f32.mrf.mxu0
  %v1681 = vpop.f32.mrf.mxu0
  %v1682 = vadd.f32 %v1622, %v1681
  %v1683 = vpop.f32.mrf.mxu0
  %1684 = vmatprep.mubr.bf16.mxu0 0
  %1685 = vmatmul.mubr.bf16.gmra.mxu0 %v1303
  %v1686 = vpop.f32.mrf.mxu0
  %v1687 = vadd.f32 %v1622, %v1686
  %v1688 = vpop.f32.mrf.mxu0
  %v1689 = vpop.f32.mrf.mxu0
  %v1690 = vadd.f32 %v1622, %v1689
  %v1691 = vpop.f32.mrf.mxu0
  %1692 = vmatprep.mubr.bf16.mxu0 0
  %1693 = vmatmul.mubr.bf16.gmra.mxu0 %v1306
  %v1694 = vpop.f32.mrf.mxu0
  %v1695 = vadd.f32 %v1622, %v1694
  %v1696 = vpop.f32.mrf.mxu0
  %v1697 = vpop.f32.mrf.mxu0
  %v1698 = vadd.f32 %v1622, %v1697
  %v1699 = vpop.f32.mrf.mxu0
  %1700 = vmatprep.mubr.bf16.mxu0 0
  %1701 = vmatmul.mubr.bf16.gmra.mxu0 %v1309
  %v1702 = vpop.f32.mrf.mxu0
  %v1703 = vadd.f32 %v1622, %v1702
  %v1704 = vpop.f32.mrf.mxu0
  %v1705 = vpop.f32.mrf.mxu0
  %v1706 = vadd.f32 %v1622, %v1705
  %v1707 = vpop.f32.mrf.mxu0
  %1708 = vmatprep.mubr.bf16.mxu0 0
  %1709 = vmatmul.mubr.bf16.gmra.mxu0 %v1312
  %v1710 = vpop.f32.mrf.mxu0
  %v1711 = vadd.f32 %v1622, %v1710
  %v1712 = vpop.f32.mrf.mxu0
  %v1713 = vpop.f32.mrf.mxu0
  %v1714 = vadd.f32 %v1622, %v1713
  %v1715 = vpop.f32.mrf.mxu0
  %1716 = vmatprep.mubr.bf16.mxu0 0
  %1717 = vmatmul.mubr.bf16.gmra.mxu0 %v1315
  %v1718 = vpop.f32.mrf.mxu0
  %v1719 = vadd.f32 %v1622, %v1718
  %v1720 = vpop.f32.mrf.mxu0
  %v1721 = vpop.f32.mrf.mxu0
  %v1722 = vadd.f32 %v1622, %v1721
  %v1723 = vpop.f32.mrf.mxu0
  %1724 = vmatprep.mubr.bf16.mxu0 0
  %1725 = vmatmul.mubr.bf16.gmra.mxu0 %v1318
  %v1726 = vpop.f32.mrf.mxu0
  %v1727 = vadd.f32 %v1622, %v1726
  %v1728 = vpop.f32.mrf.mxu0
  %v1729 = vpop.f32.mrf.mxu0
  %v1730 = vadd.f32 %v1622, %v1729
  %v1731 = vpop.f32.mrf.mxu0
  %1732 = vmatprep.mubr.bf16.mxu0 0
  %1733 = vmatmul.mubr.bf16.gmra.mxu0 %v1321
  %v1734 = vpop.f32.mrf.mxu0
  %v1735 = vadd.f32 %v1622, %v1734
  %v1736 = vpop.f32.mrf.mxu0
  %v1737 = vpop.f32.mrf.mxu0
  %v1738 = vadd.f32 %v1622, %v1737
  %v1739 = vpop.f32.mrf.mxu0
  %1740 = vmatprep.mubr.bf16.mxu0 0
  %1741 = vmatmul.mubr.bf16.gmra.mxu0 %v1324
  %v1742 = vpop.f32.mrf.mxu0
  %v1743 = vadd.f32 %v1622, %v1742
  %v1744 = vpop.f32.mrf.mxu0
  %v1745 = vpop.f32.mrf.mxu0
  %v1746 = vadd.f32 %v1622, %v1745
  %v1747 = vpop.f32.mrf.mxu0
  %1748 = vmatprep.mubr.bf16.mxu0 0
  %1749 = vmatmul.mubr.bf16.gmra.mxu0 %v1327
  %v1750 = vpop.f32.mrf.mxu0
  %v1751 = vadd.f32 %v1622, %v1750
  %v1752 = vpop.f32.mrf.mxu0
  %v1753 = vpop.f32.mrf.mxu0
  %v1754 = vadd.f32 %v1622, %v1753
  %v1755 = vpop.f32.mrf.mxu0
  %1756 = vmatprep.mubr.bf16.mxu0 0
  %1757 = vmatmul.mubr.bf16.gmra.mxu0 %v1330
  %v1758 = vpop.f32.mrf.mxu0
  %v1759 = vadd.f32 %v1622, %v1758
  %v1760 = vpop.f32.mrf.mxu0
  %v1761 = vpop.f32.mrf.mxu0
  %v1762 = vadd.f32 %v1622, %v1761
  %v1763 = vpop.f32.mrf.mxu0
  %1764 = vdwg.mxu0
  %v1765 = vsel %vm877, 1, 0
  %v1766 = vsel %vm880, 1, 0
  %v1767 = vsel %vm883, 1, 0
  %v1768 = vsel %vm886, 1, 0
  %vm1769 = vcmp.eq.s32.totalorder %v1765, 1
  %vm1770 = vcmp.eq.s32.totalorder %v1766, 1
  %vm1771 = vcmp.eq.s32.totalorder %v1767, 1
  %vm1772 = vcmp.eq.s32.totalorder %v1768, 1
  %v1773 = vsel %vm1769, %v1367, 0.0
  %v1774 = vsel %vm1769, %v1370, 0.0
  %v1775 = vsel %vm1769, %v1375, 0.0
  %v1776 = vsel %vm1770, %v1367, 0.0
  %v1777 = vsel %vm1770, %v1370, 0.0
  %v1778 = vsel %vm1770, %v1375, 0.0
  %v1779 = vsel %vm1771, %v1367, 0.0
  %v1780 = vsel %vm1771, %v1370, 0.0
  %v1781 = vsel %vm1771, %v1375, 0.0
  %v1782 = vsel %vm1772, %v1367, 0.0
  %v1783 = vsel %vm1772, %v1370, 0.0
  %v1784 = vsel %vm1772, %v1375, 0.0
  %v1785 = vsel %vm1769, %v1378, 0.0
  %v1786 = vsel %vm1769, %v1383, 0.0
  %v1787 = vsel %vm1769, %v1386, 0.0
  %v1788 = vsel %vm1770, %v1378, 0.0
  %v1789 = vsel %vm1770, %v1383, 0.0
  %v1790 = vsel %vm1770, %v1386, 0.0
  %v1791 = vsel %vm1771, %v1378, 0.0
  %v1792 = vsel %vm1771, %v1383, 0.0
  %v1793 = vsel %vm1771, %v1386, 0.0
  %v1794 = vsel %vm1772, %v1378, 0.0
  %v1795 = vsel %vm1772, %v1383, 0.0
  %v1796 = vsel %vm1772, %v1386, 0.0
  %v1797 = vsel %vm1769, %v1391, 0.0
  %v1798 = vsel %vm1769, %v1394, 0.0
  %v1799 = vsel %vm1769, %v1399, 0.0
  %v1800 = vsel %vm1770, %v1391, 0.0
  %v1801 = vsel %vm1770, %v1394, 0.0
  %v1802 = vsel %vm1770, %v1399, 0.0
  %v1803 = vsel %vm1771, %v1391, 0.0
  %v1804 = vsel %vm1771, %v1394, 0.0
  %v1805 = vsel %vm1771, %v1399, 0.0
  %v1806 = vsel %vm1772, %v1391, 0.0
  %v1807 = vsel %vm1772, %v1394, 0.0
  %v1808 = vsel %vm1772, %v1399, 0.0
  %v1809 = vsel %vm1769, %v1402, 0.0
  %v1810 = vsel %vm1769, %v1407, 0.0
  %v1811 = vsel %vm1769, %v1410, 0.0
  %v1812 = vsel %vm1770, %v1402, 0.0
  %v1813 = vsel %vm1770, %v1407, 0.0
  %v1814 = vsel %vm1770, %v1410, 0.0
  %v1815 = vsel %vm1771, %v1402, 0.0
  %v1816 = vsel %vm1771, %v1407, 0.0
  %v1817 = vsel %vm1771, %v1410, 0.0
  %v1818 = vsel %vm1772, %v1402, 0.0
  %v1819 = vsel %vm1772, %v1407, 0.0
  %v1820 = vsel %vm1772, %v1410, 0.0
  %v1821 = vsel %vm1769, %v1415, 0.0
  %v1822 = vsel %vm1769, %v1418, 0.0
  %v1823 = vsel %vm1769, %v1423, 0.0
  %v1824 = vsel %vm1770, %v1415, 0.0
  %v1825 = vsel %vm1770, %v1418, 0.0
  %v1826 = vsel %vm1770, %v1423, 0.0
  %v1827 = vsel %vm1771, %v1415, 0.0
  %v1828 = vsel %vm1771, %v1418, 0.0
  %v1829 = vsel %vm1771, %v1423, 0.0
  %v1830 = vsel %vm1772, %v1415, 0.0
  %v1831 = vsel %vm1772, %v1418, 0.0
  %v1832 = vsel %vm1772, %v1423, 0.0
  %v1833 = vsel %vm1769, %v1426, 0.0
  %v1834 = vsel %vm1769, %v1431, 0.0
  %v1835 = vsel %vm1769, %v1434, 0.0
  %v1836 = vsel %vm1770, %v1426, 0.0
  %v1837 = vsel %vm1770, %v1431, 0.0
  %v1838 = vsel %vm1770, %v1434, 0.0
  %v1839 = vsel %vm1771, %v1426, 0.0
  %v1840 = vsel %vm1771, %v1431, 0.0
  %v1841 = vsel %vm1771, %v1434, 0.0
  %v1842 = vsel %vm1772, %v1426, 0.0
  %v1843 = vsel %vm1772, %v1431, 0.0
  %v1844 = vsel %vm1772, %v1434, 0.0
  %v1845 = vsel %vm1769, %v1439, 0.0
  %v1846 = vsel %vm1769, %v1442, 0.0
  %v1847 = vsel %vm1769, %v1447, 0.0
  %v1848 = vsel %vm1770, %v1439, 0.0
  %v1849 = vsel %vm1770, %v1442, 0.0
  %v1850 = vsel %vm1770, %v1447, 0.0
  %v1851 = vsel %vm1771, %v1439, 0.0
  %v1852 = vsel %vm1771, %v1442, 0.0
  %v1853 = vsel %vm1771, %v1447, 0.0
  %v1854 = vsel %vm1772, %v1439, 0.0
  %v1855 = vsel %vm1772, %v1442, 0.0
  %v1856 = vsel %vm1772, %v1447, 0.0
  %v1857 = vsel %vm1769, %v1450, 0.0
  %v1858 = vsel %vm1769, %v1455, 0.0
  %v1859 = vsel %vm1769, %v1458, 0.0
  %v1860 = vsel %vm1770, %v1450, 0.0
  %v1861 = vsel %vm1770, %v1455, 0.0
  %v1862 = vsel %vm1770, %v1458, 0.0
  %v1863 = vsel %vm1771, %v1450, 0.0
  %v1864 = vsel %vm1771, %v1455, 0.0
  %v1865 = vsel %vm1771, %v1458, 0.0
  %v1866 = vsel %vm1772, %v1450, 0.0
  %v1867 = vsel %vm1772, %v1455, 0.0
  %v1868 = vsel %vm1772, %v1458, 0.0
  %v1869 = vpack.c.bf16 %v1774, %v1773
  %v1870 = vpack.c.bf16 %v1776, %v1775
  %v1871 = vpack.c.bf16 %v1778, %v1777
  %v1872 = vpack.c.bf16 %v1780, %v1779
  %v1873 = vpack.c.bf16 %v1782, %v1781
  %v1874 = vpack.c.bf16 %v1784, %v1783
  %v1875 = vpack.c.bf16 %v1786, %v1785
  %v1876 = vpack.c.bf16 %v1788, %v1787
  %v1877 = vpack.c.bf16 %v1790, %v1789
  %v1878 = vpack.c.bf16 %v1792, %v1791
  %v1879 = vpack.c.bf16 %v1794, %v1793
  %v1880 = vpack.c.bf16 %v1796, %v1795
  %v1881 = vpack.c.bf16 %v1798, %v1797
  %v1882 = vpack.c.bf16 %v1800, %v1799
  %v1883 = vpack.c.bf16 %v1802, %v1801
  %v1884 = vpack.c.bf16 %v1804, %v1803
  %v1885 = vpack.c.bf16 %v1806, %v1805
  %v1886 = vpack.c.bf16 %v1808, %v1807
  %v1887 = vpack.c.bf16 %v1810, %v1809
  %v1888 = vpack.c.bf16 %v1812, %v1811
  %v1889 = vpack.c.bf16 %v1814, %v1813
  %v1890 = vpack.c.bf16 %v1816, %v1815
  %v1891 = vpack.c.bf16 %v1818, %v1817
  %v1892 = vpack.c.bf16 %v1820, %v1819
  %v1893 = vpack.c.bf16 %v1822, %v1821
  %v1894 = vpack.c.bf16 %v1824, %v1823
  %v1895 = vpack.c.bf16 %v1826, %v1825
  %v1896 = vpack.c.bf16 %v1828, %v1827
  %v1897 = vpack.c.bf16 %v1830, %v1829
  %v1898 = vpack.c.bf16 %v1832, %v1831
  %v1899 = vpack.c.bf16 %v1834, %v1833
  %v1900 = vpack.c.bf16 %v1836, %v1835
  %v1901 = vpack.c.bf16 %v1838, %v1837
  %v1902 = vpack.c.bf16 %v1840, %v1839
  %v1903 = vpack.c.bf16 %v1842, %v1841
  %v1904 = vpack.c.bf16 %v1844, %v1843
  %v1905 = vpack.c.bf16 %v1846, %v1845
  %v1906 = vpack.c.bf16 %v1848, %v1847
  %v1907 = vpack.c.bf16 %v1850, %v1849
  %v1908 = vpack.c.bf16 %v1852, %v1851
  %v1909 = vpack.c.bf16 %v1854, %v1853
  %v1910 = vpack.c.bf16 %v1856, %v1855
  %v1911 = vpack.c.bf16 %v1858, %v1857
  %v1912 = vpack.c.bf16 %v1860, %v1859
  %v1913 = vpack.c.bf16 %v1862, %v1861
  %v1914 = vpack.c.bf16 %v1864, %v1863
  %v1915 = vpack.c.bf16 %v1866, %v1865
  %v1916 = vpack.c.bf16 %v1868, %v1867
  %v1917 = vpack.c.bf16 %v1522, %v1519
  %v1918 = vpack.c.bf16 %v1527, %v1527
  %v1919 = vpack.c.bf16 %v1535, %v1530
  %v1920 = vpack.c.bf16 %v1538, %v1538
  %v1921 = vpack.c.bf16 %v1546, %v1543
  %v1922 = vpack.c.bf16 %v1551, %v1551
  %v1923 = vpack.c.bf16 %v1559, %v1554
  %v1924 = vpack.c.bf16 %v1562, %v1562
  %v1925 = vpack.c.bf16 %v1570, %v1567
  %v1926 = vpack.c.bf16 %v1575, %v1575
  %v1927 = vpack.c.bf16 %v1583, %v1578
  %v1928 = vpack.c.bf16 %v1586, %v1586
  %v1929 = vpack.c.bf16 %v1594, %v1591
  %v1930 = vpack.c.bf16 %v1599, %v1599
  %v1931 = vpack.c.bf16 %v1607, %v1602
  %v1932 = vpack.c.bf16 %v1610, %v1610
  %v1934 = vsel %vm498, %v1869, 0
  %v1937 = vsel %vm498, %v1870, 0
  %v1940 = vsel %vm498, %v1871, 0
  %v1943 = vsel %vm498, %v1872, 0
  %v1946 = vsel %vm498, %v1873, 0
  %v1949 = vsel %vm498, %v1874, 0
  %v1952 = vsel %vm498, %v1917, 0
  %v1955 = vsel %vm498, %v1918, 0
  %1957 = vmatprep.subr.bf16.mxu0 0
  %1958 = vmatpush1.bf16.xpose.msra.mxu0 0
  %1959 = vmatprep.subr.bf16.mxu0 0
  %1960 = vmatpush1.bf16.xpose.msra.mxu0 0
  %1961 = vmatprep.subr.bf16.mxu0 0
  %1962 = vmatpush1.bf16.xpose.msra.mxu0 0
  %1963 = vmatprep.subr.bf16.mxu0 0
  %1964 = vmatpush1.bf16.xpose.msra.mxu0 0
  %1965 = vmatprep.subr.bf16.mxu0 0
  %1966 = vmatpush1.bf16.xpose.msra.mxu0 0
  %1967 = vmatprep.subr.bf16.mxu0 0
  %1968 = vmatpush1.bf16.xpose.msra.mxu0 0
  %1969 = vmatprep.subr.bf16.mxu0 0
  %1970 = vmatpush1.bf16.xpose.msra.mxu0 %v1955
  %1971 = vmatprep.subr.bf16.mxu0 0
  %1972 = vmatpush1.bf16.xpose.msra.mxu0 %v1952
  %1973 = vmatprep.subr.bf16.mxu0 0
  %1974 = vmatpush2.bf16.xpose.msra.mxu0 0
  %1975 = vmatprep.subr.bf16.mxu0 0
  %1976 = vmatpush2.bf16.xpose.msra.mxu0 0
  %1977 = vmatprep.subr.bf16.mxu0 0
  %1978 = vmatpush2.bf16.xpose.msra.mxu0 0
  %1979 = vmatprep.subr.bf16.mxu0 0
  %1980 = vmatpush2.bf16.xpose.msra.mxu0 0
  %1981 = vmatprep.subr.bf16.mxu0 0
  %1982 = vmatpush2.bf16.xpose.msra.mxu0 0
  %1983 = vmatprep.subr.bf16.mxu0 0
  %1984 = vmatpush2.bf16.xpose.msra.mxu0 0
  %1985 = vmatprep.subr.bf16.mxu0 0
  %1986 = vmatpush2.bf16.xpose.msra.mxu0 0
  %1987 = vmatprep.subr.bf16.mxu0 0
  %1988 = vmatpush2.bf16.xpose.msra.mxu0 0
  %1989 = vmatprep.mubr.bf16.mxu0 0
  %1990 = vmatmul.mubr.bf16.gmra.mxu0 %v1934
  %v1991 = vpop.f32.mrf.mxu0
  %v1992 = vadd.f32 0.0, %v1991
  %v1993 = vpop.f32.mrf.mxu0
  %v1994 = vpop.f32.mrf.mxu0
  %v1995 = vadd.f32 0.0, %v1994
  %v1996 = vpop.f32.mrf.mxu0
  %1997 = vmatprep.mubr.bf16.mxu0 0
  %1998 = vmatmul.mubr.bf16.gmra.mxu0 %v1937
  %v1999 = vpop.f32.mrf.mxu0
  %v2000 = vadd.f32 0.0, %v1999
  %v2001 = vpop.f32.mrf.mxu0
  %v2002 = vpop.f32.mrf.mxu0
  %v2003 = vadd.f32 0.0, %v2002
  %v2004 = vpop.f32.mrf.mxu0
  %2005 = vmatprep.mubr.bf16.mxu0 0
  %2006 = vmatmul.mubr.bf16.gmra.mxu0 %v1940
  %v2007 = vpop.f32.mrf.mxu0
  %v2008 = vadd.f32 0.0, %v2007
  %v2009 = vpop.f32.mrf.mxu0
  %v2010 = vpop.f32.mrf.mxu0
  %v2011 = vadd.f32 0.0, %v2010
  %v2012 = vpop.f32.mrf.mxu0
  %2013 = vmatprep.mubr.bf16.mxu0 0
  %2014 = vmatmul.mubr.bf16.gmra.mxu0 %v1943
  %v2015 = vpop.f32.mrf.mxu0
  %v2016 = vadd.f32 0.0, %v2015
  %v2017 = vpop.f32.mrf.mxu0
  %v2018 = vpop.f32.mrf.mxu0
  %v2019 = vadd.f32 0.0, %v2018
  %v2020 = vpop.f32.mrf.mxu0
  %2021 = vmatprep.mubr.bf16.mxu0 0
  %2022 = vmatmul.mubr.bf16.gmra.mxu0 %v1946
  %v2023 = vpop.f32.mrf.mxu0
  %v2024 = vadd.f32 0.0, %v2023
  %v2025 = vpop.f32.mrf.mxu0
  %v2026 = vpop.f32.mrf.mxu0
  %v2027 = vadd.f32 0.0, %v2026
  %v2028 = vpop.f32.mrf.mxu0
  %2029 = vmatprep.mubr.bf16.mxu0 0
  %2030 = vmatmul.mubr.bf16.gmra.mxu0 %v1949
  %v2031 = vpop.f32.mrf.mxu0
  %v2032 = vadd.f32 0.0, %v2031
  %v2033 = vpop.f32.mrf.mxu0
  %v2034 = vpop.f32.mrf.mxu0
  %v2035 = vadd.f32 0.0, %v2034
  %v2036 = vpop.f32.mrf.mxu0
  %2037 = vdwg.mxu0
  %v2039 = vsel %vm498, %v1875, 0
  %v2042 = vsel %vm498, %v1876, 0
  %v2045 = vsel %vm498, %v1877, 0
  %v2048 = vsel %vm498, %v1878, 0
  %v2051 = vsel %vm498, %v1879, 0
  %v2054 = vsel %vm498, %v1880, 0
  %v2057 = vsel %vm498, %v1919, 0
  %v2060 = vsel %vm498, %v1920, 0
  %2062 = vmatprep.subr.bf16.mxu0 0
  %2063 = vmatpush1.bf16.xpose.msra.mxu0 0
  %2064 = vmatprep.subr.bf16.mxu0 0
  %2065 = vmatpush1.bf16.xpose.msra.mxu0 0
  %2066 = vmatprep.subr.bf16.mxu0 0
  %2067 = vmatpush1.bf16.xpose.msra.mxu0 0
  %2068 = vmatprep.subr.bf16.mxu0 0
  %2069 = vmatpush1.bf16.xpose.msra.mxu0 0
  %2070 = vmatprep.subr.bf16.mxu0 0
  %2071 = vmatpush1.bf16.xpose.msra.mxu0 0
  %2072 = vmatprep.subr.bf16.mxu0 0
  %2073 = vmatpush1.bf16.xpose.msra.mxu0 0
  %2074 = vmatprep.subr.bf16.mxu0 0
  %2075 = vmatpush1.bf16.xpose.msra.mxu0 %v2060
  %2076 = vmatprep.subr.bf16.mxu0 0
  %2077 = vmatpush1.bf16.xpose.msra.mxu0 %v2057
  %2078 = vmatprep.subr.bf16.mxu0 0
  %2079 = vmatpush2.bf16.xpose.msra.mxu0 0
  %2080 = vmatprep.subr.bf16.mxu0 0
  %2081 = vmatpush2.bf16.xpose.msra.mxu0 0
  %2082 = vmatprep.subr.bf16.mxu0 0
  %2083 = vmatpush2.bf16.xpose.msra.mxu0 0
  %2084 = vmatprep.subr.bf16.mxu0 0
  %2085 = vmatpush2.bf16.xpose.msra.mxu0 0
  %2086 = vmatprep.subr.bf16.mxu0 0
  %2087 = vmatpush2.bf16.xpose.msra.mxu0 0
  %2088 = vmatprep.subr.bf16.mxu0 0
  %2089 = vmatpush2.bf16.xpose.msra.mxu0 0
  %2090 = vmatprep.subr.bf16.mxu0 0
  %2091 = vmatpush2.bf16.xpose.msra.mxu0 0
  %2092 = vmatprep.subr.bf16.mxu0 0
  %2093 = vmatpush2.bf16.xpose.msra.mxu0 0
  %2094 = vmatprep.mubr.bf16.mxu0 0
  %2095 = vmatmul.mubr.bf16.gmra.mxu0 %v2039
  %v2096 = vpop.f32.mrf.mxu0
  %v2097 = vadd.f32 0.0, %v2096
  %v2098 = vpop.f32.mrf.mxu0
  %v2099 = vpop.f32.mrf.mxu0
  %v2100 = vadd.f32 0.0, %v2099
  %v2101 = vpop.f32.mrf.mxu0
  %2102 = vmatprep.mubr.bf16.mxu0 0
  %2103 = vmatmul.mubr.bf16.gmra.mxu0 %v2042
  %v2104 = vpop.f32.mrf.mxu0
  %v2105 = vadd.f32 0.0, %v2104
  %v2106 = vpop.f32.mrf.mxu0
  %v2107 = vpop.f32.mrf.mxu0
  %v2108 = vadd.f32 0.0, %v2107
  %v2109 = vpop.f32.mrf.mxu0
  %2110 = vmatprep.mubr.bf16.mxu0 0
  %2111 = vmatmul.mubr.bf16.gmra.mxu0 %v2045
  %v2112 = vpop.f32.mrf.mxu0
  %v2113 = vadd.f32 0.0, %v2112
  %v2114 = vpop.f32.mrf.mxu0
  %v2115 = vpop.f32.mrf.mxu0
  %v2116 = vadd.f32 0.0, %v2115
  %v2117 = vpop.f32.mrf.mxu0
  %2118 = vmatprep.mubr.bf16.mxu0 0
  %2119 = vmatmul.mubr.bf16.gmra.mxu0 %v2048
  %v2120 = vpop.f32.mrf.mxu0
  %v2121 = vadd.f32 0.0, %v2120
  %v2122 = vpop.f32.mrf.mxu0
  %v2123 = vpop.f32.mrf.mxu0
  %v2124 = vadd.f32 0.0, %v2123
  %v2125 = vpop.f32.mrf.mxu0
  %2126 = vmatprep.mubr.bf16.mxu0 0
  %2127 = vmatmul.mubr.bf16.gmra.mxu0 %v2051
  %v2128 = vpop.f32.mrf.mxu0
  %v2129 = vadd.f32 0.0, %v2128
  %v2130 = vpop.f32.mrf.mxu0
  %v2131 = vpop.f32.mrf.mxu0
  %v2132 = vadd.f32 0.0, %v2131
  %v2133 = vpop.f32.mrf.mxu0
  %2134 = vmatprep.mubr.bf16.mxu0 0
  %2135 = vmatmul.mubr.bf16.gmra.mxu0 %v2054
  %v2136 = vpop.f32.mrf.mxu0
  %v2137 = vadd.f32 0.0, %v2136
  %v2138 = vpop.f32.mrf.mxu0
  %v2139 = vpop.f32.mrf.mxu0
  %v2140 = vadd.f32 0.0, %v2139
  %v2141 = vpop.f32.mrf.mxu0
  %2142 = vdwg.mxu0
  %v2144 = vsel %vm498, %v1881, 0
  %v2147 = vsel %vm498, %v1882, 0
  %v2150 = vsel %vm498, %v1883, 0
  %v2153 = vsel %vm498, %v1884, 0
  %v2156 = vsel %vm498, %v1885, 0
  %v2159 = vsel %vm498, %v1886, 0
  %v2162 = vsel %vm498, %v1921, 0
  %v2165 = vsel %vm498, %v1922, 0
  %2167 = vmatprep.subr.bf16.mxu0 0
  %2168 = vmatpush1.bf16.xpose.msra.mxu0 0
  %2169 = vmatprep.subr.bf16.mxu0 0
  %2170 = vmatpush1.bf16.xpose.msra.mxu0 0
  %2171 = vmatprep.subr.bf16.mxu0 0
  %2172 = vmatpush1.bf16.xpose.msra.mxu0 0
  %2173 = vmatprep.subr.bf16.mxu0 0
  %2174 = vmatpush1.bf16.xpose.msra.mxu0 0
  %2175 = vmatprep.subr.bf16.mxu0 0
  %2176 = vmatpush1.bf16.xpose.msra.mxu0 0
  %2177 = vmatprep.subr.bf16.mxu0 0
  %2178 = vmatpush1.bf16.xpose.msra.mxu0 0
  %2179 = vmatprep.subr.bf16.mxu0 0
  %2180 = vmatpush1.bf16.xpose.msra.mxu0 %v2165
  %2181 = vmatprep.subr.bf16.mxu0 0
  %2182 = vmatpush1.bf16.xpose.msra.mxu0 %v2162
  %2183 = vmatprep.subr.bf16.mxu0 0
  %2184 = vmatpush2.bf16.xpose.msra.mxu0 0
  %2185 = vmatprep.subr.bf16.mxu0 0
  %2186 = vmatpush2.bf16.xpose.msra.mxu0 0
  %2187 = vmatprep.subr.bf16.mxu0 0
  %2188 = vmatpush2.bf16.xpose.msra.mxu0 0
  %2189 = vmatprep.subr.bf16.mxu0 0
  %2190 = vmatpush2.bf16.xpose.msra.mxu0 0
  %2191 = vmatprep.subr.bf16.mxu0 0
  %2192 = vmatpush2.bf16.xpose.msra.mxu0 0
  %2193 = vmatprep.subr.bf16.mxu0 0
  %2194 = vmatpush2.bf16.xpose.msra.mxu0 0
  %2195 = vmatprep.subr.bf16.mxu0 0
  %2196 = vmatpush2.bf16.xpose.msra.mxu0 0
  %2197 = vmatprep.subr.bf16.mxu0 0
  %2198 = vmatpush2.bf16.xpose.msra.mxu0 0
  %2199 = vmatprep.mubr.bf16.mxu0 0
  %2200 = vmatmul.mubr.bf16.gmra.mxu0 %v2144
  %v2201 = vpop.f32.mrf.mxu0
  %v2202 = vadd.f32 0.0, %v2201
  %v2203 = vpop.f32.mrf.mxu0
  %v2204 = vpop.f32.mrf.mxu0
  %v2205 = vadd.f32 0.0, %v2204
  %v2206 = vpop.f32.mrf.mxu0
  %2207 = vmatprep.mubr.bf16.mxu0 0
  %2208 = vmatmul.mubr.bf16.gmra.mxu0 %v2147
  %v2209 = vpop.f32.mrf.mxu0
  %v2210 = vadd.f32 0.0, %v2209
  %v2211 = vpop.f32.mrf.mxu0
  %v2212 = vpop.f32.mrf.mxu0
  %v2213 = vadd.f32 0.0, %v2212
  %v2214 = vpop.f32.mrf.mxu0
  %2215 = vmatprep.mubr.bf16.mxu0 0
  %2216 = vmatmul.mubr.bf16.gmra.mxu0 %v2150
  %v2217 = vpop.f32.mrf.mxu0
  %v2218 = vadd.f32 0.0, %v2217
  %v2219 = vpop.f32.mrf.mxu0
  %v2220 = vpop.f32.mrf.mxu0
  %v2221 = vadd.f32 0.0, %v2220
  %v2222 = vpop.f32.mrf.mxu0
  %2223 = vmatprep.mubr.bf16.mxu0 0
  %2224 = vmatmul.mubr.bf16.gmra.mxu0 %v2153
  %v2225 = vpop.f32.mrf.mxu0
  %v2226 = vadd.f32 0.0, %v2225
  %v2227 = vpop.f32.mrf.mxu0
  %v2228 = vpop.f32.mrf.mxu0
  %v2229 = vadd.f32 0.0, %v2228
  %v2230 = vpop.f32.mrf.mxu0
  %2231 = vmatprep.mubr.bf16.mxu0 0
  %2232 = vmatmul.mubr.bf16.gmra.mxu0 %v2156
  %v2233 = vpop.f32.mrf.mxu0
  %v2234 = vadd.f32 0.0, %v2233
  %v2235 = vpop.f32.mrf.mxu0
  %v2236 = vpop.f32.mrf.mxu0
  %v2237 = vadd.f32 0.0, %v2236
  %v2238 = vpop.f32.mrf.mxu0
  %2239 = vmatprep.mubr.bf16.mxu0 0
  %2240 = vmatmul.mubr.bf16.gmra.mxu0 %v2159
  %v2241 = vpop.f32.mrf.mxu0
  %v2242 = vadd.f32 0.0, %v2241
  %v2243 = vpop.f32.mrf.mxu0
  %v2244 = vpop.f32.mrf.mxu0
  %v2245 = vadd.f32 0.0, %v2244
  %v2246 = vpop.f32.mrf.mxu0
  %2247 = vdwg.mxu0
  %v2249 = vsel %vm498, %v1887, 0
  %v2252 = vsel %vm498, %v1888, 0
  %v2255 = vsel %vm498, %v1889, 0
  %v2258 = vsel %vm498, %v1890, 0
  %v2261 = vsel %vm498, %v1891, 0
  %v2264 = vsel %vm498, %v1892, 0
  %v2267 = vsel %vm498, %v1923, 0
  %v2270 = vsel %vm498, %v1924, 0
  %2272 = vmatprep.subr.bf16.mxu0 0
  %2273 = vmatpush1.bf16.xpose.msra.mxu0 0
  %2274 = vmatprep.subr.bf16.mxu0 0
  %2275 = vmatpush1.bf16.xpose.msra.mxu0 0
  %2276 = vmatprep.subr.bf16.mxu0 0
  %2277 = vmatpush1.bf16.xpose.msra.mxu0 0
  %2278 = vmatprep.subr.bf16.mxu0 0
  %2279 = vmatpush1.bf16.xpose.msra.mxu0 0
  %2280 = vmatprep.subr.bf16.mxu0 0
  %2281 = vmatpush1.bf16.xpose.msra.mxu0 0
  %2282 = vmatprep.subr.bf16.mxu0 0
  %2283 = vmatpush1.bf16.xpose.msra.mxu0 0
  %2284 = vmatprep.subr.bf16.mxu0 0
  %2285 = vmatpush1.bf16.xpose.msra.mxu0 %v2270
  %2286 = vmatprep.subr.bf16.mxu0 0
  %2287 = vmatpush1.bf16.xpose.msra.mxu0 %v2267
  %2288 = vmatprep.subr.bf16.mxu0 0
  %2289 = vmatpush2.bf16.xpose.msra.mxu0 0
  %2290 = vmatprep.subr.bf16.mxu0 0
  %2291 = vmatpush2.bf16.xpose.msra.mxu0 0
  %2292 = vmatprep.subr.bf16.mxu0 0
  %2293 = vmatpush2.bf16.xpose.msra.mxu0 0
  %2294 = vmatprep.subr.bf16.mxu0 0
  %2295 = vmatpush2.bf16.xpose.msra.mxu0 0
  %2296 = vmatprep.subr.bf16.mxu0 0
  %2297 = vmatpush2.bf16.xpose.msra.mxu0 0
  %2298 = vmatprep.subr.bf16.mxu0 0
  %2299 = vmatpush2.bf16.xpose.msra.mxu0 0
  %2300 = vmatprep.subr.bf16.mxu0 0
  %2301 = vmatpush2.bf16.xpose.msra.mxu0 0
  %2302 = vmatprep.subr.bf16.mxu0 0
  %2303 = vmatpush2.bf16.xpose.msra.mxu0 0
  %2304 = vmatprep.mubr.bf16.mxu0 0
  %2305 = vmatmul.mubr.bf16.gmra.mxu0 %v2249
  %v2306 = vpop.f32.mrf.mxu0
  %v2307 = vadd.f32 0.0, %v2306
  %v2308 = vpop.f32.mrf.mxu0
  %v2309 = vpop.f32.mrf.mxu0
  %v2310 = vadd.f32 0.0, %v2309
  %v2311 = vpop.f32.mrf.mxu0
  %2312 = vmatprep.mubr.bf16.mxu0 0
  %2313 = vmatmul.mubr.bf16.gmra.mxu0 %v2252
  %v2314 = vpop.f32.mrf.mxu0
  %v2315 = vadd.f32 0.0, %v2314
  %v2316 = vpop.f32.mrf.mxu0
  %v2317 = vpop.f32.mrf.mxu0
  %v2318 = vadd.f32 0.0, %v2317
  %v2319 = vpop.f32.mrf.mxu0
  %2320 = vmatprep.mubr.bf16.mxu0 0
  %2321 = vmatmul.mubr.bf16.gmra.mxu0 %v2255
  %v2322 = vpop.f32.mrf.mxu0
  %v2323 = vadd.f32 0.0, %v2322
  %v2324 = vpop.f32.mrf.mxu0
  %v2325 = vpop.f32.mrf.mxu0
  %v2326 = vadd.f32 0.0, %v2325
  %v2327 = vpop.f32.mrf.mxu0
  %2328 = vmatprep.mubr.bf16.mxu0 0
  %2329 = vmatmul.mubr.bf16.gmra.mxu0 %v2258
  %v2330 = vpop.f32.mrf.mxu0
  %v2331 = vadd.f32 0.0, %v2330
  %v2332 = vpop.f32.mrf.mxu0
  %v2333 = vpop.f32.mrf.mxu0
  %v2334 = vadd.f32 0.0, %v2333
  %v2335 = vpop.f32.mrf.mxu0
  %2336 = vmatprep.mubr.bf16.mxu0 0
  %2337 = vmatmul.mubr.bf16.gmra.mxu0 %v2261
  %v2338 = vpop.f32.mrf.mxu0
  %v2339 = vadd.f32 0.0, %v2338
  %v2340 = vpop.f32.mrf.mxu0
  %v2341 = vpop.f32.mrf.mxu0
  %v2342 = vadd.f32 0.0, %v2341
  %v2343 = vpop.f32.mrf.mxu0
  %2344 = vmatprep.mubr.bf16.mxu0 0
  %2345 = vmatmul.mubr.bf16.gmra.mxu0 %v2264
  %v2346 = vpop.f32.mrf.mxu0
  %v2347 = vadd.f32 0.0, %v2346
  %v2348 = vpop.f32.mrf.mxu0
  %v2349 = vpop.f32.mrf.mxu0
  %v2350 = vadd.f32 0.0, %v2349
  %v2351 = vpop.f32.mrf.mxu0
  %2352 = vdwg.mxu0
  %v2354 = vsel %vm498, %v1893, 0
  %v2357 = vsel %vm498, %v1894, 0
  %v2360 = vsel %vm498, %v1895, 0
  %v2363 = vsel %vm498, %v1896, 0
  %v2366 = vsel %vm498, %v1897, 0
  %v2369 = vsel %vm498, %v1898, 0
  %v2372 = vsel %vm498, %v1925, 0
  %v2375 = vsel %vm498, %v1926, 0
  %2377 = vmatprep.subr.bf16.mxu0 0
  %2378 = vmatpush1.bf16.xpose.msra.mxu0 0
  %2379 = vmatprep.subr.bf16.mxu0 0
  %2380 = vmatpush1.bf16.xpose.msra.mxu0 0
  %2381 = vmatprep.subr.bf16.mxu0 0
  %2382 = vmatpush1.bf16.xpose.msra.mxu0 0
  %2383 = vmatprep.subr.bf16.mxu0 0
  %2384 = vmatpush1.bf16.xpose.msra.mxu0 0
  %2385 = vmatprep.subr.bf16.mxu0 0
  %2386 = vmatpush1.bf16.xpose.msra.mxu0 0
  %2387 = vmatprep.subr.bf16.mxu0 0
  %2388 = vmatpush1.bf16.xpose.msra.mxu0 0
  %2389 = vmatprep.subr.bf16.mxu0 0
  %2390 = vmatpush1.bf16.xpose.msra.mxu0 %v2375
  %2391 = vmatprep.subr.bf16.mxu0 0
  %2392 = vmatpush1.bf16.xpose.msra.mxu0 %v2372
  %2393 = vmatprep.subr.bf16.mxu0 0
  %2394 = vmatpush2.bf16.xpose.msra.mxu0 0
  %2395 = vmatprep.subr.bf16.mxu0 0
  %2396 = vmatpush2.bf16.xpose.msra.mxu0 0
  %2397 = vmatprep.subr.bf16.mxu0 0
  %2398 = vmatpush2.bf16.xpose.msra.mxu0 0
  %2399 = vmatprep.subr.bf16.mxu0 0
  %2400 = vmatpush2.bf16.xpose.msra.mxu0 0
  %2401 = vmatprep.subr.bf16.mxu0 0
  %2402 = vmatpush2.bf16.xpose.msra.mxu0 0
  %2403 = vmatprep.subr.bf16.mxu0 0
  %2404 = vmatpush2.bf16.xpose.msra.mxu0 0
  %2405 = vmatprep.subr.bf16.mxu0 0
  %2406 = vmatpush2.bf16.xpose.msra.mxu0 0
  %2407 = vmatprep.subr.bf16.mxu0 0
  %2408 = vmatpush2.bf16.xpose.msra.mxu0 0
  %2409 = vmatprep.mubr.bf16.mxu0 0
  %2410 = vmatmul.mubr.bf16.gmra.mxu0 %v2354
  %v2411 = vpop.f32.mrf.mxu0
  %v2412 = vadd.f32 0.0, %v2411
  %v2413 = vpop.f32.mrf.mxu0
  %v2414 = vpop.f32.mrf.mxu0
  %v2415 = vadd.f32 0.0, %v2414
  %v2416 = vpop.f32.mrf.mxu0
  %2417 = vmatprep.mubr.bf16.mxu0 0
  %2418 = vmatmul.mubr.bf16.gmra.mxu0 %v2357
  %v2419 = vpop.f32.mrf.mxu0
  %v2420 = vadd.f32 0.0, %v2419
  %v2421 = vpop.f32.mrf.mxu0
  %v2422 = vpop.f32.mrf.mxu0
  %v2423 = vadd.f32 0.0, %v2422
  %v2424 = vpop.f32.mrf.mxu0
  %2425 = vmatprep.mubr.bf16.mxu0 0
  %2426 = vmatmul.mubr.bf16.gmra.mxu0 %v2360
  %v2427 = vpop.f32.mrf.mxu0
  %v2428 = vadd.f32 0.0, %v2427
  %v2429 = vpop.f32.mrf.mxu0
  %v2430 = vpop.f32.mrf.mxu0
  %v2431 = vadd.f32 0.0, %v2430
  %v2432 = vpop.f32.mrf.mxu0
  %2433 = vmatprep.mubr.bf16.mxu0 0
  %2434 = vmatmul.mubr.bf16.gmra.mxu0 %v2363
  %v2435 = vpop.f32.mrf.mxu0
  %v2436 = vadd.f32 0.0, %v2435
  %v2437 = vpop.f32.mrf.mxu0
  %v2438 = vpop.f32.mrf.mxu0
  %v2439 = vadd.f32 0.0, %v2438
  %v2440 = vpop.f32.mrf.mxu0
  %2441 = vmatprep.mubr.bf16.mxu0 0
  %2442 = vmatmul.mubr.bf16.gmra.mxu0 %v2366
  %v2443 = vpop.f32.mrf.mxu0
  %v2444 = vadd.f32 0.0, %v2443
  %v2445 = vpop.f32.mrf.mxu0
  %v2446 = vpop.f32.mrf.mxu0
  %v2447 = vadd.f32 0.0, %v2446
  %v2448 = vpop.f32.mrf.mxu0
  %2449 = vmatprep.mubr.bf16.mxu0 0
  %2450 = vmatmul.mubr.bf16.gmra.mxu0 %v2369
  %v2451 = vpop.f32.mrf.mxu0
  %v2452 = vadd.f32 0.0, %v2451
  %v2453 = vpop.f32.mrf.mxu0
  %v2454 = vpop.f32.mrf.mxu0
  %v2455 = vadd.f32 0.0, %v2454
  %v2456 = vpop.f32.mrf.mxu0
  %2457 = vdwg.mxu0
  %v2459 = vsel %vm498, %v1899, 0
  %v2462 = vsel %vm498, %v1900, 0
  %v2465 = vsel %vm498, %v1901, 0
  %v2468 = vsel %vm498, %v1902, 0
  %v2471 = vsel %vm498, %v1903, 0
  %v2474 = vsel %vm498, %v1904, 0
  %v2477 = vsel %vm498, %v1927, 0
  %v2480 = vsel %vm498, %v1928, 0
  %2482 = vmatprep.subr.bf16.mxu0 0
  %2483 = vmatpush1.bf16.xpose.msra.mxu0 0
  %2484 = vmatprep.subr.bf16.mxu0 0
  %2485 = vmatpush1.bf16.xpose.msra.mxu0 0
  %2486 = vmatprep.subr.bf16.mxu0 0
  %2487 = vmatpush1.bf16.xpose.msra.mxu0 0
  %2488 = vmatprep.subr.bf16.mxu0 0
  %2489 = vmatpush1.bf16.xpose.msra.mxu0 0
  %2490 = vmatprep.subr.bf16.mxu0 0
  %2491 = vmatpush1.bf16.xpose.msra.mxu0 0
  %2492 = vmatprep.subr.bf16.mxu0 0
  %2493 = vmatpush1.bf16.xpose.msra.mxu0 0
  %2494 = vmatprep.subr.bf16.mxu0 0
  %2495 = vmatpush1.bf16.xpose.msra.mxu0 %v2480
  %2496 = vmatprep.subr.bf16.mxu0 0
  %2497 = vmatpush1.bf16.xpose.msra.mxu0 %v2477
  %2498 = vmatprep.subr.bf16.mxu0 0
  %2499 = vmatpush2.bf16.xpose.msra.mxu0 0
  %2500 = vmatprep.subr.bf16.mxu0 0
  %2501 = vmatpush2.bf16.xpose.msra.mxu0 0
  %2502 = vmatprep.subr.bf16.mxu0 0
  %2503 = vmatpush2.bf16.xpose.msra.mxu0 0
  %2504 = vmatprep.subr.bf16.mxu0 0
  %2505 = vmatpush2.bf16.xpose.msra.mxu0 0
  %2506 = vmatprep.subr.bf16.mxu0 0
  %2507 = vmatpush2.bf16.xpose.msra.mxu0 0
  %2508 = vmatprep.subr.bf16.mxu0 0
  %2509 = vmatpush2.bf16.xpose.msra.mxu0 0
  %2510 = vmatprep.subr.bf16.mxu0 0
  %2511 = vmatpush2.bf16.xpose.msra.mxu0 0
  %2512 = vmatprep.subr.bf16.mxu0 0
  %2513 = vmatpush2.bf16.xpose.msra.mxu0 0
  %2514 = vmatprep.mubr.bf16.mxu0 0
  %2515 = vmatmul.mubr.bf16.gmra.mxu0 %v2459
  %v2516 = vpop.f32.mrf.mxu0
  %v2517 = vadd.f32 0.0, %v2516
  %v2518 = vpop.f32.mrf.mxu0
  %v2519 = vpop.f32.mrf.mxu0
  %v2520 = vadd.f32 0.0, %v2519
  %v2521 = vpop.f32.mrf.mxu0
  %2522 = vmatprep.mubr.bf16.mxu0 0
  %2523 = vmatmul.mubr.bf16.gmra.mxu0 %v2462
  %v2524 = vpop.f32.mrf.mxu0
  %v2525 = vadd.f32 0.0, %v2524
  %v2526 = vpop.f32.mrf.mxu0
  %v2527 = vpop.f32.mrf.mxu0
  %v2528 = vadd.f32 0.0, %v2527
  %v2529 = vpop.f32.mrf.mxu0
  %2530 = vmatprep.mubr.bf16.mxu0 0
  %2531 = vmatmul.mubr.bf16.gmra.mxu0 %v2465
  %v2532 = vpop.f32.mrf.mxu0
  %v2533 = vadd.f32 0.0, %v2532
  %v2534 = vpop.f32.mrf.mxu0
  %v2535 = vpop.f32.mrf.mxu0
  %v2536 = vadd.f32 0.0, %v2535
  %v2537 = vpop.f32.mrf.mxu0
  %2538 = vmatprep.mubr.bf16.mxu0 0
  %2539 = vmatmul.mubr.bf16.gmra.mxu0 %v2468
  %v2540 = vpop.f32.mrf.mxu0
  %v2541 = vadd.f32 0.0, %v2540
  %v2542 = vpop.f32.mrf.mxu0
  %v2543 = vpop.f32.mrf.mxu0
  %v2544 = vadd.f32 0.0, %v2543
  %v2545 = vpop.f32.mrf.mxu0
  %2546 = vmatprep.mubr.bf16.mxu0 0
  %2547 = vmatmul.mubr.bf16.gmra.mxu0 %v2471
  %v2548 = vpop.f32.mrf.mxu0
  %v2549 = vadd.f32 0.0, %v2548
  %v2550 = vpop.f32.mrf.mxu0
  %v2551 = vpop.f32.mrf.mxu0
  %v2552 = vadd.f32 0.0, %v2551
  %v2553 = vpop.f32.mrf.mxu0
  %2554 = vmatprep.mubr.bf16.mxu0 0
  %2555 = vmatmul.mubr.bf16.gmra.mxu0 %v2474
  %v2556 = vpop.f32.mrf.mxu0
  %v2557 = vadd.f32 0.0, %v2556
  %v2558 = vpop.f32.mrf.mxu0
  %v2559 = vpop.f32.mrf.mxu0
  %v2560 = vadd.f32 0.0, %v2559
  %v2561 = vpop.f32.mrf.mxu0
  %2562 = vdwg.mxu0
  %v2564 = vsel %vm498, %v1905, 0
  %v2567 = vsel %vm498, %v1906, 0
  %v2570 = vsel %vm498, %v1907, 0
  %v2573 = vsel %vm498, %v1908, 0
  %v2576 = vsel %vm498, %v1909, 0
  %v2579 = vsel %vm498, %v1910, 0
  %v2582 = vsel %vm498, %v1929, 0
  %v2585 = vsel %vm498, %v1930, 0
  %2587 = vmatprep.subr.bf16.mxu0 0
  %2588 = vmatpush1.bf16.xpose.msra.mxu0 0
  %2589 = vmatprep.subr.bf16.mxu0 0
  %2590 = vmatpush1.bf16.xpose.msra.mxu0 0
  %2591 = vmatprep.subr.bf16.mxu0 0
  %2592 = vmatpush1.bf16.xpose.msra.mxu0 0
  %2593 = vmatprep.subr.bf16.mxu0 0
  %2594 = vmatpush1.bf16.xpose.msra.mxu0 0
  %2595 = vmatprep.subr.bf16.mxu0 0
  %2596 = vmatpush1.bf16.xpose.msra.mxu0 0
  %2597 = vmatprep.subr.bf16.mxu0 0
  %2598 = vmatpush1.bf16.xpose.msra.mxu0 0
  %2599 = vmatprep.subr.bf16.mxu0 0
  %2600 = vmatpush1.bf16.xpose.msra.mxu0 %v2585
  %2601 = vmatprep.subr.bf16.mxu0 0
  %2602 = vmatpush1.bf16.xpose.msra.mxu0 %v2582
  %2603 = vmatprep.subr.bf16.mxu0 0
  %2604 = vmatpush2.bf16.xpose.msra.mxu0 0
  %2605 = vmatprep.subr.bf16.mxu0 0
  %2606 = vmatpush2.bf16.xpose.msra.mxu0 0
  %2607 = vmatprep.subr.bf16.mxu0 0
  %2608 = vmatpush2.bf16.xpose.msra.mxu0 0
  %2609 = vmatprep.subr.bf16.mxu0 0
  %2610 = vmatpush2.bf16.xpose.msra.mxu0 0
  %2611 = vmatprep.subr.bf16.mxu0 0
  %2612 = vmatpush2.bf16.xpose.msra.mxu0 0
  %2613 = vmatprep.subr.bf16.mxu0 0
  %2614 = vmatpush2.bf16.xpose.msra.mxu0 0
  %2615 = vmatprep.subr.bf16.mxu0 0
  %2616 = vmatpush2.bf16.xpose.msra.mxu0 0
  %2617 = vmatprep.subr.bf16.mxu0 0
  %2618 = vmatpush2.bf16.xpose.msra.mxu0 0
  %2619 = vmatprep.mubr.bf16.mxu0 0
  %2620 = vmatmul.mubr.bf16.gmra.mxu0 %v2564
  %v2621 = vpop.f32.mrf.mxu0
  %v2622 = vadd.f32 0.0, %v2621
  %v2623 = vpop.f32.mrf.mxu0
  %v2624 = vpop.f32.mrf.mxu0
  %v2625 = vadd.f32 0.0, %v2624
  %v2626 = vpop.f32.mrf.mxu0
  %2627 = vmatprep.mubr.bf16.mxu0 0
  %2628 = vmatmul.mubr.bf16.gmra.mxu0 %v2567
  %v2629 = vpop.f32.mrf.mxu0
  %v2630 = vadd.f32 0.0, %v2629
  %v2631 = vpop.f32.mrf.mxu0
  %v2632 = vpop.f32.mrf.mxu0
  %v2633 = vadd.f32 0.0, %v2632
  %v2634 = vpop.f32.mrf.mxu0
  %2635 = vmatprep.mubr.bf16.mxu0 0
  %2636 = vmatmul.mubr.bf16.gmra.mxu0 %v2570
  %v2637 = vpop.f32.mrf.mxu0
  %v2638 = vadd.f32 0.0, %v2637
  %v2639 = vpop.f32.mrf.mxu0
  %v2640 = vpop.f32.mrf.mxu0
  %v2641 = vadd.f32 0.0, %v2640
  %v2642 = vpop.f32.mrf.mxu0
  %2643 = vmatprep.mubr.bf16.mxu0 0
  %2644 = vmatmul.mubr.bf16.gmra.mxu0 %v2573
  %v2645 = vpop.f32.mrf.mxu0
  %v2646 = vadd.f32 0.0, %v2645
  %v2647 = vpop.f32.mrf.mxu0
  %v2648 = vpop.f32.mrf.mxu0
  %v2649 = vadd.f32 0.0, %v2648
  %v2650 = vpop.f32.mrf.mxu0
  %2651 = vmatprep.mubr.bf16.mxu0 0
  %2652 = vmatmul.mubr.bf16.gmra.mxu0 %v2576
  %v2653 = vpop.f32.mrf.mxu0
  %v2654 = vadd.f32 0.0, %v2653
  %v2655 = vpop.f32.mrf.mxu0
  %v2656 = vpop.f32.mrf.mxu0
  %v2657 = vadd.f32 0.0, %v2656
  %v2658 = vpop.f32.mrf.mxu0
  %2659 = vmatprep.mubr.bf16.mxu0 0
  %2660 = vmatmul.mubr.bf16.gmra.mxu0 %v2579
  %v2661 = vpop.f32.mrf.mxu0
  %v2662 = vadd.f32 0.0, %v2661
  %v2663 = vpop.f32.mrf.mxu0
  %v2664 = vpop.f32.mrf.mxu0
  %v2665 = vadd.f32 0.0, %v2664
  %v2666 = vpop.f32.mrf.mxu0
  %2667 = vdwg.mxu0
  %v2669 = vsel %vm498, %v1911, 0
  %v2672 = vsel %vm498, %v1912, 0
  %v2675 = vsel %vm498, %v1913, 0
  %v2678 = vsel %vm498, %v1914, 0
  %v2681 = vsel %vm498, %v1915, 0
  %v2684 = vsel %vm498, %v1916, 0
  %v2687 = vsel %vm498, %v1931, 0
  %v2690 = vsel %vm498, %v1932, 0
  %2692 = vmatprep.subr.bf16.mxu0 0
  %2693 = vmatpush1.bf16.xpose.msra.mxu0 0
  %2694 = vmatprep.subr.bf16.mxu0 0
  %2695 = vmatpush1.bf16.xpose.msra.mxu0 0
  %2696 = vmatprep.subr.bf16.mxu0 0
  %2697 = vmatpush1.bf16.xpose.msra.mxu0 0
  %2698 = vmatprep.subr.bf16.mxu0 0
  %2699 = vmatpush1.bf16.xpose.msra.mxu0 0
  %2700 = vmatprep.subr.bf16.mxu0 0
  %2701 = vmatpush1.bf16.xpose.msra.mxu0 0
  %2702 = vmatprep.subr.bf16.mxu0 0
  %2703 = vmatpush1.bf16.xpose.msra.mxu0 0
  %2704 = vmatprep.subr.bf16.mxu0 0
  %2705 = vmatpush1.bf16.xpose.msra.mxu0 %v2690
  %2706 = vmatprep.subr.bf16.mxu0 0
  %2707 = vmatpush1.bf16.xpose.msra.mxu0 %v2687
  %2708 = vmatprep.subr.bf16.mxu0 0
  %2709 = vmatpush2.bf16.xpose.msra.mxu0 0
  %2710 = vmatprep.subr.bf16.mxu0 0
  %2711 = vmatpush2.bf16.xpose.msra.mxu0 0
  %2712 = vmatprep.subr.bf16.mxu0 0
  %2713 = vmatpush2.bf16.xpose.msra.mxu0 0
  %2714 = vmatprep.subr.bf16.mxu0 0
  %2715 = vmatpush2.bf16.xpose.msra.mxu0 0
  %2716 = vmatprep.subr.bf16.mxu0 0
  %2717 = vmatpush2.bf16.xpose.msra.mxu0 0
  %2718 = vmatprep.subr.bf16.mxu0 0
  %2719 = vmatpush2.bf16.xpose.msra.mxu0 0
  %2720 = vmatprep.subr.bf16.mxu0 0
  %2721 = vmatpush2.bf16.xpose.msra.mxu0 0
  %2722 = vmatprep.subr.bf16.mxu0 0
  %2723 = vmatpush2.bf16.xpose.msra.mxu0 0
  %2724 = vmatprep.mubr.bf16.mxu0 0
  %2725 = vmatmul.mubr.bf16.gmra.mxu0 %v2669
  %v2726 = vpop.f32.mrf.mxu0
  %v2727 = vadd.f32 0.0, %v2726
  %v2728 = vpop.f32.mrf.mxu0
  %v2729 = vpop.f32.mrf.mxu0
  %v2730 = vadd.f32 0.0, %v2729
  %v2731 = vpop.f32.mrf.mxu0
  %2732 = vmatprep.mubr.bf16.mxu0 0
  %2733 = vmatmul.mubr.bf16.gmra.mxu0 %v2672
  %v2734 = vpop.f32.mrf.mxu0
  %v2735 = vadd.f32 0.0, %v2734
  %v2736 = vpop.f32.mrf.mxu0
  %v2737 = vpop.f32.mrf.mxu0
  %v2738 = vadd.f32 0.0, %v2737
  %v2739 = vpop.f32.mrf.mxu0
  %2740 = vmatprep.mubr.bf16.mxu0 0
  %2741 = vmatmul.mubr.bf16.gmra.mxu0 %v2675
  %v2742 = vpop.f32.mrf.mxu0
  %v2743 = vadd.f32 0.0, %v2742
  %v2744 = vpop.f32.mrf.mxu0
  %v2745 = vpop.f32.mrf.mxu0
  %v2746 = vadd.f32 0.0, %v2745
  %v2747 = vpop.f32.mrf.mxu0
  %2748 = vmatprep.mubr.bf16.mxu0 0
  %2749 = vmatmul.mubr.bf16.gmra.mxu0 %v2678
  %v2750 = vpop.f32.mrf.mxu0
  %v2751 = vadd.f32 0.0, %v2750
  %v2752 = vpop.f32.mrf.mxu0
  %v2753 = vpop.f32.mrf.mxu0
  %v2754 = vadd.f32 0.0, %v2753
  %v2755 = vpop.f32.mrf.mxu0
  %2756 = vmatprep.mubr.bf16.mxu0 0
  %2757 = vmatmul.mubr.bf16.gmra.mxu0 %v2681
  %v2758 = vpop.f32.mrf.mxu0
  %v2759 = vadd.f32 0.0, %v2758
  %v2760 = vpop.f32.mrf.mxu0
  %v2761 = vpop.f32.mrf.mxu0
  %v2762 = vadd.f32 0.0, %v2761
  %v2763 = vpop.f32.mrf.mxu0
  %2764 = vmatprep.mubr.bf16.mxu0 0
  %2765 = vmatmul.mubr.bf16.gmra.mxu0 %v2684
  %v2766 = vpop.f32.mrf.mxu0
  %v2767 = vadd.f32 0.0, %v2766
  %v2768 = vpop.f32.mrf.mxu0
  %v2769 = vpop.f32.mrf.mxu0
  %v2770 = vadd.f32 0.0, %v2769
  %v2771 = vpop.f32.mrf.mxu0
  %2772 = vdwg.mxu0
  %v2773 = vsel %vm874, 1, 0
  %vm2774 = vcmp.eq.s32.totalorder %v2773, 1
  %v2775 = vsel %vm2774, %v1992, -1e+30
  %v2776 = vsel %vm2774, %v1995, -1e+30
  %v2777 = vsel %vm2774, %v2000, -1e+30
  %v2778 = vsel %vm2774, %v2003, -1e+30
  %v2779 = vsel %vm2774, %v2008, -1e+30
  %v2780 = vsel %vm2774, %v2011, -1e+30
  %v2781 = vsel %vm2774, %v2016, -1e+30
  %v2782 = vsel %vm2774, %v2019, -1e+30
  %v2783 = vsel %vm2774, %v2024, -1e+30
  %v2784 = vsel %vm2774, %v2027, -1e+30
  %v2785 = vsel %vm2774, %v2032, -1e+30
  %v2786 = vsel %vm2774, %v2035, -1e+30
  %v2787 = vsel %vm2774, %v2097, -1e+30
  %v2788 = vsel %vm2774, %v2100, -1e+30
  %v2789 = vsel %vm2774, %v2105, -1e+30
  %v2790 = vsel %vm2774, %v2108, -1e+30
  %v2791 = vsel %vm2774, %v2113, -1e+30
  %v2792 = vsel %vm2774, %v2116, -1e+30
  %v2793 = vsel %vm2774, %v2121, -1e+30
  %v2794 = vsel %vm2774, %v2124, -1e+30
  %v2795 = vsel %vm2774, %v2129, -1e+30
  %v2796 = vsel %vm2774, %v2132, -1e+30
  %v2797 = vsel %vm2774, %v2137, -1e+30
  %v2798 = vsel %vm2774, %v2140, -1e+30
  %v2799 = vsel %vm2774, %v2202, -1e+30
  %v2800 = vsel %vm2774, %v2205, -1e+30
  %v2801 = vsel %vm2774, %v2210, -1e+30
  %v2802 = vsel %vm2774, %v2213, -1e+30
  %v2803 = vsel %vm2774, %v2218, -1e+30
  %v2804 = vsel %vm2774, %v2221, -1e+30
  %v2805 = vsel %vm2774, %v2226, -1e+30
  %v2806 = vsel %vm2774, %v2229, -1e+30
  %v2807 = vsel %vm2774, %v2234, -1e+30
  %v2808 = vsel %vm2774, %v2237, -1e+30
  %v2809 = vsel %vm2774, %v2242, -1e+30
  %v2810 = vsel %vm2774, %v2245, -1e+30
  %v2811 = vsel %vm2774, %v2307, -1e+30
  %v2812 = vsel %vm2774, %v2310, -1e+30
  %v2813 = vsel %vm2774, %v2315, -1e+30
  %v2814 = vsel %vm2774, %v2318, -1e+30
  %v2815 = vsel %vm2774, %v2323, -1e+30
  %v2816 = vsel %vm2774, %v2326, -1e+30
  %v2817 = vsel %vm2774, %v2331, -1e+30
  %v2818 = vsel %vm2774, %v2334, -1e+30
  %v2819 = vsel %vm2774, %v2339, -1e+30
  %v2820 = vsel %vm2774, %v2342, -1e+30
  %v2821 = vsel %vm2774, %v2347, -1e+30
  %v2822 = vsel %vm2774, %v2350, -1e+30
  %v2823 = vsel %vm2774, %v2412, -1e+30
  %v2824 = vsel %vm2774, %v2415, -1e+30
  %v2825 = vsel %vm2774, %v2420, -1e+30
  %v2826 = vsel %vm2774, %v2423, -1e+30
  %v2827 = vsel %vm2774, %v2428, -1e+30
  %v2828 = vsel %vm2774, %v2431, -1e+30
  %v2829 = vsel %vm2774, %v2436, -1e+30
  %v2830 = vsel %vm2774, %v2439, -1e+30
  %v2831 = vsel %vm2774, %v2444, -1e+30
  %v2832 = vsel %vm2774, %v2447, -1e+30
  %v2833 = vsel %vm2774, %v2452, -1e+30
  %v2834 = vsel %vm2774, %v2455, -1e+30
  %v2835 = vsel %vm2774, %v2517, -1e+30
  %v2836 = vsel %vm2774, %v2520, -1e+30
  %v2837 = vsel %vm2774, %v2525, -1e+30
  %v2838 = vsel %vm2774, %v2528, -1e+30
  %v2839 = vsel %vm2774, %v2533, -1e+30
  %v2840 = vsel %vm2774, %v2536, -1e+30
  %v2841 = vsel %vm2774, %v2541, -1e+30
  %v2842 = vsel %vm2774, %v2544, -1e+30
  %v2843 = vsel %vm2774, %v2549, -1e+30
  %v2844 = vsel %vm2774, %v2552, -1e+30
  %v2845 = vsel %vm2774, %v2557, -1e+30
  %v2846 = vsel %vm2774, %v2560, -1e+30
  %v2847 = vsel %vm2774, %v2622, -1e+30
  %v2848 = vsel %vm2774, %v2625, -1e+30
  %v2849 = vsel %vm2774, %v2630, -1e+30
  %v2850 = vsel %vm2774, %v2633, -1e+30
  %v2851 = vsel %vm2774, %v2638, -1e+30
  %v2852 = vsel %vm2774, %v2641, -1e+30
  %v2853 = vsel %vm2774, %v2646, -1e+30
  %v2854 = vsel %vm2774, %v2649, -1e+30
  %v2855 = vsel %vm2774, %v2654, -1e+30
  %v2856 = vsel %vm2774, %v2657, -1e+30
  %v2857 = vsel %vm2774, %v2662, -1e+30
  %v2858 = vsel %vm2774, %v2665, -1e+30
  %v2859 = vsel %vm2774, %v2727, -1e+30
  %v2860 = vsel %vm2774, %v2730, -1e+30
  %v2861 = vsel %vm2774, %v2735, -1e+30
  %v2862 = vsel %vm2774, %v2738, -1e+30
  %v2863 = vsel %vm2774, %v2743, -1e+30
  %v2864 = vsel %vm2774, %v2746, -1e+30
  %v2865 = vsel %vm2774, %v2751, -1e+30
  %v2866 = vsel %vm2774, %v2754, -1e+30
  %v2867 = vsel %vm2774, %v2759, -1e+30
  %v2868 = vsel %vm2774, %v2762, -1e+30
  %v2869 = vsel %vm2774, %v2767, -1e+30
  %v2870 = vsel %vm2774, %v2770, -1e+30
  %vm2871 = vcmask 195584
  %v2872 = vsel %vm2871, %v2775, -inf
  %2873 = vmax.xlane.f32.xlu0 %v2872
  %v2874 = vpop.xlane.xlu0 %2873
  %v2875 = vsel %vm2871, %v2776, -inf
  %2876 = vmax.xlane.f32.xlu0 %v2875
  %v2877 = vpop.xlane.xlu0 %2876
  %v2878 = vsel %vm2871, %v2777, -inf
  %2879 = vmax.xlane.f32.xlu0 %v2878
  %v2880 = vpop.xlane.xlu0 %2879
  %v2881 = vsel %vm2871, %v2778, -inf
  %2882 = vmax.xlane.f32.xlu0 %v2881
  %v2883 = vpop.xlane.xlu0 %2882
  %v2884 = vsel %vm2871, %v2779, -inf
  %2885 = vmax.xlane.f32.xlu0 %v2884
  %v2886 = vpop.xlane.xlu0 %2885
  %v2887 = vsel %vm2871, %v2780, -inf
  %2888 = vmax.xlane.f32.xlu0 %v2887
  %v2889 = vpop.xlane.xlu0 %2888
  %v2890 = vsel %vm2871, %v2781, -inf
  %2891 = vmax.xlane.f32.xlu0 %v2890
  %v2892 = vpop.xlane.xlu0 %2891
  %v2893 = vsel %vm2871, %v2782, -inf
  %2894 = vmax.xlane.f32.xlu0 %v2893
  %v2895 = vpop.xlane.xlu0 %2894
  %v2896 = vsel %vm2871, %v2783, -inf
  %2897 = vmax.xlane.f32.xlu0 %v2896
  %v2898 = vpop.xlane.xlu0 %2897
  %v2899 = vsel %vm2871, %v2784, -inf
  %2900 = vmax.xlane.f32.xlu0 %v2899
  %v2901 = vpop.xlane.xlu0 %2900
  %v2902 = vsel %vm2871, %v2785, -inf
  %2903 = vmax.xlane.f32.xlu0 %v2902
  %v2904 = vpop.xlane.xlu0 %2903
  %v2905 = vsel %vm2871, %v2786, -inf
  %2906 = vmax.xlane.f32.xlu0 %v2905
  %v2907 = vpop.xlane.xlu0 %2906
  %v2908 = vsel %vm2871, %v2787, -inf
  %2909 = vmax.xlane.f32.xlu0 %v2908
  %v2910 = vpop.xlane.xlu0 %2909
  %v2911 = vsel %vm2871, %v2788, -inf
  %2912 = vmax.xlane.f32.xlu0 %v2911
  %v2913 = vpop.xlane.xlu0 %2912
  %v2914 = vsel %vm2871, %v2789, -inf
  %2915 = vmax.xlane.f32.xlu0 %v2914
  %v2916 = vpop.xlane.xlu0 %2915
  %v2917 = vsel %vm2871, %v2790, -inf
  %2918 = vmax.xlane.f32.xlu0 %v2917
  %v2919 = vpop.xlane.xlu0 %2918
  %v2920 = vsel %vm2871, %v2791, -inf
  %2921 = vmax.xlane.f32.xlu0 %v2920
  %v2922 = vpop.xlane.xlu0 %2921
  %v2923 = vsel %vm2871, %v2792, -inf
  %2924 = vmax.xlane.f32.xlu0 %v2923
  %v2925 = vpop.xlane.xlu0 %2924
  %v2926 = vsel %vm2871, %v2793, -inf
  %2927 = vmax.xlane.f32.xlu0 %v2926
  %v2928 = vpop.xlane.xlu0 %2927
  %v2929 = vsel %vm2871, %v2794, -inf
  %2930 = vmax.xlane.f32.xlu0 %v2929
  %v2931 = vpop.xlane.xlu0 %2930
  %v2932 = vsel %vm2871, %v2795, -inf
  %2933 = vmax.xlane.f32.xlu0 %v2932
  %v2934 = vpop.xlane.xlu0 %2933
  %v2935 = vsel %vm2871, %v2796, -inf
  %2936 = vmax.xlane.f32.xlu0 %v2935
  %v2937 = vpop.xlane.xlu0 %2936
  %v2938 = vsel %vm2871, %v2797, -inf
  %2939 = vmax.xlane.f32.xlu0 %v2938
  %v2940 = vpop.xlane.xlu0 %2939
  %v2941 = vsel %vm2871, %v2798, -inf
  %2942 = vmax.xlane.f32.xlu0 %v2941
  %v2943 = vpop.xlane.xlu0 %2942
  %v2944 = vsel %vm2871, %v2799, -inf
  %2945 = vmax.xlane.f32.xlu0 %v2944
  %v2946 = vpop.xlane.xlu0 %2945
  %v2947 = vsel %vm2871, %v2800, -inf
  %2948 = vmax.xlane.f32.xlu0 %v2947
  %v2949 = vpop.xlane.xlu0 %2948
  %v2950 = vsel %vm2871, %v2801, -inf
  %2951 = vmax.xlane.f32.xlu0 %v2950
  %v2952 = vpop.xlane.xlu0 %2951
  %v2953 = vsel %vm2871, %v2802, -inf
  %2954 = vmax.xlane.f32.xlu0 %v2953
  %v2955 = vpop.xlane.xlu0 %2954
  %v2956 = vsel %vm2871, %v2803, -inf
  %2957 = vmax.xlane.f32.xlu0 %v2956
  %v2958 = vpop.xlane.xlu0 %2957
  %v2959 = vsel %vm2871, %v2804, -inf
  %2960 = vmax.xlane.f32.xlu0 %v2959
  %v2961 = vpop.xlane.xlu0 %2960
  %v2962 = vsel %vm2871, %v2805, -inf
  %2963 = vmax.xlane.f32.xlu0 %v2962
  %v2964 = vpop.xlane.xlu0 %2963
  %v2965 = vsel %vm2871, %v2806, -inf
  %2966 = vmax.xlane.f32.xlu0 %v2965
  %v2967 = vpop.xlane.xlu0 %2966
  %v2968 = vsel %vm2871, %v2807, -inf
  %2969 = vmax.xlane.f32.xlu0 %v2968
  %v2970 = vpop.xlane.xlu0 %2969
  %v2971 = vsel %vm2871, %v2808, -inf
  %2972 = vmax.xlane.f32.xlu0 %v2971
  %v2973 = vpop.xlane.xlu0 %2972
  %v2974 = vsel %vm2871, %v2809, -inf
  %2975 = vmax.xlane.f32.xlu0 %v2974
  %v2976 = vpop.xlane.xlu0 %2975
  %v2977 = vsel %vm2871, %v2810, -inf
  %2978 = vmax.xlane.f32.xlu0 %v2977
  %v2979 = vpop.xlane.xlu0 %2978
  %v2980 = vsel %vm2871, %v2811, -inf
  %2981 = vmax.xlane.f32.xlu0 %v2980
  %v2982 = vpop.xlane.xlu0 %2981
  %v2983 = vsel %vm2871, %v2812, -inf
  %2984 = vmax.xlane.f32.xlu0 %v2983
  %v2985 = vpop.xlane.xlu0 %2984
  %v2986 = vsel %vm2871, %v2813, -inf
  %2987 = vmax.xlane.f32.xlu0 %v2986
  %v2988 = vpop.xlane.xlu0 %2987
  %v2989 = vsel %vm2871, %v2814, -inf
  %2990 = vmax.xlane.f32.xlu0 %v2989
  %v2991 = vpop.xlane.xlu0 %2990
  %v2992 = vsel %vm2871, %v2815, -inf
  %2993 = vmax.xlane.f32.xlu0 %v2992
  %v2994 = vpop.xlane.xlu0 %2993
  %v2995 = vsel %vm2871, %v2816, -inf
  %2996 = vmax.xlane.f32.xlu0 %v2995
  %v2997 = vpop.xlane.xlu0 %2996
  %v2998 = vsel %vm2871, %v2817, -inf
  %2999 = vmax.xlane.f32.xlu0 %v2998
  %v3000 = vpop.xlane.xlu0 %2999
  %v3001 = vsel %vm2871, %v2818, -inf
  %3002 = vmax.xlane.f32.xlu0 %v3001
  %v3003 = vpop.xlane.xlu0 %3002
  %v3004 = vsel %vm2871, %v2819, -inf
  %3005 = vmax.xlane.f32.xlu0 %v3004
  %v3006 = vpop.xlane.xlu0 %3005
  %v3007 = vsel %vm2871, %v2820, -inf
  %3008 = vmax.xlane.f32.xlu0 %v3007
  %v3009 = vpop.xlane.xlu0 %3008
  %v3010 = vsel %vm2871, %v2821, -inf
  %3011 = vmax.xlane.f32.xlu0 %v3010
  %v3012 = vpop.xlane.xlu0 %3011
  %v3013 = vsel %vm2871, %v2822, -inf
  %3014 = vmax.xlane.f32.xlu0 %v3013
  %v3015 = vpop.xlane.xlu0 %3014
  %v3016 = vsel %vm2871, %v2823, -inf
  %3017 = vmax.xlane.f32.xlu0 %v3016
  %v3018 = vpop.xlane.xlu0 %3017
  %v3019 = vsel %vm2871, %v2824, -inf
  %3020 = vmax.xlane.f32.xlu0 %v3019
  %v3021 = vpop.xlane.xlu0 %3020
  %v3022 = vsel %vm2871, %v2825, -inf
  %3023 = vmax.xlane.f32.xlu0 %v3022
  %v3024 = vpop.xlane.xlu0 %3023
  %v3025 = vsel %vm2871, %v2826, -inf
  %3026 = vmax.xlane.f32.xlu0 %v3025
  %v3027 = vpop.xlane.xlu0 %3026
  %v3028 = vsel %vm2871, %v2827, -inf
  %3029 = vmax.xlane.f32.xlu0 %v3028
  %v3030 = vpop.xlane.xlu0 %3029
  %v3031 = vsel %vm2871, %v2828, -inf
  %3032 = vmax.xlane.f32.xlu0 %v3031
  %v3033 = vpop.xlane.xlu0 %3032
  %v3034 = vsel %vm2871, %v2829, -inf
  %3035 = vmax.xlane.f32.xlu0 %v3034
  %v3036 = vpop.xlane.xlu0 %3035
  %v3037 = vsel %vm2871, %v2830, -inf
  %3038 = vmax.xlane.f32.xlu0 %v3037
  %v3039 = vpop.xlane.xlu0 %3038
  %v3040 = vsel %vm2871, %v2831, -inf
  %3041 = vmax.xlane.f32.xlu0 %v3040
  %v3042 = vpop.xlane.xlu0 %3041
  %v3043 = vsel %vm2871, %v2832, -inf
  %3044 = vmax.xlane.f32.xlu0 %v3043
  %v3045 = vpop.xlane.xlu0 %3044
  %v3046 = vsel %vm2871, %v2833, -inf
  %3047 = vmax.xlane.f32.xlu0 %v3046
  %v3048 = vpop.xlane.xlu0 %3047
  %v3049 = vsel %vm2871, %v2834, -inf
  %3050 = vmax.xlane.f32.xlu0 %v3049
  %v3051 = vpop.xlane.xlu0 %3050
  %v3052 = vsel %vm2871, %v2835, -inf
  %3053 = vmax.xlane.f32.xlu0 %v3052
  %v3054 = vpop.xlane.xlu0 %3053
  %v3055 = vsel %vm2871, %v2836, -inf
  %3056 = vmax.xlane.f32.xlu0 %v3055
  %v3057 = vpop.xlane.xlu0 %3056
  %v3058 = vsel %vm2871, %v2837, -inf
  %3059 = vmax.xlane.f32.xlu0 %v3058
  %v3060 = vpop.xlane.xlu0 %3059
  %v3061 = vsel %vm2871, %v2838, -inf
  %3062 = vmax.xlane.f32.xlu0 %v3061
  %v3063 = vpop.xlane.xlu0 %3062
  %v3064 = vsel %vm2871, %v2839, -inf
  %3065 = vmax.xlane.f32.xlu0 %v3064
  %v3066 = vpop.xlane.xlu0 %3065
  %v3067 = vsel %vm2871, %v2840, -inf
  %3068 = vmax.xlane.f32.xlu0 %v3067
  %v3069 = vpop.xlane.xlu0 %3068
  %v3070 = vsel %vm2871, %v2841, -inf
  %3071 = vmax.xlane.f32.xlu0 %v3070
  %v3072 = vpop.xlane.xlu0 %3071
  %v3073 = vsel %vm2871, %v2842, -inf
  %3074 = vmax.xlane.f32.xlu0 %v3073
  %v3075 = vpop.xlane.xlu0 %3074
  %v3076 = vsel %vm2871, %v2843, -inf
  %3077 = vmax.xlane.f32.xlu0 %v3076
  %v3078 = vpop.xlane.xlu0 %3077
  %v3079 = vsel %vm2871, %v2844, -inf
  %3080 = vmax.xlane.f32.xlu0 %v3079
  %v3081 = vpop.xlane.xlu0 %3080
  %v3082 = vsel %vm2871, %v2845, -inf
  %3083 = vmax.xlane.f32.xlu0 %v3082
  %v3084 = vpop.xlane.xlu0 %3083
  %v3085 = vsel %vm2871, %v2846, -inf
  %3086 = vmax.xlane.f32.xlu0 %v3085
  %v3087 = vpop.xlane.xlu0 %3086
  %v3088 = vsel %vm2871, %v2847, -inf
  %3089 = vmax.xlane.f32.xlu0 %v3088
  %v3090 = vpop.xlane.xlu0 %3089
  %v3091 = vsel %vm2871, %v2848, -inf
  %3092 = vmax.xlane.f32.xlu0 %v3091
  %v3093 = vpop.xlane.xlu0 %3092
  %v3094 = vsel %vm2871, %v2849, -inf
  %3095 = vmax.xlane.f32.xlu0 %v3094
  %v3096 = vpop.xlane.xlu0 %3095
  %v3097 = vsel %vm2871, %v2850, -inf
  %3098 = vmax.xlane.f32.xlu0 %v3097
  %v3099 = vpop.xlane.xlu0 %3098
  %v3100 = vsel %vm2871, %v2851, -inf
  %3101 = vmax.xlane.f32.xlu0 %v3100
  %v3102 = vpop.xlane.xlu0 %3101
  %v3103 = vsel %vm2871, %v2852, -inf
  %3104 = vmax.xlane.f32.xlu0 %v3103
  %v3105 = vpop.xlane.xlu0 %3104
  %v3106 = vsel %vm2871, %v2853, -inf
  %3107 = vmax.xlane.f32.xlu0 %v3106
  %v3108 = vpop.xlane.xlu0 %3107
  %v3109 = vsel %vm2871, %v2854, -inf
  %3110 = vmax.xlane.f32.xlu0 %v3109
  %v3111 = vpop.xlane.xlu0 %3110
  %v3112 = vsel %vm2871, %v2855, -inf
  %3113 = vmax.xlane.f32.xlu0 %v3112
  %v3114 = vpop.xlane.xlu0 %3113
  %v3115 = vsel %vm2871, %v2856, -inf
  %3116 = vmax.xlane.f32.xlu0 %v3115
  %v3117 = vpop.xlane.xlu0 %3116
  %v3118 = vsel %vm2871, %v2857, -inf
  %3119 = vmax.xlane.f32.xlu0 %v3118
  %v3120 = vpop.xlane.xlu0 %3119
  %v3121 = vsel %vm2871, %v2858, -inf
  %3122 = vmax.xlane.f32.xlu0 %v3121
  %v3123 = vpop.xlane.xlu0 %3122
  %v3124 = vsel %vm2871, %v2859, -inf
  %3125 = vmax.xlane.f32.xlu0 %v3124
  %v3126 = vpop.xlane.xlu0 %3125
  %v3127 = vsel %vm2871, %v2860, -inf
  %3128 = vmax.xlane.f32.xlu0 %v3127
  %v3129 = vpop.xlane.xlu0 %3128
  %v3130 = vsel %vm2871, %v2861, -inf
  %3131 = vmax.xlane.f32.xlu0 %v3130
  %v3132 = vpop.xlane.xlu0 %3131
  %v3133 = vsel %vm2871, %v2862, -inf
  %3134 = vmax.xlane.f32.xlu0 %v3133
  %v3135 = vpop.xlane.xlu0 %3134
  %v3136 = vsel %vm2871, %v2863, -inf
  %3137 = vmax.xlane.f32.xlu0 %v3136
  %v3138 = vpop.xlane.xlu0 %3137
  %v3139 = vsel %vm2871, %v2864, -inf
  %3140 = vmax.xlane.f32.xlu0 %v3139
  %v3141 = vpop.xlane.xlu0 %3140
  %v3142 = vsel %vm2871, %v2865, -inf
  %3143 = vmax.xlane.f32.xlu0 %v3142
  %v3144 = vpop.xlane.xlu0 %3143
  %v3145 = vsel %vm2871, %v2866, -inf
  %3146 = vmax.xlane.f32.xlu0 %v3145
  %v3147 = vpop.xlane.xlu0 %3146
  %v3148 = vsel %vm2871, %v2867, -inf
  %3149 = vmax.xlane.f32.xlu0 %v3148
  %v3150 = vpop.xlane.xlu0 %3149
  %v3151 = vsel %vm2871, %v2868, -inf
  %3152 = vmax.xlane.f32.xlu0 %v3151
  %v3153 = vpop.xlane.xlu0 %3152
  %v3154 = vsel %vm2871, %v2869, -inf
  %3155 = vmax.xlane.f32.xlu0 %v3154
  %v3156 = vpop.xlane.xlu0 %3155
  %v3157 = vsel %vm2871, %v2870, -inf
  %3158 = vmax.xlane.f32.xlu0 %v3157
  %v3159 = vpop.xlane.xlu0 %3158
  %v3160 = vsub.f32 %v2775, %v2874
  %v3161 = vsub.f32 %v2776, %v2877
  %v3162 = vsub.f32 %v2777, %v2880
  %v3163 = vsub.f32 %v2778, %v2883
  %v3164 = vsub.f32 %v2779, %v2886
  %v3165 = vsub.f32 %v2780, %v2889
  %v3166 = vsub.f32 %v2781, %v2892
  %v3167 = vsub.f32 %v2782, %v2895
  %v3168 = vsub.f32 %v2783, %v2898
  %v3169 = vsub.f32 %v2784, %v2901
  %v3170 = vsub.f32 %v2785, %v2904
  %v3171 = vsub.f32 %v2786, %v2907
  %v3172 = vsub.f32 %v2787, %v2910
  %v3173 = vsub.f32 %v2788, %v2913
  %v3174 = vsub.f32 %v2789, %v2916
  %v3175 = vsub.f32 %v2790, %v2919
  %v3176 = vsub.f32 %v2791, %v2922
  %v3177 = vsub.f32 %v2792, %v2925
  %v3178 = vsub.f32 %v2793, %v2928
  %v3179 = vsub.f32 %v2794, %v2931
  %v3180 = vsub.f32 %v2795, %v2934
  %v3181 = vsub.f32 %v2796, %v2937
  %v3182 = vsub.f32 %v2797, %v2940
  %v3183 = vsub.f32 %v2798, %v2943
  %v3184 = vsub.f32 %v2799, %v2946
  %v3185 = vsub.f32 %v2800, %v2949
  %v3186 = vsub.f32 %v2801, %v2952
  %v3187 = vsub.f32 %v2802, %v2955
  %v3188 = vsub.f32 %v2803, %v2958
  %v3189 = vsub.f32 %v2804, %v2961
  %v3190 = vsub.f32 %v2805, %v2964
  %v3191 = vsub.f32 %v2806, %v2967
  %v3192 = vsub.f32 %v2807, %v2970
  %v3193 = vsub.f32 %v2808, %v2973
  %v3194 = vsub.f32 %v2809, %v2976
  %v3195 = vsub.f32 %v2810, %v2979
  %v3196 = vsub.f32 %v2811, %v2982
  %v3197 = vsub.f32 %v2812, %v2985
  %v3198 = vsub.f32 %v2813, %v2988
  %v3199 = vsub.f32 %v2814, %v2991
  %v3200 = vsub.f32 %v2815, %v2994
  %v3201 = vsub.f32 %v2816, %v2997
  %v3202 = vsub.f32 %v2817, %v3000
  %v3203 = vsub.f32 %v2818, %v3003
  %v3204 = vsub.f32 %v2819, %v3006
  %v3205 = vsub.f32 %v2820, %v3009
  %v3206 = vsub.f32 %v2821, %v3012
  %v3207 = vsub.f32 %v2822, %v3015
  %v3208 = vsub.f32 %v2823, %v3018
  %v3209 = vsub.f32 %v2824, %v3021
  %v3210 = vsub.f32 %v2825, %v3024
  %v3211 = vsub.f32 %v2826, %v3027
  %v3212 = vsub.f32 %v2827, %v3030
  %v3213 = vsub.f32 %v2828, %v3033
  %v3214 = vsub.f32 %v2829, %v3036
  %v3215 = vsub.f32 %v2830, %v3039
  %v3216 = vsub.f32 %v2831, %v3042
  %v3217 = vsub.f32 %v2832, %v3045
  %v3218 = vsub.f32 %v2833, %v3048
  %v3219 = vsub.f32 %v2834, %v3051
  %v3220 = vsub.f32 %v2835, %v3054
  %v3221 = vsub.f32 %v2836, %v3057
  %v3222 = vsub.f32 %v2837, %v3060
  %v3223 = vsub.f32 %v2838, %v3063
  %v3224 = vsub.f32 %v2839, %v3066
  %v3225 = vsub.f32 %v2840, %v3069
  %v3226 = vsub.f32 %v2841, %v3072
  %v3227 = vsub.f32 %v2842, %v3075
  %v3228 = vsub.f32 %v2843, %v3078
  %v3229 = vsub.f32 %v2844, %v3081
  %v3230 = vsub.f32 %v2845, %v3084
  %v3231 = vsub.f32 %v2846, %v3087
  %v3232 = vsub.f32 %v2847, %v3090
  %v3233 = vsub.f32 %v2848, %v3093
  %v3234 = vsub.f32 %v2849, %v3096
  %v3235 = vsub.f32 %v2850, %v3099
  %v3236 = vsub.f32 %v2851, %v3102
  %v3237 = vsub.f32 %v2852, %v3105
  %v3238 = vsub.f32 %v2853, %v3108
  %v3239 = vsub.f32 %v2854, %v3111
  %v3240 = vsub.f32 %v2855, %v3114
  %v3241 = vsub.f32 %v2856, %v3117
  %v3242 = vsub.f32 %v2857, %v3120
  %v3243 = vsub.f32 %v2858, %v3123
  %v3244 = vsub.f32 %v2859, %v3126
  %v3245 = vsub.f32 %v2860, %v3129
  %v3246 = vsub.f32 %v2861, %v3132
  %v3247 = vsub.f32 %v2862, %v3135
  %v3248 = vsub.f32 %v2863, %v3138
  %v3249 = vsub.f32 %v2864, %v3141
  %v3250 = vsub.f32 %v2865, %v3144
  %v3251 = vsub.f32 %v2866, %v3147
  %v3252 = vsub.f32 %v2867, %v3150
  %v3253 = vsub.f32 %v2868, %v3153
  %v3254 = vsub.f32 %v2869, %v3156
  %v3255 = vsub.f32 %v2870, %v3159
  %v3256 = vmul.f32 %v3160, 1.442695
  %v3257 = vpow.pop %v3256
  %v3258 = vmul.f32 %v3161, 1.442695
  %v3259 = vpow.pop %v3258
  %v3260 = vmul.f32 %v3162, 1.442695
  %v3261 = vpow.pop %v3260
  %v3262 = vmul.f32 %v3163, 1.442695
  %v3263 = vpow.pop %v3262
  %v3264 = vmul.f32 %v3164, 1.442695
  %v3265 = vpow.pop %v3264
  %v3266 = vmul.f32 %v3165, 1.442695
  %v3267 = vpow.pop %v3266
  %v3268 = vmul.f32 %v3166, 1.442695
  %v3269 = vpow.pop %v3268
  %v3270 = vmul.f32 %v3167, 1.442695
  %v3271 = vpow.pop %v3270
  %v3272 = vmul.f32 %v3168, 1.442695
  %v3273 = vpow.pop %v3272
  %v3274 = vmul.f32 %v3169, 1.442695
  %v3275 = vpow.pop %v3274
  %v3276 = vmul.f32 %v3170, 1.442695
  %v3277 = vpow.pop %v3276
  %v3278 = vmul.f32 %v3171, 1.442695
  %v3279 = vpow.pop %v3278
  %v3280 = vmul.f32 %v3172, 1.442695
  %v3281 = vpow.pop %v3280
  %v3282 = vmul.f32 %v3173, 1.442695
  %v3283 = vpow.pop %v3282
  %v3284 = vmul.f32 %v3174, 1.442695
  %v3285 = vpow.pop %v3284
  %v3286 = vmul.f32 %v3175, 1.442695
  %v3287 = vpow.pop %v3286
  %v3288 = vmul.f32 %v3176, 1.442695
  %v3289 = vpow.pop %v3288
  %v3290 = vmul.f32 %v3177, 1.442695
  %v3291 = vpow.pop %v3290
  %v3292 = vmul.f32 %v3178, 1.442695
  %v3293 = vpow.pop %v3292
  %v3294 = vmul.f32 %v3179, 1.442695
  %v3295 = vpow.pop %v3294
  %v3296 = vmul.f32 %v3180, 1.442695
  %v3297 = vpow.pop %v3296
  %v3298 = vmul.f32 %v3181, 1.442695
  %v3299 = vpow.pop %v3298
  %v3300 = vmul.f32 %v3182, 1.442695
  %v3301 = vpow.pop %v3300
  %v3302 = vmul.f32 %v3183, 1.442695
  %v3303 = vpow.pop %v3302
  %v3304 = vmul.f32 %v3184, 1.442695
  %v3305 = vpow.pop %v3304
  %v3306 = vmul.f32 %v3185, 1.442695
  %v3307 = vpow.pop %v3306
  %v3308 = vmul.f32 %v3186, 1.442695
  %v3309 = vpow.pop %v3308
  %v3310 = vmul.f32 %v3187, 1.442695
  %v3311 = vpow.pop %v3310
  %v3312 = vmul.f32 %v3188, 1.442695
  %v3313 = vpow.pop %v3312
  %v3314 = vmul.f32 %v3189, 1.442695
  %v3315 = vpow.pop %v3314
  %v3316 = vmul.f32 %v3190, 1.442695
  %v3317 = vpow.pop %v3316
  %v3318 = vmul.f32 %v3191, 1.442695
  %v3319 = vpow.pop %v3318
  %v3320 = vmul.f32 %v3192, 1.442695
  %v3321 = vpow.pop %v3320
  %v3322 = vmul.f32 %v3193, 1.442695
  %v3323 = vpow.pop %v3322
  %v3324 = vmul.f32 %v3194, 1.442695
  %v3325 = vpow.pop %v3324
  %v3326 = vmul.f32 %v3195, 1.442695
  %v3327 = vpow.pop %v3326
  %v3328 = vmul.f32 %v3196, 1.442695
  %v3329 = vpow.pop %v3328
  %v3330 = vmul.f32 %v3197, 1.442695
  %v3331 = vpow.pop %v3330
  %v3332 = vmul.f32 %v3198, 1.442695
  %v3333 = vpow.pop %v3332
  %v3334 = vmul.f32 %v3199, 1.442695
  %v3335 = vpow.pop %v3334
  %v3336 = vmul.f32 %v3200, 1.442695
  %v3337 = vpow.pop %v3336
  %v3338 = vmul.f32 %v3201, 1.442695
  %v3339 = vpow.pop %v3338
  %v3340 = vmul.f32 %v3202, 1.442695
  %v3341 = vpow.pop %v3340
  %v3342 = vmul.f32 %v3203, 1.442695
  %v3343 = vpow.pop %v3342
  %v3344 = vmul.f32 %v3204, 1.442695
  %v3345 = vpow.pop %v3344
  %v3346 = vmul.f32 %v3205, 1.442695
  %v3347 = vpow.pop %v3346
  %v3348 = vmul.f32 %v3206, 1.442695
  %v3349 = vpow.pop %v3348
  %v3350 = vmul.f32 %v3207, 1.442695
  %v3351 = vpow.pop %v3350
  %v3352 = vmul.f32 %v3208, 1.442695
  %v3353 = vpow.pop %v3352
  %v3354 = vmul.f32 %v3209, 1.442695
  %v3355 = vpow.pop %v3354
  %v3356 = vmul.f32 %v3210, 1.442695
  %v3357 = vpow.pop %v3356
  %v3358 = vmul.f32 %v3211, 1.442695
  %v3359 = vpow.pop %v3358
  %v3360 = vmul.f32 %v3212, 1.442695
  %v3361 = vpow.pop %v3360
  %v3362 = vmul.f32 %v3213, 1.442695
  %v3363 = vpow.pop %v3362
  %v3364 = vmul.f32 %v3214, 1.442695
  %v3365 = vpow.pop %v3364
  %v3366 = vmul.f32 %v3215, 1.442695
  %v3367 = vpow.pop %v3366
  %v3368 = vmul.f32 %v3216, 1.442695
  %v3369 = vpow.pop %v3368
  %v3370 = vmul.f32 %v3217, 1.442695
  %v3371 = vpow.pop %v3370
  %v3372 = vmul.f32 %v3218, 1.442695
  %v3373 = vpow.pop %v3372
  %v3374 = vmul.f32 %v3219, 1.442695
  %v3375 = vpow.pop %v3374
  %v3376 = vmul.f32 %v3220, 1.442695
  %v3377 = vpow.pop %v3376
  %v3378 = vmul.f32 %v3221, 1.442695
  %v3379 = vpow.pop %v3378
  %v3380 = vmul.f32 %v3222, 1.442695
  %v3381 = vpow.pop %v3380
  %v3382 = vmul.f32 %v3223, 1.442695
  %v3383 = vpow.pop %v3382
  %v3384 = vmul.f32 %v3224, 1.442695
  %v3385 = vpow.pop %v3384
  %v3386 = vmul.f32 %v3225, 1.442695
  %v3387 = vpow.pop %v3386
  %v3388 = vmul.f32 %v3226, 1.442695
  %v3389 = vpow.pop %v3388
  %v3390 = vmul.f32 %v3227, 1.442695
  %v3391 = vpow.pop %v3390
  %v3392 = vmul.f32 %v3228, 1.442695
  %v3393 = vpow.pop %v3392
  %v3394 = vmul.f32 %v3229, 1.442695
  %v3395 = vpow.pop %v3394
  %v3396 = vmul.f32 %v3230, 1.442695
  %v3397 = vpow.pop %v3396
  %v3398 = vmul.f32 %v3231, 1.442695
  %v3399 = vpow.pop %v3398
  %v3400 = vmul.f32 %v3232, 1.442695
  %v3401 = vpow.pop %v3400
  %v3402 = vmul.f32 %v3233, 1.442695
  %v3403 = vpow.pop %v3402
  %v3404 = vmul.f32 %v3234, 1.442695
  %v3405 = vpow.pop %v3404
  %v3406 = vmul.f32 %v3235, 1.442695
  %v3407 = vpow.pop %v3406
  %v3408 = vmul.f32 %v3236, 1.442695
  %v3409 = vpow.pop %v3408
  %v3410 = vmul.f32 %v3237, 1.442695
  %v3411 = vpow.pop %v3410
  %v3412 = vmul.f32 %v3238, 1.442695
  %v3413 = vpow.pop %v3412
  %v3414 = vmul.f32 %v3239, 1.442695
  %v3415 = vpow.pop %v3414
  %v3416 = vmul.f32 %v3240, 1.442695
  %v3417 = vpow.pop %v3416
  %v3418 = vmul.f32 %v3241, 1.442695
  %v3419 = vpow.pop %v3418
  %v3420 = vmul.f32 %v3242, 1.442695
  %v3421 = vpow.pop %v3420
  %v3422 = vmul.f32 %v3243, 1.442695
  %v3423 = vpow.pop %v3422
  %v3424 = vmul.f32 %v3244, 1.442695
  %v3425 = vpow.pop %v3424
  %v3426 = vmul.f32 %v3245, 1.442695
  %v3427 = vpow.pop %v3426
  %v3428 = vmul.f32 %v3246, 1.442695
  %v3429 = vpow.pop %v3428
  %v3430 = vmul.f32 %v3247, 1.442695
  %v3431 = vpow.pop %v3430
  %v3432 = vmul.f32 %v3248, 1.442695
  %v3433 = vpow.pop %v3432
  %v3434 = vmul.f32 %v3249, 1.442695
  %v3435 = vpow.pop %v3434
  %v3436 = vmul.f32 %v3250, 1.442695
  %v3437 = vpow.pop %v3436
  %v3438 = vmul.f32 %v3251, 1.442695
  %v3439 = vpow.pop %v3438
  %v3440 = vmul.f32 %v3252, 1.442695
  %v3441 = vpow.pop %v3440
  %v3442 = vmul.f32 %v3253, 1.442695
  %v3443 = vpow.pop %v3442
  %v3444 = vmul.f32 %v3254, 1.442695
  %v3445 = vpow.pop %v3444
  %v3446 = vmul.f32 %v3255, 1.442695
  %v3447 = vpow.pop %v3446
  %v3448 = vsel %vm2871, %v3257, 0.0
  %3449 = vadd.xlane.f32.xlu0 %v3448
  %v3450 = vpop.xlane.xlu0 %3449
  %v3451 = vsel %vm2871, %v3259, 0.0
  %3452 = vadd.xlane.f32.xlu0 %v3451
  %v3453 = vpop.xlane.xlu0 %3452
  %v3454 = vsel %vm2871, %v3261, 0.0
  %3455 = vadd.xlane.f32.xlu0 %v3454
  %v3456 = vpop.xlane.xlu0 %3455
  %v3457 = vsel %vm2871, %v3263, 0.0
  %3458 = vadd.xlane.f32.xlu0 %v3457
  %v3459 = vpop.xlane.xlu0 %3458
  %v3460 = vsel %vm2871, %v3265, 0.0
  %3461 = vadd.xlane.f32.xlu0 %v3460
  %v3462 = vpop.xlane.xlu0 %3461
  %v3463 = vsel %vm2871, %v3267, 0.0
  %3464 = vadd.xlane.f32.xlu0 %v3463
  %v3465 = vpop.xlane.xlu0 %3464
  %v3466 = vsel %vm2871, %v3269, 0.0
  %3467 = vadd.xlane.f32.xlu0 %v3466
  %v3468 = vpop.xlane.xlu0 %3467
  %v3469 = vsel %vm2871, %v3271, 0.0
  %3470 = vadd.xlane.f32.xlu0 %v3469
  %v3471 = vpop.xlane.xlu0 %3470
  %v3472 = vsel %vm2871, %v3273, 0.0
  %3473 = vadd.xlane.f32.xlu0 %v3472
  %v3474 = vpop.xlane.xlu0 %3473
  %v3475 = vsel %vm2871, %v3275, 0.0
  %3476 = vadd.xlane.f32.xlu0 %v3475
  %v3477 = vpop.xlane.xlu0 %3476
  %v3478 = vsel %vm2871, %v3277, 0.0
  %3479 = vadd.xlane.f32.xlu0 %v3478
  %v3480 = vpop.xlane.xlu0 %3479
  %v3481 = vsel %vm2871, %v3279, 0.0
  %3482 = vadd.xlane.f32.xlu0 %v3481
  %v3483 = vpop.xlane.xlu0 %3482
  %v3484 = vsel %vm2871, %v3281, 0.0
  %3485 = vadd.xlane.f32.xlu0 %v3484
  %v3486 = vpop.xlane.xlu0 %3485
  %v3487 = vsel %vm2871, %v3283, 0.0
  %3488 = vadd.xlane.f32.xlu0 %v3487
  %v3489 = vpop.xlane.xlu0 %3488
  %v3490 = vsel %vm2871, %v3285, 0.0
  %3491 = vadd.xlane.f32.xlu0 %v3490
  %v3492 = vpop.xlane.xlu0 %3491
  %v3493 = vsel %vm2871, %v3287, 0.0
  %3494 = vadd.xlane.f32.xlu0 %v3493
  %v3495 = vpop.xlane.xlu0 %3494
  %v3496 = vsel %vm2871, %v3289, 0.0
  %3497 = vadd.xlane.f32.xlu0 %v3496
  %v3498 = vpop.xlane.xlu0 %3497
  %v3499 = vsel %vm2871, %v3291, 0.0
  %3500 = vadd.xlane.f32.xlu0 %v3499
  %v3501 = vpop.xlane.xlu0 %3500
  %v3502 = vsel %vm2871, %v3293, 0.0
  %3503 = vadd.xlane.f32.xlu0 %v3502
  %v3504 = vpop.xlane.xlu0 %3503
  %v3505 = vsel %vm2871, %v3295, 0.0
  %3506 = vadd.xlane.f32.xlu0 %v3505
  %v3507 = vpop.xlane.xlu0 %3506
  %v3508 = vsel %vm2871, %v3297, 0.0
  %3509 = vadd.xlane.f32.xlu0 %v3508
  %v3510 = vpop.xlane.xlu0 %3509
  %v3511 = vsel %vm2871, %v3299, 0.0
  %3512 = vadd.xlane.f32.xlu0 %v3511
  %v3513 = vpop.xlane.xlu0 %3512
  %v3514 = vsel %vm2871, %v3301, 0.0
  %3515 = vadd.xlane.f32.xlu0 %v3514
  %v3516 = vpop.xlane.xlu0 %3515
  %v3517 = vsel %vm2871, %v3303, 0.0
  %3518 = vadd.xlane.f32.xlu0 %v3517
  %v3519 = vpop.xlane.xlu0 %3518
  %v3520 = vsel %vm2871, %v3305, 0.0
  %3521 = vadd.xlane.f32.xlu0 %v3520
  %v3522 = vpop.xlane.xlu0 %3521
  %v3523 = vsel %vm2871, %v3307, 0.0
  %3524 = vadd.xlane.f32.xlu0 %v3523
  %v3525 = vpop.xlane.xlu0 %3524
  %v3526 = vsel %vm2871, %v3309, 0.0
  %3527 = vadd.xlane.f32.xlu0 %v3526
  %v3528 = vpop.xlane.xlu0 %3527
  %v3529 = vsel %vm2871, %v3311, 0.0
  %3530 = vadd.xlane.f32.xlu0 %v3529
  %v3531 = vpop.xlane.xlu0 %3530
  %v3532 = vsel %vm2871, %v3313, 0.0
  %3533 = vadd.xlane.f32.xlu0 %v3532
  %v3534 = vpop.xlane.xlu0 %3533
  %v3535 = vsel %vm2871, %v3315, 0.0
  %3536 = vadd.xlane.f32.xlu0 %v3535
  %v3537 = vpop.xlane.xlu0 %3536
  %v3538 = vsel %vm2871, %v3317, 0.0
  %3539 = vadd.xlane.f32.xlu0 %v3538
  %v3540 = vpop.xlane.xlu0 %3539
  %v3541 = vsel %vm2871, %v3319, 0.0
  %3542 = vadd.xlane.f32.xlu0 %v3541
  %v3543 = vpop.xlane.xlu0 %3542
  %v3544 = vsel %vm2871, %v3321, 0.0
  %3545 = vadd.xlane.f32.xlu0 %v3544
  %v3546 = vpop.xlane.xlu0 %3545
  %v3547 = vsel %vm2871, %v3323, 0.0
  %3548 = vadd.xlane.f32.xlu0 %v3547
  %v3549 = vpop.xlane.xlu0 %3548
  %v3550 = vsel %vm2871, %v3325, 0.0
  %3551 = vadd.xlane.f32.xlu0 %v3550
  %v3552 = vpop.xlane.xlu0 %3551
  %v3553 = vsel %vm2871, %v3327, 0.0
  %3554 = vadd.xlane.f32.xlu0 %v3553
  %v3555 = vpop.xlane.xlu0 %3554
  %v3556 = vsel %vm2871, %v3329, 0.0
  %3557 = vadd.xlane.f32.xlu0 %v3556
  %v3558 = vpop.xlane.xlu0 %3557
  %v3559 = vsel %vm2871, %v3331, 0.0
  %3560 = vadd.xlane.f32.xlu0 %v3559
  %v3561 = vpop.xlane.xlu0 %3560
  %v3562 = vsel %vm2871, %v3333, 0.0
  %3563 = vadd.xlane.f32.xlu0 %v3562
  %v3564 = vpop.xlane.xlu0 %3563
  %v3565 = vsel %vm2871, %v3335, 0.0
  %3566 = vadd.xlane.f32.xlu0 %v3565
  %v3567 = vpop.xlane.xlu0 %3566
  %v3568 = vsel %vm2871, %v3337, 0.0
  %3569 = vadd.xlane.f32.xlu0 %v3568
  %v3570 = vpop.xlane.xlu0 %3569
  %v3571 = vsel %vm2871, %v3339, 0.0
  %3572 = vadd.xlane.f32.xlu0 %v3571
  %v3573 = vpop.xlane.xlu0 %3572
  %v3574 = vsel %vm2871, %v3341, 0.0
  %3575 = vadd.xlane.f32.xlu0 %v3574
  %v3576 = vpop.xlane.xlu0 %3575
  %v3577 = vsel %vm2871, %v3343, 0.0
  %3578 = vadd.xlane.f32.xlu0 %v3577
  %v3579 = vpop.xlane.xlu0 %3578
  %v3580 = vsel %vm2871, %v3345, 0.0
  %3581 = vadd.xlane.f32.xlu0 %v3580
  %v3582 = vpop.xlane.xlu0 %3581
  %v3583 = vsel %vm2871, %v3347, 0.0
  %3584 = vadd.xlane.f32.xlu0 %v3583
  %v3585 = vpop.xlane.xlu0 %3584
  %v3586 = vsel %vm2871, %v3349, 0.0
  %3587 = vadd.xlane.f32.xlu0 %v3586
  %v3588 = vpop.xlane.xlu0 %3587
  %v3589 = vsel %vm2871, %v3351, 0.0
  %3590 = vadd.xlane.f32.xlu0 %v3589
  %v3591 = vpop.xlane.xlu0 %3590
  %v3592 = vsel %vm2871, %v3353, 0.0
  %3593 = vadd.xlane.f32.xlu0 %v3592
  %v3594 = vpop.xlane.xlu0 %3593
  %v3595 = vsel %vm2871, %v3355, 0.0
  %3596 = vadd.xlane.f32.xlu0 %v3595
  %v3597 = vpop.xlane.xlu0 %3596
  %v3598 = vsel %vm2871, %v3357, 0.0
  %3599 = vadd.xlane.f32.xlu0 %v3598
  %v3600 = vpop.xlane.xlu0 %3599
  %v3601 = vsel %vm2871, %v3359, 0.0
  %3602 = vadd.xlane.f32.xlu0 %v3601
  %v3603 = vpop.xlane.xlu0 %3602
  %v3604 = vsel %vm2871, %v3361, 0.0
  %3605 = vadd.xlane.f32.xlu0 %v3604
  %v3606 = vpop.xlane.xlu0 %3605
  %v3607 = vsel %vm2871, %v3363, 0.0
  %3608 = vadd.xlane.f32.xlu0 %v3607
  %v3609 = vpop.xlane.xlu0 %3608
  %v3610 = vsel %vm2871, %v3365, 0.0
  %3611 = vadd.xlane.f32.xlu0 %v3610
  %v3612 = vpop.xlane.xlu0 %3611
  %v3613 = vsel %vm2871, %v3367, 0.0
  %3614 = vadd.xlane.f32.xlu0 %v3613
  %v3615 = vpop.xlane.xlu0 %3614
  %v3616 = vsel %vm2871, %v3369, 0.0
  %3617 = vadd.xlane.f32.xlu0 %v3616
  %v3618 = vpop.xlane.xlu0 %3617
  %v3619 = vsel %vm2871, %v3371, 0.0
  %3620 = vadd.xlane.f32.xlu0 %v3619
  %v3621 = vpop.xlane.xlu0 %3620
  %v3622 = vsel %vm2871, %v3373, 0.0
  %3623 = vadd.xlane.f32.xlu0 %v3622
  %v3624 = vpop.xlane.xlu0 %3623
  %v3625 = vsel %vm2871, %v3375, 0.0
  %3626 = vadd.xlane.f32.xlu0 %v3625
  %v3627 = vpop.xlane.xlu0 %3626
  %v3628 = vsel %vm2871, %v3377, 0.0
  %3629 = vadd.xlane.f32.xlu0 %v3628
  %v3630 = vpop.xlane.xlu0 %3629
  %v3631 = vsel %vm2871, %v3379, 0.0
  %3632 = vadd.xlane.f32.xlu0 %v3631
  %v3633 = vpop.xlane.xlu0 %3632
  %v3634 = vsel %vm2871, %v3381, 0.0
  %3635 = vadd.xlane.f32.xlu0 %v3634
  %v3636 = vpop.xlane.xlu0 %3635
  %v3637 = vsel %vm2871, %v3383, 0.0
  %3638 = vadd.xlane.f32.xlu0 %v3637
  %v3639 = vpop.xlane.xlu0 %3638
  %v3640 = vsel %vm2871, %v3385, 0.0
  %3641 = vadd.xlane.f32.xlu0 %v3640
  %v3642 = vpop.xlane.xlu0 %3641
  %v3643 = vsel %vm2871, %v3387, 0.0
  %3644 = vadd.xlane.f32.xlu0 %v3643
  %v3645 = vpop.xlane.xlu0 %3644
  %v3646 = vsel %vm2871, %v3389, 0.0
  %3647 = vadd.xlane.f32.xlu0 %v3646
  %v3648 = vpop.xlane.xlu0 %3647
  %v3649 = vsel %vm2871, %v3391, 0.0
  %3650 = vadd.xlane.f32.xlu0 %v3649
  %v3651 = vpop.xlane.xlu0 %3650
  %v3652 = vsel %vm2871, %v3393, 0.0
  %3653 = vadd.xlane.f32.xlu0 %v3652
  %v3654 = vpop.xlane.xlu0 %3653
  %v3655 = vsel %vm2871, %v3395, 0.0
  %3656 = vadd.xlane.f32.xlu0 %v3655
  %v3657 = vpop.xlane.xlu0 %3656
  %v3658 = vsel %vm2871, %v3397, 0.0
  %3659 = vadd.xlane.f32.xlu0 %v3658
  %v3660 = vpop.xlane.xlu0 %3659
  %v3661 = vsel %vm2871, %v3399, 0.0
  %3662 = vadd.xlane.f32.xlu0 %v3661
  %v3663 = vpop.xlane.xlu0 %3662
  %v3664 = vsel %vm2871, %v3401, 0.0
  %3665 = vadd.xlane.f32.xlu0 %v3664
  %v3666 = vpop.xlane.xlu0 %3665
  %v3667 = vsel %vm2871, %v3403, 0.0
  %3668 = vadd.xlane.f32.xlu0 %v3667
  %v3669 = vpop.xlane.xlu0 %3668
  %v3670 = vsel %vm2871, %v3405, 0.0
  %3671 = vadd.xlane.f32.xlu0 %v3670
  %v3672 = vpop.xlane.xlu0 %3671
  %v3673 = vsel %vm2871, %v3407, 0.0
  %3674 = vadd.xlane.f32.xlu0 %v3673
  %v3675 = vpop.xlane.xlu0 %3674
  %v3676 = vsel %vm2871, %v3409, 0.0
  %3677 = vadd.xlane.f32.xlu0 %v3676
  %v3678 = vpop.xlane.xlu0 %3677
  %v3679 = vsel %vm2871, %v3411, 0.0
  %3680 = vadd.xlane.f32.xlu0 %v3679
  %v3681 = vpop.xlane.xlu0 %3680
  %v3682 = vsel %vm2871, %v3413, 0.0
  %3683 = vadd.xlane.f32.xlu0 %v3682
  %v3684 = vpop.xlane.xlu0 %3683
  %v3685 = vsel %vm2871, %v3415, 0.0
  %3686 = vadd.xlane.f32.xlu0 %v3685
  %v3687 = vpop.xlane.xlu0 %3686
  %v3688 = vsel %vm2871, %v3417, 0.0
  %3689 = vadd.xlane.f32.xlu0 %v3688
  %v3690 = vpop.xlane.xlu0 %3689
  %v3691 = vsel %vm2871, %v3419, 0.0
  %3692 = vadd.xlane.f32.xlu0 %v3691
  %v3693 = vpop.xlane.xlu0 %3692
  %v3694 = vsel %vm2871, %v3421, 0.0
  %3695 = vadd.xlane.f32.xlu0 %v3694
  %v3696 = vpop.xlane.xlu0 %3695
  %v3697 = vsel %vm2871, %v3423, 0.0
  %3698 = vadd.xlane.f32.xlu0 %v3697
  %v3699 = vpop.xlane.xlu0 %3698
  %v3700 = vsel %vm2871, %v3425, 0.0
  %3701 = vadd.xlane.f32.xlu0 %v3700
  %v3702 = vpop.xlane.xlu0 %3701
  %v3703 = vsel %vm2871, %v3427, 0.0
  %3704 = vadd.xlane.f32.xlu0 %v3703
  %v3705 = vpop.xlane.xlu0 %3704
  %v3706 = vsel %vm2871, %v3429, 0.0
  %3707 = vadd.xlane.f32.xlu0 %v3706
  %v3708 = vpop.xlane.xlu0 %3707
  %v3709 = vsel %vm2871, %v3431, 0.0
  %3710 = vadd.xlane.f32.xlu0 %v3709
  %v3711 = vpop.xlane.xlu0 %3710
  %v3712 = vsel %vm2871, %v3433, 0.0
  %3713 = vadd.xlane.f32.xlu0 %v3712
  %v3714 = vpop.xlane.xlu0 %3713
  %v3715 = vsel %vm2871, %v3435, 0.0
  %3716 = vadd.xlane.f32.xlu0 %v3715
  %v3717 = vpop.xlane.xlu0 %3716
  %v3718 = vsel %vm2871, %v3437, 0.0
  %3719 = vadd.xlane.f32.xlu0 %v3718
  %v3720 = vpop.xlane.xlu0 %3719
  %v3721 = vsel %vm2871, %v3439, 0.0
  %3722 = vadd.xlane.f32.xlu0 %v3721
  %v3723 = vpop.xlane.xlu0 %3722
  %v3724 = vsel %vm2871, %v3441, 0.0
  %3725 = vadd.xlane.f32.xlu0 %v3724
  %v3726 = vpop.xlane.xlu0 %3725
  %v3727 = vsel %vm2871, %v3443, 0.0
  %3728 = vadd.xlane.f32.xlu0 %v3727
  %v3729 = vpop.xlane.xlu0 %3728
  %v3730 = vsel %vm2871, %v3445, 0.0
  %3731 = vadd.xlane.f32.xlu0 %v3730
  %v3732 = vpop.xlane.xlu0 %3731
  %v3733 = vsel %vm2871, %v3447, 0.0
  %3734 = vadd.xlane.f32.xlu0 %v3733
  %v3735 = vpop.xlane.xlu0 %3734
  %v3736 = vrcp.pop %v3450
  %v3737 = vrcp.pop %v3453
  %v3738 = vrcp.pop %v3456
  %v3739 = vrcp.pop %v3459
  %v3740 = vrcp.pop %v3462
  %v3741 = vrcp.pop %v3465
  %v3742 = vrcp.pop %v3468
  %v3743 = vrcp.pop %v3471
  %v3744 = vrcp.pop %v3474
  %v3745 = vrcp.pop %v3477
  %v3746 = vrcp.pop %v3480
  %v3747 = vrcp.pop %v3483
  %v3748 = vrcp.pop %v3486
  %v3749 = vrcp.pop %v3489
  %v3750 = vrcp.pop %v3492
  %v3751 = vrcp.pop %v3495
  %v3752 = vrcp.pop %v3498
  %v3753 = vrcp.pop %v3501
  %v3754 = vrcp.pop %v3504
  %v3755 = vrcp.pop %v3507
  %v3756 = vrcp.pop %v3510
  %v3757 = vrcp.pop %v3513
  %v3758 = vrcp.pop %v3516
  %v3759 = vrcp.pop %v3519
  %v3760 = vrcp.pop %v3522
  %v3761 = vrcp.pop %v3525
  %v3762 = vrcp.pop %v3528
  %v3763 = vrcp.pop %v3531
  %v3764 = vrcp.pop %v3534
  %v3765 = vrcp.pop %v3537
  %v3766 = vrcp.pop %v3540
  %v3767 = vrcp.pop %v3543
  %v3768 = vrcp.pop %v3546
  %v3769 = vrcp.pop %v3549
  %v3770 = vrcp.pop %v3552
  %v3771 = vrcp.pop %v3555
  %v3772 = vrcp.pop %v3558
  %v3773 = vrcp.pop %v3561
  %v3774 = vrcp.pop %v3564
  %v3775 = vrcp.pop %v3567
  %v3776 = vrcp.pop %v3570
  %v3777 = vrcp.pop %v3573
  %v3778 = vrcp.pop %v3576
  %v3779 = vrcp.pop %v3579
  %v3780 = vrcp.pop %v3582
  %v3781 = vrcp.pop %v3585
  %v3782 = vrcp.pop %v3588
  %v3783 = vrcp.pop %v3591
  %v3784 = vrcp.pop %v3594
  %v3785 = vrcp.pop %v3597
  %v3786 = vrcp.pop %v3600
  %v3787 = vrcp.pop %v3603
  %v3788 = vrcp.pop %v3606
  %v3789 = vrcp.pop %v3609
  %v3790 = vrcp.pop %v3612
  %v3791 = vrcp.pop %v3615
  %v3792 = vrcp.pop %v3618
  %v3793 = vrcp.pop %v3621
  %v3794 = vrcp.pop %v3624
  %v3795 = vrcp.pop %v3627
  %v3796 = vrcp.pop %v3630
  %v3797 = vrcp.pop %v3633
  %v3798 = vrcp.pop %v3636
  %v3799 = vrcp.pop %v3639
  %v3800 = vrcp.pop %v3642
  %v3801 = vrcp.pop %v3645
  %v3802 = vrcp.pop %v3648
  %v3803 = vrcp.pop %v3651
  %v3804 = vrcp.pop %v3654
  %v3805 = vrcp.pop %v3657
  %v3806 = vrcp.pop %v3660
  %v3807 = vrcp.pop %v3663
  %v3808 = vrcp.pop %v3666
  %v3809 = vrcp.pop %v3669
  %v3810 = vrcp.pop %v3672
  %v3811 = vrcp.pop %v3675
  %v3812 = vrcp.pop %v3678
  %v3813 = vrcp.pop %v3681
  %v3814 = vrcp.pop %v3684
  %v3815 = vrcp.pop %v3687
  %v3816 = vrcp.pop %v3690
  %v3817 = vrcp.pop %v3693
  %v3818 = vrcp.pop %v3696
  %v3819 = vrcp.pop %v3699
  %v3820 = vrcp.pop %v3702
  %v3821 = vrcp.pop %v3705
  %v3822 = vrcp.pop %v3708
  %v3823 = vrcp.pop %v3711
  %v3824 = vrcp.pop %v3714
  %v3825 = vrcp.pop %v3717
  %v3826 = vrcp.pop %v3720
  %v3827 = vrcp.pop %v3723
  %v3828 = vrcp.pop %v3726
  %v3829 = vrcp.pop %v3729
  %v3830 = vrcp.pop %v3732
  %v3831 = vrcp.pop %v3735
  %v3832 = vmul.f32 %v3257, %v3736
  %v3833 = vmul.f32 %v3259, %v3737
  %v3834 = vmul.f32 %v3261, %v3738
  %v3835 = vmul.f32 %v3263, %v3739
  %v3836 = vmul.f32 %v3265, %v3740
  %v3837 = vmul.f32 %v3267, %v3741
  %v3838 = vmul.f32 %v3269, %v3742
  %v3839 = vmul.f32 %v3271, %v3743
  %v3840 = vmul.f32 %v3273, %v3744
  %v3841 = vmul.f32 %v3275, %v3745
  %v3842 = vmul.f32 %v3277, %v3746
  %v3843 = vmul.f32 %v3279, %v3747
  %v3844 = vmul.f32 %v3281, %v3748
  %v3845 = vmul.f32 %v3283, %v3749
  %v3846 = vmul.f32 %v3285, %v3750
  %v3847 = vmul.f32 %v3287, %v3751
  %v3848 = vmul.f32 %v3289, %v3752
  %v3849 = vmul.f32 %v3291, %v3753
  %v3850 = vmul.f32 %v3293, %v3754
  %v3851 = vmul.f32 %v3295, %v3755
  %v3852 = vmul.f32 %v3297, %v3756
  %v3853 = vmul.f32 %v3299, %v3757
  %v3854 = vmul.f32 %v3301, %v3758
  %v3855 = vmul.f32 %v3303, %v3759
  %v3856 = vmul.f32 %v3305, %v3760
  %v3857 = vmul.f32 %v3307, %v3761
  %v3858 = vmul.f32 %v3309, %v3762
  %v3859 = vmul.f32 %v3311, %v3763
  %v3860 = vmul.f32 %v3313, %v3764
  %v3861 = vmul.f32 %v3315, %v3765
  %v3862 = vmul.f32 %v3317, %v3766
  %v3863 = vmul.f32 %v3319, %v3767
  %v3864 = vmul.f32 %v3321, %v3768
  %v3865 = vmul.f32 %v3323, %v3769
  %v3866 = vmul.f32 %v3325, %v3770
  %v3867 = vmul.f32 %v3327, %v3771
  %v3868 = vmul.f32 %v3329, %v3772
  %v3869 = vmul.f32 %v3331, %v3773
  %v3870 = vmul.f32 %v3333, %v3774
  %v3871 = vmul.f32 %v3335, %v3775
  %v3872 = vmul.f32 %v3337, %v3776
  %v3873 = vmul.f32 %v3339, %v3777
  %v3874 = vmul.f32 %v3341, %v3778
  %v3875 = vmul.f32 %v3343, %v3779
  %v3876 = vmul.f32 %v3345, %v3780
  %v3877 = vmul.f32 %v3347, %v3781
  %v3878 = vmul.f32 %v3349, %v3782
  %v3879 = vmul.f32 %v3351, %v3783
  %v3880 = vmul.f32 %v3353, %v3784
  %v3881 = vmul.f32 %v3355, %v3785
  %v3882 = vmul.f32 %v3357, %v3786
  %v3883 = vmul.f32 %v3359, %v3787
  %v3884 = vmul.f32 %v3361, %v3788
  %v3885 = vmul.f32 %v3363, %v3789
  %v3886 = vmul.f32 %v3365, %v3790
  %v3887 = vmul.f32 %v3367, %v3791
  %v3888 = vmul.f32 %v3369, %v3792
  %v3889 = vmul.f32 %v3371, %v3793
  %v3890 = vmul.f32 %v3373, %v3794
  %v3891 = vmul.f32 %v3375, %v3795
  %v3892 = vmul.f32 %v3377, %v3796
  %v3893 = vmul.f32 %v3379, %v3797
  %v3894 = vmul.f32 %v3381, %v3798
  %v3895 = vmul.f32 %v3383, %v3799
  %v3896 = vmul.f32 %v3385, %v3800
  %v3897 = vmul.f32 %v3387, %v3801
  %v3898 = vmul.f32 %v3389, %v3802
  %v3899 = vmul.f32 %v3391, %v3803
  %v3900 = vmul.f32 %v3393, %v3804
  %v3901 = vmul.f32 %v3395, %v3805
  %v3902 = vmul.f32 %v3397, %v3806
  %v3903 = vmul.f32 %v3399, %v3807
  %v3904 = vmul.f32 %v3401, %v3808
  %v3905 = vmul.f32 %v3403, %v3809
  %v3906 = vmul.f32 %v3405, %v3810
  %v3907 = vmul.f32 %v3407, %v3811
  %v3908 = vmul.f32 %v3409, %v3812
  %v3909 = vmul.f32 %v3411, %v3813
  %v3910 = vmul.f32 %v3413, %v3814
  %v3911 = vmul.f32 %v3415, %v3815
  %v3912 = vmul.f32 %v3417, %v3816
  %v3913 = vmul.f32 %v3419, %v3817
  %v3914 = vmul.f32 %v3421, %v3818
  %v3915 = vmul.f32 %v3423, %v3819
  %v3916 = vmul.f32 %v3425, %v3820
  %v3917 = vmul.f32 %v3427, %v3821
  %v3918 = vmul.f32 %v3429, %v3822
  %v3919 = vmul.f32 %v3431, %v3823
  %v3920 = vmul.f32 %v3433, %v3824
  %v3921 = vmul.f32 %v3435, %v3825
  %v3922 = vmul.f32 %v3437, %v3826
  %v3923 = vmul.f32 %v3439, %v3827
  %v3924 = vmul.f32 %v3441, %v3828
  %v3925 = vmul.f32 %v3443, %v3829
  %v3926 = vmul.f32 %v3445, %v3830
  %v3927 = vmul.f32 %v3447, %v3831
  %v3928 = vpack.c.bf16 %v3833, %v3832
  %v3929 = vpack.c.bf16 %v3835, %v3834
  %v3930 = vpack.c.bf16 %v3837, %v3836
  %v3931 = vpack.c.bf16 %v3839, %v3838
  %v3932 = vpack.c.bf16 %v3841, %v3840
  %v3933 = vpack.c.bf16 %v3843, %v3842
  %v3934 = vpack.c.bf16 %v3845, %v3844
  %v3935 = vpack.c.bf16 %v3847, %v3846
  %v3936 = vpack.c.bf16 %v3849, %v3848
  %v3937 = vpack.c.bf16 %v3851, %v3850
  %v3938 = vpack.c.bf16 %v3853, %v3852
  %v3939 = vpack.c.bf16 %v3855, %v3854
  %v3940 = vpack.c.bf16 %v3857, %v3856
  %v3941 = vpack.c.bf16 %v3859, %v3858
  %v3942 = vpack.c.bf16 %v3861, %v3860
  %v3943 = vpack.c.bf16 %v3863, %v3862
  %v3944 = vpack.c.bf16 %v3865, %v3864
  %v3945 = vpack.c.bf16 %v3867, %v3866
  %v3946 = vpack.c.bf16 %v3869, %v3868
  %v3947 = vpack.c.bf16 %v3871, %v3870
  %v3948 = vpack.c.bf16 %v3873, %v3872
  %v3949 = vpack.c.bf16 %v3875, %v3874
  %v3950 = vpack.c.bf16 %v3877, %v3876
  %v3951 = vpack.c.bf16 %v3879, %v3878
  %v3952 = vpack.c.bf16 %v3881, %v3880
  %v3953 = vpack.c.bf16 %v3883, %v3882
  %v3954 = vpack.c.bf16 %v3885, %v3884
  %v3955 = vpack.c.bf16 %v3887, %v3886
  %v3956 = vpack.c.bf16 %v3889, %v3888
  %v3957 = vpack.c.bf16 %v3891, %v3890
  %v3958 = vpack.c.bf16 %v3893, %v3892
  %v3959 = vpack.c.bf16 %v3895, %v3894
  %v3960 = vpack.c.bf16 %v3897, %v3896
  %v3961 = vpack.c.bf16 %v3899, %v3898
  %v3962 = vpack.c.bf16 %v3901, %v3900
  %v3963 = vpack.c.bf16 %v3903, %v3902
  %v3964 = vpack.c.bf16 %v3905, %v3904
  %v3965 = vpack.c.bf16 %v3907, %v3906
  %v3966 = vpack.c.bf16 %v3909, %v3908
  %v3967 = vpack.c.bf16 %v3911, %v3910
  %v3968 = vpack.c.bf16 %v3913, %v3912
  %v3969 = vpack.c.bf16 %v3915, %v3914
  %v3970 = vpack.c.bf16 %v3917, %v3916
  %v3971 = vpack.c.bf16 %v3919, %v3918
  %v3972 = vpack.c.bf16 %v3921, %v3920
  %v3973 = vpack.c.bf16 %v3923, %v3922
  %v3974 = vpack.c.bf16 %v3925, %v3924
  %v3975 = vpack.c.bf16 %v3927, %v3926
  %v3976 = vpack.c.bf16 %v1674, %v1671
  %v3977 = vpack.c.bf16 %v1679, %v1679
  %v3978 = vpack.c.bf16 %v1687, %v1682
  %v3979 = vpack.c.bf16 %v1690, %v1690
  %v3980 = vpack.c.bf16 %v1698, %v1695
  %v3981 = vpack.c.bf16 %v1703, %v1703
  %v3982 = vpack.c.bf16 %v1711, %v1706
  %v3983 = vpack.c.bf16 %v1714, %v1714
  %v3984 = vpack.c.bf16 %v1722, %v1719
  %v3985 = vpack.c.bf16 %v1727, %v1727
  %v3986 = vpack.c.bf16 %v1735, %v1730
  %v3987 = vpack.c.bf16 %v1738, %v1738
  %v3988 = vpack.c.bf16 %v1746, %v1743
  %v3989 = vpack.c.bf16 %v1751, %v1751
  %v3990 = vpack.c.bf16 %v1759, %v1754
  %v3991 = vpack.c.bf16 %v1762, %v1762
  %v3993 = vsel %vm2871, %v3928, 0
  %v3996 = vsel %vm2871, %v3929, 0
  %v3999 = vsel %vm2871, %v3930, 0
  %v4002 = vsel %vm2871, %v3931, 0
  %v4005 = vsel %vm2871, %v3932, 0
  %v4008 = vsel %vm2871, %v3933, 0
  %vm4010 = vcmask 1043456
  %v4012 = vsel %vm4010, %v3977, 0
  %4014 = vmatprep.subr.bf16.mxu0 0
  %4015 = vmatpush1.bf16.msra.mxu0 0
  %4016 = vmatprep.subr.bf16.mxu0 0
  %4017 = vmatpush1.bf16.msra.mxu0 0
  %4018 = vmatprep.subr.bf16.mxu0 0
  %4019 = vmatpush1.bf16.msra.mxu0 0
  %4020 = vmatprep.subr.bf16.mxu0 0
  %4021 = vmatpush1.bf16.msra.mxu0 0
  %4022 = vmatprep.subr.bf16.mxu0 0
  %4023 = vmatpush1.bf16.msra.mxu0 0
  %4024 = vmatprep.subr.bf16.mxu0 0
  %4025 = vmatpush1.bf16.msra.mxu0 0
  %4026 = vmatprep.subr.bf16.mxu0 0
  %4027 = vmatpush1.bf16.msra.mxu0 %v4012
  %4028 = vmatprep.subr.bf16.mxu0 0
  %4029 = vmatpush1.bf16.msra.mxu0 %v3976
  %4030 = vmatprep.subr.bf16.mxu0 0
  %4031 = vmatpush2.bf16.msra.mxu0 0
  %4032 = vmatprep.subr.bf16.mxu0 0
  %4033 = vmatpush2.bf16.msra.mxu0 0
  %4034 = vmatprep.subr.bf16.mxu0 0
  %4035 = vmatpush2.bf16.msra.mxu0 0
  %4036 = vmatprep.subr.bf16.mxu0 0
  %4037 = vmatpush2.bf16.msra.mxu0 0
  %4038 = vmatprep.subr.bf16.mxu0 0
  %4039 = vmatpush2.bf16.msra.mxu0 0
  %4040 = vmatprep.subr.bf16.mxu0 0
  %4041 = vmatpush2.bf16.msra.mxu0 0
  %4042 = vmatprep.subr.bf16.mxu0 0
  %4043 = vmatpush2.bf16.msra.mxu0 0
  %4044 = vmatprep.subr.bf16.mxu0 0
  %4045 = vmatpush2.bf16.msra.mxu0 0
  %4046 = vmatprep.mubr.bf16.mxu0 0
  %4047 = vmatmul.mubr.bf16.gmra.mxu0 %v3993
  %v4048 = vpop.f32.mrf.mxu0
  %v4049 = vadd.f32 0.0, %v4048
  %v4050 = vpop.f32.mrf.mxu0
  %v4051 = vpop.f32.mrf.mxu0
  %v4052 = vadd.f32 0.0, %v4051
  %v4053 = vpop.f32.mrf.mxu0
  %4054 = vmatprep.mubr.bf16.mxu0 0
  %4055 = vmatmul.mubr.bf16.gmra.mxu0 %v3996
  %v4056 = vpop.f32.mrf.mxu0
  %v4057 = vadd.f32 0.0, %v4056
  %v4058 = vpop.f32.mrf.mxu0
  %v4059 = vpop.f32.mrf.mxu0
  %v4060 = vadd.f32 0.0, %v4059
  %v4061 = vpop.f32.mrf.mxu0
  %4062 = vmatprep.mubr.bf16.mxu0 0
  %4063 = vmatmul.mubr.bf16.gmra.mxu0 %v3999
  %v4064 = vpop.f32.mrf.mxu0
  %v4065 = vadd.f32 0.0, %v4064
  %v4066 = vpop.f32.mrf.mxu0
  %v4067 = vpop.f32.mrf.mxu0
  %v4068 = vadd.f32 0.0, %v4067
  %v4069 = vpop.f32.mrf.mxu0
  %4070 = vmatprep.mubr.bf16.mxu0 0
  %4071 = vmatmul.mubr.bf16.gmra.mxu0 %v4002
  %v4072 = vpop.f32.mrf.mxu0
  %v4073 = vadd.f32 0.0, %v4072
  %v4074 = vpop.f32.mrf.mxu0
  %v4075 = vpop.f32.mrf.mxu0
  %v4076 = vadd.f32 0.0, %v4075
  %v4077 = vpop.f32.mrf.mxu0
  %4078 = vmatprep.mubr.bf16.mxu0 0
  %4079 = vmatmul.mubr.bf16.gmra.mxu0 %v4005
  %v4080 = vpop.f32.mrf.mxu0
  %v4081 = vadd.f32 0.0, %v4080
  %v4082 = vpop.f32.mrf.mxu0
  %v4083 = vpop.f32.mrf.mxu0
  %v4084 = vadd.f32 0.0, %v4083
  %v4085 = vpop.f32.mrf.mxu0
  %4086 = vmatprep.mubr.bf16.mxu0 0
  %4087 = vmatmul.mubr.bf16.gmra.mxu0 %v4008
  %v4088 = vpop.f32.mrf.mxu0
  %v4089 = vadd.f32 0.0, %v4088
  %v4090 = vpop.f32.mrf.mxu0
  %v4091 = vpop.f32.mrf.mxu0
  %v4092 = vadd.f32 0.0, %v4091
  %v4093 = vpop.f32.mrf.mxu0
  %4094 = vdwg.mxu0
  %v4096 = vsel %vm2871, %v3934, 0
  %v4099 = vsel %vm2871, %v3935, 0
  %v4102 = vsel %vm2871, %v3936, 0
  %v4105 = vsel %vm2871, %v3937, 0
  %v4108 = vsel %vm2871, %v3938, 0
  %v4111 = vsel %vm2871, %v3939, 0
  %v4114 = vsel %vm4010, %v3979, 0
  %4116 = vmatprep.subr.bf16.mxu0 0
  %4117 = vmatpush1.bf16.msra.mxu0 0
  %4118 = vmatprep.subr.bf16.mxu0 0
  %4119 = vmatpush1.bf16.msra.mxu0 0
  %4120 = vmatprep.subr.bf16.mxu0 0
  %4121 = vmatpush1.bf16.msra.mxu0 0
  %4122 = vmatprep.subr.bf16.mxu0 0
  %4123 = vmatpush1.bf16.msra.mxu0 0
  %4124 = vmatprep.subr.bf16.mxu0 0
  %4125 = vmatpush1.bf16.msra.mxu0 0
  %4126 = vmatprep.subr.bf16.mxu0 0
  %4127 = vmatpush1.bf16.msra.mxu0 0
  %4128 = vmatprep.subr.bf16.mxu0 0
  %4129 = vmatpush1.bf16.msra.mxu0 %v4114
  %4130 = vmatprep.subr.bf16.mxu0 0
  %4131 = vmatpush1.bf16.msra.mxu0 %v3978
  %4132 = vmatprep.subr.bf16.mxu0 0
  %4133 = vmatpush2.bf16.msra.mxu0 0
  %4134 = vmatprep.subr.bf16.mxu0 0
  %4135 = vmatpush2.bf16.msra.mxu0 0
  %4136 = vmatprep.subr.bf16.mxu0 0
  %4137 = vmatpush2.bf16.msra.mxu0 0
  %4138 = vmatprep.subr.bf16.mxu0 0
  %4139 = vmatpush2.bf16.msra.mxu0 0
  %4140 = vmatprep.subr.bf16.mxu0 0
  %4141 = vmatpush2.bf16.msra.mxu0 0
  %4142 = vmatprep.subr.bf16.mxu0 0
  %4143 = vmatpush2.bf16.msra.mxu0 0
  %4144 = vmatprep.subr.bf16.mxu0 0
  %4145 = vmatpush2.bf16.msra.mxu0 0
  %4146 = vmatprep.subr.bf16.mxu0 0
  %4147 = vmatpush2.bf16.msra.mxu0 0
  %4148 = vmatprep.mubr.bf16.mxu0 0
  %4149 = vmatmul.mubr.bf16.gmra.mxu0 %v4096
  %v4150 = vpop.f32.mrf.mxu0
  %v4151 = vadd.f32 0.0, %v4150
  %v4152 = vpop.f32.mrf.mxu0
  %v4153 = vpop.f32.mrf.mxu0
  %v4154 = vadd.f32 0.0, %v4153
  %v4155 = vpop.f32.mrf.mxu0
  %4156 = vmatprep.mubr.bf16.mxu0 0
  %4157 = vmatmul.mubr.bf16.gmra.mxu0 %v4099
  %v4158 = vpop.f32.mrf.mxu0
  %v4159 = vadd.f32 0.0, %v4158
  %v4160 = vpop.f32.mrf.mxu0
  %v4161 = vpop.f32.mrf.mxu0
  %v4162 = vadd.f32 0.0, %v4161
  %v4163 = vpop.f32.mrf.mxu0
  %4164 = vmatprep.mubr.bf16.mxu0 0
  %4165 = vmatmul.mubr.bf16.gmra.mxu0 %v4102
  %v4166 = vpop.f32.mrf.mxu0
  %v4167 = vadd.f32 0.0, %v4166
  %v4168 = vpop.f32.mrf.mxu0
  %v4169 = vpop.f32.mrf.mxu0
  %v4170 = vadd.f32 0.0, %v4169
  %v4171 = vpop.f32.mrf.mxu0
  %4172 = vmatprep.mubr.bf16.mxu0 0
  %4173 = vmatmul.mubr.bf16.gmra.mxu0 %v4105
  %v4174 = vpop.f32.mrf.mxu0
  %v4175 = vadd.f32 0.0, %v4174
  %v4176 = vpop.f32.mrf.mxu0
  %v4177 = vpop.f32.mrf.mxu0
  %v4178 = vadd.f32 0.0, %v4177
  %v4179 = vpop.f32.mrf.mxu0
  %4180 = vmatprep.mubr.bf16.mxu0 0
  %4181 = vmatmul.mubr.bf16.gmra.mxu0 %v4108
  %v4182 = vpop.f32.mrf.mxu0
  %v4183 = vadd.f32 0.0, %v4182
  %v4184 = vpop.f32.mrf.mxu0
  %v4185 = vpop.f32.mrf.mxu0
  %v4186 = vadd.f32 0.0, %v4185
  %v4187 = vpop.f32.mrf.mxu0
  %4188 = vmatprep.mubr.bf16.mxu0 0
  %4189 = vmatmul.mubr.bf16.gmra.mxu0 %v4111
  %v4190 = vpop.f32.mrf.mxu0
  %v4191 = vadd.f32 0.0, %v4190
  %v4192 = vpop.f32.mrf.mxu0
  %v4193 = vpop.f32.mrf.mxu0
  %v4194 = vadd.f32 0.0, %v4193
  %v4195 = vpop.f32.mrf.mxu0
  %4196 = vdwg.mxu0
  %v4198 = vsel %vm2871, %v3940, 0
  %v4201 = vsel %vm2871, %v3941, 0
  %v4204 = vsel %vm2871, %v3942, 0
  %v4207 = vsel %vm2871, %v3943, 0
  %v4210 = vsel %vm2871, %v3944, 0
  %v4213 = vsel %vm2871, %v3945, 0
  %v4216 = vsel %vm4010, %v3981, 0
  %4218 = vmatprep.subr.bf16.mxu0 0
  %4219 = vmatpush1.bf16.msra.mxu0 0
  %4220 = vmatprep.subr.bf16.mxu0 0
  %4221 = vmatpush1.bf16.msra.mxu0 0
  %4222 = vmatprep.subr.bf16.mxu0 0
  %4223 = vmatpush1.bf16.msra.mxu0 0
  %4224 = vmatprep.subr.bf16.mxu0 0
  %4225 = vmatpush1.bf16.msra.mxu0 0
  %4226 = vmatprep.subr.bf16.mxu0 0
  %4227 = vmatpush1.bf16.msra.mxu0 0
  %4228 = vmatprep.subr.bf16.mxu0 0
  %4229 = vmatpush1.bf16.msra.mxu0 0
  %4230 = vmatprep.subr.bf16.mxu0 0
  %4231 = vmatpush1.bf16.msra.mxu0 %v4216
  %4232 = vmatprep.subr.bf16.mxu0 0
  %4233 = vmatpush1.bf16.msra.mxu0 %v3980
  %4234 = vmatprep.subr.bf16.mxu0 0
  %4235 = vmatpush2.bf16.msra.mxu0 0
  %4236 = vmatprep.subr.bf16.mxu0 0
  %4237 = vmatpush2.bf16.msra.mxu0 0
  %4238 = vmatprep.subr.bf16.mxu0 0
  %4239 = vmatpush2.bf16.msra.mxu0 0
  %4240 = vmatprep.subr.bf16.mxu0 0
  %4241 = vmatpush2.bf16.msra.mxu0 0
  %4242 = vmatprep.subr.bf16.mxu0 0
  %4243 = vmatpush2.bf16.msra.mxu0 0
  %4244 = vmatprep.subr.bf16.mxu0 0
  %4245 = vmatpush2.bf16.msra.mxu0 0
  %4246 = vmatprep.subr.bf16.mxu0 0
  %4247 = vmatpush2.bf16.msra.mxu0 0
  %4248 = vmatprep.subr.bf16.mxu0 0
  %4249 = vmatpush2.bf16.msra.mxu0 0
  %4250 = vmatprep.mubr.bf16.mxu0 0
  %4251 = vmatmul.mubr.bf16.gmra.mxu0 %v4198
  %v4252 = vpop.f32.mrf.mxu0
  %v4253 = vadd.f32 0.0, %v4252
  %v4254 = vpop.f32.mrf.mxu0
  %v4255 = vpop.f32.mrf.mxu0
  %v4256 = vadd.f32 0.0, %v4255
  %v4257 = vpop.f32.mrf.mxu0
  %4258 = vmatprep.mubr.bf16.mxu0 0
  %4259 = vmatmul.mubr.bf16.gmra.mxu0 %v4201
  %v4260 = vpop.f32.mrf.mxu0
  %v4261 = vadd.f32 0.0, %v4260
  %v4262 = vpop.f32.mrf.mxu0
  %v4263 = vpop.f32.mrf.mxu0
  %v4264 = vadd.f32 0.0, %v4263
  %v4265 = vpop.f32.mrf.mxu0
  %4266 = vmatprep.mubr.bf16.mxu0 0
  %4267 = vmatmul.mubr.bf16.gmra.mxu0 %v4204
  %v4268 = vpop.f32.mrf.mxu0
  %v4269 = vadd.f32 0.0, %v4268
  %v4270 = vpop.f32.mrf.mxu0
  %v4271 = vpop.f32.mrf.mxu0
  %v4272 = vadd.f32 0.0, %v4271
  %v4273 = vpop.f32.mrf.mxu0
  %4274 = vmatprep.mubr.bf16.mxu0 0
  %4275 = vmatmul.mubr.bf16.gmra.mxu0 %v4207
  %v4276 = vpop.f32.mrf.mxu0
  %v4277 = vadd.f32 0.0, %v4276
  %v4278 = vpop.f32.mrf.mxu0
  %v4279 = vpop.f32.mrf.mxu0
  %v4280 = vadd.f32 0.0, %v4279
  %v4281 = vpop.f32.mrf.mxu0
  %4282 = vmatprep.mubr.bf16.mxu0 0
  %4283 = vmatmul.mubr.bf16.gmra.mxu0 %v4210
  %v4284 = vpop.f32.mrf.mxu0
  %v4285 = vadd.f32 0.0, %v4284
  %v4286 = vpop.f32.mrf.mxu0
  %v4287 = vpop.f32.mrf.mxu0
  %v4288 = vadd.f32 0.0, %v4287
  %v4289 = vpop.f32.mrf.mxu0
  %4290 = vmatprep.mubr.bf16.mxu0 0
  %4291 = vmatmul.mubr.bf16.gmra.mxu0 %v4213
  %v4292 = vpop.f32.mrf.mxu0
  %v4293 = vadd.f32 0.0, %v4292
  %v4294 = vpop.f32.mrf.mxu0
  %v4295 = vpop.f32.mrf.mxu0
  %v4296 = vadd.f32 0.0, %v4295
  %v4297 = vpop.f32.mrf.mxu0
  %4298 = vdwg.mxu0
  %v4300 = vsel %vm2871, %v3946, 0
  %v4303 = vsel %vm2871, %v3947, 0
  %v4306 = vsel %vm2871, %v3948, 0
  %v4309 = vsel %vm2871, %v3949, 0
  %v4312 = vsel %vm2871, %v3950, 0
  %v4315 = vsel %vm2871, %v3951, 0
  %v4318 = vsel %vm4010, %v3983, 0
  %4320 = vmatprep.subr.bf16.mxu0 0
  %4321 = vmatpush1.bf16.msra.mxu0 0
  %4322 = vmatprep.subr.bf16.mxu0 0
  %4323 = vmatpush1.bf16.msra.mxu0 0
  %4324 = vmatprep.subr.bf16.mxu0 0
  %4325 = vmatpush1.bf16.msra.mxu0 0
  %4326 = vmatprep.subr.bf16.mxu0 0
  %4327 = vmatpush1.bf16.msra.mxu0 0
  %4328 = vmatprep.subr.bf16.mxu0 0
  %4329 = vmatpush1.bf16.msra.mxu0 0
  %4330 = vmatprep.subr.bf16.mxu0 0
  %4331 = vmatpush1.bf16.msra.mxu0 0
  %4332 = vmatprep.subr.bf16.mxu0 0
  %4333 = vmatpush1.bf16.msra.mxu0 %v4318
  %4334 = vmatprep.subr.bf16.mxu0 0
  %4335 = vmatpush1.bf16.msra.mxu0 %v3982
  %4336 = vmatprep.subr.bf16.mxu0 0
  %4337 = vmatpush2.bf16.msra.mxu0 0
  %4338 = vmatprep.subr.bf16.mxu0 0
  %4339 = vmatpush2.bf16.msra.mxu0 0
  %4340 = vmatprep.subr.bf16.mxu0 0
  %4341 = vmatpush2.bf16.msra.mxu0 0
  %4342 = vmatprep.subr.bf16.mxu0 0
  %4343 = vmatpush2.bf16.msra.mxu0 0
  %4344 = vmatprep.subr.bf16.mxu0 0
  %4345 = vmatpush2.bf16.msra.mxu0 0
  %4346 = vmatprep.subr.bf16.mxu0 0
  %4347 = vmatpush2.bf16.msra.mxu0 0
  %4348 = vmatprep.subr.bf16.mxu0 0
  %4349 = vmatpush2.bf16.msra.mxu0 0
  %4350 = vmatprep.subr.bf16.mxu0 0
  %4351 = vmatpush2.bf16.msra.mxu0 0
  %4352 = vmatprep.mubr.bf16.mxu0 0
  %4353 = vmatmul.mubr.bf16.gmra.mxu0 %v4300
  %v4354 = vpop.f32.mrf.mxu0
  %v4355 = vadd.f32 0.0, %v4354
  %v4356 = vpop.f32.mrf.mxu0
  %v4357 = vpop.f32.mrf.mxu0
  %v4358 = vadd.f32 0.0, %v4357
  %v4359 = vpop.f32.mrf.mxu0
  %4360 = vmatprep.mubr.bf16.mxu0 0
  %4361 = vmatmul.mubr.bf16.gmra.mxu0 %v4303
  %v4362 = vpop.f32.mrf.mxu0
  %v4363 = vadd.f32 0.0, %v4362
  %v4364 = vpop.f32.mrf.mxu0
  %v4365 = vpop.f32.mrf.mxu0
  %v4366 = vadd.f32 0.0, %v4365
  %v4367 = vpop.f32.mrf.mxu0
  %4368 = vmatprep.mubr.bf16.mxu0 0
  %4369 = vmatmul.mubr.bf16.gmra.mxu0 %v4306
  %v4370 = vpop.f32.mrf.mxu0
  %v4371 = vadd.f32 0.0, %v4370
  %v4372 = vpop.f32.mrf.mxu0
  %v4373 = vpop.f32.mrf.mxu0
  %v4374 = vadd.f32 0.0, %v4373
  %v4375 = vpop.f32.mrf.mxu0
  %4376 = vmatprep.mubr.bf16.mxu0 0
  %4377 = vmatmul.mubr.bf16.gmra.mxu0 %v4309
  %v4378 = vpop.f32.mrf.mxu0
  %v4379 = vadd.f32 0.0, %v4378
  %v4380 = vpop.f32.mrf.mxu0
  %v4381 = vpop.f32.mrf.mxu0
  %v4382 = vadd.f32 0.0, %v4381
  %v4383 = vpop.f32.mrf.mxu0
  %4384 = vmatprep.mubr.bf16.mxu0 0
  %4385 = vmatmul.mubr.bf16.gmra.mxu0 %v4312
  %v4386 = vpop.f32.mrf.mxu0
  %v4387 = vadd.f32 0.0, %v4386
  %v4388 = vpop.f32.mrf.mxu0
  %v4389 = vpop.f32.mrf.mxu0
  %v4390 = vadd.f32 0.0, %v4389
  %v4391 = vpop.f32.mrf.mxu0
  %4392 = vmatprep.mubr.bf16.mxu0 0
  %4393 = vmatmul.mubr.bf16.gmra.mxu0 %v4315
  %v4394 = vpop.f32.mrf.mxu0
  %v4395 = vadd.f32 0.0, %v4394
  %v4396 = vpop.f32.mrf.mxu0
  %v4397 = vpop.f32.mrf.mxu0
  %v4398 = vadd.f32 0.0, %v4397
  %v4399 = vpop.f32.mrf.mxu0
  %4400 = vdwg.mxu0
  %v4402 = vsel %vm2871, %v3952, 0
  %v4405 = vsel %vm2871, %v3953, 0
  %v4408 = vsel %vm2871, %v3954, 0
  %v4411 = vsel %vm2871, %v3955, 0
  %v4414 = vsel %vm2871, %v3956, 0
  %v4417 = vsel %vm2871, %v3957, 0
  %v4420 = vsel %vm4010, %v3985, 0
  %4422 = vmatprep.subr.bf16.mxu0 0
  %4423 = vmatpush1.bf16.msra.mxu0 0
  %4424 = vmatprep.subr.bf16.mxu0 0
  %4425 = vmatpush1.bf16.msra.mxu0 0
  %4426 = vmatprep.subr.bf16.mxu0 0
  %4427 = vmatpush1.bf16.msra.mxu0 0
  %4428 = vmatprep.subr.bf16.mxu0 0
  %4429 = vmatpush1.bf16.msra.mxu0 0
  %4430 = vmatprep.subr.bf16.mxu0 0
  %4431 = vmatpush1.bf16.msra.mxu0 0
  %4432 = vmatprep.subr.bf16.mxu0 0
  %4433 = vmatpush1.bf16.msra.mxu0 0
  %4434 = vmatprep.subr.bf16.mxu0 0
  %4435 = vmatpush1.bf16.msra.mxu0 %v4420
  %4436 = vmatprep.subr.bf16.mxu0 0
  %4437 = vmatpush1.bf16.msra.mxu0 %v3984
  %4438 = vmatprep.subr.bf16.mxu0 0
  %4439 = vmatpush2.bf16.msra.mxu0 0
  %4440 = vmatprep.subr.bf16.mxu0 0
  %4441 = vmatpush2.bf16.msra.mxu0 0
  %4442 = vmatprep.subr.bf16.mxu0 0
  %4443 = vmatpush2.bf16.msra.mxu0 0
  %4444 = vmatprep.subr.bf16.mxu0 0
  %4445 = vmatpush2.bf16.msra.mxu0 0
  %4446 = vmatprep.subr.bf16.mxu0 0
  %4447 = vmatpush2.bf16.msra.mxu0 0
  %4448 = vmatprep.subr.bf16.mxu0 0
  %4449 = vmatpush2.bf16.msra.mxu0 0
  %4450 = vmatprep.subr.bf16.mxu0 0
  %4451 = vmatpush2.bf16.msra.mxu0 0
  %4452 = vmatprep.subr.bf16.mxu0 0
  %4453 = vmatpush2.bf16.msra.mxu0 0
  %4454 = vmatprep.mubr.bf16.mxu0 0
  %4455 = vmatmul.mubr.bf16.gmra.mxu0 %v4402
  %v4456 = vpop.f32.mrf.mxu0
  %v4457 = vadd.f32 0.0, %v4456
  %v4458 = vpop.f32.mrf.mxu0
  %v4459 = vpop.f32.mrf.mxu0
  %v4460 = vadd.f32 0.0, %v4459
  %v4461 = vpop.f32.mrf.mxu0
  %4462 = vmatprep.mubr.bf16.mxu0 0
  %4463 = vmatmul.mubr.bf16.gmra.mxu0 %v4405
  %v4464 = vpop.f32.mrf.mxu0
  %v4465 = vadd.f32 0.0, %v4464
  %v4466 = vpop.f32.mrf.mxu0
  %v4467 = vpop.f32.mrf.mxu0
  %v4468 = vadd.f32 0.0, %v4467
  %v4469 = vpop.f32.mrf.mxu0
  %4470 = vmatprep.mubr.bf16.mxu0 0
  %4471 = vmatmul.mubr.bf16.gmra.mxu0 %v4408
  %v4472 = vpop.f32.mrf.mxu0
  %v4473 = vadd.f32 0.0, %v4472
  %v4474 = vpop.f32.mrf.mxu0
  %v4475 = vpop.f32.mrf.mxu0
  %v4476 = vadd.f32 0.0, %v4475
  %v4477 = vpop.f32.mrf.mxu0
  %4478 = vmatprep.mubr.bf16.mxu0 0
  %4479 = vmatmul.mubr.bf16.gmra.mxu0 %v4411
  %v4480 = vpop.f32.mrf.mxu0
  %v4481 = vadd.f32 0.0, %v4480
  %v4482 = vpop.f32.mrf.mxu0
  %v4483 = vpop.f32.mrf.mxu0
  %v4484 = vadd.f32 0.0, %v4483
  %v4485 = vpop.f32.mrf.mxu0
  %4486 = vmatprep.mubr.bf16.mxu0 0
  %4487 = vmatmul.mubr.bf16.gmra.mxu0 %v4414
  %v4488 = vpop.f32.mrf.mxu0
  %v4489 = vadd.f32 0.0, %v4488
  %v4490 = vpop.f32.mrf.mxu0
  %v4491 = vpop.f32.mrf.mxu0
  %v4492 = vadd.f32 0.0, %v4491
  %v4493 = vpop.f32.mrf.mxu0
  %4494 = vmatprep.mubr.bf16.mxu0 0
  %4495 = vmatmul.mubr.bf16.gmra.mxu0 %v4417
  %v4496 = vpop.f32.mrf.mxu0
  %v4497 = vadd.f32 0.0, %v4496
  %v4498 = vpop.f32.mrf.mxu0
  %v4499 = vpop.f32.mrf.mxu0
  %v4500 = vadd.f32 0.0, %v4499
  %v4501 = vpop.f32.mrf.mxu0
  %4502 = vdwg.mxu0
  %v4504 = vsel %vm2871, %v3958, 0
  %v4507 = vsel %vm2871, %v3959, 0
  %v4510 = vsel %vm2871, %v3960, 0
  %v4513 = vsel %vm2871, %v3961, 0
  %v4516 = vsel %vm2871, %v3962, 0
  %v4519 = vsel %vm2871, %v3963, 0
  %v4522 = vsel %vm4010, %v3987, 0
  %4524 = vmatprep.subr.bf16.mxu0 0
  %4525 = vmatpush1.bf16.msra.mxu0 0
  %4526 = vmatprep.subr.bf16.mxu0 0
  %4527 = vmatpush1.bf16.msra.mxu0 0
  %4528 = vmatprep.subr.bf16.mxu0 0
  %4529 = vmatpush1.bf16.msra.mxu0 0
  %4530 = vmatprep.subr.bf16.mxu0 0
  %4531 = vmatpush1.bf16.msra.mxu0 0
  %4532 = vmatprep.subr.bf16.mxu0 0
  %4533 = vmatpush1.bf16.msra.mxu0 0
  %4534 = vmatprep.subr.bf16.mxu0 0
  %4535 = vmatpush1.bf16.msra.mxu0 0
  %4536 = vmatprep.subr.bf16.mxu0 0
  %4537 = vmatpush1.bf16.msra.mxu0 %v4522
  %4538 = vmatprep.subr.bf16.mxu0 0
  %4539 = vmatpush1.bf16.msra.mxu0 %v3986
  %4540 = vmatprep.subr.bf16.mxu0 0
  %4541 = vmatpush2.bf16.msra.mxu0 0
  %4542 = vmatprep.subr.bf16.mxu0 0
  %4543 = vmatpush2.bf16.msra.mxu0 0
  %4544 = vmatprep.subr.bf16.mxu0 0
  %4545 = vmatpush2.bf16.msra.mxu0 0
  %4546 = vmatprep.subr.bf16.mxu0 0
  %4547 = vmatpush2.bf16.msra.mxu0 0
  %4548 = vmatprep.subr.bf16.mxu0 0
  %4549 = vmatpush2.bf16.msra.mxu0 0
  %4550 = vmatprep.subr.bf16.mxu0 0
  %4551 = vmatpush2.bf16.msra.mxu0 0
  %4552 = vmatprep.subr.bf16.mxu0 0
  %4553 = vmatpush2.bf16.msra.mxu0 0
  %4554 = vmatprep.subr.bf16.mxu0 0
  %4555 = vmatpush2.bf16.msra.mxu0 0
  %4556 = vmatprep.mubr.bf16.mxu0 0
  %4557 = vmatmul.mubr.bf16.gmra.mxu0 %v4504
  %v4558 = vpop.f32.mrf.mxu0
  %v4559 = vadd.f32 0.0, %v4558
  %v4560 = vpop.f32.mrf.mxu0
  %v4561 = vpop.f32.mrf.mxu0
  %v4562 = vadd.f32 0.0, %v4561
  %v4563 = vpop.f32.mrf.mxu0
  %4564 = vmatprep.mubr.bf16.mxu0 0
  %4565 = vmatmul.mubr.bf16.gmra.mxu0 %v4507
  %v4566 = vpop.f32.mrf.mxu0
  %v4567 = vadd.f32 0.0, %v4566
  %v4568 = vpop.f32.mrf.mxu0
  %v4569 = vpop.f32.mrf.mxu0
  %v4570 = vadd.f32 0.0, %v4569
  %v4571 = vpop.f32.mrf.mxu0
  %4572 = vmatprep.mubr.bf16.mxu0 0
  %4573 = vmatmul.mubr.bf16.gmra.mxu0 %v4510
  %v4574 = vpop.f32.mrf.mxu0
  %v4575 = vadd.f32 0.0, %v4574
  %v4576 = vpop.f32.mrf.mxu0
  %v4577 = vpop.f32.mrf.mxu0
  %v4578 = vadd.f32 0.0, %v4577
  %v4579 = vpop.f32.mrf.mxu0
  %4580 = vmatprep.mubr.bf16.mxu0 0
  %4581 = vmatmul.mubr.bf16.gmra.mxu0 %v4513
  %v4582 = vpop.f32.mrf.mxu0
  %v4583 = vadd.f32 0.0, %v4582
  %v4584 = vpop.f32.mrf.mxu0
  %v4585 = vpop.f32.mrf.mxu0
  %v4586 = vadd.f32 0.0, %v4585
  %v4587 = vpop.f32.mrf.mxu0
  %4588 = vmatprep.mubr.bf16.mxu0 0
  %4589 = vmatmul.mubr.bf16.gmra.mxu0 %v4516
  %v4590 = vpop.f32.mrf.mxu0
  %v4591 = vadd.f32 0.0, %v4590
  %v4592 = vpop.f32.mrf.mxu0
  %v4593 = vpop.f32.mrf.mxu0
  %v4594 = vadd.f32 0.0, %v4593
  %v4595 = vpop.f32.mrf.mxu0
  %4596 = vmatprep.mubr.bf16.mxu0 0
  %4597 = vmatmul.mubr.bf16.gmra.mxu0 %v4519
  %v4598 = vpop.f32.mrf.mxu0
  %v4599 = vadd.f32 0.0, %v4598
  %v4600 = vpop.f32.mrf.mxu0
  %v4601 = vpop.f32.mrf.mxu0
  %v4602 = vadd.f32 0.0, %v4601
  %v4603 = vpop.f32.mrf.mxu0
  %4604 = vdwg.mxu0
  %v4606 = vsel %vm2871, %v3964, 0
  %v4609 = vsel %vm2871, %v3965, 0
  %v4612 = vsel %vm2871, %v3966, 0
  %v4615 = vsel %vm2871, %v3967, 0
  %v4618 = vsel %vm2871, %v3968, 0
  %v4621 = vsel %vm2871, %v3969, 0
  %v4624 = vsel %vm4010, %v3989, 0
  %4626 = vmatprep.subr.bf16.mxu0 0
  %4627 = vmatpush1.bf16.msra.mxu0 0
  %4628 = vmatprep.subr.bf16.mxu0 0
  %4629 = vmatpush1.bf16.msra.mxu0 0
  %4630 = vmatprep.subr.bf16.mxu0 0
  %4631 = vmatpush1.bf16.msra.mxu0 0
  %4632 = vmatprep.subr.bf16.mxu0 0
  %4633 = vmatpush1.bf16.msra.mxu0 0
  %4634 = vmatprep.subr.bf16.mxu0 0
  %4635 = vmatpush1.bf16.msra.mxu0 0
  %4636 = vmatprep.subr.bf16.mxu0 0
  %4637 = vmatpush1.bf16.msra.mxu0 0
  %4638 = vmatprep.subr.bf16.mxu0 0
  %4639 = vmatpush1.bf16.msra.mxu0 %v4624
  %4640 = vmatprep.subr.bf16.mxu0 0
  %4641 = vmatpush1.bf16.msra.mxu0 %v3988
  %4642 = vmatprep.subr.bf16.mxu0 0
  %4643 = vmatpush2.bf16.msra.mxu0 0
  %4644 = vmatprep.subr.bf16.mxu0 0
  %4645 = vmatpush2.bf16.msra.mxu0 0
  %4646 = vmatprep.subr.bf16.mxu0 0
  %4647 = vmatpush2.bf16.msra.mxu0 0
  %4648 = vmatprep.subr.bf16.mxu0 0
  %4649 = vmatpush2.bf16.msra.mxu0 0
  %4650 = vmatprep.subr.bf16.mxu0 0
  %4651 = vmatpush2.bf16.msra.mxu0 0
  %4652 = vmatprep.subr.bf16.mxu0 0
  %4653 = vmatpush2.bf16.msra.mxu0 0
  %4654 = vmatprep.subr.bf16.mxu0 0
  %4655 = vmatpush2.bf16.msra.mxu0 0
  %4656 = vmatprep.subr.bf16.mxu0 0
  %4657 = vmatpush2.bf16.msra.mxu0 0
  %4658 = vmatprep.mubr.bf16.mxu0 0
  %4659 = vmatmul.mubr.bf16.gmra.mxu0 %v4606
  %v4660 = vpop.f32.mrf.mxu0
  %v4661 = vadd.f32 0.0, %v4660
  %v4662 = vpop.f32.mrf.mxu0
  %v4663 = vpop.f32.mrf.mxu0
  %v4664 = vadd.f32 0.0, %v4663
  %v4665 = vpop.f32.mrf.mxu0
  %4666 = vmatprep.mubr.bf16.mxu0 0
  %4667 = vmatmul.mubr.bf16.gmra.mxu0 %v4609
  %v4668 = vpop.f32.mrf.mxu0
  %v4669 = vadd.f32 0.0, %v4668
  %v4670 = vpop.f32.mrf.mxu0
  %v4671 = vpop.f32.mrf.mxu0
  %v4672 = vadd.f32 0.0, %v4671
  %v4673 = vpop.f32.mrf.mxu0
  %4674 = vmatprep.mubr.bf16.mxu0 0
  %4675 = vmatmul.mubr.bf16.gmra.mxu0 %v4612
  %v4676 = vpop.f32.mrf.mxu0
  %v4677 = vadd.f32 0.0, %v4676
  %v4678 = vpop.f32.mrf.mxu0
  %v4679 = vpop.f32.mrf.mxu0
  %v4680 = vadd.f32 0.0, %v4679
  %v4681 = vpop.f32.mrf.mxu0
  %4682 = vmatprep.mubr.bf16.mxu0 0
  %4683 = vmatmul.mubr.bf16.gmra.mxu0 %v4615
  %v4684 = vpop.f32.mrf.mxu0
  %v4685 = vadd.f32 0.0, %v4684
  %v4686 = vpop.f32.mrf.mxu0
  %v4687 = vpop.f32.mrf.mxu0
  %v4688 = vadd.f32 0.0, %v4687
  %v4689 = vpop.f32.mrf.mxu0
  %4690 = vmatprep.mubr.bf16.mxu0 0
  %4691 = vmatmul.mubr.bf16.gmra.mxu0 %v4618
  %v4692 = vpop.f32.mrf.mxu0
  %v4693 = vadd.f32 0.0, %v4692
  %v4694 = vpop.f32.mrf.mxu0
  %v4695 = vpop.f32.mrf.mxu0
  %v4696 = vadd.f32 0.0, %v4695
  %v4697 = vpop.f32.mrf.mxu0
  %4698 = vmatprep.mubr.bf16.mxu0 0
  %4699 = vmatmul.mubr.bf16.gmra.mxu0 %v4621
  %v4700 = vpop.f32.mrf.mxu0
  %v4701 = vadd.f32 0.0, %v4700
  %v4702 = vpop.f32.mrf.mxu0
  %v4703 = vpop.f32.mrf.mxu0
  %v4704 = vadd.f32 0.0, %v4703
  %v4705 = vpop.f32.mrf.mxu0
  %4706 = vdwg.mxu0
  %v4708 = vsel %vm2871, %v3970, 0
  %v4711 = vsel %vm2871, %v3971, 0
  %v4714 = vsel %vm2871, %v3972, 0
  %v4717 = vsel %vm2871, %v3973, 0
  %v4720 = vsel %vm2871, %v3974, 0
  %v4723 = vsel %vm2871, %v3975, 0
  %v4726 = vsel %vm4010, %v3991, 0
  %4728 = vmatprep.subr.bf16.mxu0 0
  %4729 = vmatpush1.bf16.msra.mxu0 0
  %4730 = vmatprep.subr.bf16.mxu0 0
  %4731 = vmatpush1.bf16.msra.mxu0 0
  %4732 = vmatprep.subr.bf16.mxu0 0
  %4733 = vmatpush1.bf16.msra.mxu0 0
  %4734 = vmatprep.subr.bf16.mxu0 0
  %4735 = vmatpush1.bf16.msra.mxu0 0
  %4736 = vmatprep.subr.bf16.mxu0 0
  %4737 = vmatpush1.bf16.msra.mxu0 0
  %4738 = vmatprep.subr.bf16.mxu0 0
  %4739 = vmatpush1.bf16.msra.mxu0 0
  %4740 = vmatprep.subr.bf16.mxu0 0
  %4741 = vmatpush1.bf16.msra.mxu0 %v4726
  %4742 = vmatprep.subr.bf16.mxu0 0
  %4743 = vmatpush1.bf16.msra.mxu0 %v3990
  %4744 = vmatprep.subr.bf16.mxu0 0
  %4745 = vmatpush2.bf16.msra.mxu0 0
  %4746 = vmatprep.subr.bf16.mxu0 0
  %4747 = vmatpush2.bf16.msra.mxu0 0
  %4748 = vmatprep.subr.bf16.mxu0 0
  %4749 = vmatpush2.bf16.msra.mxu0 0
  %4750 = vmatprep.subr.bf16.mxu0 0
  %4751 = vmatpush2.bf16.msra.mxu0 0
  %4752 = vmatprep.subr.bf16.mxu0 0
  %4753 = vmatpush2.bf16.msra.mxu0 0
  %4754 = vmatprep.subr.bf16.mxu0 0
  %4755 = vmatpush2.bf16.msra.mxu0 0
  %4756 = vmatprep.subr.bf16.mxu0 0
  %4757 = vmatpush2.bf16.msra.mxu0 0
  %4758 = vmatprep.subr.bf16.mxu0 0
  %4759 = vmatpush2.bf16.msra.mxu0 0
  %4760 = vmatprep.mubr.bf16.mxu0 0
  %4761 = vmatmul.mubr.bf16.gmra.mxu0 %v4708
  %v4762 = vpop.f32.mrf.mxu0
  %v4763 = vadd.f32 0.0, %v4762
  %v4764 = vpop.f32.mrf.mxu0
  %v4765 = vpop.f32.mrf.mxu0
  %v4766 = vadd.f32 0.0, %v4765
  %v4767 = vpop.f32.mrf.mxu0
  %4768 = vmatprep.mubr.bf16.mxu0 0
  %4769 = vmatmul.mubr.bf16.gmra.mxu0 %v4711
  %v4770 = vpop.f32.mrf.mxu0
  %v4771 = vadd.f32 0.0, %v4770
  %v4772 = vpop.f32.mrf.mxu0
  %v4773 = vpop.f32.mrf.mxu0
  %v4774 = vadd.f32 0.0, %v4773
  %v4775 = vpop.f32.mrf.mxu0
  %4776 = vmatprep.mubr.bf16.mxu0 0
  %4777 = vmatmul.mubr.bf16.gmra.mxu0 %v4714
  %v4778 = vpop.f32.mrf.mxu0
  %v4779 = vadd.f32 0.0, %v4778
  %v4780 = vpop.f32.mrf.mxu0
  %v4781 = vpop.f32.mrf.mxu0
  %v4782 = vadd.f32 0.0, %v4781
  %v4783 = vpop.f32.mrf.mxu0
  %4784 = vmatprep.mubr.bf16.mxu0 0
  %4785 = vmatmul.mubr.bf16.gmra.mxu0 %v4717
  %v4786 = vpop.f32.mrf.mxu0
  %v4787 = vadd.f32 0.0, %v4786
  %v4788 = vpop.f32.mrf.mxu0
  %v4789 = vpop.f32.mrf.mxu0
  %v4790 = vadd.f32 0.0, %v4789
  %v4791 = vpop.f32.mrf.mxu0
  %4792 = vmatprep.mubr.bf16.mxu0 0
  %4793 = vmatmul.mubr.bf16.gmra.mxu0 %v4720
  %v4794 = vpop.f32.mrf.mxu0
  %v4795 = vadd.f32 0.0, %v4794
  %v4796 = vpop.f32.mrf.mxu0
  %v4797 = vpop.f32.mrf.mxu0
  %v4798 = vadd.f32 0.0, %v4797
  %v4799 = vpop.f32.mrf.mxu0
  %4800 = vmatprep.mubr.bf16.mxu0 0
  %4801 = vmatmul.mubr.bf16.gmra.mxu0 %v4723
  %v4802 = vpop.f32.mrf.mxu0
  %v4803 = vadd.f32 0.0, %v4802
  %v4804 = vpop.f32.mrf.mxu0
  %v4805 = vpop.f32.mrf.mxu0
  %v4806 = vadd.f32 0.0, %v4805
  %v4807 = vpop.f32.mrf.mxu0
  %4808 = vdwg.mxu0
  %v4809 = vsel %vm1769, %v4049, 0.0
  %v4810 = vsel %vm1769, %v4052, 0.0
  %v4811 = vsel %vm1769, %v4057, 0.0
  %v4812 = vsel %vm1770, %v4060, 0.0
  %v4813 = vsel %vm1770, %v4065, 0.0
  %v4814 = vsel %vm1770, %v4068, 0.0
  %v4815 = vsel %vm1771, %v4073, 0.0
  %v4816 = vsel %vm1771, %v4076, 0.0
  %v4817 = vsel %vm1771, %v4081, 0.0
  %v4818 = vsel %vm1772, %v4084, 0.0
  %v4819 = vsel %vm1772, %v4089, 0.0
  %v4820 = vsel %vm1772, %v4092, 0.0
  %v4821 = vsel %vm1769, %v4151, 0.0
  %v4822 = vsel %vm1769, %v4154, 0.0
  %v4823 = vsel %vm1769, %v4159, 0.0
  %v4824 = vsel %vm1770, %v4162, 0.0
  %v4825 = vsel %vm1770, %v4167, 0.0
  %v4826 = vsel %vm1770, %v4170, 0.0
  %v4827 = vsel %vm1771, %v4175, 0.0
  %v4828 = vsel %vm1771, %v4178, 0.0
  %v4829 = vsel %vm1771, %v4183, 0.0
  %v4830 = vsel %vm1772, %v4186, 0.0
  %v4831 = vsel %vm1772, %v4191, 0.0
  %v4832 = vsel %vm1772, %v4194, 0.0
  %v4833 = vsel %vm1769, %v4253, 0.0
  %v4834 = vsel %vm1769, %v4256, 0.0
  %v4835 = vsel %vm1769, %v4261, 0.0
  %v4836 = vsel %vm1770, %v4264, 0.0
  %v4837 = vsel %vm1770, %v4269, 0.0
  %v4838 = vsel %vm1770, %v4272, 0.0
  %v4839 = vsel %vm1771, %v4277, 0.0
  %v4840 = vsel %vm1771, %v4280, 0.0
  %v4841 = vsel %vm1771, %v4285, 0.0
  %v4842 = vsel %vm1772, %v4288, 0.0
  %v4843 = vsel %vm1772, %v4293, 0.0
  %v4844 = vsel %vm1772, %v4296, 0.0
  %v4845 = vsel %vm1769, %v4355, 0.0
  %v4846 = vsel %vm1769, %v4358, 0.0
  %v4847 = vsel %vm1769, %v4363, 0.0
  %v4848 = vsel %vm1770, %v4366, 0.0
  %v4849 = vsel %vm1770, %v4371, 0.0
  %v4850 = vsel %vm1770, %v4374, 0.0
  %v4851 = vsel %vm1771, %v4379, 0.0
  %v4852 = vsel %vm1771, %v4382, 0.0
  %v4853 = vsel %vm1771, %v4387, 0.0
  %v4854 = vsel %vm1772, %v4390, 0.0
  %v4855 = vsel %vm1772, %v4395, 0.0
  %v4856 = vsel %vm1772, %v4398, 0.0
  %v4857 = vsel %vm1769, %v4457, 0.0
  %v4858 = vsel %vm1769, %v4460, 0.0
  %v4859 = vsel %vm1769, %v4465, 0.0
  %v4860 = vsel %vm1770, %v4468, 0.0
  %v4861 = vsel %vm1770, %v4473, 0.0
  %v4862 = vsel %vm1770, %v4476, 0.0
  %v4863 = vsel %vm1771, %v4481, 0.0
  %v4864 = vsel %vm1771, %v4484, 0.0
  %v4865 = vsel %vm1771, %v4489, 0.0
  %v4866 = vsel %vm1772, %v4492, 0.0
  %v4867 = vsel %vm1772, %v4497, 0.0
  %v4868 = vsel %vm1772, %v4500, 0.0
  %v4869 = vsel %vm1769, %v4559, 0.0
  %v4870 = vsel %vm1769, %v4562, 0.0
  %v4871 = vsel %vm1769, %v4567, 0.0
  %v4872 = vsel %vm1770, %v4570, 0.0
  %v4873 = vsel %vm1770, %v4575, 0.0
  %v4874 = vsel %vm1770, %v4578, 0.0
  %v4875 = vsel %vm1771, %v4583, 0.0
  %v4876 = vsel %vm1771, %v4586, 0.0
  %v4877 = vsel %vm1771, %v4591, 0.0
  %v4878 = vsel %vm1772, %v4594, 0.0
  %v4879 = vsel %vm1772, %v4599, 0.0
  %v4880 = vsel %vm1772, %v4602, 0.0
  %v4881 = vsel %vm1769, %v4661, 0.0
  %v4882 = vsel %vm1769, %v4664, 0.0
  %v4883 = vsel %vm1769, %v4669, 0.0
  %v4884 = vsel %vm1770, %v4672, 0.0
  %v4885 = vsel %vm1770, %v4677, 0.0
  %v4886 = vsel %vm1770, %v4680, 0.0
  %v4887 = vsel %vm1771, %v4685, 0.0
  %v4888 = vsel %vm1771, %v4688, 0.0
  %v4889 = vsel %vm1771, %v4693, 0.0
  %v4890 = vsel %vm1772, %v4696, 0.0
  %v4891 = vsel %vm1772, %v4701, 0.0
  %v4892 = vsel %vm1772, %v4704, 0.0
  %v4893 = vsel %vm1769, %v4763, 0.0
  %v4894 = vsel %vm1769, %v4766, 0.0
  %v4895 = vsel %vm1769, %v4771, 0.0
  %v4896 = vsel %vm1770, %v4774, 0.0
  %v4897 = vsel %vm1770, %v4779, 0.0
  %v4898 = vsel %vm1770, %v4782, 0.0
  %v4899 = vsel %vm1771, %v4787, 0.0
  %v4900 = vsel %vm1771, %v4790, 0.0
  %v4901 = vsel %vm1771, %v4795, 0.0
  %v4902 = vsel %vm1772, %v4798, 0.0
  %v4903 = vsel %vm1772, %v4803, 0.0
  %v4904 = vsel %vm1772, %v4806, 0.0
  %v4905 = vadd.f32 %v4809, %v4812
  %v4906 = vadd.f32 %v4810, %v4813
  %v4907 = vadd.f32 %v4811, %v4814
  %v4908 = vadd.f32 %v4821, %v4824
  %v4909 = vadd.f32 %v4822, %v4825
  %v4910 = vadd.f32 %v4823, %v4826
  %v4911 = vadd.f32 %v4833, %v4836
  %v4912 = vadd.f32 %v4834, %v4837
  %v4913 = vadd.f32 %v4835, %v4838
  %v4914 = vadd.f32 %v4845, %v4848
  %v4915 = vadd.f32 %v4846, %v4849
  %v4916 = vadd.f32 %v4847, %v4850
  %v4917 = vadd.f32 %v4857, %v4860
  %v4918 = vadd.f32 %v4858, %v4861
  %v4919 = vadd.f32 %v4859, %v4862
  %v4920 = vadd.f32 %v4869, %v4872
  %v4921 = vadd.f32 %v4870, %v4873
  %v4922 = vadd.f32 %v4871, %v4874
  %v4923 = vadd.f32 %v4881, %v4884
  %v4924 = vadd.f32 %v4882, %v4885
  %v4925 = vadd.f32 %v4883, %v4886
  %v4926 = vadd.f32 %v4893, %v4896
  %v4927 = vadd.f32 %v4894, %v4897
  %v4928 = vadd.f32 %v4895, %v4898
  %v4929 = vadd.f32 %v4905, %v4815
  %v4930 = vadd.f32 %v4906, %v4816
  %v4931 = vadd.f32 %v4907, %v4817
  %v4932 = vadd.f32 %v4908, %v4827
  %v4933 = vadd.f32 %v4909, %v4828
  %v4934 = vadd.f32 %v4910, %v4829
  %v4935 = vadd.f32 %v4911, %v4839
  %v4936 = vadd.f32 %v4912, %v4840
  %v4937 = vadd.f32 %v4913, %v4841
  %v4938 = vadd.f32 %v4914, %v4851
  %v4939 = vadd.f32 %v4915, %v4852
  %v4940 = vadd.f32 %v4916, %v4853
  %v4941 = vadd.f32 %v4917, %v4863
  %v4942 = vadd.f32 %v4918, %v4864
  %v4943 = vadd.f32 %v4919, %v4865
  %v4944 = vadd.f32 %v4920, %v4875
  %v4945 = vadd.f32 %v4921, %v4876
  %v4946 = vadd.f32 %v4922, %v4877
  %v4947 = vadd.f32 %v4923, %v4887
  %v4948 = vadd.f32 %v4924, %v4888
  %v4949 = vadd.f32 %v4925, %v4889
  %v4950 = vadd.f32 %v4926, %v4899
  %v4951 = vadd.f32 %v4927, %v4900
  %v4952 = vadd.f32 %v4928, %v4901
  %v4953 = vadd.f32 %v4929, %v4818
  %v4954 = vadd.f32 %v4930, %v4819
  %v4955 = vadd.f32 %v4931, %v4820
  %v4956 = vadd.f32 %v4932, %v4830
  %v4957 = vadd.f32 %v4933, %v4831
  %v4958 = vadd.f32 %v4934, %v4832
  %v4959 = vadd.f32 %v4935, %v4842
  %v4960 = vadd.f32 %v4936, %v4843
  %v4961 = vadd.f32 %v4937, %v4844
  %v4962 = vadd.f32 %v4938, %v4854
  %v4963 = vadd.f32 %v4939, %v4855
  %v4964 = vadd.f32 %v4940, %v4856
  %v4965 = vadd.f32 %v4941, %v4866
  %v4966 = vadd.f32 %v4942, %v4867
  %v4967 = vadd.f32 %v4943, %v4868
  %v4968 = vadd.f32 %v4944, %v4878
  %v4969 = vadd.f32 %v4945, %v4879
  %v4970 = vadd.f32 %v4946, %v4880
  %v4971 = vadd.f32 %v4947, %v4890
  %v4972 = vadd.f32 %v4948, %v4891
  %v4973 = vadd.f32 %v4949, %v4892
  %v4974 = vadd.f32 %v4950, %v4902
  %v4975 = vadd.f32 %v4951, %v4903
  %v4976 = vadd.f32 %v4952, %v4904
  %v4977 = vpack.c.bf16 %v4954, %v4953
  %v4978 = vpack.c.bf16 %v4956, %v4955
  %v4979 = vpack.c.bf16 %v4958, %v4957
  %v4980 = vpack.c.bf16 %v4960, %v4959
  %v4981 = vpack.c.bf16 %v4962, %v4961
  %v4982 = vpack.c.bf16 %v4964, %v4963
  %v4983 = vpack.c.bf16 %v4966, %v4965
  %v4984 = vpack.c.bf16 %v4968, %v4967
  %v4985 = vpack.c.bf16 %v4970, %v4969
  %v4986 = vpack.c.bf16 %v4972, %v4971
  %v4987 = vpack.c.bf16 %v4974, %v4973
  %v4988 = vpack.c.bf16 %v4976, %v4975
  %v4989 = vld [vmem:[%s11] sm:$0xf]
  %v4990 = vld [vmem:[%s11 + $0x4] sm:$0xf]
  %v4991 = vld [vmem:[%s11 + $0x8] sm:$0xf]
  %v4992 = vld [vmem:[%s11 + $0xc] sm:$0xf]
  %v4993 = vld [vmem:[%s12] sm:$0x1]
  %v4995 = vlaneseq
  %v4996 = vshrl.u32 %v4995, 7
  %v4997 = vsub.s32 0, %v4996
  %v4998 = vrot.slane %v4993, %v4997
  %v5004 = vunpack.c.l.b16 %v4989
  %v5005 = vunpack.c.l.b16 %v4990
  %v5006 = vunpack.c.l.b16 %v4991
  %v5007 = vunpack.c.l.b16 %v4992
  %v5008 = vpack.c.b16 %v5005, %v5004
  %v5009 = vpack.c.b16 %v5007, %v5006
  %v5013 = vsel %vm498, %v4977, 0
  %v5016 = vsel %vm498, %v4978, 0
  %v5019 = vsel %vm498, %v4979, 0
  %v5022 = vsel %vm498, %v4980, 0
  %v5025 = vsel %vm498, %v4981, 0
  %v5028 = vsel %vm498, %v4982, 0
  %v5031 = vsel %vm498, %v4983, 0
  %v5034 = vsel %vm498, %v4984, 0
  %v5037 = vsel %vm498, %v4985, 0
  %v5040 = vsel %vm498, %v4986, 0
  %v5043 = vsel %vm498, %v4987, 0
  %v5046 = vsel %vm498, %v4988, 0
  %5048 = vmatprep.subr.bf16.mxu0 0
  %5049 = vmatpush1.bf16.msra.mxu0 0
  %5050 = vmatprep.subr.bf16.mxu0 0
  %5051 = vmatpush1.bf16.msra.mxu0 0
  %5052 = vmatprep.subr.bf16.mxu0 0
  %5053 = vmatpush1.bf16.msra.mxu0 0
  %5054 = vmatprep.subr.bf16.mxu0 0
  %5055 = vmatpush1.bf16.msra.mxu0 0
  %5056 = vmatprep.subr.bf16.mxu0 0
  %5057 = vmatpush1.bf16.msra.mxu0 0
  %5058 = vmatprep.subr.bf16.mxu0 0
  %5059 = vmatpush1.bf16.msra.mxu0 0
  %5060 = vmatprep.subr.bf16.mxu0 0
  %5061 = vmatpush1.bf16.msra.mxu0 %v5009
  %5062 = vmatprep.subr.bf16.mxu0 0
  %5063 = vmatpush1.bf16.msra.mxu0 %v5008
  %5064 = vmatprep.subr.bf16.mxu0 0
  %5065 = vmatpush2.bf16.msra.mxu0 0
  %5066 = vmatprep.subr.bf16.mxu0 0
  %5067 = vmatpush2.bf16.msra.mxu0 0
  %5068 = vmatprep.subr.bf16.mxu0 0
  %5069 = vmatpush2.bf16.msra.mxu0 0
  %5070 = vmatprep.subr.bf16.mxu0 0
  %5071 = vmatpush2.bf16.msra.mxu0 0
  %5072 = vmatprep.subr.bf16.mxu0 0
  %5073 = vmatpush2.bf16.msra.mxu0 0
  %5074 = vmatprep.subr.bf16.mxu0 0
  %5075 = vmatpush2.bf16.msra.mxu0 0
  %5076 = vmatprep.subr.bf16.mxu0 0
  %5077 = vmatpush2.bf16.msra.mxu0 0
  %5078 = vmatprep.subr.bf16.mxu0 0
  %5079 = vmatpush2.bf16.msra.mxu0 0
  %5080 = vmatprep.mubr.bf16.mxu0 0
  %5081 = vmatmul.mubr.bf16.gmra.mxu0 %v5013
  %v5082 = vpop.f32.mrf.mxu0
  %v5083 = vadd.f32 %v4998, %v5082
  %v5084 = vpop.f32.mrf.mxu0
  %v5085 = vpop.f32.mrf.mxu0
  %v5086 = vadd.f32 %v4998, %v5085
  %v5087 = vpop.f32.mrf.mxu0
  %5088 = vmatprep.mubr.bf16.mxu0 0
  %5089 = vmatmul.mubr.bf16.gmra.mxu0 %v5016
  %v5090 = vpop.f32.mrf.mxu0
  %v5091 = vadd.f32 %v4998, %v5090
  %v5092 = vpop.f32.mrf.mxu0
  %v5093 = vpop.f32.mrf.mxu0
  %v5094 = vadd.f32 %v4998, %v5093
  %v5095 = vpop.f32.mrf.mxu0
  %5096 = vmatprep.mubr.bf16.mxu0 0
  %5097 = vmatmul.mubr.bf16.gmra.mxu0 %v5019
  %v5098 = vpop.f32.mrf.mxu0
  %v5099 = vadd.f32 %v4998, %v5098
  %v5100 = vpop.f32.mrf.mxu0
  %v5101 = vpop.f32.mrf.mxu0
  %v5102 = vadd.f32 %v4998, %v5101
  %v5103 = vpop.f32.mrf.mxu0
  %5104 = vmatprep.mubr.bf16.mxu0 0
  %5105 = vmatmul.mubr.bf16.gmra.mxu0 %v5022
  %v5106 = vpop.f32.mrf.mxu0
  %v5107 = vadd.f32 %v4998, %v5106
  %v5108 = vpop.f32.mrf.mxu0
  %v5109 = vpop.f32.mrf.mxu0
  %v5110 = vadd.f32 %v4998, %v5109
  %v5111 = vpop.f32.mrf.mxu0
  %5112 = vmatprep.mubr.bf16.mxu0 0
  %5113 = vmatmul.mubr.bf16.gmra.mxu0 %v5025
  %v5114 = vpop.f32.mrf.mxu0
  %v5115 = vadd.f32 %v4998, %v5114
  %v5116 = vpop.f32.mrf.mxu0
  %v5117 = vpop.f32.mrf.mxu0
  %v5118 = vadd.f32 %v4998, %v5117
  %v5119 = vpop.f32.mrf.mxu0
  %5120 = vmatprep.mubr.bf16.mxu0 0
  %5121 = vmatmul.mubr.bf16.gmra.mxu0 %v5028
  %v5122 = vpop.f32.mrf.mxu0
  %v5123 = vadd.f32 %v4998, %v5122
  %v5124 = vpop.f32.mrf.mxu0
  %v5125 = vpop.f32.mrf.mxu0
  %v5126 = vadd.f32 %v4998, %v5125
  %v5127 = vpop.f32.mrf.mxu0
  %5128 = vmatprep.mubr.bf16.mxu0 0
  %5129 = vmatmul.mubr.bf16.gmra.mxu0 %v5031
  %v5130 = vpop.f32.mrf.mxu0
  %v5131 = vadd.f32 %v4998, %v5130
  %v5132 = vpop.f32.mrf.mxu0
  %v5133 = vpop.f32.mrf.mxu0
  %v5134 = vadd.f32 %v4998, %v5133
  %v5135 = vpop.f32.mrf.mxu0
  %5136 = vmatprep.mubr.bf16.mxu0 0
  %5137 = vmatmul.mubr.bf16.gmra.mxu0 %v5034
  %v5138 = vpop.f32.mrf.mxu0
  %v5139 = vadd.f32 %v4998, %v5138
  %v5140 = vpop.f32.mrf.mxu0
  %v5141 = vpop.f32.mrf.mxu0
  %v5142 = vadd.f32 %v4998, %v5141
  %v5143 = vpop.f32.mrf.mxu0
  %5144 = vmatprep.mubr.bf16.mxu0 0
  %5145 = vmatmul.mubr.bf16.gmra.mxu0 %v5037
  %v5146 = vpop.f32.mrf.mxu0
  %v5147 = vadd.f32 %v4998, %v5146
  %v5148 = vpop.f32.mrf.mxu0
  %v5149 = vpop.f32.mrf.mxu0
  %v5150 = vadd.f32 %v4998, %v5149
  %v5151 = vpop.f32.mrf.mxu0
  %5152 = vmatprep.mubr.bf16.mxu0 0
  %5153 = vmatmul.mubr.bf16.gmra.mxu0 %v5040
  %v5154 = vpop.f32.mrf.mxu0
  %v5155 = vadd.f32 %v4998, %v5154
  %v5156 = vpop.f32.mrf.mxu0
  %v5157 = vpop.f32.mrf.mxu0
  %v5158 = vadd.f32 %v4998, %v5157
  %v5159 = vpop.f32.mrf.mxu0
  %5160 = vmatprep.mubr.bf16.mxu0 0
  %5161 = vmatmul.mubr.bf16.gmra.mxu0 %v5043
  %v5162 = vpop.f32.mrf.mxu0
  %v5163 = vadd.f32 %v4998, %v5162
  %v5164 = vpop.f32.mrf.mxu0
  %v5165 = vpop.f32.mrf.mxu0
  %v5166 = vadd.f32 %v4998, %v5165
  %v5167 = vpop.f32.mrf.mxu0
  %5168 = vmatprep.mubr.bf16.mxu0 0
  %5169 = vmatmul.mubr.bf16.gmra.mxu0 %v5046
  %v5170 = vpop.f32.mrf.mxu0
  %v5171 = vadd.f32 %v4998, %v5170
  %v5172 = vpop.f32.mrf.mxu0
  %v5173 = vpop.f32.mrf.mxu0
  %v5174 = vadd.f32 %v4998, %v5173
  %v5175 = vpop.f32.mrf.mxu0
  %5176 = vdwg.mxu0
  %v5177 = vadd.f32 %v848, %v5083
  %v5178 = vadd.f32 %v849, %v5086
  %v5179 = vadd.f32 %v850, %v5091
  %v5180 = vadd.f32 %v851, %v5094
  %v5181 = vadd.f32 %v852, %v5099
  %v5182 = vadd.f32 %v853, %v5102
  %v5183 = vadd.f32 %v854, %v5107
  %v5184 = vadd.f32 %v855, %v5110
  %v5185 = vadd.f32 %v856, %v5115
  %v5186 = vadd.f32 %v857, %v5118
  %v5187 = vadd.f32 %v858, %v5123
  %v5188 = vadd.f32 %v859, %v5126
  %v5189 = vadd.f32 %v860, %v5131
  %v5190 = vadd.f32 %v861, %v5134
  %v5191 = vadd.f32 %v862, %v5139
  %v5192 = vadd.f32 %v863, %v5142
  %v5193 = vadd.f32 %v864, %v5147
  %v5194 = vadd.f32 %v865, %v5150
  %v5195 = vadd.f32 %v866, %v5155
  %v5196 = vadd.f32 %v867, %v5158
  %v5197 = vadd.f32 %v868, %v5163
  %v5198 = vadd.f32 %v869, %v5166
  %v5199 = vadd.f32 %v870, %v5171
  %v5200 = vadd.f32 %v871, %v5174
  %v5201 = vld [vmem:[%s15] sm:$0x1]
  %v5202 = vld [vmem:[%s16] sm:$0x1]
  %v5203 = vsel %vm498, %v5177, 0.0
  %5204 = vadd.xlane.f32.xlu0 %v5203
  %v5205 = vpop.xlane.xlu0 %5204
  %v5206 = vsel %vm498, %v5178, 0.0
  %5207 = vadd.xlane.f32.xlu0 %v5206
  %v5208 = vpop.xlane.xlu0 %5207
  %v5209 = vsel %vm498, %v5179, 0.0
  %5210 = vadd.xlane.f32.xlu0 %v5209
  %v5211 = vpop.xlane.xlu0 %5210
  %v5212 = vsel %vm498, %v5180, 0.0
  %5213 = vadd.xlane.f32.xlu0 %v5212
  %v5214 = vpop.xlane.xlu0 %5213
  %v5215 = vsel %vm498, %v5181, 0.0
  %5216 = vadd.xlane.f32.xlu0 %v5215
  %v5217 = vpop.xlane.xlu0 %5216
  %v5218 = vsel %vm498, %v5182, 0.0
  %5219 = vadd.xlane.f32.xlu0 %v5218
  %v5220 = vpop.xlane.xlu0 %5219
  %v5221 = vsel %vm498, %v5183, 0.0
  %5222 = vadd.xlane.f32.xlu0 %v5221
  %v5223 = vpop.xlane.xlu0 %5222
  %v5224 = vsel %vm498, %v5184, 0.0
  %5225 = vadd.xlane.f32.xlu0 %v5224
  %v5226 = vpop.xlane.xlu0 %5225
  %v5227 = vsel %vm498, %v5185, 0.0
  %5228 = vadd.xlane.f32.xlu0 %v5227
  %v5229 = vpop.xlane.xlu0 %5228
  %v5230 = vsel %vm498, %v5186, 0.0
  %5231 = vadd.xlane.f32.xlu0 %v5230
  %v5232 = vpop.xlane.xlu0 %5231
  %v5233 = vsel %vm498, %v5187, 0.0
  %5234 = vadd.xlane.f32.xlu0 %v5233
  %v5235 = vpop.xlane.xlu0 %5234
  %v5236 = vsel %vm498, %v5188, 0.0
  %5237 = vadd.xlane.f32.xlu0 %v5236
  %v5238 = vpop.xlane.xlu0 %5237
  %v5239 = vsel %vm498, %v5189, 0.0
  %5240 = vadd.xlane.f32.xlu0 %v5239
  %v5241 = vpop.xlane.xlu0 %5240
  %v5242 = vsel %vm498, %v5190, 0.0
  %5243 = vadd.xlane.f32.xlu0 %v5242
  %v5244 = vpop.xlane.xlu0 %5243
  %v5245 = vsel %vm498, %v5191, 0.0
  %5246 = vadd.xlane.f32.xlu0 %v5245
  %v5247 = vpop.xlane.xlu0 %5246
  %v5248 = vsel %vm498, %v5192, 0.0
  %5249 = vadd.xlane.f32.xlu0 %v5248
  %v5250 = vpop.xlane.xlu0 %5249
  %v5251 = vsel %vm498, %v5193, 0.0
  %5252 = vadd.xlane.f32.xlu0 %v5251
  %v5253 = vpop.xlane.xlu0 %5252
  %v5254 = vsel %vm498, %v5194, 0.0
  %5255 = vadd.xlane.f32.xlu0 %v5254
  %v5256 = vpop.xlane.xlu0 %5255
  %v5257 = vsel %vm498, %v5195, 0.0
  %5258 = vadd.xlane.f32.xlu0 %v5257
  %v5259 = vpop.xlane.xlu0 %5258
  %v5260 = vsel %vm498, %v5196, 0.0
  %5261 = vadd.xlane.f32.xlu0 %v5260
  %v5262 = vpop.xlane.xlu0 %5261
  %v5263 = vsel %vm498, %v5197, 0.0
  %5264 = vadd.xlane.f32.xlu0 %v5263
  %v5265 = vpop.xlane.xlu0 %5264
  %v5266 = vsel %vm498, %v5198, 0.0
  %5267 = vadd.xlane.f32.xlu0 %v5266
  %v5268 = vpop.xlane.xlu0 %5267
  %v5269 = vsel %vm498, %v5199, 0.0
  %5270 = vadd.xlane.f32.xlu0 %v5269
  %v5271 = vpop.xlane.xlu0 %5270
  %v5272 = vsel %vm498, %v5200, 0.0
  %5273 = vadd.xlane.f32.xlu0 %v5272
  %v5274 = vpop.xlane.xlu0 %5273
  %v5275 = vmul.f32 %v5205, %v571
  %v5276 = vmul.f32 %v5208, %v571
  %v5277 = vmul.f32 %v5211, %v571
  %v5278 = vmul.f32 %v5214, %v571
  %v5279 = vmul.f32 %v5217, %v571
  %v5280 = vmul.f32 %v5220, %v571
  %v5281 = vmul.f32 %v5223, %v571
  %v5282 = vmul.f32 %v5226, %v571
  %v5283 = vmul.f32 %v5229, %v571
  %v5284 = vmul.f32 %v5232, %v571
  %v5285 = vmul.f32 %v5235, %v571
  %v5286 = vmul.f32 %v5238, %v571
  %v5287 = vmul.f32 %v5241, %v571
  %v5288 = vmul.f32 %v5244, %v571
  %v5289 = vmul.f32 %v5247, %v571
  %v5290 = vmul.f32 %v5250, %v571
  %v5291 = vmul.f32 %v5253, %v571
  %v5292 = vmul.f32 %v5256, %v571
  %v5293 = vmul.f32 %v5259, %v571
  %v5294 = vmul.f32 %v5262, %v571
  %v5295 = vmul.f32 %v5265, %v571
  %v5296 = vmul.f32 %v5268, %v571
  %v5297 = vmul.f32 %v5271, %v571
  %v5298 = vmul.f32 %v5274, %v571
  %v5299 = vsub.f32 %v5177, %v5275
  %v5300 = vsub.f32 %v5178, %v5276
  %v5301 = vsub.f32 %v5179, %v5277
  %v5302 = vsub.f32 %v5180, %v5278
  %v5303 = vsub.f32 %v5181, %v5279
  %v5304 = vsub.f32 %v5182, %v5280
  %v5305 = vsub.f32 %v5183, %v5281
  %v5306 = vsub.f32 %v5184, %v5282
  %v5307 = vsub.f32 %v5185, %v5283
  %v5308 = vsub.f32 %v5186, %v5284
  %v5309 = vsub.f32 %v5187, %v5285
  %v5310 = vsub.f32 %v5188, %v5286
  %v5311 = vsub.f32 %v5189, %v5287
  %v5312 = vsub.f32 %v5190, %v5288
  %v5313 = vsub.f32 %v5191, %v5289
  %v5314 = vsub.f32 %v5192, %v5290
  %v5315 = vsub.f32 %v5193, %v5291
  %v5316 = vsub.f32 %v5194, %v5292
  %v5317 = vsub.f32 %v5195, %v5293
  %v5318 = vsub.f32 %v5196, %v5294
  %v5319 = vsub.f32 %v5197, %v5295
  %v5320 = vsub.f32 %v5198, %v5296
  %v5321 = vsub.f32 %v5199, %v5297
  %v5322 = vsub.f32 %v5200, %v5298
  %v5323 = vmul.f32 %v5299, %v5299
  %v5324 = vmul.f32 %v5300, %v5300
  %v5325 = vmul.f32 %v5301, %v5301
  %v5326 = vmul.f32 %v5302, %v5302
  %v5327 = vmul.f32 %v5303, %v5303
  %v5328 = vmul.f32 %v5304, %v5304
  %v5329 = vmul.f32 %v5305, %v5305
  %v5330 = vmul.f32 %v5306, %v5306
  %v5331 = vmul.f32 %v5307, %v5307
  %v5332 = vmul.f32 %v5308, %v5308
  %v5333 = vmul.f32 %v5309, %v5309
  %v5334 = vmul.f32 %v5310, %v5310
  %v5335 = vmul.f32 %v5311, %v5311
  %v5336 = vmul.f32 %v5312, %v5312
  %v5337 = vmul.f32 %v5313, %v5313
  %v5338 = vmul.f32 %v5314, %v5314
  %v5339 = vmul.f32 %v5315, %v5315
  %v5340 = vmul.f32 %v5316, %v5316
  %v5341 = vmul.f32 %v5317, %v5317
  %v5342 = vmul.f32 %v5318, %v5318
  %v5343 = vmul.f32 %v5319, %v5319
  %v5344 = vmul.f32 %v5320, %v5320
  %v5345 = vmul.f32 %v5321, %v5321
  %v5346 = vmul.f32 %v5322, %v5322
  %v5347 = vsel %vm498, %v5323, 0.0
  %5348 = vadd.xlane.f32.xlu0 %v5347
  %v5349 = vpop.xlane.xlu0 %5348
  %v5350 = vsel %vm498, %v5324, 0.0
  %5351 = vadd.xlane.f32.xlu0 %v5350
  %v5352 = vpop.xlane.xlu0 %5351
  %v5353 = vsel %vm498, %v5325, 0.0
  %5354 = vadd.xlane.f32.xlu0 %v5353
  %v5355 = vpop.xlane.xlu0 %5354
  %v5356 = vsel %vm498, %v5326, 0.0
  %5357 = vadd.xlane.f32.xlu0 %v5356
  %v5358 = vpop.xlane.xlu0 %5357
  %v5359 = vsel %vm498, %v5327, 0.0
  %5360 = vadd.xlane.f32.xlu0 %v5359
  %v5361 = vpop.xlane.xlu0 %5360
  %v5362 = vsel %vm498, %v5328, 0.0
  %5363 = vadd.xlane.f32.xlu0 %v5362
  %v5364 = vpop.xlane.xlu0 %5363
  %v5365 = vsel %vm498, %v5329, 0.0
  %5366 = vadd.xlane.f32.xlu0 %v5365
  %v5367 = vpop.xlane.xlu0 %5366
  %v5368 = vsel %vm498, %v5330, 0.0
  %5369 = vadd.xlane.f32.xlu0 %v5368
  %v5370 = vpop.xlane.xlu0 %5369
  %v5371 = vsel %vm498, %v5331, 0.0
  %5372 = vadd.xlane.f32.xlu0 %v5371
  %v5373 = vpop.xlane.xlu0 %5372
  %v5374 = vsel %vm498, %v5332, 0.0
  %5375 = vadd.xlane.f32.xlu0 %v5374
  %v5376 = vpop.xlane.xlu0 %5375
  %v5377 = vsel %vm498, %v5333, 0.0
  %5378 = vadd.xlane.f32.xlu0 %v5377
  %v5379 = vpop.xlane.xlu0 %5378
  %v5380 = vsel %vm498, %v5334, 0.0
  %5381 = vadd.xlane.f32.xlu0 %v5380
  %v5382 = vpop.xlane.xlu0 %5381
  %v5383 = vsel %vm498, %v5335, 0.0
  %5384 = vadd.xlane.f32.xlu0 %v5383
  %v5385 = vpop.xlane.xlu0 %5384
  %v5386 = vsel %vm498, %v5336, 0.0
  %5387 = vadd.xlane.f32.xlu0 %v5386
  %v5388 = vpop.xlane.xlu0 %5387
  %v5389 = vsel %vm498, %v5337, 0.0
  %5390 = vadd.xlane.f32.xlu0 %v5389
  %v5391 = vpop.xlane.xlu0 %5390
  %v5392 = vsel %vm498, %v5338, 0.0
  %5393 = vadd.xlane.f32.xlu0 %v5392
  %v5394 = vpop.xlane.xlu0 %5393
  %v5395 = vsel %vm498, %v5339, 0.0
  %5396 = vadd.xlane.f32.xlu0 %v5395
  %v5397 = vpop.xlane.xlu0 %5396
  %v5398 = vsel %vm498, %v5340, 0.0
  %5399 = vadd.xlane.f32.xlu0 %v5398
  %v5400 = vpop.xlane.xlu0 %5399
  %v5401 = vsel %vm498, %v5341, 0.0
  %5402 = vadd.xlane.f32.xlu0 %v5401
  %v5403 = vpop.xlane.xlu0 %5402
  %v5404 = vsel %vm498, %v5342, 0.0
  %5405 = vadd.xlane.f32.xlu0 %v5404
  %v5406 = vpop.xlane.xlu0 %5405
  %v5407 = vsel %vm498, %v5343, 0.0
  %5408 = vadd.xlane.f32.xlu0 %v5407
  %v5409 = vpop.xlane.xlu0 %5408
  %v5410 = vsel %vm498, %v5344, 0.0
  %5411 = vadd.xlane.f32.xlu0 %v5410
  %v5412 = vpop.xlane.xlu0 %5411
  %v5413 = vsel %vm498, %v5345, 0.0
  %5414 = vadd.xlane.f32.xlu0 %v5413
  %v5415 = vpop.xlane.xlu0 %5414
  %v5416 = vsel %vm498, %v5346, 0.0
  %5417 = vadd.xlane.f32.xlu0 %v5416
  %v5418 = vpop.xlane.xlu0 %5417
  %v5419 = vmul.f32 %v5349, %v571
  %v5420 = vmul.f32 %v5352, %v571
  %v5421 = vmul.f32 %v5355, %v571
  %v5422 = vmul.f32 %v5358, %v571
  %v5423 = vmul.f32 %v5361, %v571
  %v5424 = vmul.f32 %v5364, %v571
  %v5425 = vmul.f32 %v5367, %v571
  %v5426 = vmul.f32 %v5370, %v571
  %v5427 = vmul.f32 %v5373, %v571
  %v5428 = vmul.f32 %v5376, %v571
  %v5429 = vmul.f32 %v5379, %v571
  %v5430 = vmul.f32 %v5382, %v571
  %v5431 = vmul.f32 %v5385, %v571
  %v5432 = vmul.f32 %v5388, %v571
  %v5433 = vmul.f32 %v5391, %v571
  %v5434 = vmul.f32 %v5394, %v571
  %v5435 = vmul.f32 %v5397, %v571
  %v5436 = vmul.f32 %v5400, %v571
  %v5437 = vmul.f32 %v5403, %v571
  %v5438 = vmul.f32 %v5406, %v571
  %v5439 = vmul.f32 %v5409, %v571
  %v5440 = vmul.f32 %v5412, %v571
  %v5441 = vmul.f32 %v5415, %v571
  %v5442 = vmul.f32 %v5418, %v571
  %v5443 = vadd.f32 %v5419, 1e-05
  %v5444 = vadd.f32 %v5420, 1e-05
  %v5445 = vadd.f32 %v5421, 1e-05
  %v5446 = vadd.f32 %v5422, 1e-05
  %v5447 = vadd.f32 %v5423, 1e-05
  %v5448 = vadd.f32 %v5424, 1e-05
  %v5449 = vadd.f32 %v5425, 1e-05
  %v5450 = vadd.f32 %v5426, 1e-05
  %v5451 = vadd.f32 %v5427, 1e-05
  %v5452 = vadd.f32 %v5428, 1e-05
  %v5453 = vadd.f32 %v5429, 1e-05
  %v5454 = vadd.f32 %v5430, 1e-05
  %v5455 = vadd.f32 %v5431, 1e-05
  %v5456 = vadd.f32 %v5432, 1e-05
  %v5457 = vadd.f32 %v5433, 1e-05
  %v5458 = vadd.f32 %v5434, 1e-05
  %v5459 = vadd.f32 %v5435, 1e-05
  %v5460 = vadd.f32 %v5436, 1e-05
  %v5461 = vadd.f32 %v5437, 1e-05
  %v5462 = vadd.f32 %v5438, 1e-05
  %v5463 = vadd.f32 %v5439, 1e-05
  %v5464 = vadd.f32 %v5440, 1e-05
  %v5465 = vadd.f32 %v5441, 1e-05
  %v5466 = vadd.f32 %v5442, 1e-05
  %v5467 = vrsqrt.pop %v5443
  %v5468 = vrsqrt.pop %v5444
  %v5469 = vrsqrt.pop %v5445
  %v5470 = vrsqrt.pop %v5446
  %v5471 = vrsqrt.pop %v5447
  %v5472 = vrsqrt.pop %v5448
  %v5473 = vrsqrt.pop %v5449
  %v5474 = vrsqrt.pop %v5450
  %v5475 = vrsqrt.pop %v5451
  %v5476 = vrsqrt.pop %v5452
  %v5477 = vrsqrt.pop %v5453
  %v5478 = vrsqrt.pop %v5454
  %v5479 = vrsqrt.pop %v5455
  %v5480 = vrsqrt.pop %v5456
  %v5481 = vrsqrt.pop %v5457
  %v5482 = vrsqrt.pop %v5458
  %v5483 = vrsqrt.pop %v5459
  %v5484 = vrsqrt.pop %v5460
  %v5485 = vrsqrt.pop %v5461
  %v5486 = vrsqrt.pop %v5462
  %v5487 = vrsqrt.pop %v5463
  %v5488 = vrsqrt.pop %v5464
  %v5489 = vrsqrt.pop %v5465
  %v5490 = vrsqrt.pop %v5466
  %v5491 = vmul.f32 %v5299, %v5467
  %v5492 = vmul.f32 %v5300, %v5468
  %v5493 = vmul.f32 %v5301, %v5469
  %v5494 = vmul.f32 %v5302, %v5470
  %v5495 = vmul.f32 %v5303, %v5471
  %v5496 = vmul.f32 %v5304, %v5472
  %v5497 = vmul.f32 %v5305, %v5473
  %v5498 = vmul.f32 %v5306, %v5474
  %v5499 = vmul.f32 %v5307, %v5475
  %v5500 = vmul.f32 %v5308, %v5476
  %v5501 = vmul.f32 %v5309, %v5477
  %v5502 = vmul.f32 %v5310, %v5478
  %v5503 = vmul.f32 %v5311, %v5479
  %v5504 = vmul.f32 %v5312, %v5480
  %v5505 = vmul.f32 %v5313, %v5481
  %v5506 = vmul.f32 %v5314, %v5482
  %v5507 = vmul.f32 %v5315, %v5483
  %v5508 = vmul.f32 %v5316, %v5484
  %v5509 = vmul.f32 %v5317, %v5485
  %v5510 = vmul.f32 %v5318, %v5486
  %v5511 = vmul.f32 %v5319, %v5487
  %v5512 = vmul.f32 %v5320, %v5488
  %v5513 = vmul.f32 %v5321, %v5489
  %v5514 = vmul.f32 %v5322, %v5490
  %v5516 = vlaneseq
  %v5517 = vshrl.u32 %v5516, 7
  %v5518 = vsub.s32 0, %v5517
  %v5519 = vrot.slane %v5201, %v5518
  %v5521 = vmul.f32 %v5491, %v5519
  %v5522 = vmul.f32 %v5492, %v5519
  %v5523 = vmul.f32 %v5493, %v5519
  %v5524 = vmul.f32 %v5494, %v5519
  %v5525 = vmul.f32 %v5495, %v5519
  %v5526 = vmul.f32 %v5496, %v5519
  %v5527 = vmul.f32 %v5497, %v5519
  %v5528 = vmul.f32 %v5498, %v5519
  %v5529 = vmul.f32 %v5499, %v5519
  %v5530 = vmul.f32 %v5500, %v5519
  %v5531 = vmul.f32 %v5501, %v5519
  %v5532 = vmul.f32 %v5502, %v5519
  %v5533 = vmul.f32 %v5503, %v5519
  %v5534 = vmul.f32 %v5504, %v5519
  %v5535 = vmul.f32 %v5505, %v5519
  %v5536 = vmul.f32 %v5506, %v5519
  %v5537 = vmul.f32 %v5507, %v5519
  %v5538 = vmul.f32 %v5508, %v5519
  %v5539 = vmul.f32 %v5509, %v5519
  %v5540 = vmul.f32 %v5510, %v5519
  %v5541 = vmul.f32 %v5511, %v5519
  %v5542 = vmul.f32 %v5512, %v5519
  %v5543 = vmul.f32 %v5513, %v5519
  %v5544 = vmul.f32 %v5514, %v5519
  %v5546 = vlaneseq
  %v5547 = vshrl.u32 %v5546, 7
  %v5548 = vsub.s32 0, %v5547
  %v5549 = vrot.slane %v5202, %v5548
  %v5551 = vadd.f32 %v5521, %v5549
  %v5552 = vadd.f32 %v5522, %v5549
  %v5553 = vadd.f32 %v5523, %v5549
  %v5554 = vadd.f32 %v5524, %v5549
  %v5555 = vadd.f32 %v5525, %v5549
  %v5556 = vadd.f32 %v5526, %v5549
  %v5557 = vadd.f32 %v5527, %v5549
  %v5558 = vadd.f32 %v5528, %v5549
  %v5559 = vadd.f32 %v5529, %v5549
  %v5560 = vadd.f32 %v5530, %v5549
  %v5561 = vadd.f32 %v5531, %v5549
  %v5562 = vadd.f32 %v5532, %v5549
  %v5563 = vadd.f32 %v5533, %v5549
  %v5564 = vadd.f32 %v5534, %v5549
  %v5565 = vadd.f32 %v5535, %v5549
  %v5566 = vadd.f32 %v5536, %v5549
  %v5567 = vadd.f32 %v5537, %v5549
  %v5568 = vadd.f32 %v5538, %v5549
  %v5569 = vadd.f32 %v5539, %v5549
  %v5570 = vadd.f32 %v5540, %v5549
  %v5571 = vadd.f32 %v5541, %v5549
  %v5572 = vadd.f32 %v5542, %v5549
  %v5573 = vadd.f32 %v5543, %v5549
  %v5574 = vadd.f32 %v5544, %v5549
  %v5575 = vpack.c.bf16 %v5552, %v5551
  %v5576 = vpack.c.bf16 %v5554, %v5553
  %v5577 = vpack.c.bf16 %v5556, %v5555
  %v5578 = vpack.c.bf16 %v5558, %v5557
  %v5579 = vpack.c.bf16 %v5560, %v5559
  %v5580 = vpack.c.bf16 %v5562, %v5561
  %v5581 = vpack.c.bf16 %v5564, %v5563
  %v5582 = vpack.c.bf16 %v5566, %v5565
  %v5583 = vpack.c.bf16 %v5568, %v5567
  %v5584 = vpack.c.bf16 %v5570, %v5569
  %v5585 = vpack.c.bf16 %v5572, %v5571
  %v5586 = vpack.c.bf16 %v5574, %v5573
  %v5587 = vld [vmem:[%s17] sm:$0xf]
  %v5588 = vld [vmem:[%s17 + $0x4] sm:$0xf]
  %v5589 = vld [vmem:[%s17 + $0x8] sm:$0xf]
  %v5590 = vld [vmem:[%s17 + $0xc] sm:$0xf]
  %v5591 = vld [vmem:[%s18] sm:$0x1]
  %v5593 = vlaneseq
  %v5594 = vshrl.u32 %v5593, 7
  %v5595 = vsub.s32 0, %v5594
  %v5596 = vrot.slane %v5591, %v5595
  %v5602 = vunpack.c.l.b16 %v5587
  %v5603 = vunpack.c.l.b16 %v5588
  %v5604 = vunpack.c.l.b16 %v5589
  %v5605 = vunpack.c.l.b16 %v5590
  %v5606 = vpack.c.b16 %v5603, %v5602
  %v5607 = vpack.c.b16 %v5605, %v5604
  %v5611 = vsel %vm498, %v5575, 0
  %v5614 = vsel %vm498, %v5576, 0
  %v5617 = vsel %vm498, %v5577, 0
  %v5620 = vsel %vm498, %v5578, 0
  %v5623 = vsel %vm498, %v5579, 0
  %v5626 = vsel %vm498, %v5580, 0
  %v5629 = vsel %vm498, %v5581, 0
  %v5632 = vsel %vm498, %v5582, 0
  %v5635 = vsel %vm498, %v5583, 0
  %v5638 = vsel %vm498, %v5584, 0
  %v5641 = vsel %vm498, %v5585, 0
  %v5644 = vsel %vm498, %v5586, 0
  %5646 = vmatprep.subr.bf16.mxu0 0
  %5647 = vmatpush1.bf16.msra.mxu0 0
  %5648 = vmatprep.subr.bf16.mxu0 0
  %5649 = vmatpush1.bf16.msra.mxu0 0
  %5650 = vmatprep.subr.bf16.mxu0 0
  %5651 = vmatpush1.bf16.msra.mxu0 0
  %5652 = vmatprep.subr.bf16.mxu0 0
  %5653 = vmatpush1.bf16.msra.mxu0 0
  %5654 = vmatprep.subr.bf16.mxu0 0
  %5655 = vmatpush1.bf16.msra.mxu0 0
  %5656 = vmatprep.subr.bf16.mxu0 0
  %5657 = vmatpush1.bf16.msra.mxu0 0
  %5658 = vmatprep.subr.bf16.mxu0 0
  %5659 = vmatpush1.bf16.msra.mxu0 %v5607
  %5660 = vmatprep.subr.bf16.mxu0 0
  %5661 = vmatpush1.bf16.msra.mxu0 %v5606
  %5662 = vmatprep.subr.bf16.mxu0 0
  %5663 = vmatpush2.bf16.msra.mxu0 0
  %5664 = vmatprep.subr.bf16.mxu0 0
  %5665 = vmatpush2.bf16.msra.mxu0 0
  %5666 = vmatprep.subr.bf16.mxu0 0
  %5667 = vmatpush2.bf16.msra.mxu0 0
  %5668 = vmatprep.subr.bf16.mxu0 0
  %5669 = vmatpush2.bf16.msra.mxu0 0
  %5670 = vmatprep.subr.bf16.mxu0 0
  %5671 = vmatpush2.bf16.msra.mxu0 0
  %5672 = vmatprep.subr.bf16.mxu0 0
  %5673 = vmatpush2.bf16.msra.mxu0 0
  %5674 = vmatprep.subr.bf16.mxu0 0
  %5675 = vmatpush2.bf16.msra.mxu0 0
  %5676 = vmatprep.subr.bf16.mxu0 0
  %5677 = vmatpush2.bf16.msra.mxu0 0
  %5678 = vmatprep.mubr.bf16.mxu0 0
  %5679 = vmatmul.mubr.bf16.gmra.mxu0 %v5611
  %v5680 = vpop.f32.mrf.mxu0
  %v5681 = vadd.f32 %v5596, %v5680
  %v5682 = vpop.f32.mrf.mxu0
  %v5683 = vpop.f32.mrf.mxu0
  %v5684 = vadd.f32 %v5596, %v5683
  %v5685 = vpop.f32.mrf.mxu0
  %5686 = vmatprep.mubr.bf16.mxu0 0
  %5687 = vmatmul.mubr.bf16.gmra.mxu0 %v5614
  %v5688 = vpop.f32.mrf.mxu0
  %v5689 = vadd.f32 %v5596, %v5688
  %v5690 = vpop.f32.mrf.mxu0
  %v5691 = vpop.f32.mrf.mxu0
  %v5692 = vadd.f32 %v5596, %v5691
  %v5693 = vpop.f32.mrf.mxu0
  %5694 = vmatprep.mubr.bf16.mxu0 0
  %5695 = vmatmul.mubr.bf16.gmra.mxu0 %v5617
  %v5696 = vpop.f32.mrf.mxu0
  %v5697 = vadd.f32 %v5596, %v5696
  %v5698 = vpop.f32.mrf.mxu0
  %v5699 = vpop.f32.mrf.mxu0
  %v5700 = vadd.f32 %v5596, %v5699
  %v5701 = vpop.f32.mrf.mxu0
  %5702 = vmatprep.mubr.bf16.mxu0 0
  %5703 = vmatmul.mubr.bf16.gmra.mxu0 %v5620
  %v5704 = vpop.f32.mrf.mxu0
  %v5705 = vadd.f32 %v5596, %v5704
  %v5706 = vpop.f32.mrf.mxu0
  %v5707 = vpop.f32.mrf.mxu0
  %v5708 = vadd.f32 %v5596, %v5707
  %v5709 = vpop.f32.mrf.mxu0
  %5710 = vmatprep.mubr.bf16.mxu0 0
  %5711 = vmatmul.mubr.bf16.gmra.mxu0 %v5623
  %v5712 = vpop.f32.mrf.mxu0
  %v5713 = vadd.f32 %v5596, %v5712
  %v5714 = vpop.f32.mrf.mxu0
  %v5715 = vpop.f32.mrf.mxu0
  %v5716 = vadd.f32 %v5596, %v5715
  %v5717 = vpop.f32.mrf.mxu0
  %5718 = vmatprep.mubr.bf16.mxu0 0
  %5719 = vmatmul.mubr.bf16.gmra.mxu0 %v5626
  %v5720 = vpop.f32.mrf.mxu0
  %v5721 = vadd.f32 %v5596, %v5720
  %v5722 = vpop.f32.mrf.mxu0
  %v5723 = vpop.f32.mrf.mxu0
  %v5724 = vadd.f32 %v5596, %v5723
  %v5725 = vpop.f32.mrf.mxu0
  %5726 = vmatprep.mubr.bf16.mxu0 0
  %5727 = vmatmul.mubr.bf16.gmra.mxu0 %v5629
  %v5728 = vpop.f32.mrf.mxu0
  %v5729 = vadd.f32 %v5596, %v5728
  %v5730 = vpop.f32.mrf.mxu0
  %v5731 = vpop.f32.mrf.mxu0
  %v5732 = vadd.f32 %v5596, %v5731
  %v5733 = vpop.f32.mrf.mxu0
  %5734 = vmatprep.mubr.bf16.mxu0 0
  %5735 = vmatmul.mubr.bf16.gmra.mxu0 %v5632
  %v5736 = vpop.f32.mrf.mxu0
  %v5737 = vadd.f32 %v5596, %v5736
  %v5738 = vpop.f32.mrf.mxu0
  %v5739 = vpop.f32.mrf.mxu0
  %v5740 = vadd.f32 %v5596, %v5739
  %v5741 = vpop.f32.mrf.mxu0
  %5742 = vmatprep.mubr.bf16.mxu0 0
  %5743 = vmatmul.mubr.bf16.gmra.mxu0 %v5635
  %v5744 = vpop.f32.mrf.mxu0
  %v5745 = vadd.f32 %v5596, %v5744
  %v5746 = vpop.f32.mrf.mxu0
  %v5747 = vpop.f32.mrf.mxu0
  %v5748 = vadd.f32 %v5596, %v5747
  %v5749 = vpop.f32.mrf.mxu0
  %5750 = vmatprep.mubr.bf16.mxu0 0
  %5751 = vmatmul.mubr.bf16.gmra.mxu0 %v5638
  %v5752 = vpop.f32.mrf.mxu0
  %v5753 = vadd.f32 %v5596, %v5752
  %v5754 = vpop.f32.mrf.mxu0
  %v5755 = vpop.f32.mrf.mxu0
  %v5756 = vadd.f32 %v5596, %v5755
  %v5757 = vpop.f32.mrf.mxu0
  %5758 = vmatprep.mubr.bf16.mxu0 0
  %5759 = vmatmul.mubr.bf16.gmra.mxu0 %v5641
  %v5760 = vpop.f32.mrf.mxu0
  %v5761 = vadd.f32 %v5596, %v5760
  %v5762 = vpop.f32.mrf.mxu0
  %v5763 = vpop.f32.mrf.mxu0
  %v5764 = vadd.f32 %v5596, %v5763
  %v5765 = vpop.f32.mrf.mxu0
  %5766 = vmatprep.mubr.bf16.mxu0 0
  %5767 = vmatmul.mubr.bf16.gmra.mxu0 %v5644
  %v5768 = vpop.f32.mrf.mxu0
  %v5769 = vadd.f32 %v5596, %v5768
  %v5770 = vpop.f32.mrf.mxu0
  %v5771 = vpop.f32.mrf.mxu0
  %v5772 = vadd.f32 %v5596, %v5771
  %v5773 = vpop.f32.mrf.mxu0
  %5774 = vdwg.mxu0
  %v5775 = vmul.f32 %v5681, 1.702
  %v5776 = vmul.f32 %v5684, 1.702
  %v5777 = vmul.f32 %v5689, 1.702
  %v5778 = vmul.f32 %v5692, 1.702
  %v5779 = vmul.f32 %v5697, 1.702
  %v5780 = vmul.f32 %v5700, 1.702
  %v5781 = vmul.f32 %v5705, 1.702
  %v5782 = vmul.f32 %v5708, 1.702
  %v5783 = vmul.f32 %v5713, 1.702
  %v5784 = vmul.f32 %v5716, 1.702
  %v5785 = vmul.f32 %v5721, 1.702
  %v5786 = vmul.f32 %v5724, 1.702
  %v5787 = vmul.f32 %v5729, 1.702
  %v5788 = vmul.f32 %v5732, 1.702
  %v5789 = vmul.f32 %v5737, 1.702
  %v5790 = vmul.f32 %v5740, 1.702
  %v5791 = vmul.f32 %v5745, 1.702
  %v5792 = vmul.f32 %v5748, 1.702
  %v5793 = vmul.f32 %v5753, 1.702
  %v5794 = vmul.f32 %v5756, 1.702
  %v5795 = vmul.f32 %v5761, 1.702
  %v5796 = vmul.f32 %v5764, 1.702
  %v5797 = vmul.f32 %v5769, 1.702
  %v5798 = vmul.f32 %v5772, 1.702
  %v5799 = vxor.u32 %v5775, 2147483648
  %v5800 = vxor.u32 %v5776, 2147483648
  %v5801 = vxor.u32 %v5777, 2147483648
  %v5802 = vxor.u32 %v5778, 2147483648
  %v5803 = vxor.u32 %v5779, 2147483648
  %v5804 = vxor.u32 %v5780, 2147483648
  %v5805 = vxor.u32 %v5781, 2147483648
  %v5806 = vxor.u32 %v5782, 2147483648
  %v5807 = vxor.u32 %v5783, 2147483648
  %v5808 = vxor.u32 %v5784, 2147483648
  %v5809 = vxor.u32 %v5785, 2147483648
  %v5810 = vxor.u32 %v5786, 2147483648
  %v5811 = vxor.u32 %v5787, 2147483648
  %v5812 = vxor.u32 %v5788, 2147483648
  %v5813 = vxor.u32 %v5789, 2147483648
  %v5814 = vxor.u32 %v5790, 2147483648
  %v5815 = vxor.u32 %v5791, 2147483648
  %v5816 = vxor.u32 %v5792, 2147483648
  %v5817 = vxor.u32 %v5793, 2147483648
  %v5818 = vxor.u32 %v5794, 2147483648
  %v5819 = vxor.u32 %v5795, 2147483648
  %v5820 = vxor.u32 %v5796, 2147483648
  %v5821 = vxor.u32 %v5797, 2147483648
  %v5822 = vxor.u32 %v5798, 2147483648
  %v5823 = vmul.f32 %v5799, 1.442695
  %v5824 = vpow.pop %v5823
  %v5825 = vmul.f32 %v5800, 1.442695
  %v5826 = vpow.pop %v5825
  %v5827 = vmul.f32 %v5801, 1.442695
  %v5828 = vpow.pop %v5827
  %v5829 = vmul.f32 %v5802, 1.442695
  %v5830 = vpow.pop %v5829
  %v5831 = vmul.f32 %v5803, 1.442695
  %v5832 = vpow.pop %v5831
  %v5833 = vmul.f32 %v5804, 1.442695
  %v5834 = vpow.pop %v5833
  %v5835 = vmul.f32 %v5805, 1.442695
  %v5836 = vpow.pop %v5835
  %v5837 = vmul.f32 %v5806, 1.442695
  %v5838 = vpow.pop %v5837
  %v5839 = vmul.f32 %v5807, 1.442695
  %v5840 = vpow.pop %v5839
  %v5841 = vmul.f32 %v5808, 1.442695
  %v5842 = vpow.pop %v5841
  %v5843 = vmul.f32 %v5809, 1.442695
  %v5844 = vpow.pop %v5843
  %v5845 = vmul.f32 %v5810, 1.442695
  %v5846 = vpow.pop %v5845
  %v5847 = vmul.f32 %v5811, 1.442695
  %v5848 = vpow.pop %v5847
  %v5849 = vmul.f32 %v5812, 1.442695
  %v5850 = vpow.pop %v5849
  %v5851 = vmul.f32 %v5813, 1.442695
  %v5852 = vpow.pop %v5851
  %v5853 = vmul.f32 %v5814, 1.442695
  %v5854 = vpow.pop %v5853
  %v5855 = vmul.f32 %v5815, 1.442695
  %v5856 = vpow.pop %v5855
  %v5857 = vmul.f32 %v5816, 1.442695
  %v5858 = vpow.pop %v5857
  %v5859 = vmul.f32 %v5817, 1.442695
  %v5860 = vpow.pop %v5859
  %v5861 = vmul.f32 %v5818, 1.442695
  %v5862 = vpow.pop %v5861
  %v5863 = vmul.f32 %v5819, 1.442695
  %v5864 = vpow.pop %v5863
  %v5865 = vmul.f32 %v5820, 1.442695
  %v5866 = vpow.pop %v5865
  %v5867 = vmul.f32 %v5821, 1.442695
  %v5868 = vpow.pop %v5867
  %v5869 = vmul.f32 %v5822, 1.442695
  %v5870 = vpow.pop %v5869
  %v5871 = vadd.f32 %v5824, 1.0
  %v5872 = vadd.f32 %v5826, 1.0
  %v5873 = vadd.f32 %v5828, 1.0
  %v5874 = vadd.f32 %v5830, 1.0
  %v5875 = vadd.f32 %v5832, 1.0
  %v5876 = vadd.f32 %v5834, 1.0
  %v5877 = vadd.f32 %v5836, 1.0
  %v5878 = vadd.f32 %v5838, 1.0
  %v5879 = vadd.f32 %v5840, 1.0
  %v5880 = vadd.f32 %v5842, 1.0
  %v5881 = vadd.f32 %v5844, 1.0
  %v5882 = vadd.f32 %v5846, 1.0
  %v5883 = vadd.f32 %v5848, 1.0
  %v5884 = vadd.f32 %v5850, 1.0
  %v5885 = vadd.f32 %v5852, 1.0
  %v5886 = vadd.f32 %v5854, 1.0
  %v5887 = vadd.f32 %v5856, 1.0
  %v5888 = vadd.f32 %v5858, 1.0
  %v5889 = vadd.f32 %v5860, 1.0
  %v5890 = vadd.f32 %v5862, 1.0
  %v5891 = vadd.f32 %v5864, 1.0
  %v5892 = vadd.f32 %v5866, 1.0
  %v5893 = vadd.f32 %v5868, 1.0
  %v5894 = vadd.f32 %v5870, 1.0
  %v5895 = vrcp.pop %v5871
  %v5896 = vmul.f32 1.0, %v5895
  %v5897 = vrcp.pop %v5872
  %v5898 = vmul.f32 1.0, %v5897
  %v5899 = vrcp.pop %v5873
  %v5900 = vmul.f32 1.0, %v5899
  %v5901 = vrcp.pop %v5874
  %v5902 = vmul.f32 1.0, %v5901
  %v5903 = vrcp.pop %v5875
  %v5904 = vmul.f32 1.0, %v5903
  %v5905 = vrcp.pop %v5876
  %v5906 = vmul.f32 1.0, %v5905
  %v5907 = vrcp.pop %v5877
  %v5908 = vmul.f32 1.0, %v5907
  %v5909 = vrcp.pop %v5878
  %v5910 = vmul.f32 1.0, %v5909
  %v5911 = vrcp.pop %v5879
  %v5912 = vmul.f32 1.0, %v5911
  %v5913 = vrcp.pop %v5880
  %v5914 = vmul.f32 1.0, %v5913
  %v5915 = vrcp.pop %v5881
  %v5916 = vmul.f32 1.0, %v5915
  %v5917 = vrcp.pop %v5882
  %v5918 = vmul.f32 1.0, %v5917
  %v5919 = vrcp.pop %v5883
  %v5920 = vmul.f32 1.0, %v5919
  %v5921 = vrcp.pop %v5884
  %v5922 = vmul.f32 1.0, %v5921
  %v5923 = vrcp.pop %v5885
  %v5924 = vmul.f32 1.0, %v5923
  %v5925 = vrcp.pop %v5886
  %v5926 = vmul.f32 1.0, %v5925
  %v5927 = vrcp.pop %v5887
  %v5928 = vmul.f32 1.0, %v5927
  %v5929 = vrcp.pop %v5888
  %v5930 = vmul.f32 1.0, %v5929
  %v5931 = vrcp.pop %v5889
  %v5932 = vmul.f32 1.0, %v5931
  %v5933 = vrcp.pop %v5890
  %v5934 = vmul.f32 1.0, %v5933
  %v5935 = vrcp.pop %v5891
  %v5936 = vmul.f32 1.0, %v5935
  %v5937 = vrcp.pop %v5892
  %v5938 = vmul.f32 1.0, %v5937
  %v5939 = vrcp.pop %v5893
  %v5940 = vmul.f32 1.0, %v5939
  %v5941 = vrcp.pop %v5894
  %v5942 = vmul.f32 1.0, %v5941
  %v5943 = vmul.f32 %v5681, %v5896
  %v5944 = vmul.f32 %v5684, %v5898
  %v5945 = vmul.f32 %v5689, %v5900
  %v5946 = vmul.f32 %v5692, %v5902
  %v5947 = vmul.f32 %v5697, %v5904
  %v5948 = vmul.f32 %v5700, %v5906
  %v5949 = vmul.f32 %v5705, %v5908
  %v5950 = vmul.f32 %v5708, %v5910
  %v5951 = vmul.f32 %v5713, %v5912
  %v5952 = vmul.f32 %v5716, %v5914
  %v5953 = vmul.f32 %v5721, %v5916
  %v5954 = vmul.f32 %v5724, %v5918
  %v5955 = vmul.f32 %v5729, %v5920
  %v5956 = vmul.f32 %v5732, %v5922
  %v5957 = vmul.f32 %v5737, %v5924
  %v5958 = vmul.f32 %v5740, %v5926
  %v5959 = vmul.f32 %v5745, %v5928
  %v5960 = vmul.f32 %v5748, %v5930
  %v5961 = vmul.f32 %v5753, %v5932
  %v5962 = vmul.f32 %v5756, %v5934
  %v5963 = vmul.f32 %v5761, %v5936
  %v5964 = vmul.f32 %v5764, %v5938
  %v5965 = vmul.f32 %v5769, %v5940
  %v5966 = vmul.f32 %v5772, %v5942
  %v5967 = vpack.c.bf16 %v5944, %v5943
  %v5968 = vpack.c.bf16 %v5946, %v5945
  %v5969 = vpack.c.bf16 %v5948, %v5947
  %v5970 = vpack.c.bf16 %v5950, %v5949
  %v5971 = vpack.c.bf16 %v5952, %v5951
  %v5972 = vpack.c.bf16 %v5954, %v5953
  %v5973 = vpack.c.bf16 %v5956, %v5955
  %v5974 = vpack.c.bf16 %v5958, %v5957
  %v5975 = vpack.c.bf16 %v5960, %v5959
  %v5976 = vpack.c.bf16 %v5962, %v5961
  %v5977 = vpack.c.bf16 %v5964, %v5963
  %v5978 = vpack.c.bf16 %v5966, %v5965
  %v5979 = vld [vmem:[%s19] sm:$0xf]
  %v5980 = vld [vmem:[%s19 + $0x4] sm:$0xf]
  %v5981 = vld [vmem:[%s19 + $0x8] sm:$0xf]
  %v5982 = vld [vmem:[%s19 + $0xc] sm:$0xf]
  %v5983 = vld [vmem:[%s19 + $0x10] sm:$0xf]
  %v5984 = vld [vmem:[%s19 + $0x14] sm:$0xf]
  %v5985 = vld [vmem:[%s19 + $0x18] sm:$0xf]
  %v5986 = vld [vmem:[%s19 + $0x1c] sm:$0xf]
  %v5987 = vld [vmem:[%s19 + $0x20] sm:$0xf]
  %v5988 = vld [vmem:[%s19 + $0x24] sm:$0xf]
  %v5989 = vld [vmem:[%s19 + $0x28] sm:$0xf]
  %v5990 = vld [vmem:[%s19 + $0x2c] sm:$0xf]
  %v5991 = vld [vmem:[%s19 + $0x30] sm:$0xf]
  %v5992 = vld [vmem:[%s19 + $0x34] sm:$0xf]
  %v5993 = vld [vmem:[%s19 + $0x38] sm:$0xf]
  %v5994 = vld [vmem:[%s19 + $0x3c] sm:$0xf]
  %v5995 = vld [vmem:[%s20] sm:$0x1]
  %v5997 = vlaneseq
  %v5998 = vshrl.u32 %v5997, 7
  %v5999 = vsub.s32 0, %v5998
  %v6000 = vrot.slane %v5995, %v5999
  %v6018 = vunpack.c.l.b16 %v5979
  %v6019 = vunpack.c.l.b16 %v5980
  %v6020 = vunpack.c.l.b16 %v5981
  %v6021 = vunpack.c.l.b16 %v5982
  %v6022 = vunpack.c.l.b16 %v5983
  %v6023 = vunpack.c.l.b16 %v5984
  %v6024 = vunpack.c.l.b16 %v5985
  %v6025 = vunpack.c.l.b16 %v5986
  %v6026 = vunpack.c.l.b16 %v5987
  %v6027 = vunpack.c.l.b16 %v5988
  %v6028 = vunpack.c.l.b16 %v5989
  %v6029 = vunpack.c.l.b16 %v5990
  %v6030 = vunpack.c.l.b16 %v5991
  %v6031 = vunpack.c.l.b16 %v5992
  %v6032 = vunpack.c.l.b16 %v5993
  %v6033 = vunpack.c.l.b16 %v5994
  %v6034 = vpack.c.b16 %v6019, %v6018
  %v6035 = vpack.c.b16 %v6021, %v6020
  %v6036 = vpack.c.b16 %v6023, %v6022
  %v6037 = vpack.c.b16 %v6025, %v6024
  %v6038 = vpack.c.b16 %v6027, %v6026
  %v6039 = vpack.c.b16 %v6029, %v6028
  %v6040 = vpack.c.b16 %v6031, %v6030
  %v6041 = vpack.c.b16 %v6033, %v6032
  %6050 = vmatprep.subr.bf16.mxu0 0
  %6051 = vmatpush1.bf16.msra.mxu0 %v6041
  %6052 = vmatprep.subr.bf16.mxu0 0
  %6053 = vmatpush1.bf16.msra.mxu0 %v6040
  %6054 = vmatprep.subr.bf16.mxu0 0
  %6055 = vmatpush1.bf16.msra.mxu0 %v6039
  %6056 = vmatprep.subr.bf16.mxu0 0
  %6057 = vmatpush1.bf16.msra.mxu0 %v6038
  %6058 = vmatprep.subr.bf16.mxu0 0
  %6059 = vmatpush1.bf16.msra.mxu0 %v6037
  %6060 = vmatprep.subr.bf16.mxu0 0
  %6061 = vmatpush1.bf16.msra.mxu0 %v6036
  %6062 = vmatprep.subr.bf16.mxu0 0
  %6063 = vmatpush1.bf16.msra.mxu0 %v6035
  %6064 = vmatprep.subr.bf16.mxu0 0
  %6065 = vmatpush1.bf16.msra.mxu0 %v6034
  %6066 = vmatprep.subr.bf16.mxu0 0
  %6067 = vmatpush2.bf16.msra.mxu0 0
  %6068 = vmatprep.subr.bf16.mxu0 0
  %6069 = vmatpush2.bf16.msra.mxu0 0
  %6070 = vmatprep.subr.bf16.mxu0 0
  %6071 = vmatpush2.bf16.msra.mxu0 0
  %6072 = vmatprep.subr.bf16.mxu0 0
  %6073 = vmatpush2.bf16.msra.mxu0 0
  %6074 = vmatprep.subr.bf16.mxu0 0
  %6075 = vmatpush2.bf16.msra.mxu0 0
  %6076 = vmatprep.subr.bf16.mxu0 0
  %6077 = vmatpush2.bf16.msra.mxu0 0
  %6078 = vmatprep.subr.bf16.mxu0 0
  %6079 = vmatpush2.bf16.msra.mxu0 0
  %6080 = vmatprep.subr.bf16.mxu0 0
  %6081 = vmatpush2.bf16.msra.mxu0 0
  %6082 = vmatprep.mubr.bf16.mxu0 0
  %6083 = vmatmul.mubr.bf16.gmra.mxu0 %v5967
  %v6084 = vpop.f32.mrf.mxu0
  %v6085 = vadd.f32 %v6000, %v6084
  %v6086 = vpop.f32.mrf.mxu0
  %v6087 = vpop.f32.mrf.mxu0
  %v6088 = vadd.f32 %v6000, %v6087
  %v6089 = vpop.f32.mrf.mxu0
  %6090 = vmatprep.mubr.bf16.mxu0 0
  %6091 = vmatmul.mubr.bf16.gmra.mxu0 %v5968
  %v6092 = vpop.f32.mrf.mxu0
  %v6093 = vadd.f32 %v6000, %v6092
  %v6094 = vpop.f32.mrf.mxu0
  %v6095 = vpop.f32.mrf.mxu0
  %v6096 = vadd.f32 %v6000, %v6095
  %v6097 = vpop.f32.mrf.mxu0
  %6098 = vmatprep.mubr.bf16.mxu0 0
  %6099 = vmatmul.mubr.bf16.gmra.mxu0 %v5969
  %v6100 = vpop.f32.mrf.mxu0
  %v6101 = vadd.f32 %v6000, %v6100
  %v6102 = vpop.f32.mrf.mxu0
  %v6103 = vpop.f32.mrf.mxu0
  %v6104 = vadd.f32 %v6000, %v6103
  %v6105 = vpop.f32.mrf.mxu0
  %6106 = vmatprep.mubr.bf16.mxu0 0
  %6107 = vmatmul.mubr.bf16.gmra.mxu0 %v5970
  %v6108 = vpop.f32.mrf.mxu0
  %v6109 = vadd.f32 %v6000, %v6108
  %v6110 = vpop.f32.mrf.mxu0
  %v6111 = vpop.f32.mrf.mxu0
  %v6112 = vadd.f32 %v6000, %v6111
  %v6113 = vpop.f32.mrf.mxu0
  %6114 = vmatprep.mubr.bf16.mxu0 0
  %6115 = vmatmul.mubr.bf16.gmra.mxu0 %v5971
  %v6116 = vpop.f32.mrf.mxu0
  %v6117 = vadd.f32 %v6000, %v6116
  %v6118 = vpop.f32.mrf.mxu0
  %v6119 = vpop.f32.mrf.mxu0
  %v6120 = vadd.f32 %v6000, %v6119
  %v6121 = vpop.f32.mrf.mxu0
  %6122 = vmatprep.mubr.bf16.mxu0 0
  %6123 = vmatmul.mubr.bf16.gmra.mxu0 %v5972
  %v6124 = vpop.f32.mrf.mxu0
  %v6125 = vadd.f32 %v6000, %v6124
  %v6126 = vpop.f32.mrf.mxu0
  %v6127 = vpop.f32.mrf.mxu0
  %v6128 = vadd.f32 %v6000, %v6127
  %v6129 = vpop.f32.mrf.mxu0
  %6130 = vmatprep.mubr.bf16.mxu0 0
  %6131 = vmatmul.mubr.bf16.gmra.mxu0 %v5973
  %v6132 = vpop.f32.mrf.mxu0
  %v6133 = vadd.f32 %v6000, %v6132
  %v6134 = vpop.f32.mrf.mxu0
  %v6135 = vpop.f32.mrf.mxu0
  %v6136 = vadd.f32 %v6000, %v6135
  %v6137 = vpop.f32.mrf.mxu0
  %6138 = vmatprep.mubr.bf16.mxu0 0
  %6139 = vmatmul.mubr.bf16.gmra.mxu0 %v5974
  %v6140 = vpop.f32.mrf.mxu0
  %v6141 = vadd.f32 %v6000, %v6140
  %v6142 = vpop.f32.mrf.mxu0
  %v6143 = vpop.f32.mrf.mxu0
  %v6144 = vadd.f32 %v6000, %v6143
  %v6145 = vpop.f32.mrf.mxu0
  %6146 = vmatprep.mubr.bf16.mxu0 0
  %6147 = vmatmul.mubr.bf16.gmra.mxu0 %v5975
  %v6148 = vpop.f32.mrf.mxu0
  %v6149 = vadd.f32 %v6000, %v6148
  %v6150 = vpop.f32.mrf.mxu0
  %v6151 = vpop.f32.mrf.mxu0
  %v6152 = vadd.f32 %v6000, %v6151
  %v6153 = vpop.f32.mrf.mxu0
  %6154 = vmatprep.mubr.bf16.mxu0 0
  %6155 = vmatmul.mubr.bf16.gmra.mxu0 %v5976
  %v6156 = vpop.f32.mrf.mxu0
  %v6157 = vadd.f32 %v6000, %v6156
  %v6158 = vpop.f32.mrf.mxu0
  %v6159 = vpop.f32.mrf.mxu0
  %v6160 = vadd.f32 %v6000, %v6159
  %v6161 = vpop.f32.mrf.mxu0
  %6162 = vmatprep.mubr.bf16.mxu0 0
  %6163 = vmatmul.mubr.bf16.gmra.mxu0 %v5977
  %v6164 = vpop.f32.mrf.mxu0
  %v6165 = vadd.f32 %v6000, %v6164
  %v6166 = vpop.f32.mrf.mxu0
  %v6167 = vpop.f32.mrf.mxu0
  %v6168 = vadd.f32 %v6000, %v6167
  %v6169 = vpop.f32.mrf.mxu0
  %6170 = vmatprep.mubr.bf16.mxu0 0
  %6171 = vmatmul.mubr.bf16.gmra.mxu0 %v5978
  %v6172 = vpop.f32.mrf.mxu0
  %v6173 = vadd.f32 %v6000, %v6172
  %v6174 = vpop.f32.mrf.mxu0
  %v6175 = vpop.f32.mrf.mxu0
  %v6176 = vadd.f32 %v6000, %v6175
  %v6177 = vpop.f32.mrf.mxu0
  %6178 = vdwg.mxu0
  %v6179 = vadd.f32 %v5177, %v6085
  %v6180 = vadd.f32 %v5178, %v6088
  %v6181 = vadd.f32 %v5179, %v6093
  %v6182 = vadd.f32 %v5180, %v6096
  %v6183 = vadd.f32 %v5181, %v6101
  %v6184 = vadd.f32 %v5182, %v6104
  %v6185 = vadd.f32 %v5183, %v6109
  %v6186 = vadd.f32 %v5184, %v6112
  %v6187 = vadd.f32 %v5185, %v6117
  %v6188 = vadd.f32 %v5186, %v6120
  %v6189 = vadd.f32 %v5187, %v6125
  %v6190 = vadd.f32 %v5188, %v6128
  %v6191 = vadd.f32 %v5189, %v6133
  %v6192 = vadd.f32 %v5190, %v6136
  %v6193 = vadd.f32 %v5191, %v6141
  %v6194 = vadd.f32 %v5192, %v6144
  %v6195 = vadd.f32 %v5193, %v6149
  %v6196 = vadd.f32 %v5194, %v6152
  %v6197 = vadd.f32 %v5195, %v6157
  %v6198 = vadd.f32 %v5196, %v6160
  %v6199 = vadd.f32 %v5197, %v6165
  %v6200 = vadd.f32 %v5198, %v6168
  %v6201 = vadd.f32 %v5199, %v6173
  %v6202 = vadd.f32 %v5200, %v6176
  %s6203 = scalar_lea.vmem %s13, 1
  %v6204 = vld [vmem:[%s6203] sm:$0x1]
  %s6205 = scalar_lea.vmem %s14, 1
  %v6206 = vld [vmem:[%s6205] sm:$0x1]
  %v6207 = vsel %vm498, %v6179, 0.0
  %6208 = vadd.xlane.f32.xlu0 %v6207
  %v6209 = vpop.xlane.xlu0 %6208
  %v6210 = vsel %vm498, %v6180, 0.0
  %6211 = vadd.xlane.f32.xlu0 %v6210
  %v6212 = vpop.xlane.xlu0 %6211
  %v6213 = vsel %vm498, %v6181, 0.0
  %6214 = vadd.xlane.f32.xlu0 %v6213
  %v6215 = vpop.xlane.xlu0 %6214
  %v6216 = vsel %vm498, %v6182, 0.0
  %6217 = vadd.xlane.f32.xlu0 %v6216
  %v6218 = vpop.xlane.xlu0 %6217
  %v6219 = vsel %vm498, %v6183, 0.0
  %6220 = vadd.xlane.f32.xlu0 %v6219
  %v6221 = vpop.xlane.xlu0 %6220
  %v6222 = vsel %vm498, %v6184, 0.0
  %6223 = vadd.xlane.f32.xlu0 %v6222
  %v6224 = vpop.xlane.xlu0 %6223
  %v6225 = vsel %vm498, %v6185, 0.0
  %6226 = vadd.xlane.f32.xlu0 %v6225
  %v6227 = vpop.xlane.xlu0 %6226
  %v6228 = vsel %vm498, %v6186, 0.0
  %6229 = vadd.xlane.f32.xlu0 %v6228
  %v6230 = vpop.xlane.xlu0 %6229
  %v6231 = vsel %vm498, %v6187, 0.0
  %6232 = vadd.xlane.f32.xlu0 %v6231
  %v6233 = vpop.xlane.xlu0 %6232
  %v6234 = vsel %vm498, %v6188, 0.0
  %6235 = vadd.xlane.f32.xlu0 %v6234
  %v6236 = vpop.xlane.xlu0 %6235
  %v6237 = vsel %vm498, %v6189, 0.0
  %6238 = vadd.xlane.f32.xlu0 %v6237
  %v6239 = vpop.xlane.xlu0 %6238
  %v6240 = vsel %vm498, %v6190, 0.0
  %6241 = vadd.xlane.f32.xlu0 %v6240
  %v6242 = vpop.xlane.xlu0 %6241
  %v6243 = vsel %vm498, %v6191, 0.0
  %6244 = vadd.xlane.f32.xlu0 %v6243
  %v6245 = vpop.xlane.xlu0 %6244
  %v6246 = vsel %vm498, %v6192, 0.0
  %6247 = vadd.xlane.f32.xlu0 %v6246
  %v6248 = vpop.xlane.xlu0 %6247
  %v6249 = vsel %vm498, %v6193, 0.0
  %6250 = vadd.xlane.f32.xlu0 %v6249
  %v6251 = vpop.xlane.xlu0 %6250
  %v6252 = vsel %vm498, %v6194, 0.0
  %6253 = vadd.xlane.f32.xlu0 %v6252
  %v6254 = vpop.xlane.xlu0 %6253
  %v6255 = vsel %vm498, %v6195, 0.0
  %6256 = vadd.xlane.f32.xlu0 %v6255
  %v6257 = vpop.xlane.xlu0 %6256
  %v6258 = vsel %vm498, %v6196, 0.0
  %6259 = vadd.xlane.f32.xlu0 %v6258
  %v6260 = vpop.xlane.xlu0 %6259
  %v6261 = vsel %vm498, %v6197, 0.0
  %6262 = vadd.xlane.f32.xlu0 %v6261
  %v6263 = vpop.xlane.xlu0 %6262
  %v6264 = vsel %vm498, %v6198, 0.0
  %6265 = vadd.xlane.f32.xlu0 %v6264
  %v6266 = vpop.xlane.xlu0 %6265
  %v6267 = vsel %vm498, %v6199, 0.0
  %6268 = vadd.xlane.f32.xlu0 %v6267
  %v6269 = vpop.xlane.xlu0 %6268
  %v6270 = vsel %vm498, %v6200, 0.0
  %6271 = vadd.xlane.f32.xlu0 %v6270
  %v6272 = vpop.xlane.xlu0 %6271
  %v6273 = vsel %vm498, %v6201, 0.0
  %6274 = vadd.xlane.f32.xlu0 %v6273
  %v6275 = vpop.xlane.xlu0 %6274
  %v6276 = vsel %vm498, %v6202, 0.0
  %6277 = vadd.xlane.f32.xlu0 %v6276
  %v6278 = vpop.xlane.xlu0 %6277
  %v6279 = vmul.f32 %v6209, %v571
  %v6280 = vmul.f32 %v6212, %v571
  %v6281 = vmul.f32 %v6215, %v571
  %v6282 = vmul.f32 %v6218, %v571
  %v6283 = vmul.f32 %v6221, %v571
  %v6284 = vmul.f32 %v6224, %v571
  %v6285 = vmul.f32 %v6227, %v571
  %v6286 = vmul.f32 %v6230, %v571
  %v6287 = vmul.f32 %v6233, %v571
  %v6288 = vmul.f32 %v6236, %v571
  %v6289 = vmul.f32 %v6239, %v571
  %v6290 = vmul.f32 %v6242, %v571
  %v6291 = vmul.f32 %v6245, %v571
  %v6292 = vmul.f32 %v6248, %v571
  %v6293 = vmul.f32 %v6251, %v571
  %v6294 = vmul.f32 %v6254, %v571
  %v6295 = vmul.f32 %v6257, %v571
  %v6296 = vmul.f32 %v6260, %v571
  %v6297 = vmul.f32 %v6263, %v571
  %v6298 = vmul.f32 %v6266, %v571
  %v6299 = vmul.f32 %v6269, %v571
  %v6300 = vmul.f32 %v6272, %v571
  %v6301 = vmul.f32 %v6275, %v571
  %v6302 = vmul.f32 %v6278, %v571
  %v6303 = vsub.f32 %v6179, %v6279
  %v6304 = vsub.f32 %v6180, %v6280
  %v6305 = vsub.f32 %v6181, %v6281
  %v6306 = vsub.f32 %v6182, %v6282
  %v6307 = vsub.f32 %v6183, %v6283
  %v6308 = vsub.f32 %v6184, %v6284
  %v6309 = vsub.f32 %v6185, %v6285
  %v6310 = vsub.f32 %v6186, %v6286
  %v6311 = vsub.f32 %v6187, %v6287
  %v6312 = vsub.f32 %v6188, %v6288
  %v6313 = vsub.f32 %v6189, %v6289
  %v6314 = vsub.f32 %v6190, %v6290
  %v6315 = vsub.f32 %v6191, %v6291
  %v6316 = vsub.f32 %v6192, %v6292
  %v6317 = vsub.f32 %v6193, %v6293
  %v6318 = vsub.f32 %v6194, %v6294
  %v6319 = vsub.f32 %v6195, %v6295
  %v6320 = vsub.f32 %v6196, %v6296
  %v6321 = vsub.f32 %v6197, %v6297
  %v6322 = vsub.f32 %v6198, %v6298
  %v6323 = vsub.f32 %v6199, %v6299
  %v6324 = vsub.f32 %v6200, %v6300
  %v6325 = vsub.f32 %v6201, %v6301
  %v6326 = vsub.f32 %v6202, %v6302
  %v6327 = vmul.f32 %v6303, %v6303
  %v6328 = vmul.f32 %v6304, %v6304
  %v6329 = vmul.f32 %v6305, %v6305
  %v6330 = vmul.f32 %v6306, %v6306
  %v6331 = vmul.f32 %v6307, %v6307
  %v6332 = vmul.f32 %v6308, %v6308
  %v6333 = vmul.f32 %v6309, %v6309
  %v6334 = vmul.f32 %v6310, %v6310
  %v6335 = vmul.f32 %v6311, %v6311
  %v6336 = vmul.f32 %v6312, %v6312
  %v6337 = vmul.f32 %v6313, %v6313
  %v6338 = vmul.f32 %v6314, %v6314
  %v6339 = vmul.f32 %v6315, %v6315
  %v6340 = vmul.f32 %v6316, %v6316
  %v6341 = vmul.f32 %v6317, %v6317
  %v6342 = vmul.f32 %v6318, %v6318
  %v6343 = vmul.f32 %v6319, %v6319
  %v6344 = vmul.f32 %v6320, %v6320
  %v6345 = vmul.f32 %v6321, %v6321
  %v6346 = vmul.f32 %v6322, %v6322
  %v6347 = vmul.f32 %v6323, %v6323
  %v6348 = vmul.f32 %v6324, %v6324
  %v6349 = vmul.f32 %v6325, %v6325
  %v6350 = vmul.f32 %v6326, %v6326
  %v6351 = vsel %vm498, %v6327, 0.0
  %6352 = vadd.xlane.f32.xlu0 %v6351
  %v6353 = vpop.xlane.xlu0 %6352
  %v6354 = vsel %vm498, %v6328, 0.0
  %6355 = vadd.xlane.f32.xlu0 %v6354
  %v6356 = vpop.xlane.xlu0 %6355
  %v6357 = vsel %vm498, %v6329, 0.0
  %6358 = vadd.xlane.f32.xlu0 %v6357
  %v6359 = vpop.xlane.xlu0 %6358
  %v6360 = vsel %vm498, %v6330, 0.0
  %6361 = vadd.xlane.f32.xlu0 %v6360
  %v6362 = vpop.xlane.xlu0 %6361
  %v6363 = vsel %vm498, %v6331, 0.0
  %6364 = vadd.xlane.f32.xlu0 %v6363
  %v6365 = vpop.xlane.xlu0 %6364
  %v6366 = vsel %vm498, %v6332, 0.0
  %6367 = vadd.xlane.f32.xlu0 %v6366
  %v6368 = vpop.xlane.xlu0 %6367
  %v6369 = vsel %vm498, %v6333, 0.0
  %6370 = vadd.xlane.f32.xlu0 %v6369
  %v6371 = vpop.xlane.xlu0 %6370
  %v6372 = vsel %vm498, %v6334, 0.0
  %6373 = vadd.xlane.f32.xlu0 %v6372
  %v6374 = vpop.xlane.xlu0 %6373
  %v6375 = vsel %vm498, %v6335, 0.0
  %6376 = vadd.xlane.f32.xlu0 %v6375
  %v6377 = vpop.xlane.xlu0 %6376
  %v6378 = vsel %vm498, %v6336, 0.0
  %6379 = vadd.xlane.f32.xlu0 %v6378
  %v6380 = vpop.xlane.xlu0 %6379
  %v6381 = vsel %vm498, %v6337, 0.0
  %6382 = vadd.xlane.f32.xlu0 %v6381
  %v6383 = vpop.xlane.xlu0 %6382
  %v6384 = vsel %vm498, %v6338, 0.0
  %6385 = vadd.xlane.f32.xlu0 %v6384
  %v6386 = vpop.xlane.xlu0 %6385
  %v6387 = vsel %vm498, %v6339, 0.0
  %6388 = vadd.xlane.f32.xlu0 %v6387
  %v6389 = vpop.xlane.xlu0 %6388
  %v6390 = vsel %vm498, %v6340, 0.0
  %6391 = vadd.xlane.f32.xlu0 %v6390
  %v6392 = vpop.xlane.xlu0 %6391
  %v6393 = vsel %vm498, %v6341, 0.0
  %6394 = vadd.xlane.f32.xlu0 %v6393
  %v6395 = vpop.xlane.xlu0 %6394
  %v6396 = vsel %vm498, %v6342, 0.0
  %6397 = vadd.xlane.f32.xlu0 %v6396
  %v6398 = vpop.xlane.xlu0 %6397
  %v6399 = vsel %vm498, %v6343, 0.0
  %6400 = vadd.xlane.f32.xlu0 %v6399
  %v6401 = vpop.xlane.xlu0 %6400
  %v6402 = vsel %vm498, %v6344, 0.0
  %6403 = vadd.xlane.f32.xlu0 %v6402
  %v6404 = vpop.xlane.xlu0 %6403
  %v6405 = vsel %vm498, %v6345, 0.0
  %6406 = vadd.xlane.f32.xlu0 %v6405
  %v6407 = vpop.xlane.xlu0 %6406
  %v6408 = vsel %vm498, %v6346, 0.0
  %6409 = vadd.xlane.f32.xlu0 %v6408
  %v6410 = vpop.xlane.xlu0 %6409
  %v6411 = vsel %vm498, %v6347, 0.0
  %6412 = vadd.xlane.f32.xlu0 %v6411
  %v6413 = vpop.xlane.xlu0 %6412
  %v6414 = vsel %vm498, %v6348, 0.0
  %6415 = vadd.xlane.f32.xlu0 %v6414
  %v6416 = vpop.xlane.xlu0 %6415
  %v6417 = vsel %vm498, %v6349, 0.0
  %6418 = vadd.xlane.f32.xlu0 %v6417
  %v6419 = vpop.xlane.xlu0 %6418
  %v6420 = vsel %vm498, %v6350, 0.0
  %6421 = vadd.xlane.f32.xlu0 %v6420
  %v6422 = vpop.xlane.xlu0 %6421
  %v6423 = vmul.f32 %v6353, %v571
  %v6424 = vmul.f32 %v6356, %v571
  %v6425 = vmul.f32 %v6359, %v571
  %v6426 = vmul.f32 %v6362, %v571
  %v6427 = vmul.f32 %v6365, %v571
  %v6428 = vmul.f32 %v6368, %v571
  %v6429 = vmul.f32 %v6371, %v571
  %v6430 = vmul.f32 %v6374, %v571
  %v6431 = vmul.f32 %v6377, %v571
  %v6432 = vmul.f32 %v6380, %v571
  %v6433 = vmul.f32 %v6383, %v571
  %v6434 = vmul.f32 %v6386, %v571
  %v6435 = vmul.f32 %v6389, %v571
  %v6436 = vmul.f32 %v6392, %v571
  %v6437 = vmul.f32 %v6395, %v571
  %v6438 = vmul.f32 %v6398, %v571
  %v6439 = vmul.f32 %v6401, %v571
  %v6440 = vmul.f32 %v6404, %v571
  %v6441 = vmul.f32 %v6407, %v571
  %v6442 = vmul.f32 %v6410, %v571
  %v6443 = vmul.f32 %v6413, %v571
  %v6444 = vmul.f32 %v6416, %v571
  %v6445 = vmul.f32 %v6419, %v571
  %v6446 = vmul.f32 %v6422, %v571
  %v6447 = vadd.f32 %v6423, 1e-05
  %v6448 = vadd.f32 %v6424, 1e-05
  %v6449 = vadd.f32 %v6425, 1e-05
  %v6450 = vadd.f32 %v6426, 1e-05
  %v6451 = vadd.f32 %v6427, 1e-05
  %v6452 = vadd.f32 %v6428, 1e-05
  %v6453 = vadd.f32 %v6429, 1e-05
  %v6454 = vadd.f32 %v6430, 1e-05
  %v6455 = vadd.f32 %v6431, 1e-05
  %v6456 = vadd.f32 %v6432, 1e-05
  %v6457 = vadd.f32 %v6433, 1e-05
  %v6458 = vadd.f32 %v6434, 1e-05
  %v6459 = vadd.f32 %v6435, 1e-05
  %v6460 = vadd.f32 %v6436, 1e-05
  %v6461 = vadd.f32 %v6437, 1e-05
  %v6462 = vadd.f32 %v6438, 1e-05
  %v6463 = vadd.f32 %v6439, 1e-05
  %v6464 = vadd.f32 %v6440, 1e-05
  %v6465 = vadd.f32 %v6441, 1e-05
  %v6466 = vadd.f32 %v6442, 1e-05
  %v6467 = vadd.f32 %v6443, 1e-05
  %v6468 = vadd.f32 %v6444, 1e-05
  %v6469 = vadd.f32 %v6445, 1e-05
  %v6470 = vadd.f32 %v6446, 1e-05
  %v6471 = vrsqrt.pop %v6447
  %v6472 = vrsqrt.pop %v6448
  %v6473 = vrsqrt.pop %v6449
  %v6474 = vrsqrt.pop %v6450
  %v6475 = vrsqrt.pop %v6451
  %v6476 = vrsqrt.pop %v6452
  %v6477 = vrsqrt.pop %v6453
  %v6478 = vrsqrt.pop %v6454
  %v6479 = vrsqrt.pop %v6455
  %v6480 = vrsqrt.pop %v6456
  %v6481 = vrsqrt.pop %v6457
  %v6482 = vrsqrt.pop %v6458
  %v6483 = vrsqrt.pop %v6459
  %v6484 = vrsqrt.pop %v6460
  %v6485 = vrsqrt.pop %v6461
  %v6486 = vrsqrt.pop %v6462
  %v6487 = vrsqrt.pop %v6463
  %v6488 = vrsqrt.pop %v6464
  %v6489 = vrsqrt.pop %v6465
  %v6490 = vrsqrt.pop %v6466
  %v6491 = vrsqrt.pop %v6467
  %v6492 = vrsqrt.pop %v6468
  %v6493 = vrsqrt.pop %v6469
  %v6494 = vrsqrt.pop %v6470
  %v6495 = vmul.f32 %v6303, %v6471
  %v6496 = vmul.f32 %v6304, %v6472
  %v6497 = vmul.f32 %v6305, %v6473
  %v6498 = vmul.f32 %v6306, %v6474
  %v6499 = vmul.f32 %v6307, %v6475
  %v6500 = vmul.f32 %v6308, %v6476
  %v6501 = vmul.f32 %v6309, %v6477
  %v6502 = vmul.f32 %v6310, %v6478
  %v6503 = vmul.f32 %v6311, %v6479
  %v6504 = vmul.f32 %v6312, %v6480
  %v6505 = vmul.f32 %v6313, %v6481
  %v6506 = vmul.f32 %v6314, %v6482
  %v6507 = vmul.f32 %v6315, %v6483
  %v6508 = vmul.f32 %v6316, %v6484
  %v6509 = vmul.f32 %v6317, %v6485
  %v6510 = vmul.f32 %v6318, %v6486
  %v6511 = vmul.f32 %v6319, %v6487
  %v6512 = vmul.f32 %v6320, %v6488
  %v6513 = vmul.f32 %v6321, %v6489
  %v6514 = vmul.f32 %v6322, %v6490
  %v6515 = vmul.f32 %v6323, %v6491
  %v6516 = vmul.f32 %v6324, %v6492
  %v6517 = vmul.f32 %v6325, %v6493
  %v6518 = vmul.f32 %v6326, %v6494
  %v6520 = vlaneseq
  %v6521 = vshrl.u32 %v6520, 7
  %v6522 = vsub.s32 0, %v6521
  %v6523 = vrot.slane %v6204, %v6522
  %v6525 = vmul.f32 %v6495, %v6523
  %v6526 = vmul.f32 %v6496, %v6523
  %v6527 = vmul.f32 %v6497, %v6523
  %v6528 = vmul.f32 %v6498, %v6523
  %v6529 = vmul.f32 %v6499, %v6523
  %v6530 = vmul.f32 %v6500, %v6523
  %v6531 = vmul.f32 %v6501, %v6523
  %v6532 = vmul.f32 %v6502, %v6523
  %v6533 = vmul.f32 %v6503, %v6523
  %v6534 = vmul.f32 %v6504, %v6523
  %v6535 = vmul.f32 %v6505, %v6523
  %v6536 = vmul.f32 %v6506, %v6523
  %v6537 = vmul.f32 %v6507, %v6523
  %v6538 = vmul.f32 %v6508, %v6523
  %v6539 = vmul.f32 %v6509, %v6523
  %v6540 = vmul.f32 %v6510, %v6523
  %v6541 = vmul.f32 %v6511, %v6523
  %v6542 = vmul.f32 %v6512, %v6523
  %v6543 = vmul.f32 %v6513, %v6523
  %v6544 = vmul.f32 %v6514, %v6523
  %v6545 = vmul.f32 %v6515, %v6523
  %v6546 = vmul.f32 %v6516, %v6523
  %v6547 = vmul.f32 %v6517, %v6523
  %v6548 = vmul.f32 %v6518, %v6523
  %v6550 = vlaneseq
  %v6551 = vshrl.u32 %v6550, 7
  %v6552 = vsub.s32 0, %v6551
  %v6553 = vrot.slane %v6206, %v6552
  %v6555 = vadd.f32 %v6525, %v6553
  %v6556 = vadd.f32 %v6526, %v6553
  %v6557 = vadd.f32 %v6527, %v6553
  %v6558 = vadd.f32 %v6528, %v6553
  %v6559 = vadd.f32 %v6529, %v6553
  %v6560 = vadd.f32 %v6530, %v6553
  %v6561 = vadd.f32 %v6531, %v6553
  %v6562 = vadd.f32 %v6532, %v6553
  %v6563 = vadd.f32 %v6533, %v6553
  %v6564 = vadd.f32 %v6534, %v6553
  %v6565 = vadd.f32 %v6535, %v6553
  %v6566 = vadd.f32 %v6536, %v6553
  %v6567 = vadd.f32 %v6537, %v6553
  %v6568 = vadd.f32 %v6538, %v6553
  %v6569 = vadd.f32 %v6539, %v6553
  %v6570 = vadd.f32 %v6540, %v6553
  %v6571 = vadd.f32 %v6541, %v6553
  %v6572 = vadd.f32 %v6542, %v6553
  %v6573 = vadd.f32 %v6543, %v6553
  %v6574 = vadd.f32 %v6544, %v6553
  %v6575 = vadd.f32 %v6545, %v6553
  %v6576 = vadd.f32 %v6546, %v6553
  %v6577 = vadd.f32 %v6547, %v6553
  %v6578 = vadd.f32 %v6548, %v6553
  %v6579 = vpack.c.bf16 %v6556, %v6555
  %v6580 = vpack.c.bf16 %v6558, %v6557
  %v6581 = vpack.c.bf16 %v6560, %v6559
  %v6582 = vpack.c.bf16 %v6562, %v6561
  %v6583 = vpack.c.bf16 %v6564, %v6563
  %v6584 = vpack.c.bf16 %v6566, %v6565
  %v6585 = vpack.c.bf16 %v6568, %v6567
  %v6586 = vpack.c.bf16 %v6570, %v6569
  %v6587 = vpack.c.bf16 %v6572, %v6571
  %v6588 = vpack.c.bf16 %v6574, %v6573
  %v6589 = vpack.c.bf16 %v6576, %v6575
  %v6590 = vpack.c.bf16 %v6578, %v6577
  %s6591 = scalar_lea.vmem %s5, 16
  %v6592 = vld [vmem:[%s6591] sm:$0xf]
  %v6593 = vld [vmem:[%s6591 + $0x4] sm:$0xf]
  %v6594 = vld [vmem:[%s6591 + $0x8] sm:$0xf]
  %v6595 = vld [vmem:[%s6591 + $0xc] sm:$0xf]
  %s6596 = scalar_lea.vmem %s8, 1
  %v6597 = vld [vmem:[%s6596] sm:$0x1]
  %v6599 = vlaneseq
  %v6600 = vshrl.u32 %v6599, 7
  %v6601 = vsub.s32 0, %v6600
  %v6602 = vrot.slane %v6597, %v6601
  %v6608 = vunpack.c.l.b16 %v6592
  %v6609 = vunpack.c.l.b16 %v6593
  %v6610 = vunpack.c.l.b16 %v6594
  %v6611 = vunpack.c.l.b16 %v6595
  %v6612 = vpack.c.b16 %v6609, %v6608
  %v6613 = vpack.c.b16 %v6611, %v6610
  %v6617 = vsel %vm498, %v6579, 0
  %v6620 = vsel %vm498, %v6580, 0
  %v6623 = vsel %vm498, %v6581, 0
  %v6626 = vsel %vm498, %v6582, 0
  %v6629 = vsel %vm498, %v6583, 0
  %v6632 = vsel %vm498, %v6584, 0
  %v6635 = vsel %vm498, %v6585, 0
  %v6638 = vsel %vm498, %v6586, 0
  %v6641 = vsel %vm498, %v6587, 0
  %v6644 = vsel %vm498, %v6588, 0
  %v6647 = vsel %vm498, %v6589, 0
  %v6650 = vsel %vm498, %v6590, 0
  %6652 = vmatprep.subr.bf16.mxu0 0
  %6653 = vmatpush1.bf16.msra.mxu0 0
  %6654 = vmatprep.subr.bf16.mxu0 0
  %6655 = vmatpush1.bf16.msra.mxu0 0
  %6656 = vmatprep.subr.bf16.mxu0 0
  %6657 = vmatpush1.bf16.msra.mxu0 0
  %6658 = vmatprep.subr.bf16.mxu0 0
  %6659 = vmatpush1.bf16.msra.mxu0 0
  %6660 = vmatprep.subr.bf16.mxu0 0
  %6661 = vmatpush1.bf16.msra.mxu0 0
  %6662 = vmatprep.subr.bf16.mxu0 0
  %6663 = vmatpush1.bf16.msra.mxu0 0
  %6664 = vmatprep.subr.bf16.mxu0 0
  %6665 = vmatpush1.bf16.msra.mxu0 %v6613
  %6666 = vmatprep.subr.bf16.mxu0 0
  %6667 = vmatpush1.bf16.msra.mxu0 %v6612
  %6668 = vmatprep.subr.bf16.mxu0 0
  %6669 = vmatpush2.bf16.msra.mxu0 0
  %6670 = vmatprep.subr.bf16.mxu0 0
  %6671 = vmatpush2.bf16.msra.mxu0 0
  %6672 = vmatprep.subr.bf16.mxu0 0
  %6673 = vmatpush2.bf16.msra.mxu0 0
  %6674 = vmatprep.subr.bf16.mxu0 0
  %6675 = vmatpush2.bf16.msra.mxu0 0
  %6676 = vmatprep.subr.bf16.mxu0 0
  %6677 = vmatpush2.bf16.msra.mxu0 0
  %6678 = vmatprep.subr.bf16.mxu0 0
  %6679 = vmatpush2.bf16.msra.mxu0 0
  %6680 = vmatprep.subr.bf16.mxu0 0
  %6681 = vmatpush2.bf16.msra.mxu0 0
  %6682 = vmatprep.subr.bf16.mxu0 0
  %6683 = vmatpush2.bf16.msra.mxu0 0
  %6684 = vmatprep.mubr.bf16.mxu0 0
  %6685 = vmatmul.mubr.bf16.gmra.mxu0 %v6617
  %v6686 = vpop.f32.mrf.mxu0
  %v6687 = vadd.f32 %v6602, %v6686
  %v6688 = vpop.f32.mrf.mxu0
  %v6689 = vpop.f32.mrf.mxu0
  %v6690 = vadd.f32 %v6602, %v6689
  %v6691 = vpop.f32.mrf.mxu0
  %6692 = vmatprep.mubr.bf16.mxu0 0
  %6693 = vmatmul.mubr.bf16.gmra.mxu0 %v6620
  %v6694 = vpop.f32.mrf.mxu0
  %v6695 = vadd.f32 %v6602, %v6694
  %v6696 = vpop.f32.mrf.mxu0
  %v6697 = vpop.f32.mrf.mxu0
  %v6698 = vadd.f32 %v6602, %v6697
  %v6699 = vpop.f32.mrf.mxu0
  %6700 = vmatprep.mubr.bf16.mxu0 0
  %6701 = vmatmul.mubr.bf16.gmra.mxu0 %v6623
  %v6702 = vpop.f32.mrf.mxu0
  %v6703 = vadd.f32 %v6602, %v6702
  %v6704 = vpop.f32.mrf.mxu0
  %v6705 = vpop.f32.mrf.mxu0
  %v6706 = vadd.f32 %v6602, %v6705
  %v6707 = vpop.f32.mrf.mxu0
  %6708 = vmatprep.mubr.bf16.mxu0 0
  %6709 = vmatmul.mubr.bf16.gmra.mxu0 %v6626
  %v6710 = vpop.f32.mrf.mxu0
  %v6711 = vadd.f32 %v6602, %v6710
  %v6712 = vpop.f32.mrf.mxu0
  %v6713 = vpop.f32.mrf.mxu0
  %v6714 = vadd.f32 %v6602, %v6713
  %v6715 = vpop.f32.mrf.mxu0
  %6716 = vmatprep.mubr.bf16.mxu0 0
  %6717 = vmatmul.mubr.bf16.gmra.mxu0 %v6629
  %v6718 = vpop.f32.mrf.mxu0
  %v6719 = vadd.f32 %v6602, %v6718
  %v6720 = vpop.f32.mrf.mxu0
  %v6721 = vpop.f32.mrf.mxu0
  %v6722 = vadd.f32 %v6602, %v6721
  %v6723 = vpop.f32.mrf.mxu0
  %6724 = vmatprep.mubr.bf16.mxu0 0
  %6725 = vmatmul.mubr.bf16.gmra.mxu0 %v6632
  %v6726 = vpop.f32.mrf.mxu0
  %v6727 = vadd.f32 %v6602, %v6726
  %v6728 = vpop.f32.mrf.mxu0
  %v6729 = vpop.f32.mrf.mxu0
  %v6730 = vadd.f32 %v6602, %v6729
  %v6731 = vpop.f32.mrf.mxu0
  %6732 = vmatprep.mubr.bf16.mxu0 0
  %6733 = vmatmul.mubr.bf16.gmra.mxu0 %v6635
  %v6734 = vpop.f32.mrf.mxu0
  %v6735 = vadd.f32 %v6602, %v6734
  %v6736 = vpop.f32.mrf.mxu0
  %v6737 = vpop.f32.mrf.mxu0
  %v6738 = vadd.f32 %v6602, %v6737
  %v6739 = vpop.f32.mrf.mxu0
  %6740 = vmatprep.mubr.bf16.mxu0 0
  %6741 = vmatmul.mubr.bf16.gmra.mxu0 %v6638
  %v6742 = vpop.f32.mrf.mxu0
  %v6743 = vadd.f32 %v6602, %v6742
  %v6744 = vpop.f32.mrf.mxu0
  %v6745 = vpop.f32.mrf.mxu0
  %v6746 = vadd.f32 %v6602, %v6745
  %v6747 = vpop.f32.mrf.mxu0
  %6748 = vmatprep.mubr.bf16.mxu0 0
  %6749 = vmatmul.mubr.bf16.gmra.mxu0 %v6641
  %v6750 = vpop.f32.mrf.mxu0
  %v6751 = vadd.f32 %v6602, %v6750
  %v6752 = vpop.f32.mrf.mxu0
  %v6753 = vpop.f32.mrf.mxu0
  %v6754 = vadd.f32 %v6602, %v6753
  %v6755 = vpop.f32.mrf.mxu0
  %6756 = vmatprep.mubr.bf16.mxu0 0
  %6757 = vmatmul.mubr.bf16.gmra.mxu0 %v6644
  %v6758 = vpop.f32.mrf.mxu0
  %v6759 = vadd.f32 %v6602, %v6758
  %v6760 = vpop.f32.mrf.mxu0
  %v6761 = vpop.f32.mrf.mxu0
  %v6762 = vadd.f32 %v6602, %v6761
  %v6763 = vpop.f32.mrf.mxu0
  %6764 = vmatprep.mubr.bf16.mxu0 0
  %6765 = vmatmul.mubr.bf16.gmra.mxu0 %v6647
  %v6766 = vpop.f32.mrf.mxu0
  %v6767 = vadd.f32 %v6602, %v6766
  %v6768 = vpop.f32.mrf.mxu0
  %v6769 = vpop.f32.mrf.mxu0
  %v6770 = vadd.f32 %v6602, %v6769
  %v6771 = vpop.f32.mrf.mxu0
  %6772 = vmatprep.mubr.bf16.mxu0 0
  %6773 = vmatmul.mubr.bf16.gmra.mxu0 %v6650
  %v6774 = vpop.f32.mrf.mxu0
  %v6775 = vadd.f32 %v6602, %v6774
  %v6776 = vpop.f32.mrf.mxu0
  %v6777 = vpop.f32.mrf.mxu0
  %v6778 = vadd.f32 %v6602, %v6777
  %v6779 = vpop.f32.mrf.mxu0
  %6780 = vdwg.mxu0
  %s6781 = scalar_lea.vmem %s6, 16
  %v6782 = vld [vmem:[%s6781] sm:$0xf]
  %v6783 = vld [vmem:[%s6781 + $0x4] sm:$0xf]
  %v6784 = vld [vmem:[%s6781 + $0x8] sm:$0xf]
  %v6785 = vld [vmem:[%s6781 + $0xc] sm:$0xf]
  %s6786 = scalar_lea.vmem %s9, 1
  %v6787 = vld [vmem:[%s6786] sm:$0x1]
  %v6789 = vlaneseq
  %v6790 = vshrl.u32 %v6789, 7
  %v6791 = vsub.s32 0, %v6790
  %v6792 = vrot.slane %v6787, %v6791
  %v6798 = vunpack.c.l.b16 %v6782
  %v6799 = vunpack.c.l.b16 %v6783
  %v6800 = vunpack.c.l.b16 %v6784
  %v6801 = vunpack.c.l.b16 %v6785
  %v6802 = vpack.c.b16 %v6799, %v6798
  %v6803 = vpack.c.b16 %v6801, %v6800
  %6806 = vmatprep.subr.bf16.mxu0 0
  %6807 = vmatpush1.bf16.msra.mxu0 0
  %6808 = vmatprep.subr.bf16.mxu0 0
  %6809 = vmatpush1.bf16.msra.mxu0 0
  %6810 = vmatprep.subr.bf16.mxu0 0
  %6811 = vmatpush1.bf16.msra.mxu0 0
  %6812 = vmatprep.subr.bf16.mxu0 0
  %6813 = vmatpush1.bf16.msra.mxu0 0
  %6814 = vmatprep.subr.bf16.mxu0 0
  %6815 = vmatpush1.bf16.msra.mxu0 0
  %6816 = vmatprep.subr.bf16.mxu0 0
  %6817 = vmatpush1.bf16.msra.mxu0 0
  %6818 = vmatprep.subr.bf16.mxu0 0
  %6819 = vmatpush1.bf16.msra.mxu0 %v6803
  %6820 = vmatprep.subr.bf16.mxu0 0
  %6821 = vmatpush1.bf16.msra.mxu0 %v6802
  %6822 = vmatprep.subr.bf16.mxu0 0
  %6823 = vmatpush2.bf16.msra.mxu0 0
  %6824 = vmatprep.subr.bf16.mxu0 0
  %6825 = vmatpush2.bf16.msra.mxu0 0
  %6826 = vmatprep.subr.bf16.mxu0 0
  %6827 = vmatpush2.bf16.msra.mxu0 0
  %6828 = vmatprep.subr.bf16.mxu0 0
  %6829 = vmatpush2.bf16.msra.mxu0 0
  %6830 = vmatprep.subr.bf16.mxu0 0
  %6831 = vmatpush2.bf16.msra.mxu0 0
  %6832 = vmatprep.subr.bf16.mxu0 0
  %6833 = vmatpush2.bf16.msra.mxu0 0
  %6834 = vmatprep.subr.bf16.mxu0 0
  %6835 = vmatpush2.bf16.msra.mxu0 0
  %6836 = vmatprep.subr.bf16.mxu0 0
  %6837 = vmatpush2.bf16.msra.mxu0 0
  %6838 = vmatprep.mubr.bf16.mxu0 0
  %6839 = vmatmul.mubr.bf16.gmra.mxu0 %v6617
  %v6840 = vpop.f32.mrf.mxu0
  %v6841 = vadd.f32 %v6792, %v6840
  %v6842 = vpop.f32.mrf.mxu0
  %v6843 = vpop.f32.mrf.mxu0
  %v6844 = vadd.f32 %v6792, %v6843
  %v6845 = vpop.f32.mrf.mxu0
  %6846 = vmatprep.mubr.bf16.mxu0 0
  %6847 = vmatmul.mubr.bf16.gmra.mxu0 %v6620
  %v6848 = vpop.f32.mrf.mxu0
  %v6849 = vadd.f32 %v6792, %v6848
  %v6850 = vpop.f32.mrf.mxu0
  %v6851 = vpop.f32.mrf.mxu0
  %v6852 = vadd.f32 %v6792, %v6851
  %v6853 = vpop.f32.mrf.mxu0
  %6854 = vmatprep.mubr.bf16.mxu0 0
  %6855 = vmatmul.mubr.bf16.gmra.mxu0 %v6623
  %v6856 = vpop.f32.mrf.mxu0
  %v6857 = vadd.f32 %v6792, %v6856
  %v6858 = vpop.f32.mrf.mxu0
  %v6859 = vpop.f32.mrf.mxu0
  %v6860 = vadd.f32 %v6792, %v6859
  %v6861 = vpop.f32.mrf.mxu0
  %6862 = vmatprep.mubr.bf16.mxu0 0
  %6863 = vmatmul.mubr.bf16.gmra.mxu0 %v6626
  %v6864 = vpop.f32.mrf.mxu0
  %v6865 = vadd.f32 %v6792, %v6864
  %v6866 = vpop.f32.mrf.mxu0
  %v6867 = vpop.f32.mrf.mxu0
  %v6868 = vadd.f32 %v6792, %v6867
  %v6869 = vpop.f32.mrf.mxu0
  %6870 = vmatprep.mubr.bf16.mxu0 0
  %6871 = vmatmul.mubr.bf16.gmra.mxu0 %v6629
  %v6872 = vpop.f32.mrf.mxu0
  %v6873 = vadd.f32 %v6792, %v6872
  %v6874 = vpop.f32.mrf.mxu0
  %v6875 = vpop.f32.mrf.mxu0
  %v6876 = vadd.f32 %v6792, %v6875
  %v6877 = vpop.f32.mrf.mxu0
  %6878 = vmatprep.mubr.bf16.mxu0 0
  %6879 = vmatmul.mubr.bf16.gmra.mxu0 %v6632
  %v6880 = vpop.f32.mrf.mxu0
  %v6881 = vadd.f32 %v6792, %v6880
  %v6882 = vpop.f32.mrf.mxu0
  %v6883 = vpop.f32.mrf.mxu0
  %v6884 = vadd.f32 %v6792, %v6883
  %v6885 = vpop.f32.mrf.mxu0
  %6886 = vmatprep.mubr.bf16.mxu0 0
  %6887 = vmatmul.mubr.bf16.gmra.mxu0 %v6635
  %v6888 = vpop.f32.mrf.mxu0
  %v6889 = vadd.f32 %v6792, %v6888
  %v6890 = vpop.f32.mrf.mxu0
  %v6891 = vpop.f32.mrf.mxu0
  %v6892 = vadd.f32 %v6792, %v6891
  %v6893 = vpop.f32.mrf.mxu0
  %6894 = vmatprep.mubr.bf16.mxu0 0
  %6895 = vmatmul.mubr.bf16.gmra.mxu0 %v6638
  %v6896 = vpop.f32.mrf.mxu0
  %v6897 = vadd.f32 %v6792, %v6896
  %v6898 = vpop.f32.mrf.mxu0
  %v6899 = vpop.f32.mrf.mxu0
  %v6900 = vadd.f32 %v6792, %v6899
  %v6901 = vpop.f32.mrf.mxu0
  %6902 = vmatprep.mubr.bf16.mxu0 0
  %6903 = vmatmul.mubr.bf16.gmra.mxu0 %v6641
  %v6904 = vpop.f32.mrf.mxu0
  %v6905 = vadd.f32 %v6792, %v6904
  %v6906 = vpop.f32.mrf.mxu0
  %v6907 = vpop.f32.mrf.mxu0
  %v6908 = vadd.f32 %v6792, %v6907
  %v6909 = vpop.f32.mrf.mxu0
  %6910 = vmatprep.mubr.bf16.mxu0 0
  %6911 = vmatmul.mubr.bf16.gmra.mxu0 %v6644
  %v6912 = vpop.f32.mrf.mxu0
  %v6913 = vadd.f32 %v6792, %v6912
  %v6914 = vpop.f32.mrf.mxu0
  %v6915 = vpop.f32.mrf.mxu0
  %v6916 = vadd.f32 %v6792, %v6915
  %v6917 = vpop.f32.mrf.mxu0
  %6918 = vmatprep.mubr.bf16.mxu0 0
  %6919 = vmatmul.mubr.bf16.gmra.mxu0 %v6647
  %v6920 = vpop.f32.mrf.mxu0
  %v6921 = vadd.f32 %v6792, %v6920
  %v6922 = vpop.f32.mrf.mxu0
  %v6923 = vpop.f32.mrf.mxu0
  %v6924 = vadd.f32 %v6792, %v6923
  %v6925 = vpop.f32.mrf.mxu0
  %6926 = vmatprep.mubr.bf16.mxu0 0
  %6927 = vmatmul.mubr.bf16.gmra.mxu0 %v6650
  %v6928 = vpop.f32.mrf.mxu0
  %v6929 = vadd.f32 %v6792, %v6928
  %v6930 = vpop.f32.mrf.mxu0
  %v6931 = vpop.f32.mrf.mxu0
  %v6932 = vadd.f32 %v6792, %v6931
  %v6933 = vpop.f32.mrf.mxu0
  %6934 = vdwg.mxu0
  %s6935 = scalar_lea.vmem %s7, 16
  %v6936 = vld [vmem:[%s6935] sm:$0xf]
  %v6937 = vld [vmem:[%s6935 + $0x4] sm:$0xf]
  %v6938 = vld [vmem:[%s6935 + $0x8] sm:$0xf]
  %v6939 = vld [vmem:[%s6935 + $0xc] sm:$0xf]
  %s6940 = scalar_lea.vmem %s10, 1
  %v6941 = vld [vmem:[%s6940] sm:$0x1]
  %v6943 = vlaneseq
  %v6944 = vshrl.u32 %v6943, 7
  %v6945 = vsub.s32 0, %v6944
  %v6946 = vrot.slane %v6941, %v6945
  %v6952 = vunpack.c.l.b16 %v6936
  %v6953 = vunpack.c.l.b16 %v6937
  %v6954 = vunpack.c.l.b16 %v6938
  %v6955 = vunpack.c.l.b16 %v6939
  %v6956 = vpack.c.b16 %v6953, %v6952
  %v6957 = vpack.c.b16 %v6955, %v6954
  %6960 = vmatprep.subr.bf16.mxu0 0
  %6961 = vmatpush1.bf16.msra.mxu0 0
  %6962 = vmatprep.subr.bf16.mxu0 0
  %6963 = vmatpush1.bf16.msra.mxu0 0
  %6964 = vmatprep.subr.bf16.mxu0 0
  %6965 = vmatpush1.bf16.msra.mxu0 0
  %6966 = vmatprep.subr.bf16.mxu0 0
  %6967 = vmatpush1.bf16.msra.mxu0 0
  %6968 = vmatprep.subr.bf16.mxu0 0
  %6969 = vmatpush1.bf16.msra.mxu0 0
  %6970 = vmatprep.subr.bf16.mxu0 0
  %6971 = vmatpush1.bf16.msra.mxu0 0
  %6972 = vmatprep.subr.bf16.mxu0 0
  %6973 = vmatpush1.bf16.msra.mxu0 %v6957
  %6974 = vmatprep.subr.bf16.mxu0 0
  %6975 = vmatpush1.bf16.msra.mxu0 %v6956
  %6976 = vmatprep.subr.bf16.mxu0 0
  %6977 = vmatpush2.bf16.msra.mxu0 0
  %6978 = vmatprep.subr.bf16.mxu0 0
  %6979 = vmatpush2.bf16.msra.mxu0 0
  %6980 = vmatprep.subr.bf16.mxu0 0
  %6981 = vmatpush2.bf16.msra.mxu0 0
  %6982 = vmatprep.subr.bf16.mxu0 0
  %6983 = vmatpush2.bf16.msra.mxu0 0
  %6984 = vmatprep.subr.bf16.mxu0 0
  %6985 = vmatpush2.bf16.msra.mxu0 0
  %6986 = vmatprep.subr.bf16.mxu0 0
  %6987 = vmatpush2.bf16.msra.mxu0 0
  %6988 = vmatprep.subr.bf16.mxu0 0
  %6989 = vmatpush2.bf16.msra.mxu0 0
  %6990 = vmatprep.subr.bf16.mxu0 0
  %6991 = vmatpush2.bf16.msra.mxu0 0
  %6992 = vmatprep.mubr.bf16.mxu0 0
  %6993 = vmatmul.mubr.bf16.gmra.mxu0 %v6617
  %v6994 = vpop.f32.mrf.mxu0
  %v6995 = vadd.f32 %v6946, %v6994
  %v6996 = vpop.f32.mrf.mxu0
  %v6997 = vpop.f32.mrf.mxu0
  %v6998 = vadd.f32 %v6946, %v6997
  %v6999 = vpop.f32.mrf.mxu0
  %7000 = vmatprep.mubr.bf16.mxu0 0
  %7001 = vmatmul.mubr.bf16.gmra.mxu0 %v6620
  %v7002 = vpop.f32.mrf.mxu0
  %v7003 = vadd.f32 %v6946, %v7002
  %v7004 = vpop.f32.mrf.mxu0
  %v7005 = vpop.f32.mrf.mxu0
  %v7006 = vadd.f32 %v6946, %v7005
  %v7007 = vpop.f32.mrf.mxu0
  %7008 = vmatprep.mubr.bf16.mxu0 0
  %7009 = vmatmul.mubr.bf16.gmra.mxu0 %v6623
  %v7010 = vpop.f32.mrf.mxu0
  %v7011 = vadd.f32 %v6946, %v7010
  %v7012 = vpop.f32.mrf.mxu0
  %v7013 = vpop.f32.mrf.mxu0
  %v7014 = vadd.f32 %v6946, %v7013
  %v7015 = vpop.f32.mrf.mxu0
  %7016 = vmatprep.mubr.bf16.mxu0 0
  %7017 = vmatmul.mubr.bf16.gmra.mxu0 %v6626
  %v7018 = vpop.f32.mrf.mxu0
  %v7019 = vadd.f32 %v6946, %v7018
  %v7020 = vpop.f32.mrf.mxu0
  %v7021 = vpop.f32.mrf.mxu0
  %v7022 = vadd.f32 %v6946, %v7021
  %v7023 = vpop.f32.mrf.mxu0
  %7024 = vmatprep.mubr.bf16.mxu0 0
  %7025 = vmatmul.mubr.bf16.gmra.mxu0 %v6629
  %v7026 = vpop.f32.mrf.mxu0
  %v7027 = vadd.f32 %v6946, %v7026
  %v7028 = vpop.f32.mrf.mxu0
  %v7029 = vpop.f32.mrf.mxu0
  %v7030 = vadd.f32 %v6946, %v7029
  %v7031 = vpop.f32.mrf.mxu0
  %7032 = vmatprep.mubr.bf16.mxu0 0
  %7033 = vmatmul.mubr.bf16.gmra.mxu0 %v6632
  %v7034 = vpop.f32.mrf.mxu0
  %v7035 = vadd.f32 %v6946, %v7034
  %v7036 = vpop.f32.mrf.mxu0
  %v7037 = vpop.f32.mrf.mxu0
  %v7038 = vadd.f32 %v6946, %v7037
  %v7039 = vpop.f32.mrf.mxu0
  %7040 = vmatprep.mubr.bf16.mxu0 0
  %7041 = vmatmul.mubr.bf16.gmra.mxu0 %v6635
  %v7042 = vpop.f32.mrf.mxu0
  %v7043 = vadd.f32 %v6946, %v7042
  %v7044 = vpop.f32.mrf.mxu0
  %v7045 = vpop.f32.mrf.mxu0
  %v7046 = vadd.f32 %v6946, %v7045
  %v7047 = vpop.f32.mrf.mxu0
  %7048 = vmatprep.mubr.bf16.mxu0 0
  %7049 = vmatmul.mubr.bf16.gmra.mxu0 %v6638
  %v7050 = vpop.f32.mrf.mxu0
  %v7051 = vadd.f32 %v6946, %v7050
  %v7052 = vpop.f32.mrf.mxu0
  %v7053 = vpop.f32.mrf.mxu0
  %v7054 = vadd.f32 %v6946, %v7053
  %v7055 = vpop.f32.mrf.mxu0
  %7056 = vmatprep.mubr.bf16.mxu0 0
  %7057 = vmatmul.mubr.bf16.gmra.mxu0 %v6641
  %v7058 = vpop.f32.mrf.mxu0
  %v7059 = vadd.f32 %v6946, %v7058
  %v7060 = vpop.f32.mrf.mxu0
  %v7061 = vpop.f32.mrf.mxu0
  %v7062 = vadd.f32 %v6946, %v7061
  %v7063 = vpop.f32.mrf.mxu0
  %7064 = vmatprep.mubr.bf16.mxu0 0
  %7065 = vmatmul.mubr.bf16.gmra.mxu0 %v6644
  %v7066 = vpop.f32.mrf.mxu0
  %v7067 = vadd.f32 %v6946, %v7066
  %v7068 = vpop.f32.mrf.mxu0
  %v7069 = vpop.f32.mrf.mxu0
  %v7070 = vadd.f32 %v6946, %v7069
  %v7071 = vpop.f32.mrf.mxu0
  %7072 = vmatprep.mubr.bf16.mxu0 0
  %7073 = vmatmul.mubr.bf16.gmra.mxu0 %v6647
  %v7074 = vpop.f32.mrf.mxu0
  %v7075 = vadd.f32 %v6946, %v7074
  %v7076 = vpop.f32.mrf.mxu0
  %v7077 = vpop.f32.mrf.mxu0
  %v7078 = vadd.f32 %v6946, %v7077
  %v7079 = vpop.f32.mrf.mxu0
  %7080 = vmatprep.mubr.bf16.mxu0 0
  %7081 = vmatmul.mubr.bf16.gmra.mxu0 %v6650
  %v7082 = vpop.f32.mrf.mxu0
  %v7083 = vadd.f32 %v6946, %v7082
  %v7084 = vpop.f32.mrf.mxu0
  %v7085 = vpop.f32.mrf.mxu0
  %v7086 = vadd.f32 %v6946, %v7085
  %v7087 = vpop.f32.mrf.mxu0
  %7088 = vdwg.mxu0
  %v7089 = vsel %vm1769, %v6687, 0.0
  %v7090 = vsel %vm1769, %v6690, 0.0
  %v7091 = vsel %vm1769, %v6695, 0.0
  %v7092 = vsel %vm1770, %v6687, 0.0
  %v7093 = vsel %vm1770, %v6690, 0.0
  %v7094 = vsel %vm1770, %v6695, 0.0
  %v7095 = vsel %vm1771, %v6687, 0.0
  %v7096 = vsel %vm1771, %v6690, 0.0
  %v7097 = vsel %vm1771, %v6695, 0.0
  %v7098 = vsel %vm1772, %v6687, 0.0
  %v7099 = vsel %vm1772, %v6690, 0.0
  %v7100 = vsel %vm1772, %v6695, 0.0
  %v7101 = vsel %vm1769, %v6698, 0.0
  %v7102 = vsel %vm1769, %v6703, 0.0
  %v7103 = vsel %vm1769, %v6706, 0.0
  %v7104 = vsel %vm1770, %v6698, 0.0
  %v7105 = vsel %vm1770, %v6703, 0.0
  %v7106 = vsel %vm1770, %v6706, 0.0
  %v7107 = vsel %vm1771, %v6698, 0.0
  %v7108 = vsel %vm1771, %v6703, 0.0
  %v7109 = vsel %vm1771, %v6706, 0.0
  %v7110 = vsel %vm1772, %v6698, 0.0
  %v7111 = vsel %vm1772, %v6703, 0.0
  %v7112 = vsel %vm1772, %v6706, 0.0
  %v7113 = vsel %vm1769, %v6711, 0.0
  %v7114 = vsel %vm1769, %v6714, 0.0
  %v7115 = vsel %vm1769, %v6719, 0.0
  %v7116 = vsel %vm1770, %v6711, 0.0
  %v7117 = vsel %vm1770, %v6714, 0.0
  %v7118 = vsel %vm1770, %v6719, 0.0
  %v7119 = vsel %vm1771, %v6711, 0.0
  %v7120 = vsel %vm1771, %v6714, 0.0
  %v7121 = vsel %vm1771, %v6719, 0.0
  %v7122 = vsel %vm1772, %v6711, 0.0
  %v7123 = vsel %vm1772, %v6714, 0.0
  %v7124 = vsel %vm1772, %v6719, 0.0
  %v7125 = vsel %vm1769, %v6722, 0.0
  %v7126 = vsel %vm1769, %v6727, 0.0
  %v7127 = vsel %vm1769, %v6730, 0.0
  %v7128 = vsel %vm1770, %v6722, 0.0
  %v7129 = vsel %vm1770, %v6727, 0.0
  %v7130 = vsel %vm1770, %v6730, 0.0
  %v7131 = vsel %vm1771, %v6722, 0.0
  %v7132 = vsel %vm1771, %v6727, 0.0
  %v7133 = vsel %vm1771, %v6730, 0.0
  %v7134 = vsel %vm1772, %v6722, 0.0
  %v7135 = vsel %vm1772, %v6727, 0.0
  %v7136 = vsel %vm1772, %v6730, 0.0
  %v7137 = vsel %vm1769, %v6735, 0.0
  %v7138 = vsel %vm1769, %v6738, 0.0
  %v7139 = vsel %vm1769, %v6743, 0.0
  %v7140 = vsel %vm1770, %v6735, 0.0
  %v7141 = vsel %vm1770, %v6738, 0.0
  %v7142 = vsel %vm1770, %v6743, 0.0
  %v7143 = vsel %vm1771, %v6735, 0.0
  %v7144 = vsel %vm1771, %v6738, 0.0
  %v7145 = vsel %vm1771, %v6743, 0.0
  %v7146 = vsel %vm1772, %v6735, 0.0
  %v7147 = vsel %vm1772, %v6738, 0.0
  %v7148 = vsel %vm1772, %v6743, 0.0
  %v7149 = vsel %vm1769, %v6746, 0.0
  %v7150 = vsel %vm1769, %v6751, 0.0
  %v7151 = vsel %vm1769, %v6754, 0.0
  %v7152 = vsel %vm1770, %v6746, 0.0
  %v7153 = vsel %vm1770, %v6751, 0.0
  %v7154 = vsel %vm1770, %v6754, 0.0
  %v7155 = vsel %vm1771, %v6746, 0.0
  %v7156 = vsel %vm1771, %v6751, 0.0
  %v7157 = vsel %vm1771, %v6754, 0.0
  %v7158 = vsel %vm1772, %v6746, 0.0
  %v7159 = vsel %vm1772, %v6751, 0.0
  %v7160 = vsel %vm1772, %v6754, 0.0
  %v7161 = vsel %vm1769, %v6759, 0.0
  %v7162 = vsel %vm1769, %v6762, 0.0
  %v7163 = vsel %vm1769, %v6767, 0.0
  %v7164 = vsel %vm1770, %v6759, 0.0
  %v7165 = vsel %vm1770, %v6762, 0.0
  %v7166 = vsel %vm1770, %v6767, 0.0
  %v7167 = vsel %vm1771, %v6759, 0.0
  %v7168 = vsel %vm1771, %v6762, 0.0
  %v7169 = vsel %vm1771, %v6767, 0.0
  %v7170 = vsel %vm1772, %v6759, 0.0
  %v7171 = vsel %vm1772, %v6762, 0.0
  %v7172 = vsel %vm1772, %v6767, 0.0
  %v7173 = vsel %vm1769, %v6770, 0.0
  %v7174 = vsel %vm1769, %v6775, 0.0
  %v7175 = vsel %vm1769, %v6778, 0.0
  %v7176 = vsel %vm1770, %v6770, 0.0
  %v7177 = vsel %vm1770, %v6775, 0.0
  %v7178 = vsel %vm1770, %v6778, 0.0
  %v7179 = vsel %vm1771, %v6770, 0.0
  %v7180 = vsel %vm1771, %v6775, 0.0
  %v7181 = vsel %vm1771, %v6778, 0.0
  %v7182 = vsel %vm1772, %v6770, 0.0
  %v7183 = vsel %vm1772, %v6775, 0.0
  %v7184 = vsel %vm1772, %v6778, 0.0
  %v7185 = vpack.c.bf16 %v7090, %v7089
  %v7186 = vpack.c.bf16 %v7092, %v7091
  %v7187 = vpack.c.bf16 %v7094, %v7093
  %v7188 = vpack.c.bf16 %v7096, %v7095
  %v7189 = vpack.c.bf16 %v7098, %v7097
  %v7190 = vpack.c.bf16 %v7100, %v7099
  %v7191 = vpack.c.bf16 %v7102, %v7101
  %v7192 = vpack.c.bf16 %v7104, %v7103
  %v7193 = vpack.c.bf16 %v7106, %v7105
  %v7194 = vpack.c.bf16 %v7108, %v7107
  %v7195 = vpack.c.bf16 %v7110, %v7109
  %v7196 = vpack.c.bf16 %v7112, %v7111
  %v7197 = vpack.c.bf16 %v7114, %v7113
  %v7198 = vpack.c.bf16 %v7116, %v7115
  %v7199 = vpack.c.bf16 %v7118, %v7117
  %v7200 = vpack.c.bf16 %v7120, %v7119
  %v7201 = vpack.c.bf16 %v7122, %v7121
  %v7202 = vpack.c.bf16 %v7124, %v7123
  %v7203 = vpack.c.bf16 %v7126, %v7125
  %v7204 = vpack.c.bf16 %v7128, %v7127
  %v7205 = vpack.c.bf16 %v7130, %v7129
  %v7206 = vpack.c.bf16 %v7132, %v7131
  %v7207 = vpack.c.bf16 %v7134, %v7133
  %v7208 = vpack.c.bf16 %v7136, %v7135
  %v7209 = vpack.c.bf16 %v7138, %v7137
  %v7210 = vpack.c.bf16 %v7140, %v7139
  %v7211 = vpack.c.bf16 %v7142, %v7141
  %v7212 = vpack.c.bf16 %v7144, %v7143
  %v7213 = vpack.c.bf16 %v7146, %v7145
  %v7214 = vpack.c.bf16 %v7148, %v7147
  %v7215 = vpack.c.bf16 %v7150, %v7149
  %v7216 = vpack.c.bf16 %v7152, %v7151
  %v7217 = vpack.c.bf16 %v7154, %v7153
  %v7218 = vpack.c.bf16 %v7156, %v7155
  %v7219 = vpack.c.bf16 %v7158, %v7157
  %v7220 = vpack.c.bf16 %v7160, %v7159
  %v7221 = vpack.c.bf16 %v7162, %v7161
  %v7222 = vpack.c.bf16 %v7164, %v7163
  %v7223 = vpack.c.bf16 %v7166, %v7165
  %v7224 = vpack.c.bf16 %v7168, %v7167
  %v7225 = vpack.c.bf16 %v7170, %v7169
  %v7226 = vpack.c.bf16 %v7172, %v7171
  %v7227 = vpack.c.bf16 %v7174, %v7173
  %v7228 = vpack.c.bf16 %v7176, %v7175
  %v7229 = vpack.c.bf16 %v7178, %v7177
  %v7230 = vpack.c.bf16 %v7180, %v7179
  %v7231 = vpack.c.bf16 %v7182, %v7181
  %v7232 = vpack.c.bf16 %v7184, %v7183
  %v7233 = vpack.c.bf16 %v6844, %v6841
  %v7234 = vpack.c.bf16 %v6849, %v6849
  %v7235 = vpack.c.bf16 %v6857, %v6852
  %v7236 = vpack.c.bf16 %v6860, %v6860
  %v7237 = vpack.c.bf16 %v6868, %v6865
  %v7238 = vpack.c.bf16 %v6873, %v6873
  %v7239 = vpack.c.bf16 %v6881, %v6876
  %v7240 = vpack.c.bf16 %v6884, %v6884
  %v7241 = vpack.c.bf16 %v6892, %v6889
  %v7242 = vpack.c.bf16 %v6897, %v6897
  %v7243 = vpack.c.bf16 %v6905, %v6900
  %v7244 = vpack.c.bf16 %v6908, %v6908
  %v7245 = vpack.c.bf16 %v6916, %v6913
  %v7246 = vpack.c.bf16 %v6921, %v6921
  %v7247 = vpack.c.bf16 %v6929, %v6924
  %v7248 = vpack.c.bf16 %v6932, %v6932
  %v7250 = vsel %vm498, %v7185, 0
  %v7253 = vsel %vm498, %v7186, 0
  %v7256 = vsel %vm498, %v7187, 0
  %v7259 = vsel %vm498, %v7188, 0
  %v7262 = vsel %vm498, %v7189, 0
  %v7265 = vsel %vm498, %v7190, 0
  %v7268 = vsel %vm498, %v7233, 0
  %v7271 = vsel %vm498, %v7234, 0
  %7273 = vmatprep.subr.bf16.mxu0 0
  %7274 = vmatpush1.bf16.xpose.msra.mxu0 0
  %7275 = vmatprep.subr.bf16.mxu0 0
  %7276 = vmatpush1.bf16.xpose.msra.mxu0 0
  %7277 = vmatprep.subr.bf16.mxu0 0
  %7278 = vmatpush1.bf16.xpose.msra.mxu0 0
  %7279 = vmatprep.subr.bf16.mxu0 0
  %7280 = vmatpush1.bf16.xpose.msra.mxu0 0
  %7281 = vmatprep.subr.bf16.mxu0 0
  %7282 = vmatpush1.bf16.xpose.msra.mxu0 0
  %7283 = vmatprep.subr.bf16.mxu0 0
  %7284 = vmatpush1.bf16.xpose.msra.mxu0 0
  %7285 = vmatprep.subr.bf16.mxu0 0
  %7286 = vmatpush1.bf16.xpose.msra.mxu0 %v7271
  %7287 = vmatprep.subr.bf16.mxu0 0
  %7288 = vmatpush1.bf16.xpose.msra.mxu0 %v7268
  %7289 = vmatprep.subr.bf16.mxu0 0
  %7290 = vmatpush2.bf16.xpose.msra.mxu0 0
  %7291 = vmatprep.subr.bf16.mxu0 0
  %7292 = vmatpush2.bf16.xpose.msra.mxu0 0
  %7293 = vmatprep.subr.bf16.mxu0 0
  %7294 = vmatpush2.bf16.xpose.msra.mxu0 0
  %7295 = vmatprep.subr.bf16.mxu0 0
  %7296 = vmatpush2.bf16.xpose.msra.mxu0 0
  %7297 = vmatprep.subr.bf16.mxu0 0
  %7298 = vmatpush2.bf16.xpose.msra.mxu0 0
  %7299 = vmatprep.subr.bf16.mxu0 0
  %7300 = vmatpush2.bf16.xpose.msra.mxu0 0
  %7301 = vmatprep.subr.bf16.mxu0 0
  %7302 = vmatpush2.bf16.xpose.msra.mxu0 0
  %7303 = vmatprep.subr.bf16.mxu0 0
  %7304 = vmatpush2.bf16.xpose.msra.mxu0 0
  %7305 = vmatprep.mubr.bf16.mxu0 0
  %7306 = vmatmul.mubr.bf16.gmra.mxu0 %v7250
  %v7307 = vpop.f32.mrf.mxu0
  %v7308 = vadd.f32 0.0, %v7307
  %v7309 = vpop.f32.mrf.mxu0
  %v7310 = vpop.f32.mrf.mxu0
  %v7311 = vadd.f32 0.0, %v7310
  %v7312 = vpop.f32.mrf.mxu0
  %7313 = vmatprep.mubr.bf16.mxu0 0
  %7314 = vmatmul.mubr.bf16.gmra.mxu0 %v7253
  %v7315 = vpop.f32.mrf.mxu0
  %v7316 = vadd.f32 0.0, %v7315
  %v7317 = vpop.f32.mrf.mxu0
  %v7318 = vpop.f32.mrf.mxu0
  %v7319 = vadd.f32 0.0, %v7318
  %v7320 = vpop.f32.mrf.mxu0
  %7321 = vmatprep.mubr.bf16.mxu0 0
  %7322 = vmatmul.mubr.bf16.gmra.mxu0 %v7256
  %v7323 = vpop.f32.mrf.mxu0
  %v7324 = vadd.f32 0.0, %v7323
  %v7325 = vpop.f32.mrf.mxu0
  %v7326 = vpop.f32.mrf.mxu0
  %v7327 = vadd.f32 0.0, %v7326
  %v7328 = vpop.f32.mrf.mxu0
  %7329 = vmatprep.mubr.bf16.mxu0 0
  %7330 = vmatmul.mubr.bf16.gmra.mxu0 %v7259
  %v7331 = vpop.f32.mrf.mxu0
  %v7332 = vadd.f32 0.0, %v7331
  %v7333 = vpop.f32.mrf.mxu0
  %v7334 = vpop.f32.mrf.mxu0
  %v7335 = vadd.f32 0.0, %v7334
  %v7336 = vpop.f32.mrf.mxu0
  %7337 = vmatprep.mubr.bf16.mxu0 0
  %7338 = vmatmul.mubr.bf16.gmra.mxu0 %v7262
  %v7339 = vpop.f32.mrf.mxu0
  %v7340 = vadd.f32 0.0, %v7339
  %v7341 = vpop.f32.mrf.mxu0
  %v7342 = vpop.f32.mrf.mxu0
  %v7343 = vadd.f32 0.0, %v7342
  %v7344 = vpop.f32.mrf.mxu0
  %7345 = vmatprep.mubr.bf16.mxu0 0
  %7346 = vmatmul.mubr.bf16.gmra.mxu0 %v7265
  %v7347 = vpop.f32.mrf.mxu0
  %v7348 = vadd.f32 0.0, %v7347
  %v7349 = vpop.f32.mrf.mxu0
  %v7350 = vpop.f32.mrf.mxu0
  %v7351 = vadd.f32 0.0, %v7350
  %v7352 = vpop.f32.mrf.mxu0
  %7353 = vdwg.mxu0
  %v7355 = vsel %vm498, %v7191, 0
  %v7358 = vsel %vm498, %v7192, 0
  %v7361 = vsel %vm498, %v7193, 0
  %v7364 = vsel %vm498, %v7194, 0
  %v7367 = vsel %vm498, %v7195, 0
  %v7370 = vsel %vm498, %v7196, 0
  %v7373 = vsel %vm498, %v7235, 0
  %v7376 = vsel %vm498, %v7236, 0
  %7378 = vmatprep.subr.bf16.mxu0 0
  %7379 = vmatpush1.bf16.xpose.msra.mxu0 0
  %7380 = vmatprep.subr.bf16.mxu0 0
  %7381 = vmatpush1.bf16.xpose.msra.mxu0 0
  %7382 = vmatprep.subr.bf16.mxu0 0
  %7383 = vmatpush1.bf16.xpose.msra.mxu0 0
  %7384 = vmatprep.subr.bf16.mxu0 0
  %7385 = vmatpush1.bf16.xpose.msra.mxu0 0
  %7386 = vmatprep.subr.bf16.mxu0 0
  %7387 = vmatpush1.bf16.xpose.msra.mxu0 0
  %7388 = vmatprep.subr.bf16.mxu0 0
  %7389 = vmatpush1.bf16.xpose.msra.mxu0 0
  %7390 = vmatprep.subr.bf16.mxu0 0
  %7391 = vmatpush1.bf16.xpose.msra.mxu0 %v7376
  %7392 = vmatprep.subr.bf16.mxu0 0
  %7393 = vmatpush1.bf16.xpose.msra.mxu0 %v7373
  %7394 = vmatprep.subr.bf16.mxu0 0
  %7395 = vmatpush2.bf16.xpose.msra.mxu0 0
  %7396 = vmatprep.subr.bf16.mxu0 0
  %7397 = vmatpush2.bf16.xpose.msra.mxu0 0
  %7398 = vmatprep.subr.bf16.mxu0 0
  %7399 = vmatpush2.bf16.xpose.msra.mxu0 0
  %7400 = vmatprep.subr.bf16.mxu0 0
  %7401 = vmatpush2.bf16.xpose.msra.mxu0 0
  %7402 = vmatprep.subr.bf16.mxu0 0
  %7403 = vmatpush2.bf16.xpose.msra.mxu0 0
  %7404 = vmatprep.subr.bf16.mxu0 0
  %7405 = vmatpush2.bf16.xpose.msra.mxu0 0
  %7406 = vmatprep.subr.bf16.mxu0 0
  %7407 = vmatpush2.bf16.xpose.msra.mxu0 0
  %7408 = vmatprep.subr.bf16.mxu0 0
  %7409 = vmatpush2.bf16.xpose.msra.mxu0 0
  %7410 = vmatprep.mubr.bf16.mxu0 0
  %7411 = vmatmul.mubr.bf16.gmra.mxu0 %v7355
  %v7412 = vpop.f32.mrf.mxu0
  %v7413 = vadd.f32 0.0, %v7412
  %v7414 = vpop.f32.mrf.mxu0
  %v7415 = vpop.f32.mrf.mxu0
  %v7416 = vadd.f32 0.0, %v7415
  %v7417 = vpop.f32.mrf.mxu0
  %7418 = vmatprep.mubr.bf16.mxu0 0
  %7419 = vmatmul.mubr.bf16.gmra.mxu0 %v7358
  %v7420 = vpop.f32.mrf.mxu0
  %v7421 = vadd.f32 0.0, %v7420
  %v7422 = vpop.f32.mrf.mxu0
  %v7423 = vpop.f32.mrf.mxu0
  %v7424 = vadd.f32 0.0, %v7423
  %v7425 = vpop.f32.mrf.mxu0
  %7426 = vmatprep.mubr.bf16.mxu0 0
  %7427 = vmatmul.mubr.bf16.gmra.mxu0 %v7361
  %v7428 = vpop.f32.mrf.mxu0
  %v7429 = vadd.f32 0.0, %v7428
  %v7430 = vpop.f32.mrf.mxu0
  %v7431 = vpop.f32.mrf.mxu0
  %v7432 = vadd.f32 0.0, %v7431
  %v7433 = vpop.f32.mrf.mxu0
  %7434 = vmatprep.mubr.bf16.mxu0 0
  %7435 = vmatmul.mubr.bf16.gmra.mxu0 %v7364
  %v7436 = vpop.f32.mrf.mxu0
  %v7437 = vadd.f32 0.0, %v7436
  %v7438 = vpop.f32.mrf.mxu0
  %v7439 = vpop.f32.mrf.mxu0
  %v7440 = vadd.f32 0.0, %v7439
  %v7441 = vpop.f32.mrf.mxu0
  %7442 = vmatprep.mubr.bf16.mxu0 0
  %7443 = vmatmul.mubr.bf16.gmra.mxu0 %v7367
  %v7444 = vpop.f32.mrf.mxu0
  %v7445 = vadd.f32 0.0, %v7444
  %v7446 = vpop.f32.mrf.mxu0
  %v7447 = vpop.f32.mrf.mxu0
  %v7448 = vadd.f32 0.0, %v7447
  %v7449 = vpop.f32.mrf.mxu0
  %7450 = vmatprep.mubr.bf16.mxu0 0
  %7451 = vmatmul.mubr.bf16.gmra.mxu0 %v7370
  %v7452 = vpop.f32.mrf.mxu0
  %v7453 = vadd.f32 0.0, %v7452
  %v7454 = vpop.f32.mrf.mxu0
  %v7455 = vpop.f32.mrf.mxu0
  %v7456 = vadd.f32 0.0, %v7455
  %v7457 = vpop.f32.mrf.mxu0
  %7458 = vdwg.mxu0
  %v7460 = vsel %vm498, %v7197, 0
  %v7463 = vsel %vm498, %v7198, 0
  %v7466 = vsel %vm498, %v7199, 0
  %v7469 = vsel %vm498, %v7200, 0
  %v7472 = vsel %vm498, %v7201, 0
  %v7475 = vsel %vm498, %v7202, 0
  %v7478 = vsel %vm498, %v7237, 0
  %v7481 = vsel %vm498, %v7238, 0
  %7483 = vmatprep.subr.bf16.mxu0 0
  %7484 = vmatpush1.bf16.xpose.msra.mxu0 0
  %7485 = vmatprep.subr.bf16.mxu0 0
  %7486 = vmatpush1.bf16.xpose.msra.mxu0 0
  %7487 = vmatprep.subr.bf16.mxu0 0
  %7488 = vmatpush1.bf16.xpose.msra.mxu0 0
  %7489 = vmatprep.subr.bf16.mxu0 0
  %7490 = vmatpush1.bf16.xpose.msra.mxu0 0
  %7491 = vmatprep.subr.bf16.mxu0 0
  %7492 = vmatpush1.bf16.xpose.msra.mxu0 0
  %7493 = vmatprep.subr.bf16.mxu0 0
  %7494 = vmatpush1.bf16.xpose.msra.mxu0 0
  %7495 = vmatprep.subr.bf16.mxu0 0
  %7496 = vmatpush1.bf16.xpose.msra.mxu0 %v7481
  %7497 = vmatprep.subr.bf16.mxu0 0
  %7498 = vmatpush1.bf16.xpose.msra.mxu0 %v7478
  %7499 = vmatprep.subr.bf16.mxu0 0
  %7500 = vmatpush2.bf16.xpose.msra.mxu0 0
  %7501 = vmatprep.subr.bf16.mxu0 0
  %7502 = vmatpush2.bf16.xpose.msra.mxu0 0
  %7503 = vmatprep.subr.bf16.mxu0 0
  %7504 = vmatpush2.bf16.xpose.msra.mxu0 0
  %7505 = vmatprep.subr.bf16.mxu0 0
  %7506 = vmatpush2.bf16.xpose.msra.mxu0 0
  %7507 = vmatprep.subr.bf16.mxu0 0
  %7508 = vmatpush2.bf16.xpose.msra.mxu0 0
  %7509 = vmatprep.subr.bf16.mxu0 0
  %7510 = vmatpush2.bf16.xpose.msra.mxu0 0
  %7511 = vmatprep.subr.bf16.mxu0 0
  %7512 = vmatpush2.bf16.xpose.msra.mxu0 0
  %7513 = vmatprep.subr.bf16.mxu0 0
  %7514 = vmatpush2.bf16.xpose.msra.mxu0 0
  %7515 = vmatprep.mubr.bf16.mxu0 0
  %7516 = vmatmul.mubr.bf16.gmra.mxu0 %v7460
  %v7517 = vpop.f32.mrf.mxu0
  %v7518 = vadd.f32 0.0, %v7517
  %v7519 = vpop.f32.mrf.mxu0
  %v7520 = vpop.f32.mrf.mxu0
  %v7521 = vadd.f32 0.0, %v7520
  %v7522 = vpop.f32.mrf.mxu0
  %7523 = vmatprep.mubr.bf16.mxu0 0
  %7524 = vmatmul.mubr.bf16.gmra.mxu0 %v7463
  %v7525 = vpop.f32.mrf.mxu0
  %v7526 = vadd.f32 0.0, %v7525
  %v7527 = vpop.f32.mrf.mxu0
  %v7528 = vpop.f32.mrf.mxu0
  %v7529 = vadd.f32 0.0, %v7528
  %v7530 = vpop.f32.mrf.mxu0
  %7531 = vmatprep.mubr.bf16.mxu0 0
  %7532 = vmatmul.mubr.bf16.gmra.mxu0 %v7466
  %v7533 = vpop.f32.mrf.mxu0
  %v7534 = vadd.f32 0.0, %v7533
  %v7535 = vpop.f32.mrf.mxu0
  %v7536 = vpop.f32.mrf.mxu0
  %v7537 = vadd.f32 0.0, %v7536
  %v7538 = vpop.f32.mrf.mxu0
  %7539 = vmatprep.mubr.bf16.mxu0 0
  %7540 = vmatmul.mubr.bf16.gmra.mxu0 %v7469
  %v7541 = vpop.f32.mrf.mxu0
  %v7542 = vadd.f32 0.0, %v7541
  %v7543 = vpop.f32.mrf.mxu0
  %v7544 = vpop.f32.mrf.mxu0
  %v7545 = vadd.f32 0.0, %v7544
  %v7546 = vpop.f32.mrf.mxu0
  %7547 = vmatprep.mubr.bf16.mxu0 0
  %7548 = vmatmul.mubr.bf16.gmra.mxu0 %v7472
  %v7549 = vpop.f32.mrf.mxu0
  %v7550 = vadd.f32 0.0, %v7549
  %v7551 = vpop.f32.mrf.mxu0
  %v7552 = vpop.f32.mrf.mxu0
  %v7553 = vadd.f32 0.0, %v7552
  %v7554 = vpop.f32.mrf.mxu0
  %7555 = vmatprep.mubr.bf16.mxu0 0
  %7556 = vmatmul.mubr.bf16.gmra.mxu0 %v7475
  %v7557 = vpop.f32.mrf.mxu0
  %v7558 = vadd.f32 0.0, %v7557
  %v7559 = vpop.f32.mrf.mxu0
  %v7560 = vpop.f32.mrf.mxu0
  %v7561 = vadd.f32 0.0, %v7560
  %v7562 = vpop.f32.mrf.mxu0
  %7563 = vdwg.mxu0
  %v7565 = vsel %vm498, %v7203, 0
  %v7568 = vsel %vm498, %v7204, 0
  %v7571 = vsel %vm498, %v7205, 0
  %v7574 = vsel %vm498, %v7206, 0
  %v7577 = vsel %vm498, %v7207, 0
  %v7580 = vsel %vm498, %v7208, 0
  %v7583 = vsel %vm498, %v7239, 0
  %v7586 = vsel %vm498, %v7240, 0
  %7588 = vmatprep.subr.bf16.mxu0 0
  %7589 = vmatpush1.bf16.xpose.msra.mxu0 0
  %7590 = vmatprep.subr.bf16.mxu0 0
  %7591 = vmatpush1.bf16.xpose.msra.mxu0 0
  %7592 = vmatprep.subr.bf16.mxu0 0
  %7593 = vmatpush1.bf16.xpose.msra.mxu0 0
  %7594 = vmatprep.subr.bf16.mxu0 0
  %7595 = vmatpush1.bf16.xpose.msra.mxu0 0
  %7596 = vmatprep.subr.bf16.mxu0 0
  %7597 = vmatpush1.bf16.xpose.msra.mxu0 0
  %7598 = vmatprep.subr.bf16.mxu0 0
  %7599 = vmatpush1.bf16.xpose.msra.mxu0 0
  %7600 = vmatprep.subr.bf16.mxu0 0
  %7601 = vmatpush1.bf16.xpose.msra.mxu0 %v7586
  %7602 = vmatprep.subr.bf16.mxu0 0
  %7603 = vmatpush1.bf16.xpose.msra.mxu0 %v7583
  %7604 = vmatprep.subr.bf16.mxu0 0
  %7605 = vmatpush2.bf16.xpose.msra.mxu0 0
  %7606 = vmatprep.subr.bf16.mxu0 0
  %7607 = vmatpush2.bf16.xpose.msra.mxu0 0
  %7608 = vmatprep.subr.bf16.mxu0 0
  %7609 = vmatpush2.bf16.xpose.msra.mxu0 0
  %7610 = vmatprep.subr.bf16.mxu0 0
  %7611 = vmatpush2.bf16.xpose.msra.mxu0 0
  %7612 = vmatprep.subr.bf16.mxu0 0
  %7613 = vmatpush2.bf16.xpose.msra.mxu0 0
  %7614 = vmatprep.subr.bf16.mxu0 0
  %7615 = vmatpush2.bf16.xpose.msra.mxu0 0
  %7616 = vmatprep.subr.bf16.mxu0 0
  %7617 = vmatpush2.bf16.xpose.msra.mxu0 0
  %7618 = vmatprep.subr.bf16.mxu0 0
  %7619 = vmatpush2.bf16.xpose.msra.mxu0 0
  %7620 = vmatprep.mubr.bf16.mxu0 0
  %7621 = vmatmul.mubr.bf16.gmra.mxu0 %v7565
  %v7622 = vpop.f32.mrf.mxu0
  %v7623 = vadd.f32 0.0, %v7622
  %v7624 = vpop.f32.mrf.mxu0
  %v7625 = vpop.f32.mrf.mxu0
  %v7626 = vadd.f32 0.0, %v7625
  %v7627 = vpop.f32.mrf.mxu0
  %7628 = vmatprep.mubr.bf16.mxu0 0
  %7629 = vmatmul.mubr.bf16.gmra.mxu0 %v7568
  %v7630 = vpop.f32.mrf.mxu0
  %v7631 = vadd.f32 0.0, %v7630
  %v7632 = vpop.f32.mrf.mxu0
  %v7633 = vpop.f32.mrf.mxu0
  %v7634 = vadd.f32 0.0, %v7633
  %v7635 = vpop.f32.mrf.mxu0
  %7636 = vmatprep.mubr.bf16.mxu0 0
  %7637 = vmatmul.mubr.bf16.gmra.mxu0 %v7571
  %v7638 = vpop.f32.mrf.mxu0
  %v7639 = vadd.f32 0.0, %v7638
  %v7640 = vpop.f32.mrf.mxu0
  %v7641 = vpop.f32.mrf.mxu0
  %v7642 = vadd.f32 0.0, %v7641
  %v7643 = vpop.f32.mrf.mxu0
  %7644 = vmatprep.mubr.bf16.mxu0 0
  %7645 = vmatmul.mubr.bf16.gmra.mxu0 %v7574
  %v7646 = vpop.f32.mrf.mxu0
  %v7647 = vadd.f32 0.0, %v7646
  %v7648 = vpop.f32.mrf.mxu0
  %v7649 = vpop.f32.mrf.mxu0
  %v7650 = vadd.f32 0.0, %v7649
  %v7651 = vpop.f32.mrf.mxu0
  %7652 = vmatprep.mubr.bf16.mxu0 0
  %7653 = vmatmul.mubr.bf16.gmra.mxu0 %v7577
  %v7654 = vpop.f32.mrf.mxu0
  %v7655 = vadd.f32 0.0, %v7654
  %v7656 = vpop.f32.mrf.mxu0
  %v7657 = vpop.f32.mrf.mxu0
  %v7658 = vadd.f32 0.0, %v7657
  %v7659 = vpop.f32.mrf.mxu0
  %7660 = vmatprep.mubr.bf16.mxu0 0
  %7661 = vmatmul.mubr.bf16.gmra.mxu0 %v7580
  %v7662 = vpop.f32.mrf.mxu0
  %v7663 = vadd.f32 0.0, %v7662
  %v7664 = vpop.f32.mrf.mxu0
  %v7665 = vpop.f32.mrf.mxu0
  %v7666 = vadd.f32 0.0, %v7665
  %v7667 = vpop.f32.mrf.mxu0
  %7668 = vdwg.mxu0
  %v7670 = vsel %vm498, %v7209, 0
  %v7673 = vsel %vm498, %v7210, 0
  %v7676 = vsel %vm498, %v7211, 0
  %v7679 = vsel %vm498, %v7212, 0
  %v7682 = vsel %vm498, %v7213, 0
  %v7685 = vsel %vm498, %v7214, 0
  %v7688 = vsel %vm498, %v7241, 0
  %v7691 = vsel %vm498, %v7242, 0
  %7693 = vmatprep.subr.bf16.mxu0 0
  %7694 = vmatpush1.bf16.xpose.msra.mxu0 0
  %7695 = vmatprep.subr.bf16.mxu0 0
  %7696 = vmatpush1.bf16.xpose.msra.mxu0 0
  %7697 = vmatprep.subr.bf16.mxu0 0
  %7698 = vmatpush1.bf16.xpose.msra.mxu0 0
  %7699 = vmatprep.subr.bf16.mxu0 0
  %7700 = vmatpush1.bf16.xpose.msra.mxu0 0
  %7701 = vmatprep.subr.bf16.mxu0 0
  %7702 = vmatpush1.bf16.xpose.msra.mxu0 0
  %7703 = vmatprep.subr.bf16.mxu0 0
  %7704 = vmatpush1.bf16.xpose.msra.mxu0 0
  %7705 = vmatprep.subr.bf16.mxu0 0
  %7706 = vmatpush1.bf16.xpose.msra.mxu0 %v7691
  %7707 = vmatprep.subr.bf16.mxu0 0
  %7708 = vmatpush1.bf16.xpose.msra.mxu0 %v7688
  %7709 = vmatprep.subr.bf16.mxu0 0
  %7710 = vmatpush2.bf16.xpose.msra.mxu0 0
  %7711 = vmatprep.subr.bf16.mxu0 0
  %7712 = vmatpush2.bf16.xpose.msra.mxu0 0
  %7713 = vmatprep.subr.bf16.mxu0 0
  %7714 = vmatpush2.bf16.xpose.msra.mxu0 0
  %7715 = vmatprep.subr.bf16.mxu0 0
  %7716 = vmatpush2.bf16.xpose.msra.mxu0 0
  %7717 = vmatprep.subr.bf16.mxu0 0
  %7718 = vmatpush2.bf16.xpose.msra.mxu0 0
  %7719 = vmatprep.subr.bf16.mxu0 0
  %7720 = vmatpush2.bf16.xpose.msra.mxu0 0
  %7721 = vmatprep.subr.bf16.mxu0 0
  %7722 = vmatpush2.bf16.xpose.msra.mxu0 0
  %7723 = vmatprep.subr.bf16.mxu0 0
  %7724 = vmatpush2.bf16.xpose.msra.mxu0 0
  %7725 = vmatprep.mubr.bf16.mxu0 0
  %7726 = vmatmul.mubr.bf16.gmra.mxu0 %v7670
  %v7727 = vpop.f32.mrf.mxu0
  %v7728 = vadd.f32 0.0, %v7727
  %v7729 = vpop.f32.mrf.mxu0
  %v7730 = vpop.f32.mrf.mxu0
  %v7731 = vadd.f32 0.0, %v7730
  %v7732 = vpop.f32.mrf.mxu0
  %7733 = vmatprep.mubr.bf16.mxu0 0
  %7734 = vmatmul.mubr.bf16.gmra.mxu0 %v7673
  %v7735 = vpop.f32.mrf.mxu0
  %v7736 = vadd.f32 0.0, %v7735
  %v7737 = vpop.f32.mrf.mxu0
  %v7738 = vpop.f32.mrf.mxu0
  %v7739 = vadd.f32 0.0, %v7738
  %v7740 = vpop.f32.mrf.mxu0
  %7741 = vmatprep.mubr.bf16.mxu0 0
  %7742 = vmatmul.mubr.bf16.gmra.mxu0 %v7676
  %v7743 = vpop.f32.mrf.mxu0
  %v7744 = vadd.f32 0.0, %v7743
  %v7745 = vpop.f32.mrf.mxu0
  %v7746 = vpop.f32.mrf.mxu0
  %v7747 = vadd.f32 0.0, %v7746
  %v7748 = vpop.f32.mrf.mxu0
  %7749 = vmatprep.mubr.bf16.mxu0 0
  %7750 = vmatmul.mubr.bf16.gmra.mxu0 %v7679
  %v7751 = vpop.f32.mrf.mxu0
  %v7752 = vadd.f32 0.0, %v7751
  %v7753 = vpop.f32.mrf.mxu0
  %v7754 = vpop.f32.mrf.mxu0
  %v7755 = vadd.f32 0.0, %v7754
  %v7756 = vpop.f32.mrf.mxu0
  %7757 = vmatprep.mubr.bf16.mxu0 0
  %7758 = vmatmul.mubr.bf16.gmra.mxu0 %v7682
  %v7759 = vpop.f32.mrf.mxu0
  %v7760 = vadd.f32 0.0, %v7759
  %v7761 = vpop.f32.mrf.mxu0
  %v7762 = vpop.f32.mrf.mxu0
  %v7763 = vadd.f32 0.0, %v7762
  %v7764 = vpop.f32.mrf.mxu0
  %7765 = vmatprep.mubr.bf16.mxu0 0
  %7766 = vmatmul.mubr.bf16.gmra.mxu0 %v7685
  %v7767 = vpop.f32.mrf.mxu0
  %v7768 = vadd.f32 0.0, %v7767
  %v7769 = vpop.f32.mrf.mxu0
  %v7770 = vpop.f32.mrf.mxu0
  %v7771 = vadd.f32 0.0, %v7770
  %v7772 = vpop.f32.mrf.mxu0
  %7773 = vdwg.mxu0
  %v7775 = vsel %vm498, %v7215, 0
  %v7778 = vsel %vm498, %v7216, 0
  %v7781 = vsel %vm498, %v7217, 0
  %v7784 = vsel %vm498, %v7218, 0
  %v7787 = vsel %vm498, %v7219, 0
  %v7790 = vsel %vm498, %v7220, 0
  %v7793 = vsel %vm498, %v7243, 0
  %v7796 = vsel %vm498, %v7244, 0
  %7798 = vmatprep.subr.bf16.mxu0 0
  %7799 = vmatpush1.bf16.xpose.msra.mxu0 0
  %7800 = vmatprep.subr.bf16.mxu0 0
  %7801 = vmatpush1.bf16.xpose.msra.mxu0 0
  %7802 = vmatprep.subr.bf16.mxu0 0
  %7803 = vmatpush1.bf16.xpose.msra.mxu0 0
  %7804 = vmatprep.subr.bf16.mxu0 0
  %7805 = vmatpush1.bf16.xpose.msra.mxu0 0
  %7806 = vmatprep.subr.bf16.mxu0 0
  %7807 = vmatpush1.bf16.xpose.msra.mxu0 0
  %7808 = vmatprep.subr.bf16.mxu0 0
  %7809 = vmatpush1.bf16.xpose.msra.mxu0 0
  %7810 = vmatprep.subr.bf16.mxu0 0
  %7811 = vmatpush1.bf16.xpose.msra.mxu0 %v7796
  %7812 = vmatprep.subr.bf16.mxu0 0
  %7813 = vmatpush1.bf16.xpose.msra.mxu0 %v7793
  %7814 = vmatprep.subr.bf16.mxu0 0
  %7815 = vmatpush2.bf16.xpose.msra.mxu0 0
  %7816 = vmatprep.subr.bf16.mxu0 0
  %7817 = vmatpush2.bf16.xpose.msra.mxu0 0
  %7818 = vmatprep.subr.bf16.mxu0 0
  %7819 = vmatpush2.bf16.xpose.msra.mxu0 0
  %7820 = vmatprep.subr.bf16.mxu0 0
  %7821 = vmatpush2.bf16.xpose.msra.mxu0 0
  %7822 = vmatprep.subr.bf16.mxu0 0
  %7823 = vmatpush2.bf16.xpose.msra.mxu0 0
  %7824 = vmatprep.subr.bf16.mxu0 0
  %7825 = vmatpush2.bf16.xpose.msra.mxu0 0
  %7826 = vmatprep.subr.bf16.mxu0 0
  %7827 = vmatpush2.bf16.xpose.msra.mxu0 0
  %7828 = vmatprep.subr.bf16.mxu0 0
  %7829 = vmatpush2.bf16.xpose.msra.mxu0 0
  %7830 = vmatprep.mubr.bf16.mxu0 0
  %7831 = vmatmul.mubr.bf16.gmra.mxu0 %v7775
  %v7832 = vpop.f32.mrf.mxu0
  %v7833 = vadd.f32 0.0, %v7832
  %v7834 = vpop.f32.mrf.mxu0
  %v7835 = vpop.f32.mrf.mxu0
  %v7836 = vadd.f32 0.0, %v7835
  %v7837 = vpop.f32.mrf.mxu0
  %7838 = vmatprep.mubr.bf16.mxu0 0
  %7839 = vmatmul.mubr.bf16.gmra.mxu0 %v7778
  %v7840 = vpop.f32.mrf.mxu0
  %v7841 = vadd.f32 0.0, %v7840
  %v7842 = vpop.f32.mrf.mxu0
  %v7843 = vpop.f32.mrf.mxu0
  %v7844 = vadd.f32 0.0, %v7843
  %v7845 = vpop.f32.mrf.mxu0
  %7846 = vmatprep.mubr.bf16.mxu0 0
  %7847 = vmatmul.mubr.bf16.gmra.mxu0 %v7781
  %v7848 = vpop.f32.mrf.mxu0
  %v7849 = vadd.f32 0.0, %v7848
  %v7850 = vpop.f32.mrf.mxu0
  %v7851 = vpop.f32.mrf.mxu0
  %v7852 = vadd.f32 0.0, %v7851
  %v7853 = vpop.f32.mrf.mxu0
  %7854 = vmatprep.mubr.bf16.mxu0 0
  %7855 = vmatmul.mubr.bf16.gmra.mxu0 %v7784
  %v7856 = vpop.f32.mrf.mxu0
  %v7857 = vadd.f32 0.0, %v7856
  %v7858 = vpop.f32.mrf.mxu0
  %v7859 = vpop.f32.mrf.mxu0
  %v7860 = vadd.f32 0.0, %v7859
  %v7861 = vpop.f32.mrf.mxu0
  %7862 = vmatprep.mubr.bf16.mxu0 0
  %7863 = vmatmul.mubr.bf16.gmra.mxu0 %v7787
  %v7864 = vpop.f32.mrf.mxu0
  %v7865 = vadd.f32 0.0, %v7864
  %v7866 = vpop.f32.mrf.mxu0
  %v7867 = vpop.f32.mrf.mxu0
  %v7868 = vadd.f32 0.0, %v7867
  %v7869 = vpop.f32.mrf.mxu0
  %7870 = vmatprep.mubr.bf16.mxu0 0
  %7871 = vmatmul.mubr.bf16.gmra.mxu0 %v7790
  %v7872 = vpop.f32.mrf.mxu0
  %v7873 = vadd.f32 0.0, %v7872
  %v7874 = vpop.f32.mrf.mxu0
  %v7875 = vpop.f32.mrf.mxu0
  %v7876 = vadd.f32 0.0, %v7875
  %v7877 = vpop.f32.mrf.mxu0
  %7878 = vdwg.mxu0
  %v7880 = vsel %vm498, %v7221, 0
  %v7883 = vsel %vm498, %v7222, 0
  %v7886 = vsel %vm498, %v7223, 0
  %v7889 = vsel %vm498, %v7224, 0
  %v7892 = vsel %vm498, %v7225, 0
  %v7895 = vsel %vm498, %v7226, 0
  %v7898 = vsel %vm498, %v7245, 0
  %v7901 = vsel %vm498, %v7246, 0
  %7903 = vmatprep.subr.bf16.mxu0 0
  %7904 = vmatpush1.bf16.xpose.msra.mxu0 0
  %7905 = vmatprep.subr.bf16.mxu0 0
  %7906 = vmatpush1.bf16.xpose.msra.mxu0 0
  %7907 = vmatprep.subr.bf16.mxu0 0
  %7908 = vmatpush1.bf16.xpose.msra.mxu0 0
  %7909 = vmatprep.subr.bf16.mxu0 0
  %7910 = vmatpush1.bf16.xpose.msra.mxu0 0
  %7911 = vmatprep.subr.bf16.mxu0 0
  %7912 = vmatpush1.bf16.xpose.msra.mxu0 0
  %7913 = vmatprep.subr.bf16.mxu0 0
  %7914 = vmatpush1.bf16.xpose.msra.mxu0 0
  %7915 = vmatprep.subr.bf16.mxu0 0
  %7916 = vmatpush1.bf16.xpose.msra.mxu0 %v7901
  %7917 = vmatprep.subr.bf16.mxu0 0
  %7918 = vmatpush1.bf16.xpose.msra.mxu0 %v7898
  %7919 = vmatprep.subr.bf16.mxu0 0
  %7920 = vmatpush2.bf16.xpose.msra.mxu0 0
  %7921 = vmatprep.subr.bf16.mxu0 0
  %7922 = vmatpush2.bf16.xpose.msra.mxu0 0
  %7923 = vmatprep.subr.bf16.mxu0 0
  %7924 = vmatpush2.bf16.xpose.msra.mxu0 0
  %7925 = vmatprep.subr.bf16.mxu0 0
  %7926 = vmatpush2.bf16.xpose.msra.mxu0 0
  %7927 = vmatprep.subr.bf16.mxu0 0
  %7928 = vmatpush2.bf16.xpose.msra.mxu0 0
  %7929 = vmatprep.subr.bf16.mxu0 0
  %7930 = vmatpush2.bf16.xpose.msra.mxu0 0
  %7931 = vmatprep.subr.bf16.mxu0 0
  %7932 = vmatpush2.bf16.xpose.msra.mxu0 0
  %7933 = vmatprep.subr.bf16.mxu0 0
  %7934 = vmatpush2.bf16.xpose.msra.mxu0 0
  %7935 = vmatprep.mubr.bf16.mxu0 0
  %7936 = vmatmul.mubr.bf16.gmra.mxu0 %v7880
  %v7937 = vpop.f32.mrf.mxu0
  %v7938 = vadd.f32 0.0, %v7937
  %v7939 = vpop.f32.mrf.mxu0
  %v7940 = vpop.f32.mrf.mxu0
  %v7941 = vadd.f32 0.0, %v7940
  %v7942 = vpop.f32.mrf.mxu0
  %7943 = vmatprep.mubr.bf16.mxu0 0
  %7944 = vmatmul.mubr.bf16.gmra.mxu0 %v7883
  %v7945 = vpop.f32.mrf.mxu0
  %v7946 = vadd.f32 0.0, %v7945
  %v7947 = vpop.f32.mrf.mxu0
  %v7948 = vpop.f32.mrf.mxu0
  %v7949 = vadd.f32 0.0, %v7948
  %v7950 = vpop.f32.mrf.mxu0
  %7951 = vmatprep.mubr.bf16.mxu0 0
  %7952 = vmatmul.mubr.bf16.gmra.mxu0 %v7886
  %v7953 = vpop.f32.mrf.mxu0
  %v7954 = vadd.f32 0.0, %v7953
  %v7955 = vpop.f32.mrf.mxu0
  %v7956 = vpop.f32.mrf.mxu0
  %v7957 = vadd.f32 0.0, %v7956
  %v7958 = vpop.f32.mrf.mxu0
  %7959 = vmatprep.mubr.bf16.mxu0 0
  %7960 = vmatmul.mubr.bf16.gmra.mxu0 %v7889
  %v7961 = vpop.f32.mrf.mxu0
  %v7962 = vadd.f32 0.0, %v7961
  %v7963 = vpop.f32.mrf.mxu0
  %v7964 = vpop.f32.mrf.mxu0
  %v7965 = vadd.f32 0.0, %v7964
  %v7966 = vpop.f32.mrf.mxu0
  %7967 = vmatprep.mubr.bf16.mxu0 0
  %7968 = vmatmul.mubr.bf16.gmra.mxu0 %v7892
  %v7969 = vpop.f32.mrf.mxu0
  %v7970 = vadd.f32 0.0, %v7969
  %v7971 = vpop.f32.mrf.mxu0
  %v7972 = vpop.f32.mrf.mxu0
  %v7973 = vadd.f32 0.0, %v7972
  %v7974 = vpop.f32.mrf.mxu0
  %7975 = vmatprep.mubr.bf16.mxu0 0
  %7976 = vmatmul.mubr.bf16.gmra.mxu0 %v7895
  %v7977 = vpop.f32.mrf.mxu0
  %v7978 = vadd.f32 0.0, %v7977
  %v7979 = vpop.f32.mrf.mxu0
  %v7980 = vpop.f32.mrf.mxu0
  %v7981 = vadd.f32 0.0, %v7980
  %v7982 = vpop.f32.mrf.mxu0
  %7983 = vdwg.mxu0
  %v7985 = vsel %vm498, %v7227, 0
  %v7988 = vsel %vm498, %v7228, 0
  %v7991 = vsel %vm498, %v7229, 0
  %v7994 = vsel %vm498, %v7230, 0
  %v7997 = vsel %vm498, %v7231, 0
  %v8000 = vsel %vm498, %v7232, 0
  %v8003 = vsel %vm498, %v7247, 0
  %v8006 = vsel %vm498, %v7248, 0
  %8008 = vmatprep.subr.bf16.mxu0 0
  %8009 = vmatpush1.bf16.xpose.msra.mxu0 0
  %8010 = vmatprep.subr.bf16.mxu0 0
  %8011 = vmatpush1.bf16.xpose.msra.mxu0 0
  %8012 = vmatprep.subr.bf16.mxu0 0
  %8013 = vmatpush1.bf16.xpose.msra.mxu0 0
  %8014 = vmatprep.subr.bf16.mxu0 0
  %8015 = vmatpush1.bf16.xpose.msra.mxu0 0
  %8016 = vmatprep.subr.bf16.mxu0 0
  %8017 = vmatpush1.bf16.xpose.msra.mxu0 0
  %8018 = vmatprep.subr.bf16.mxu0 0
  %8019 = vmatpush1.bf16.xpose.msra.mxu0 0
  %8020 = vmatprep.subr.bf16.mxu0 0
  %8021 = vmatpush1.bf16.xpose.msra.mxu0 %v8006
  %8022 = vmatprep.subr.bf16.mxu0 0
  %8023 = vmatpush1.bf16.xpose.msra.mxu0 %v8003
  %8024 = vmatprep.subr.bf16.mxu0 0
  %8025 = vmatpush2.bf16.xpose.msra.mxu0 0
  %8026 = vmatprep.subr.bf16.mxu0 0
  %8027 = vmatpush2.bf16.xpose.msra.mxu0 0
  %8028 = vmatprep.subr.bf16.mxu0 0
  %8029 = vmatpush2.bf16.xpose.msra.mxu0 0
  %8030 = vmatprep.subr.bf16.mxu0 0
  %8031 = vmatpush2.bf16.xpose.msra.mxu0 0
  %8032 = vmatprep.subr.bf16.mxu0 0
  %8033 = vmatpush2.bf16.xpose.msra.mxu0 0
  %8034 = vmatprep.subr.bf16.mxu0 0
  %8035 = vmatpush2.bf16.xpose.msra.mxu0 0
  %8036 = vmatprep.subr.bf16.mxu0 0
  %8037 = vmatpush2.bf16.xpose.msra.mxu0 0
  %8038 = vmatprep.subr.bf16.mxu0 0
  %8039 = vmatpush2.bf16.xpose.msra.mxu0 0
  %8040 = vmatprep.mubr.bf16.mxu0 0
  %8041 = vmatmul.mubr.bf16.gmra.mxu0 %v7985
  %v8042 = vpop.f32.mrf.mxu0
  %v8043 = vadd.f32 0.0, %v8042
  %v8044 = vpop.f32.mrf.mxu0
  %v8045 = vpop.f32.mrf.mxu0
  %v8046 = vadd.f32 0.0, %v8045
  %v8047 = vpop.f32.mrf.mxu0
  %8048 = vmatprep.mubr.bf16.mxu0 0
  %8049 = vmatmul.mubr.bf16.gmra.mxu0 %v7988
  %v8050 = vpop.f32.mrf.mxu0
  %v8051 = vadd.f32 0.0, %v8050
  %v8052 = vpop.f32.mrf.mxu0
  %v8053 = vpop.f32.mrf.mxu0
  %v8054 = vadd.f32 0.0, %v8053
  %v8055 = vpop.f32.mrf.mxu0
  %8056 = vmatprep.mubr.bf16.mxu0 0
  %8057 = vmatmul.mubr.bf16.gmra.mxu0 %v7991
  %v8058 = vpop.f32.mrf.mxu0
  %v8059 = vadd.f32 0.0, %v8058
  %v8060 = vpop.f32.mrf.mxu0
  %v8061 = vpop.f32.mrf.mxu0
  %v8062 = vadd.f32 0.0, %v8061
  %v8063 = vpop.f32.mrf.mxu0
  %8064 = vmatprep.mubr.bf16.mxu0 0
  %8065 = vmatmul.mubr.bf16.gmra.mxu0 %v7994
  %v8066 = vpop.f32.mrf.mxu0
  %v8067 = vadd.f32 0.0, %v8066
  %v8068 = vpop.f32.mrf.mxu0
  %v8069 = vpop.f32.mrf.mxu0
  %v8070 = vadd.f32 0.0, %v8069
  %v8071 = vpop.f32.mrf.mxu0
  %8072 = vmatprep.mubr.bf16.mxu0 0
  %8073 = vmatmul.mubr.bf16.gmra.mxu0 %v7997
  %v8074 = vpop.f32.mrf.mxu0
  %v8075 = vadd.f32 0.0, %v8074
  %v8076 = vpop.f32.mrf.mxu0
  %v8077 = vpop.f32.mrf.mxu0
  %v8078 = vadd.f32 0.0, %v8077
  %v8079 = vpop.f32.mrf.mxu0
  %8080 = vmatprep.mubr.bf16.mxu0 0
  %8081 = vmatmul.mubr.bf16.gmra.mxu0 %v8000
  %v8082 = vpop.f32.mrf.mxu0
  %v8083 = vadd.f32 0.0, %v8082
  %v8084 = vpop.f32.mrf.mxu0
  %v8085 = vpop.f32.mrf.mxu0
  %v8086 = vadd.f32 0.0, %v8085
  %v8087 = vpop.f32.mrf.mxu0
  %8088 = vdwg.mxu0
  %v8089 = vsel %vm2774, %v7308, -1e+30
  %v8090 = vsel %vm2774, %v7311, -1e+30
  %v8091 = vsel %vm2774, %v7316, -1e+30
  %v8092 = vsel %vm2774, %v7319, -1e+30
  %v8093 = vsel %vm2774, %v7324, -1e+30
  %v8094 = vsel %vm2774, %v7327, -1e+30
  %v8095 = vsel %vm2774, %v7332, -1e+30
  %v8096 = vsel %vm2774, %v7335, -1e+30
  %v8097 = vsel %vm2774, %v7340, -1e+30
  %v8098 = vsel %vm2774, %v7343, -1e+30
  %v8099 = vsel %vm2774, %v7348, -1e+30
  %v8100 = vsel %vm2774, %v7351, -1e+30
  %v8101 = vsel %vm2774, %v7413, -1e+30
  %v8102 = vsel %vm2774, %v7416, -1e+30
  %v8103 = vsel %vm2774, %v7421, -1e+30
  %v8104 = vsel %vm2774, %v7424, -1e+30
  %v8105 = vsel %vm2774, %v7429, -1e+30
  %v8106 = vsel %vm2774, %v7432, -1e+30
  %v8107 = vsel %vm2774, %v7437, -1e+30
  %v8108 = vsel %vm2774, %v7440, -1e+30
  %v8109 = vsel %vm2774, %v7445, -1e+30
  %v8110 = vsel %vm2774, %v7448, -1e+30
  %v8111 = vsel %vm2774, %v7453, -1e+30
  %v8112 = vsel %vm2774, %v7456, -1e+30
  %v8113 = vsel %vm2774, %v7518, -1e+30
  %v8114 = vsel %vm2774, %v7521, -1e+30
  %v8115 = vsel %vm2774, %v7526, -1e+30
  %v8116 = vsel %vm2774, %v7529, -1e+30
  %v8117 = vsel %vm2774, %v7534, -1e+30
  %v8118 = vsel %vm2774, %v7537, -1e+30
  %v8119 = vsel %vm2774, %v7542, -1e+30
  %v8120 = vsel %vm2774, %v7545, -1e+30
  %v8121 = vsel %vm2774, %v7550, -1e+30
  %v8122 = vsel %vm2774, %v7553, -1e+30
  %v8123 = vsel %vm2774, %v7558, -1e+30
  %v8124 = vsel %vm2774, %v7561, -1e+30
  %v8125 = vsel %vm2774, %v7623, -1e+30
  %v8126 = vsel %vm2774, %v7626, -1e+30
  %v8127 = vsel %vm2774, %v7631, -1e+30
  %v8128 = vsel %vm2774, %v7634, -1e+30
  %v8129 = vsel %vm2774, %v7639, -1e+30
  %v8130 = vsel %vm2774, %v7642, -1e+30
  %v8131 = vsel %vm2774, %v7647, -1e+30
  %v8132 = vsel %vm2774, %v7650, -1e+30
  %v8133 = vsel %vm2774, %v7655, -1e+30
  %v8134 = vsel %vm2774, %v7658, -1e+30
  %v8135 = vsel %vm2774, %v7663, -1e+30
  %v8136 = vsel %vm2774, %v7666, -1e+30
  %v8137 = vsel %vm2774, %v7728, -1e+30
  %v8138 = vsel %vm2774, %v7731, -1e+30
  %v8139 = vsel %vm2774, %v7736, -1e+30
  %v8140 = vsel %vm2774, %v7739, -1e+30
  %v8141 = vsel %vm2774, %v7744, -1e+30
  %v8142 = vsel %vm2774, %v7747, -1e+30
  %v8143 = vsel %vm2774, %v7752, -1e+30
  %v8144 = vsel %vm2774, %v7755, -1e+30
  %v8145 = vsel %vm2774, %v7760, -1e+30
  %v8146 = vsel %vm2774, %v7763, -1e+30
  %v8147 = vsel %vm2774, %v7768, -1e+30
  %v8148 = vsel %vm2774, %v7771, -1e+30
  %v8149 = vsel %vm2774, %v7833, -1e+30
  %v8150 = vsel %vm2774, %v7836, -1e+30
  %v8151 = vsel %vm2774, %v7841, -1e+30
  %v8152 = vsel %vm2774, %v7844, -1e+30
  %v8153 = vsel %vm2774, %v7849, -1e+30
  %v8154 = vsel %vm2774, %v7852, -1e+30
  %v8155 = vsel %vm2774, %v7857, -1e+30
  %v8156 = vsel %vm2774, %v7860, -1e+30
  %v8157 = vsel %vm2774, %v7865, -1e+30
  %v8158 = vsel %vm2774, %v7868, -1e+30
  %v8159 = vsel %vm2774, %v7873, -1e+30
  %v8160 = vsel %vm2774, %v7876, -1e+30
  %v8161 = vsel %vm2774, %v7938, -1e+30
  %v8162 = vsel %vm2774, %v7941, -1e+30
  %v8163 = vsel %vm2774, %v7946, -1e+30
  %v8164 = vsel %vm2774, %v7949, -1e+30
  %v8165 = vsel %vm2774, %v7954, -1e+30
  %v8166 = vsel %vm2774, %v7957, -1e+30
  %v8167 = vsel %vm2774, %v7962, -1e+30
  %v8168 = vsel %vm2774, %v7965, -1e+30
  %v8169 = vsel %vm2774, %v7970, -1e+30
  %v8170 = vsel %vm2774, %v7973, -1e+30
  %v8171 = vsel %vm2774, %v7978, -1e+30
  %v8172 = vsel %vm2774, %v7981, -1e+30
  %v8173 = vsel %vm2774, %v8043, -1e+30
  %v8174 = vsel %vm2774, %v8046, -1e+30
  %v8175 = vsel %vm2774, %v8051, -1e+30
  %v8176 = vsel %vm2774, %v8054, -1e+30
  %v8177 = vsel %vm2774, %v8059, -1e+30
  %v8178 = vsel %vm2774, %v8062, -1e+30
  %v8179 = vsel %vm2774, %v8067, -1e+30
  %v8180 = vsel %vm2774, %v8070, -1e+30
  %v8181 = vsel %vm2774, %v8075, -1e+30
  %v8182 = vsel %vm2774, %v8078, -1e+30
  %v8183 = vsel %vm2774, %v8083, -1e+30
  %v8184 = vsel %vm2774, %v8086, -1e+30
  %v8185 = vsel %vm2871, %v8089, -inf
  %8186 = vmax.xlane.f32.xlu0 %v8185
  %v8187 = vpop.xlane.xlu0 %8186
  %v8188 = vsel %vm2871, %v8090, -inf
  %8189 = vmax.xlane.f32.xlu0 %v8188
  %v8190 = vpop.xlane.xlu0 %8189
  %v8191 = vsel %vm2871, %v8091, -inf
  %8192 = vmax.xlane.f32.xlu0 %v8191
  %v8193 = vpop.xlane.xlu0 %8192
  %v8194 = vsel %vm2871, %v8092, -inf
  %8195 = vmax.xlane.f32.xlu0 %v8194
  %v8196 = vpop.xlane.xlu0 %8195
  %v8197 = vsel %vm2871, %v8093, -inf
  %8198 = vmax.xlane.f32.xlu0 %v8197
  %v8199 = vpop.xlane.xlu0 %8198
  %v8200 = vsel %vm2871, %v8094, -inf
  %8201 = vmax.xlane.f32.xlu0 %v8200
  %v8202 = vpop.xlane.xlu0 %8201
  %v8203 = vsel %vm2871, %v8095, -inf
  %8204 = vmax.xlane.f32.xlu0 %v8203
  %v8205 = vpop.xlane.xlu0 %8204
  %v8206 = vsel %vm2871, %v8096, -inf
  %8207 = vmax.xlane.f32.xlu0 %v8206
  %v8208 = vpop.xlane.xlu0 %8207
  %v8209 = vsel %vm2871, %v8097, -inf
  %8210 = vmax.xlane.f32.xlu0 %v8209
  %v8211 = vpop.xlane.xlu0 %8210
  %v8212 = vsel %vm2871, %v8098, -inf
  %8213 = vmax.xlane.f32.xlu0 %v8212
  %v8214 = vpop.xlane.xlu0 %8213
  %v8215 = vsel %vm2871, %v8099, -inf
  %8216 = vmax.xlane.f32.xlu0 %v8215
  %v8217 = vpop.xlane.xlu0 %8216
  %v8218 = vsel %vm2871, %v8100, -inf
  %8219 = vmax.xlane.f32.xlu0 %v8218
  %v8220 = vpop.xlane.xlu0 %8219
  %v8221 = vsel %vm2871, %v8101, -inf
  %8222 = vmax.xlane.f32.xlu0 %v8221
  %v8223 = vpop.xlane.xlu0 %8222
  %v8224 = vsel %vm2871, %v8102, -inf
  %8225 = vmax.xlane.f32.xlu0 %v8224
  %v8226 = vpop.xlane.xlu0 %8225
  %v8227 = vsel %vm2871, %v8103, -inf
  %8228 = vmax.xlane.f32.xlu0 %v8227
  %v8229 = vpop.xlane.xlu0 %8228
  %v8230 = vsel %vm2871, %v8104, -inf
  %8231 = vmax.xlane.f32.xlu0 %v8230
  %v8232 = vpop.xlane.xlu0 %8231
  %v8233 = vsel %vm2871, %v8105, -inf
  %8234 = vmax.xlane.f32.xlu0 %v8233
  %v8235 = vpop.xlane.xlu0 %8234
  %v8236 = vsel %vm2871, %v8106, -inf
  %8237 = vmax.xlane.f32.xlu0 %v8236
  %v8238 = vpop.xlane.xlu0 %8237
  %v8239 = vsel %vm2871, %v8107, -inf
  %8240 = vmax.xlane.f32.xlu0 %v8239
  %v8241 = vpop.xlane.xlu0 %8240
  %v8242 = vsel %vm2871, %v8108, -inf
  %8243 = vmax.xlane.f32.xlu0 %v8242
  %v8244 = vpop.xlane.xlu0 %8243
  %v8245 = vsel %vm2871, %v8109, -inf
  %8246 = vmax.xlane.f32.xlu0 %v8245
  %v8247 = vpop.xlane.xlu0 %8246
  %v8248 = vsel %vm2871, %v8110, -inf
  %8249 = vmax.xlane.f32.xlu0 %v8248
  %v8250 = vpop.xlane.xlu0 %8249
  %v8251 = vsel %vm2871, %v8111, -inf
  %8252 = vmax.xlane.f32.xlu0 %v8251
  %v8253 = vpop.xlane.xlu0 %8252
  %v8254 = vsel %vm2871, %v8112, -inf
  %8255 = vmax.xlane.f32.xlu0 %v8254
  %v8256 = vpop.xlane.xlu0 %8255
  %v8257 = vsel %vm2871, %v8113, -inf
  %8258 = vmax.xlane.f32.xlu0 %v8257
  %v8259 = vpop.xlane.xlu0 %8258
  %v8260 = vsel %vm2871, %v8114, -inf
  %8261 = vmax.xlane.f32.xlu0 %v8260
  %v8262 = vpop.xlane.xlu0 %8261
  %v8263 = vsel %vm2871, %v8115, -inf
  %8264 = vmax.xlane.f32.xlu0 %v8263
  %v8265 = vpop.xlane.xlu0 %8264
  %v8266 = vsel %vm2871, %v8116, -inf
  %8267 = vmax.xlane.f32.xlu0 %v8266
  %v8268 = vpop.xlane.xlu0 %8267
  %v8269 = vsel %vm2871, %v8117, -inf
  %8270 = vmax.xlane.f32.xlu0 %v8269
  %v8271 = vpop.xlane.xlu0 %8270
  %v8272 = vsel %vm2871, %v8118, -inf
  %8273 = vmax.xlane.f32.xlu0 %v8272
  %v8274 = vpop.xlane.xlu0 %8273
  %v8275 = vsel %vm2871, %v8119, -inf
  %8276 = vmax.xlane.f32.xlu0 %v8275
  %v8277 = vpop.xlane.xlu0 %8276
  %v8278 = vsel %vm2871, %v8120, -inf
  %8279 = vmax.xlane.f32.xlu0 %v8278
  %v8280 = vpop.xlane.xlu0 %8279
  %v8281 = vsel %vm2871, %v8121, -inf
  %8282 = vmax.xlane.f32.xlu0 %v8281
  %v8283 = vpop.xlane.xlu0 %8282
  %v8284 = vsel %vm2871, %v8122, -inf
  %8285 = vmax.xlane.f32.xlu0 %v8284
  %v8286 = vpop.xlane.xlu0 %8285
  %v8287 = vsel %vm2871, %v8123, -inf
  %8288 = vmax.xlane.f32.xlu0 %v8287
  %v8289 = vpop.xlane.xlu0 %8288
  %v8290 = vsel %vm2871, %v8124, -inf
  %8291 = vmax.xlane.f32.xlu0 %v8290
  %v8292 = vpop.xlane.xlu0 %8291
  %v8293 = vsel %vm2871, %v8125, -inf
  %8294 = vmax.xlane.f32.xlu0 %v8293
  %v8295 = vpop.xlane.xlu0 %8294
  %v8296 = vsel %vm2871, %v8126, -inf
  %8297 = vmax.xlane.f32.xlu0 %v8296
  %v8298 = vpop.xlane.xlu0 %8297
  %v8299 = vsel %vm2871, %v8127, -inf
  %8300 = vmax.xlane.f32.xlu0 %v8299
  %v8301 = vpop.xlane.xlu0 %8300
  %v8302 = vsel %vm2871, %v8128, -inf
  %8303 = vmax.xlane.f32.xlu0 %v8302
  %v8304 = vpop.xlane.xlu0 %8303
  %v8305 = vsel %vm2871, %v8129, -inf
  %8306 = vmax.xlane.f32.xlu0 %v8305
  %v8307 = vpop.xlane.xlu0 %8306
  %v8308 = vsel %vm2871, %v8130, -inf
  %8309 = vmax.xlane.f32.xlu0 %v8308
  %v8310 = vpop.xlane.xlu0 %8309
  %v8311 = vsel %vm2871, %v8131, -inf
  %8312 = vmax.xlane.f32.xlu0 %v8311
  %v8313 = vpop.xlane.xlu0 %8312
  %v8314 = vsel %vm2871, %v8132, -inf
  %8315 = vmax.xlane.f32.xlu0 %v8314
  %v8316 = vpop.xlane.xlu0 %8315
  %v8317 = vsel %vm2871, %v8133, -inf
  %8318 = vmax.xlane.f32.xlu0 %v8317
  %v8319 = vpop.xlane.xlu0 %8318
  %v8320 = vsel %vm2871, %v8134, -inf
  %8321 = vmax.xlane.f32.xlu0 %v8320
  %v8322 = vpop.xlane.xlu0 %8321
  %v8323 = vsel %vm2871, %v8135, -inf
  %8324 = vmax.xlane.f32.xlu0 %v8323
  %v8325 = vpop.xlane.xlu0 %8324
  %v8326 = vsel %vm2871, %v8136, -inf
  %8327 = vmax.xlane.f32.xlu0 %v8326
  %v8328 = vpop.xlane.xlu0 %8327
  %v8329 = vsel %vm2871, %v8137, -inf
  %8330 = vmax.xlane.f32.xlu0 %v8329
  %v8331 = vpop.xlane.xlu0 %8330
  %v8332 = vsel %vm2871, %v8138, -inf
  %8333 = vmax.xlane.f32.xlu0 %v8332
  %v8334 = vpop.xlane.xlu0 %8333
  %v8335 = vsel %vm2871, %v8139, -inf
  %8336 = vmax.xlane.f32.xlu0 %v8335
  %v8337 = vpop.xlane.xlu0 %8336
  %v8338 = vsel %vm2871, %v8140, -inf
  %8339 = vmax.xlane.f32.xlu0 %v8338
  %v8340 = vpop.xlane.xlu0 %8339
  %v8341 = vsel %vm2871, %v8141, -inf
  %8342 = vmax.xlane.f32.xlu0 %v8341
  %v8343 = vpop.xlane.xlu0 %8342
  %v8344 = vsel %vm2871, %v8142, -inf
  %8345 = vmax.xlane.f32.xlu0 %v8344
  %v8346 = vpop.xlane.xlu0 %8345
  %v8347 = vsel %vm2871, %v8143, -inf
  %8348 = vmax.xlane.f32.xlu0 %v8347
  %v8349 = vpop.xlane.xlu0 %8348
  %v8350 = vsel %vm2871, %v8144, -inf
  %8351 = vmax.xlane.f32.xlu0 %v8350
  %v8352 = vpop.xlane.xlu0 %8351
  %v8353 = vsel %vm2871, %v8145, -inf
  %8354 = vmax.xlane.f32.xlu0 %v8353
  %v8355 = vpop.xlane.xlu0 %8354
  %v8356 = vsel %vm2871, %v8146, -inf
  %8357 = vmax.xlane.f32.xlu0 %v8356
  %v8358 = vpop.xlane.xlu0 %8357
  %v8359 = vsel %vm2871, %v8147, -inf
  %8360 = vmax.xlane.f32.xlu0 %v8359
  %v8361 = vpop.xlane.xlu0 %8360
  %v8362 = vsel %vm2871, %v8148, -inf
  %8363 = vmax.xlane.f32.xlu0 %v8362
  %v8364 = vpop.xlane.xlu0 %8363
  %v8365 = vsel %vm2871, %v8149, -inf
  %8366 = vmax.xlane.f32.xlu0 %v8365
  %v8367 = vpop.xlane.xlu0 %8366
  %v8368 = vsel %vm2871, %v8150, -inf
  %8369 = vmax.xlane.f32.xlu0 %v8368
  %v8370 = vpop.xlane.xlu0 %8369
  %v8371 = vsel %vm2871, %v8151, -inf
  %8372 = vmax.xlane.f32.xlu0 %v8371
  %v8373 = vpop.xlane.xlu0 %8372
  %v8374 = vsel %vm2871, %v8152, -inf
  %8375 = vmax.xlane.f32.xlu0 %v8374
  %v8376 = vpop.xlane.xlu0 %8375
  %v8377 = vsel %vm2871, %v8153, -inf
  %8378 = vmax.xlane.f32.xlu0 %v8377
  %v8379 = vpop.xlane.xlu0 %8378
  %v8380 = vsel %vm2871, %v8154, -inf
  %8381 = vmax.xlane.f32.xlu0 %v8380
  %v8382 = vpop.xlane.xlu0 %8381
  %v8383 = vsel %vm2871, %v8155, -inf
  %8384 = vmax.xlane.f32.xlu0 %v8383
  %v8385 = vpop.xlane.xlu0 %8384
  %v8386 = vsel %vm2871, %v8156, -inf
  %8387 = vmax.xlane.f32.xlu0 %v8386
  %v8388 = vpop.xlane.xlu0 %8387
  %v8389 = vsel %vm2871, %v8157, -inf
  %8390 = vmax.xlane.f32.xlu0 %v8389
  %v8391 = vpop.xlane.xlu0 %8390
  %v8392 = vsel %vm2871, %v8158, -inf
  %8393 = vmax.xlane.f32.xlu0 %v8392
  %v8394 = vpop.xlane.xlu0 %8393
  %v8395 = vsel %vm2871, %v8159, -inf
  %8396 = vmax.xlane.f32.xlu0 %v8395
  %v8397 = vpop.xlane.xlu0 %8396
  %v8398 = vsel %vm2871, %v8160, -inf
  %8399 = vmax.xlane.f32.xlu0 %v8398
  %v8400 = vpop.xlane.xlu0 %8399
  %v8401 = vsel %vm2871, %v8161, -inf
  %8402 = vmax.xlane.f32.xlu0 %v8401
  %v8403 = vpop.xlane.xlu0 %8402
  %v8404 = vsel %vm2871, %v8162, -inf
  %8405 = vmax.xlane.f32.xlu0 %v8404
  %v8406 = vpop.xlane.xlu0 %8405
  %v8407 = vsel %vm2871, %v8163, -inf
  %8408 = vmax.xlane.f32.xlu0 %v8407
  %v8409 = vpop.xlane.xlu0 %8408
  %v8410 = vsel %vm2871, %v8164, -inf
  %8411 = vmax.xlane.f32.xlu0 %v8410
  %v8412 = vpop.xlane.xlu0 %8411
  %v8413 = vsel %vm2871, %v8165, -inf
  %8414 = vmax.xlane.f32.xlu0 %v8413
  %v8415 = vpop.xlane.xlu0 %8414
  %v8416 = vsel %vm2871, %v8166, -inf
  %8417 = vmax.xlane.f32.xlu0 %v8416
  %v8418 = vpop.xlane.xlu0 %8417
  %v8419 = vsel %vm2871, %v8167, -inf
  %8420 = vmax.xlane.f32.xlu0 %v8419
  %v8421 = vpop.xlane.xlu0 %8420
  %v8422 = vsel %vm2871, %v8168, -inf
  %8423 = vmax.xlane.f32.xlu0 %v8422
  %v8424 = vpop.xlane.xlu0 %8423
  %v8425 = vsel %vm2871, %v8169, -inf
  %8426 = vmax.xlane.f32.xlu0 %v8425
  %v8427 = vpop.xlane.xlu0 %8426
  %v8428 = vsel %vm2871, %v8170, -inf
  %8429 = vmax.xlane.f32.xlu0 %v8428
  %v8430 = vpop.xlane.xlu0 %8429
  %v8431 = vsel %vm2871, %v8171, -inf
  %8432 = vmax.xlane.f32.xlu0 %v8431
  %v8433 = vpop.xlane.xlu0 %8432
  %v8434 = vsel %vm2871, %v8172, -inf
  %8435 = vmax.xlane.f32.xlu0 %v8434
  %v8436 = vpop.xlane.xlu0 %8435
  %v8437 = vsel %vm2871, %v8173, -inf
  %8438 = vmax.xlane.f32.xlu0 %v8437
  %v8439 = vpop.xlane.xlu0 %8438
  %v8440 = vsel %vm2871, %v8174, -inf
  %8441 = vmax.xlane.f32.xlu0 %v8440
  %v8442 = vpop.xlane.xlu0 %8441
  %v8443 = vsel %vm2871, %v8175, -inf
  %8444 = vmax.xlane.f32.xlu0 %v8443
  %v8445 = vpop.xlane.xlu0 %8444
  %v8446 = vsel %vm2871, %v8176, -inf
  %8447 = vmax.xlane.f32.xlu0 %v8446
  %v8448 = vpop.xlane.xlu0 %8447
  %v8449 = vsel %vm2871, %v8177, -inf
  %8450 = vmax.xlane.f32.xlu0 %v8449
  %v8451 = vpop.xlane.xlu0 %8450
  %v8452 = vsel %vm2871, %v8178, -inf
  %8453 = vmax.xlane.f32.xlu0 %v8452
  %v8454 = vpop.xlane.xlu0 %8453
  %v8455 = vsel %vm2871, %v8179, -inf
  %8456 = vmax.xlane.f32.xlu0 %v8455
  %v8457 = vpop.xlane.xlu0 %8456
  %v8458 = vsel %vm2871, %v8180, -inf
  %8459 = vmax.xlane.f32.xlu0 %v8458
  %v8460 = vpop.xlane.xlu0 %8459
  %v8461 = vsel %vm2871, %v8181, -inf
  %8462 = vmax.xlane.f32.xlu0 %v8461
  %v8463 = vpop.xlane.xlu0 %8462
  %v8464 = vsel %vm2871, %v8182, -inf
  %8465 = vmax.xlane.f32.xlu0 %v8464
  %v8466 = vpop.xlane.xlu0 %8465
  %v8467 = vsel %vm2871, %v8183, -inf
  %8468 = vmax.xlane.f32.xlu0 %v8467
  %v8469 = vpop.xlane.xlu0 %8468
  %v8470 = vsel %vm2871, %v8184, -inf
  %8471 = vmax.xlane.f32.xlu0 %v8470
  %v8472 = vpop.xlane.xlu0 %8471
  %v8473 = vsub.f32 %v8089, %v8187
  %v8474 = vsub.f32 %v8090, %v8190
  %v8475 = vsub.f32 %v8091, %v8193
  %v8476 = vsub.f32 %v8092, %v8196
  %v8477 = vsub.f32 %v8093, %v8199
  %v8478 = vsub.f32 %v8094, %v8202
  %v8479 = vsub.f32 %v8095, %v8205
  %v8480 = vsub.f32 %v8096, %v8208
  %v8481 = vsub.f32 %v8097, %v8211
  %v8482 = vsub.f32 %v8098, %v8214
  %v8483 = vsub.f32 %v8099, %v8217
  %v8484 = vsub.f32 %v8100, %v8220
  %v8485 = vsub.f32 %v8101, %v8223
  %v8486 = vsub.f32 %v8102, %v8226
  %v8487 = vsub.f32 %v8103, %v8229
  %v8488 = vsub.f32 %v8104, %v8232
  %v8489 = vsub.f32 %v8105, %v8235
  %v8490 = vsub.f32 %v8106, %v8238
  %v8491 = vsub.f32 %v8107, %v8241
  %v8492 = vsub.f32 %v8108, %v8244
  %v8493 = vsub.f32 %v8109, %v8247
  %v8494 = vsub.f32 %v8110, %v8250
  %v8495 = vsub.f32 %v8111, %v8253
  %v8496 = vsub.f32 %v8112, %v8256
  %v8497 = vsub.f32 %v8113, %v8259
  %v8498 = vsub.f32 %v8114, %v8262
  %v8499 = vsub.f32 %v8115, %v8265
  %v8500 = vsub.f32 %v8116, %v8268
  %v8501 = vsub.f32 %v8117, %v8271
  %v8502 = vsub.f32 %v8118, %v8274
  %v8503 = vsub.f32 %v8119, %v8277
  %v8504 = vsub.f32 %v8120, %v8280
  %v8505 = vsub.f32 %v8121, %v8283
  %v8506 = vsub.f32 %v8122, %v8286
  %v8507 = vsub.f32 %v8123, %v8289
  %v8508 = vsub.f32 %v8124, %v8292
  %v8509 = vsub.f32 %v8125, %v8295
  %v8510 = vsub.f32 %v8126, %v8298
  %v8511 = vsub.f32 %v8127, %v8301
  %v8512 = vsub.f32 %v8128, %v8304
  %v8513 = vsub.f32 %v8129, %v8307
  %v8514 = vsub.f32 %v8130, %v8310
  %v8515 = vsub.f32 %v8131, %v8313
  %v8516 = vsub.f32 %v8132, %v8316
  %v8517 = vsub.f32 %v8133, %v8319
  %v8518 = vsub.f32 %v8134, %v8322
  %v8519 = vsub.f32 %v8135, %v8325
  %v8520 = vsub.f32 %v8136, %v8328
  %v8521 = vsub.f32 %v8137, %v8331
  %v8522 = vsub.f32 %v8138, %v8334
  %v8523 = vsub.f32 %v8139, %v8337
  %v8524 = vsub.f32 %v8140, %v8340
  %v8525 = vsub.f32 %v8141, %v8343
  %v8526 = vsub.f32 %v8142, %v8346
  %v8527 = vsub.f32 %v8143, %v8349
  %v8528 = vsub.f32 %v8144, %v8352
  %v8529 = vsub.f32 %v8145, %v8355
  %v8530 = vsub.f32 %v8146, %v8358
  %v8531 = vsub.f32 %v8147, %v8361
  %v8532 = vsub.f32 %v8148, %v8364
  %v8533 = vsub.f32 %v8149, %v8367
  %v8534 = vsub.f32 %v8150, %v8370
  %v8535 = vsub.f32 %v8151, %v8373
  %v8536 = vsub.f32 %v8152, %v8376
  %v8537 = vsub.f32 %v8153, %v8379
  %v8538 = vsub.f32 %v8154, %v8382
  %v8539 = vsub.f32 %v8155, %v8385
  %v8540 = vsub.f32 %v8156, %v8388
  %v8541 = vsub.f32 %v8157, %v8391
  %v8542 = vsub.f32 %v8158, %v8394
  %v8543 = vsub.f32 %v8159, %v8397
  %v8544 = vsub.f32 %v8160, %v8400
  %v8545 = vsub.f32 %v8161, %v8403
  %v8546 = vsub.f32 %v8162, %v8406
  %v8547 = vsub.f32 %v8163, %v8409
  %v8548 = vsub.f32 %v8164, %v8412
  %v8549 = vsub.f32 %v8165, %v8415
  %v8550 = vsub.f32 %v8166, %v8418
  %v8551 = vsub.f32 %v8167, %v8421
  %v8552 = vsub.f32 %v8168, %v8424
  %v8553 = vsub.f32 %v8169, %v8427
  %v8554 = vsub.f32 %v8170, %v8430
  %v8555 = vsub.f32 %v8171, %v8433
  %v8556 = vsub.f32 %v8172, %v8436
  %v8557 = vsub.f32 %v8173, %v8439
  %v8558 = vsub.f32 %v8174, %v8442
  %v8559 = vsub.f32 %v8175, %v8445
  %v8560 = vsub.f32 %v8176, %v8448
  %v8561 = vsub.f32 %v8177, %v8451
  %v8562 = vsub.f32 %v8178, %v8454
  %v8563 = vsub.f32 %v8179, %v8457
  %v8564 = vsub.f32 %v8180, %v8460
  %v8565 = vsub.f32 %v8181, %v8463
  %v8566 = vsub.f32 %v8182, %v8466
  %v8567 = vsub.f32 %v8183, %v8469
  %v8568 = vsub.f32 %v8184, %v8472
  %v8569 = vmul.f32 %v8473, 1.442695
  %v8570 = vpow.pop %v8569
  %v8571 = vmul.f32 %v8474, 1.442695
  %v8572 = vpow.pop %v8571
  %v8573 = vmul.f32 %v8475, 1.442695
  %v8574 = vpow.pop %v8573
  %v8575 = vmul.f32 %v8476, 1.442695
  %v8576 = vpow.pop %v8575
  %v8577 = vmul.f32 %v8477, 1.442695
  %v8578 = vpow.pop %v8577
  %v8579 = vmul.f32 %v8478, 1.442695
  %v8580 = vpow.pop %v8579
  %v8581 = vmul.f32 %v8479, 1.442695
  %v8582 = vpow.pop %v8581
  %v8583 = vmul.f32 %v8480, 1.442695
  %v8584 = vpow.pop %v8583
  %v8585 = vmul.f32 %v8481, 1.442695
  %v8586 = vpow.pop %v8585
  %v8587 = vmul.f32 %v8482, 1.442695
  %v8588 = vpow.pop %v8587
  %v8589 = vmul.f32 %v8483, 1.442695
  %v8590 = vpow.pop %v8589
  %v8591 = vmul.f32 %v8484, 1.442695
  %v8592 = vpow.pop %v8591
  %v8593 = vmul.f32 %v8485, 1.442695
  %v8594 = vpow.pop %v8593
  %v8595 = vmul.f32 %v8486, 1.442695
  %v8596 = vpow.pop %v8595
  %v8597 = vmul.f32 %v8487, 1.442695
  %v8598 = vpow.pop %v8597
  %v8599 = vmul.f32 %v8488, 1.442695
  %v8600 = vpow.pop %v8599
  %v8601 = vmul.f32 %v8489, 1.442695
  %v8602 = vpow.pop %v8601
  %v8603 = vmul.f32 %v8490, 1.442695
  %v8604 = vpow.pop %v8603
  %v8605 = vmul.f32 %v8491, 1.442695
  %v8606 = vpow.pop %v8605
  %v8607 = vmul.f32 %v8492, 1.442695
  %v8608 = vpow.pop %v8607
  %v8609 = vmul.f32 %v8493, 1.442695
  %v8610 = vpow.pop %v8609
  %v8611 = vmul.f32 %v8494, 1.442695
  %v8612 = vpow.pop %v8611
  %v8613 = vmul.f32 %v8495, 1.442695
  %v8614 = vpow.pop %v8613
  %v8615 = vmul.f32 %v8496, 1.442695
  %v8616 = vpow.pop %v8615
  %v8617 = vmul.f32 %v8497, 1.442695
  %v8618 = vpow.pop %v8617
  %v8619 = vmul.f32 %v8498, 1.442695
  %v8620 = vpow.pop %v8619
  %v8621 = vmul.f32 %v8499, 1.442695
  %v8622 = vpow.pop %v8621
  %v8623 = vmul.f32 %v8500, 1.442695
  %v8624 = vpow.pop %v8623
  %v8625 = vmul.f32 %v8501, 1.442695
  %v8626 = vpow.pop %v8625
  %v8627 = vmul.f32 %v8502, 1.442695
  %v8628 = vpow.pop %v8627
  %v8629 = vmul.f32 %v8503, 1.442695
  %v8630 = vpow.pop %v8629
  %v8631 = vmul.f32 %v8504, 1.442695
  %v8632 = vpow.pop %v8631
  %v8633 = vmul.f32 %v8505, 1.442695
  %v8634 = vpow.pop %v8633
  %v8635 = vmul.f32 %v8506, 1.442695
  %v8636 = vpow.pop %v8635
  %v8637 = vmul.f32 %v8507, 1.442695
  %v8638 = vpow.pop %v8637
  %v8639 = vmul.f32 %v8508, 1.442695
  %v8640 = vpow.pop %v8639
  %v8641 = vmul.f32 %v8509, 1.442695
  %v8642 = vpow.pop %v8641
  %v8643 = vmul.f32 %v8510, 1.442695
  %v8644 = vpow.pop %v8643
  %v8645 = vmul.f32 %v8511, 1.442695
  %v8646 = vpow.pop %v8645
  %v8647 = vmul.f32 %v8512, 1.442695
  %v8648 = vpow.pop %v8647
  %v8649 = vmul.f32 %v8513, 1.442695
  %v8650 = vpow.pop %v8649
  %v8651 = vmul.f32 %v8514, 1.442695
  %v8652 = vpow.pop %v8651
  %v8653 = vmul.f32 %v8515, 1.442695
  %v8654 = vpow.pop %v8653
  %v8655 = vmul.f32 %v8516, 1.442695
  %v8656 = vpow.pop %v8655
  %v8657 = vmul.f32 %v8517, 1.442695
  %v8658 = vpow.pop %v8657
  %v8659 = vmul.f32 %v8518, 1.442695
  %v8660 = vpow.pop %v8659
  %v8661 = vmul.f32 %v8519, 1.442695
  %v8662 = vpow.pop %v8661
  %v8663 = vmul.f32 %v8520, 1.442695
  %v8664 = vpow.pop %v8663
  %v8665 = vmul.f32 %v8521, 1.442695
  %v8666 = vpow.pop %v8665
  %v8667 = vmul.f32 %v8522, 1.442695
  %v8668 = vpow.pop %v8667
  %v8669 = vmul.f32 %v8523, 1.442695
  %v8670 = vpow.pop %v8669
  %v8671 = vmul.f32 %v8524, 1.442695
  %v8672 = vpow.pop %v8671
  %v8673 = vmul.f32 %v8525, 1.442695
  %v8674 = vpow.pop %v8673
  %v8675 = vmul.f32 %v8526, 1.442695
  %v8676 = vpow.pop %v8675
  %v8677 = vmul.f32 %v8527, 1.442695
  %v8678 = vpow.pop %v8677
  %v8679 = vmul.f32 %v8528, 1.442695
  %v8680 = vpow.pop %v8679
  %v8681 = vmul.f32 %v8529, 1.442695
  %v8682 = vpow.pop %v8681
  %v8683 = vmul.f32 %v8530, 1.442695
  %v8684 = vpow.pop %v8683
  %v8685 = vmul.f32 %v8531, 1.442695
  %v8686 = vpow.pop %v8685
  %v8687 = vmul.f32 %v8532, 1.442695
  %v8688 = vpow.pop %v8687
  %v8689 = vmul.f32 %v8533, 1.442695
  %v8690 = vpow.pop %v8689
  %v8691 = vmul.f32 %v8534, 1.442695
  %v8692 = vpow.pop %v8691
  %v8693 = vmul.f32 %v8535, 1.442695
  %v8694 = vpow.pop %v8693
  %v8695 = vmul.f32 %v8536, 1.442695
  %v8696 = vpow.pop %v8695
  %v8697 = vmul.f32 %v8537, 1.442695
  %v8698 = vpow.pop %v8697
  %v8699 = vmul.f32 %v8538, 1.442695
  %v8700 = vpow.pop %v8699
  %v8701 = vmul.f32 %v8539, 1.442695
  %v8702 = vpow.pop %v8701
  %v8703 = vmul.f32 %v8540, 1.442695
  %v8704 = vpow.pop %v8703
  %v8705 = vmul.f32 %v8541, 1.442695
  %v8706 = vpow.pop %v8705
  %v8707 = vmul.f32 %v8542, 1.442695
  %v8708 = vpow.pop %v8707
  %v8709 = vmul.f32 %v8543, 1.442695
  %v8710 = vpow.pop %v8709
  %v8711 = vmul.f32 %v8544, 1.442695
  %v8712 = vpow.pop %v8711
  %v8713 = vmul.f32 %v8545, 1.442695
  %v8714 = vpow.pop %v8713
  %v8715 = vmul.f32 %v8546, 1.442695
  %v8716 = vpow.pop %v8715
  %v8717 = vmul.f32 %v8547, 1.442695
  %v8718 = vpow.pop %v8717
  %v8719 = vmul.f32 %v8548, 1.442695
  %v8720 = vpow.pop %v8719
  %v8721 = vmul.f32 %v8549, 1.442695
  %v8722 = vpow.pop %v8721
  %v8723 = vmul.f32 %v8550, 1.442695
  %v8724 = vpow.pop %v8723
  %v8725 = vmul.f32 %v8551, 1.442695
  %v8726 = vpow.pop %v8725
  %v8727 = vmul.f32 %v8552, 1.442695
  %v8728 = vpow.pop %v8727
  %v8729 = vmul.f32 %v8553, 1.442695
  %v8730 = vpow.pop %v8729
  %v8731 = vmul.f32 %v8554, 1.442695
  %v8732 = vpow.pop %v8731
  %v8733 = vmul.f32 %v8555, 1.442695
  %v8734 = vpow.pop %v8733
  %v8735 = vmul.f32 %v8556, 1.442695
  %v8736 = vpow.pop %v8735
  %v8737 = vmul.f32 %v8557, 1.442695
  %v8738 = vpow.pop %v8737
  %v8739 = vmul.f32 %v8558, 1.442695
  %v8740 = vpow.pop %v8739
  %v8741 = vmul.f32 %v8559, 1.442695
  %v8742 = vpow.pop %v8741
  %v8743 = vmul.f32 %v8560, 1.442695
  %v8744 = vpow.pop %v8743
  %v8745 = vmul.f32 %v8561, 1.442695
  %v8746 = vpow.pop %v8745
  %v8747 = vmul.f32 %v8562, 1.442695
  %v8748 = vpow.pop %v8747
  %v8749 = vmul.f32 %v8563, 1.442695
  %v8750 = vpow.pop %v8749
  %v8751 = vmul.f32 %v8564, 1.442695
  %v8752 = vpow.pop %v8751
  %v8753 = vmul.f32 %v8565, 1.442695
  %v8754 = vpow.pop %v8753
  %v8755 = vmul.f32 %v8566, 1.442695
  %v8756 = vpow.pop %v8755
  %v8757 = vmul.f32 %v8567, 1.442695
  %v8758 = vpow.pop %v8757
  %v8759 = vmul.f32 %v8568, 1.442695
  %v8760 = vpow.pop %v8759
  %v8761 = vsel %vm2871, %v8570, 0.0
  %8762 = vadd.xlane.f32.xlu0 %v8761
  %v8763 = vpop.xlane.xlu0 %8762
  %v8764 = vsel %vm2871, %v8572, 0.0
  %8765 = vadd.xlane.f32.xlu0 %v8764
  %v8766 = vpop.xlane.xlu0 %8765
  %v8767 = vsel %vm2871, %v8574, 0.0
  %8768 = vadd.xlane.f32.xlu0 %v8767
  %v8769 = vpop.xlane.xlu0 %8768
  %v8770 = vsel %vm2871, %v8576, 0.0
  %8771 = vadd.xlane.f32.xlu0 %v8770
  %v8772 = vpop.xlane.xlu0 %8771
  %v8773 = vsel %vm2871, %v8578, 0.0
  %8774 = vadd.xlane.f32.xlu0 %v8773
  %v8775 = vpop.xlane.xlu0 %8774
  %v8776 = vsel %vm2871, %v8580, 0.0
  %8777 = vadd.xlane.f32.xlu0 %v8776
  %v8778 = vpop.xlane.xlu0 %8777
  %v8779 = vsel %vm2871, %v8582, 0.0
  %8780 = vadd.xlane.f32.xlu0 %v8779
  %v8781 = vpop.xlane.xlu0 %8780
  %v8782 = vsel %vm2871, %v8584, 0.0
  %8783 = vadd.xlane.f32.xlu0 %v8782
  %v8784 = vpop.xlane.xlu0 %8783
  %v8785 = vsel %vm2871, %v8586, 0.0
  %8786 = vadd.xlane.f32.xlu0 %v8785
  %v8787 = vpop.xlane.xlu0 %8786
  %v8788 = vsel %vm2871, %v8588, 0.0
  %8789 = vadd.xlane.f32.xlu0 %v8788
  %v8790 = vpop.xlane.xlu0 %8789
  %v8791 = vsel %vm2871, %v8590, 0.0
  %8792 = vadd.xlane.f32.xlu0 %v8791
  %v8793 = vpop.xlane.xlu0 %8792
  %v8794 = vsel %vm2871, %v8592, 0.0
  %8795 = vadd.xlane.f32.xlu0 %v8794
  %v8796 = vpop.xlane.xlu0 %8795
  %v8797 = vsel %vm2871, %v8594, 0.0
  %8798 = vadd.xlane.f32.xlu0 %v8797
  %v8799 = vpop.xlane.xlu0 %8798
  %v8800 = vsel %vm2871, %v8596, 0.0
  %8801 = vadd.xlane.f32.xlu0 %v8800
  %v8802 = vpop.xlane.xlu0 %8801
  %v8803 = vsel %vm2871, %v8598, 0.0
  %8804 = vadd.xlane.f32.xlu0 %v8803
  %v8805 = vpop.xlane.xlu0 %8804
  %v8806 = vsel %vm2871, %v8600, 0.0
  %8807 = vadd.xlane.f32.xlu0 %v8806
  %v8808 = vpop.xlane.xlu0 %8807
  %v8809 = vsel %vm2871, %v8602, 0.0
  %8810 = vadd.xlane.f32.xlu0 %v8809
  %v8811 = vpop.xlane.xlu0 %8810
  %v8812 = vsel %vm2871, %v8604, 0.0
  %8813 = vadd.xlane.f32.xlu0 %v8812
  %v8814 = vpop.xlane.xlu0 %8813
  %v8815 = vsel %vm2871, %v8606, 0.0
  %8816 = vadd.xlane.f32.xlu0 %v8815
  %v8817 = vpop.xlane.xlu0 %8816
  %v8818 = vsel %vm2871, %v8608, 0.0
  %8819 = vadd.xlane.f32.xlu0 %v8818
  %v8820 = vpop.xlane.xlu0 %8819
  %v8821 = vsel %vm2871, %v8610, 0.0
  %8822 = vadd.xlane.f32.xlu0 %v8821
  %v8823 = vpop.xlane.xlu0 %8822
  %v8824 = vsel %vm2871, %v8612, 0.0
  %8825 = vadd.xlane.f32.xlu0 %v8824
  %v8826 = vpop.xlane.xlu0 %8825
  %v8827 = vsel %vm2871, %v8614, 0.0
  %8828 = vadd.xlane.f32.xlu0 %v8827
  %v8829 = vpop.xlane.xlu0 %8828
  %v8830 = vsel %vm2871, %v8616, 0.0
  %8831 = vadd.xlane.f32.xlu0 %v8830
  %v8832 = vpop.xlane.xlu0 %8831
  %v8833 = vsel %vm2871, %v8618, 0.0
  %8834 = vadd.xlane.f32.xlu0 %v8833
  %v8835 = vpop.xlane.xlu0 %8834
  %v8836 = vsel %vm2871, %v8620, 0.0
  %8837 = vadd.xlane.f32.xlu0 %v8836
  %v8838 = vpop.xlane.xlu0 %8837
  %v8839 = vsel %vm2871, %v8622, 0.0
  %8840 = vadd.xlane.f32.xlu0 %v8839
  %v8841 = vpop.xlane.xlu0 %8840
  %v8842 = vsel %vm2871, %v8624, 0.0
  %8843 = vadd.xlane.f32.xlu0 %v8842
  %v8844 = vpop.xlane.xlu0 %8843
  %v8845 = vsel %vm2871, %v8626, 0.0
  %8846 = vadd.xlane.f32.xlu0 %v8845
  %v8847 = vpop.xlane.xlu0 %8846
  %v8848 = vsel %vm2871, %v8628, 0.0
  %8849 = vadd.xlane.f32.xlu0 %v8848
  %v8850 = vpop.xlane.xlu0 %8849
  %v8851 = vsel %vm2871, %v8630, 0.0
  %8852 = vadd.xlane.f32.xlu0 %v8851
  %v8853 = vpop.xlane.xlu0 %8852
  %v8854 = vsel %vm2871, %v8632, 0.0
  %8855 = vadd.xlane.f32.xlu0 %v8854
  %v8856 = vpop.xlane.xlu0 %8855
  %v8857 = vsel %vm2871, %v8634, 0.0
  %8858 = vadd.xlane.f32.xlu0 %v8857
  %v8859 = vpop.xlane.xlu0 %8858
  %v8860 = vsel %vm2871, %v8636, 0.0
  %8861 = vadd.xlane.f32.xlu0 %v8860
  %v8862 = vpop.xlane.xlu0 %8861
  %v8863 = vsel %vm2871, %v8638, 0.0
  %8864 = vadd.xlane.f32.xlu0 %v8863
  %v8865 = vpop.xlane.xlu0 %8864
  %v8866 = vsel %vm2871, %v8640, 0.0
  %8867 = vadd.xlane.f32.xlu0 %v8866
  %v8868 = vpop.xlane.xlu0 %8867
  %v8869 = vsel %vm2871, %v8642, 0.0
  %8870 = vadd.xlane.f32.xlu0 %v8869
  %v8871 = vpop.xlane.xlu0 %8870
  %v8872 = vsel %vm2871, %v8644, 0.0
  %8873 = vadd.xlane.f32.xlu0 %v8872
  %v8874 = vpop.xlane.xlu0 %8873
  %v8875 = vsel %vm2871, %v8646, 0.0
  %8876 = vadd.xlane.f32.xlu0 %v8875
  %v8877 = vpop.xlane.xlu0 %8876
  %v8878 = vsel %vm2871, %v8648, 0.0
  %8879 = vadd.xlane.f32.xlu0 %v8878
  %v8880 = vpop.xlane.xlu0 %8879
  %v8881 = vsel %vm2871, %v8650, 0.0
  %8882 = vadd.xlane.f32.xlu0 %v8881
  %v8883 = vpop.xlane.xlu0 %8882
  %v8884 = vsel %vm2871, %v8652, 0.0
  %8885 = vadd.xlane.f32.xlu0 %v8884
  %v8886 = vpop.xlane.xlu0 %8885
  %v8887 = vsel %vm2871, %v8654, 0.0
  %8888 = vadd.xlane.f32.xlu0 %v8887
  %v8889 = vpop.xlane.xlu0 %8888
  %v8890 = vsel %vm2871, %v8656, 0.0
  %8891 = vadd.xlane.f32.xlu0 %v8890
  %v8892 = vpop.xlane.xlu0 %8891
  %v8893 = vsel %vm2871, %v8658, 0.0
  %8894 = vadd.xlane.f32.xlu0 %v8893
  %v8895 = vpop.xlane.xlu0 %8894
  %v8896 = vsel %vm2871, %v8660, 0.0
  %8897 = vadd.xlane.f32.xlu0 %v8896
  %v8898 = vpop.xlane.xlu0 %8897
  %v8899 = vsel %vm2871, %v8662, 0.0
  %8900 = vadd.xlane.f32.xlu0 %v8899
  %v8901 = vpop.xlane.xlu0 %8900
  %v8902 = vsel %vm2871, %v8664, 0.0
  %8903 = vadd.xlane.f32.xlu0 %v8902
  %v8904 = vpop.xlane.xlu0 %8903
  %v8905 = vsel %vm2871, %v8666, 0.0
  %8906 = vadd.xlane.f32.xlu0 %v8905
  %v8907 = vpop.xlane.xlu0 %8906
  %v8908 = vsel %vm2871, %v8668, 0.0
  %8909 = vadd.xlane.f32.xlu0 %v8908
  %v8910 = vpop.xlane.xlu0 %8909
  %v8911 = vsel %vm2871, %v8670, 0.0
  %8912 = vadd.xlane.f32.xlu0 %v8911
  %v8913 = vpop.xlane.xlu0 %8912
  %v8914 = vsel %vm2871, %v8672, 0.0
  %8915 = vadd.xlane.f32.xlu0 %v8914
  %v8916 = vpop.xlane.xlu0 %8915
  %v8917 = vsel %vm2871, %v8674, 0.0
  %8918 = vadd.xlane.f32.xlu0 %v8917
  %v8919 = vpop.xlane.xlu0 %8918
  %v8920 = vsel %vm2871, %v8676, 0.0
  %8921 = vadd.xlane.f32.xlu0 %v8920
  %v8922 = vpop.xlane.xlu0 %8921
  %v8923 = vsel %vm2871, %v8678, 0.0
  %8924 = vadd.xlane.f32.xlu0 %v8923
  %v8925 = vpop.xlane.xlu0 %8924
  %v8926 = vsel %vm2871, %v8680, 0.0
  %8927 = vadd.xlane.f32.xlu0 %v8926
  %v8928 = vpop.xlane.xlu0 %8927
  %v8929 = vsel %vm2871, %v8682, 0.0
  %8930 = vadd.xlane.f32.xlu0 %v8929
  %v8931 = vpop.xlane.xlu0 %8930
  %v8932 = vsel %vm2871, %v8684, 0.0
  %8933 = vadd.xlane.f32.xlu0 %v8932
  %v8934 = vpop.xlane.xlu0 %8933
  %v8935 = vsel %vm2871, %v8686, 0.0
  %8936 = vadd.xlane.f32.xlu0 %v8935
  %v8937 = vpop.xlane.xlu0 %8936
  %v8938 = vsel %vm2871, %v8688, 0.0
  %8939 = vadd.xlane.f32.xlu0 %v8938
  %v8940 = vpop.xlane.xlu0 %8939
  %v8941 = vsel %vm2871, %v8690, 0.0
  %8942 = vadd.xlane.f32.xlu0 %v8941
  %v8943 = vpop.xlane.xlu0 %8942
  %v8944 = vsel %vm2871, %v8692, 0.0
  %8945 = vadd.xlane.f32.xlu0 %v8944
  %v8946 = vpop.xlane.xlu0 %8945
  %v8947 = vsel %vm2871, %v8694, 0.0
  %8948 = vadd.xlane.f32.xlu0 %v8947
  %v8949 = vpop.xlane.xlu0 %8948
  %v8950 = vsel %vm2871, %v8696, 0.0
  %8951 = vadd.xlane.f32.xlu0 %v8950
  %v8952 = vpop.xlane.xlu0 %8951
  %v8953 = vsel %vm2871, %v8698, 0.0
  %8954 = vadd.xlane.f32.xlu0 %v8953
  %v8955 = vpop.xlane.xlu0 %8954
  %v8956 = vsel %vm2871, %v8700, 0.0
  %8957 = vadd.xlane.f32.xlu0 %v8956
  %v8958 = vpop.xlane.xlu0 %8957
  %v8959 = vsel %vm2871, %v8702, 0.0
  %8960 = vadd.xlane.f32.xlu0 %v8959
  %v8961 = vpop.xlane.xlu0 %8960
  %v8962 = vsel %vm2871, %v8704, 0.0
  %8963 = vadd.xlane.f32.xlu0 %v8962
  %v8964 = vpop.xlane.xlu0 %8963
  %v8965 = vsel %vm2871, %v8706, 0.0
  %8966 = vadd.xlane.f32.xlu0 %v8965
  %v8967 = vpop.xlane.xlu0 %8966
  %v8968 = vsel %vm2871, %v8708, 0.0
  %8969 = vadd.xlane.f32.xlu0 %v8968
  %v8970 = vpop.xlane.xlu0 %8969
  %v8971 = vsel %vm2871, %v8710, 0.0
  %8972 = vadd.xlane.f32.xlu0 %v8971
  %v8973 = vpop.xlane.xlu0 %8972
  %v8974 = vsel %vm2871, %v8712, 0.0
  %8975 = vadd.xlane.f32.xlu0 %v8974
  %v8976 = vpop.xlane.xlu0 %8975
  %v8977 = vsel %vm2871, %v8714, 0.0
  %8978 = vadd.xlane.f32.xlu0 %v8977
  %v8979 = vpop.xlane.xlu0 %8978
  %v8980 = vsel %vm2871, %v8716, 0.0
  %8981 = vadd.xlane.f32.xlu0 %v8980
  %v8982 = vpop.xlane.xlu0 %8981
  %v8983 = vsel %vm2871, %v8718, 0.0
  %8984 = vadd.xlane.f32.xlu0 %v8983
  %v8985 = vpop.xlane.xlu0 %8984
  %v8986 = vsel %vm2871, %v8720, 0.0
  %8987 = vadd.xlane.f32.xlu0 %v8986
  %v8988 = vpop.xlane.xlu0 %8987
  %v8989 = vsel %vm2871, %v8722, 0.0
  %8990 = vadd.xlane.f32.xlu0 %v8989
  %v8991 = vpop.xlane.xlu0 %8990
  %v8992 = vsel %vm2871, %v8724, 0.0
  %8993 = vadd.xlane.f32.xlu0 %v8992
  %v8994 = vpop.xlane.xlu0 %8993
  %v8995 = vsel %vm2871, %v8726, 0.0
  %8996 = vadd.xlane.f32.xlu0 %v8995
  %v8997 = vpop.xlane.xlu0 %8996
  %v8998 = vsel %vm2871, %v8728, 0.0
  %8999 = vadd.xlane.f32.xlu0 %v8998
  %v9000 = vpop.xlane.xlu0 %8999
  %v9001 = vsel %vm2871, %v8730, 0.0
  %9002 = vadd.xlane.f32.xlu0 %v9001
  %v9003 = vpop.xlane.xlu0 %9002
  %v9004 = vsel %vm2871, %v8732, 0.0
  %9005 = vadd.xlane.f32.xlu0 %v9004
  %v9006 = vpop.xlane.xlu0 %9005
  %v9007 = vsel %vm2871, %v8734, 0.0
  %9008 = vadd.xlane.f32.xlu0 %v9007
  %v9009 = vpop.xlane.xlu0 %9008
  %v9010 = vsel %vm2871, %v8736, 0.0
  %9011 = vadd.xlane.f32.xlu0 %v9010
  %v9012 = vpop.xlane.xlu0 %9011
  %v9013 = vsel %vm2871, %v8738, 0.0
  %9014 = vadd.xlane.f32.xlu0 %v9013
  %v9015 = vpop.xlane.xlu0 %9014
  %v9016 = vsel %vm2871, %v8740, 0.0
  %9017 = vadd.xlane.f32.xlu0 %v9016
  %v9018 = vpop.xlane.xlu0 %9017
  %v9019 = vsel %vm2871, %v8742, 0.0
  %9020 = vadd.xlane.f32.xlu0 %v9019
  %v9021 = vpop.xlane.xlu0 %9020
  %v9022 = vsel %vm2871, %v8744, 0.0
  %9023 = vadd.xlane.f32.xlu0 %v9022
  %v9024 = vpop.xlane.xlu0 %9023
  %v9025 = vsel %vm2871, %v8746, 0.0
  %9026 = vadd.xlane.f32.xlu0 %v9025
  %v9027 = vpop.xlane.xlu0 %9026
  %v9028 = vsel %vm2871, %v8748, 0.0
  %9029 = vadd.xlane.f32.xlu0 %v9028
  %v9030 = vpop.xlane.xlu0 %9029
  %v9031 = vsel %vm2871, %v8750, 0.0
  %9032 = vadd.xlane.f32.xlu0 %v9031
  %v9033 = vpop.xlane.xlu0 %9032
  %v9034 = vsel %vm2871, %v8752, 0.0
  %9035 = vadd.xlane.f32.xlu0 %v9034
  %v9036 = vpop.xlane.xlu0 %9035
  %v9037 = vsel %vm2871, %v8754, 0.0
  %9038 = vadd.xlane.f32.xlu0 %v9037
  %v9039 = vpop.xlane.xlu0 %9038
  %v9040 = vsel %vm2871, %v8756, 0.0
  %9041 = vadd.xlane.f32.xlu0 %v9040
  %v9042 = vpop.xlane.xlu0 %9041
  %v9043 = vsel %vm2871, %v8758, 0.0
  %9044 = vadd.xlane.f32.xlu0 %v9043
  %v9045 = vpop.xlane.xlu0 %9044
  %v9046 = vsel %vm2871, %v8760, 0.0
  %9047 = vadd.xlane.f32.xlu0 %v9046
  %v9048 = vpop.xlane.xlu0 %9047
  %v9049 = vrcp.pop %v8763
  %v9050 = vrcp.pop %v8766
  %v9051 = vrcp.pop %v8769
  %v9052 = vrcp.pop %v8772
  %v9053 = vrcp.pop %v8775
  %v9054 = vrcp.pop %v8778
  %v9055 = vrcp.pop %v8781
  %v9056 = vrcp.pop %v8784
  %v9057 = vrcp.pop %v8787
  %v9058 = vrcp.pop %v8790
  %v9059 = vrcp.pop %v8793
  %v9060 = vrcp.pop %v8796
  %v9061 = vrcp.pop %v8799
  %v9062 = vrcp.pop %v8802
  %v9063 = vrcp.pop %v8805
  %v9064 = vrcp.pop %v8808
  %v9065 = vrcp.pop %v8811
  %v9066 = vrcp.pop %v8814
  %v9067 = vrcp.pop %v8817
  %v9068 = vrcp.pop %v8820
  %v9069 = vrcp.pop %v8823
  %v9070 = vrcp.pop %v8826
  %v9071 = vrcp.pop %v8829
  %v9072 = vrcp.pop %v8832
  %v9073 = vrcp.pop %v8835
  %v9074 = vrcp.pop %v8838
  %v9075 = vrcp.pop %v8841
  %v9076 = vrcp.pop %v8844
  %v9077 = vrcp.pop %v8847
  %v9078 = vrcp.pop %v8850
  %v9079 = vrcp.pop %v8853
  %v9080 = vrcp.pop %v8856
  %v9081 = vrcp.pop %v8859
  %v9082 = vrcp.pop %v8862
  %v9083 = vrcp.pop %v8865
  %v9084 = vrcp.pop %v8868
  %v9085 = vrcp.pop %v8871
  %v9086 = vrcp.pop %v8874
  %v9087 = vrcp.pop %v8877
  %v9088 = vrcp.pop %v8880
  %v9089 = vrcp.pop %v8883
  %v9090 = vrcp.pop %v8886
  %v9091 = vrcp.pop %v8889
  %v9092 = vrcp.pop %v8892
  %v9093 = vrcp.pop %v8895
  %v9094 = vrcp.pop %v8898
  %v9095 = vrcp.pop %v8901
  %v9096 = vrcp.pop %v8904
  %v9097 = vrcp.pop %v8907
  %v9098 = vrcp.pop %v8910
  %v9099 = vrcp.pop %v8913
  %v9100 = vrcp.pop %v8916
  %v9101 = vrcp.pop %v8919
  %v9102 = vrcp.pop %v8922
  %v9103 = vrcp.pop %v8925
  %v9104 = vrcp.pop %v8928
  %v9105 = vrcp.pop %v8931
  %v9106 = vrcp.pop %v8934
  %v9107 = vrcp.pop %v8937
  %v9108 = vrcp.pop %v8940
  %v9109 = vrcp.pop %v8943
  %v9110 = vrcp.pop %v8946
  %v9111 = vrcp.pop %v8949
  %v9112 = vrcp.pop %v8952
  %v9113 = vrcp.pop %v8955
  %v9114 = vrcp.pop %v8958
  %v9115 = vrcp.pop %v8961
  %v9116 = vrcp.pop %v8964
  %v9117 = vrcp.pop %v8967
  %v9118 = vrcp.pop %v8970
  %v9119 = vrcp.pop %v8973
  %v9120 = vrcp.pop %v8976
  %v9121 = vrcp.pop %v8979
  %v9122 = vrcp.pop %v8982
  %v9123 = vrcp.pop %v8985
  %v9124 = vrcp.pop %v8988
  %v9125 = vrcp.pop %v8991
  %v9126 = vrcp.pop %v8994
  %v9127 = vrcp.pop %v8997
  %v9128 = vrcp.pop %v9000
  %v9129 = vrcp.pop %v9003
  %v9130 = vrcp.pop %v9006
  %v9131 = vrcp.pop %v9009
  %v9132 = vrcp.pop %v9012
  %v9133 = vrcp.pop %v9015
  %v9134 = vrcp.pop %v9018
  %v9135 = vrcp.pop %v9021
  %v9136 = vrcp.pop %v9024
  %v9137 = vrcp.pop %v9027
  %v9138 = vrcp.pop %v9030
  %v9139 = vrcp.pop %v9033
  %v9140 = vrcp.pop %v9036
  %v9141 = vrcp.pop %v9039
  %v9142 = vrcp.pop %v9042
  %v9143 = vrcp.pop %v9045
  %v9144 = vrcp.pop %v9048
  %v9145 = vmul.f32 %v8570, %v9049
  %v9146 = vmul.f32 %v8572, %v9050
  %v9147 = vmul.f32 %v8574, %v9051
  %v9148 = vmul.f32 %v8576, %v9052
  %v9149 = vmul.f32 %v8578, %v9053
  %v9150 = vmul.f32 %v8580, %v9054
  %v9151 = vmul.f32 %v8582, %v9055
  %v9152 = vmul.f32 %v8584, %v9056
  %v9153 = vmul.f32 %v8586, %v9057
  %v9154 = vmul.f32 %v8588, %v9058
  %v9155 = vmul.f32 %v8590, %v9059
  %v9156 = vmul.f32 %v8592, %v9060
  %v9157 = vmul.f32 %v8594, %v9061
  %v9158 = vmul.f32 %v8596, %v9062
  %v9159 = vmul.f32 %v8598, %v9063
  %v9160 = vmul.f32 %v8600, %v9064
  %v9161 = vmul.f32 %v8602, %v9065
  %v9162 = vmul.f32 %v8604, %v9066
  %v9163 = vmul.f32 %v8606, %v9067
  %v9164 = vmul.f32 %v8608, %v9068
  %v9165 = vmul.f32 %v8610, %v9069
  %v9166 = vmul.f32 %v8612, %v9070
  %v9167 = vmul.f32 %v8614, %v9071
  %v9168 = vmul.f32 %v8616, %v9072
  %v9169 = vmul.f32 %v8618, %v9073
  %v9170 = vmul.f32 %v8620, %v9074
  %v9171 = vmul.f32 %v8622, %v9075
  %v9172 = vmul.f32 %v8624, %v9076
  %v9173 = vmul.f32 %v8626, %v9077
  %v9174 = vmul.f32 %v8628, %v9078
  %v9175 = vmul.f32 %v8630, %v9079
  %v9176 = vmul.f32 %v8632, %v9080
  %v9177 = vmul.f32 %v8634, %v9081
  %v9178 = vmul.f32 %v8636, %v9082
  %v9179 = vmul.f32 %v8638, %v9083
  %v9180 = vmul.f32 %v8640, %v9084
  %v9181 = vmul.f32 %v8642, %v9085
  %v9182 = vmul.f32 %v8644, %v9086
  %v9183 = vmul.f32 %v8646, %v9087
  %v9184 = vmul.f32 %v8648, %v9088
  %v9185 = vmul.f32 %v8650, %v9089
  %v9186 = vmul.f32 %v8652, %v9090
  %v9187 = vmul.f32 %v8654, %v9091
  %v9188 = vmul.f32 %v8656, %v9092
  %v9189 = vmul.f32 %v8658, %v9093
  %v9190 = vmul.f32 %v8660, %v9094
  %v9191 = vmul.f32 %v8662, %v9095
  %v9192 = vmul.f32 %v8664, %v9096
  %v9193 = vmul.f32 %v8666, %v9097
  %v9194 = vmul.f32 %v8668, %v9098
  %v9195 = vmul.f32 %v8670, %v9099
  %v9196 = vmul.f32 %v8672, %v9100
  %v9197 = vmul.f32 %v8674, %v9101
  %v9198 = vmul.f32 %v8676, %v9102
  %v9199 = vmul.f32 %v8678, %v9103
  %v9200 = vmul.f32 %v8680, %v9104
  %v9201 = vmul.f32 %v8682, %v9105
  %v9202 = vmul.f32 %v8684, %v9106
  %v9203 = vmul.f32 %v8686, %v9107
  %v9204 = vmul.f32 %v8688, %v9108
  %v9205 = vmul.f32 %v8690, %v9109
  %v9206 = vmul.f32 %v8692, %v9110
  %v9207 = vmul.f32 %v8694, %v9111
  %v9208 = vmul.f32 %v8696, %v9112
  %v9209 = vmul.f32 %v8698, %v9113
  %v9210 = vmul.f32 %v8700, %v9114
  %v9211 = vmul.f32 %v8702, %v9115
  %v9212 = vmul.f32 %v8704, %v9116
  %v9213 = vmul.f32 %v8706, %v9117
  %v9214 = vmul.f32 %v8708, %v9118
  %v9215 = vmul.f32 %v8710, %v9119
  %v9216 = vmul.f32 %v8712, %v9120
  %v9217 = vmul.f32 %v8714, %v9121
  %v9218 = vmul.f32 %v8716, %v9122
  %v9219 = vmul.f32 %v8718, %v9123
  %v9220 = vmul.f32 %v8720, %v9124
  %v9221 = vmul.f32 %v8722, %v9125
  %v9222 = vmul.f32 %v8724, %v9126
  %v9223 = vmul.f32 %v8726, %v9127
  %v9224 = vmul.f32 %v8728, %v9128
  %v9225 = vmul.f32 %v8730, %v9129
  %v9226 = vmul.f32 %v8732, %v9130
  %v9227 = vmul.f32 %v8734, %v9131
  %v9228 = vmul.f32 %v8736, %v9132
  %v9229 = vmul.f32 %v8738, %v9133
  %v9230 = vmul.f32 %v8740, %v9134
  %v9231 = vmul.f32 %v8742, %v9135
  %v9232 = vmul.f32 %v8744, %v9136
  %v9233 = vmul.f32 %v8746, %v9137
  %v9234 = vmul.f32 %v8748, %v9138
  %v9235 = vmul.f32 %v8750, %v9139
  %v9236 = vmul.f32 %v8752, %v9140
  %v9237 = vmul.f32 %v8754, %v9141
  %v9238 = vmul.f32 %v8756, %v9142
  %v9239 = vmul.f32 %v8758, %v9143
  %v9240 = vmul.f32 %v8760, %v9144
  %v9241 = vpack.c.bf16 %v9146, %v9145
  %v9242 = vpack.c.bf16 %v9148, %v9147
  %v9243 = vpack.c.bf16 %v9150, %v9149
  %v9244 = vpack.c.bf16 %v9152, %v9151
  %v9245 = vpack.c.bf16 %v9154, %v9153
  %v9246 = vpack.c.bf16 %v9156, %v9155
  %v9247 = vpack.c.bf16 %v9158, %v9157
  %v9248 = vpack.c.bf16 %v9160, %v9159
  %v9249 = vpack.c.bf16 %v9162, %v9161
  %v9250 = vpack.c.bf16 %v9164, %v9163
  %v9251 = vpack.c.bf16 %v9166, %v9165
  %v9252 = vpack.c.bf16 %v9168, %v9167
  %v9253 = vpack.c.bf16 %v9170, %v9169
  %v9254 = vpack.c.bf16 %v9172, %v9171
  %v9255 = vpack.c.bf16 %v9174, %v9173
  %v9256 = vpack.c.bf16 %v9176, %v9175
  %v9257 = vpack.c.bf16 %v9178, %v9177
  %v9258 = vpack.c.bf16 %v9180, %v9179
  %v9259 = vpack.c.bf16 %v9182, %v9181
  %v9260 = vpack.c.bf16 %v9184, %v9183
  %v9261 = vpack.c.bf16 %v9186, %v9185
  %v9262 = vpack.c.bf16 %v9188, %v9187
  %v9263 = vpack.c.bf16 %v9190, %v9189
  %v9264 = vpack.c.bf16 %v9192, %v9191
  %v9265 = vpack.c.bf16 %v9194, %v9193
  %v9266 = vpack.c.bf16 %v9196, %v9195
  %v9267 = vpack.c.bf16 %v9198, %v9197
  %v9268 = vpack.c.bf16 %v9200, %v9199
  %v9269 = vpack.c.bf16 %v9202, %v9201
  %v9270 = vpack.c.bf16 %v9204, %v9203
  %v9271 = vpack.c.bf16 %v9206, %v9205
  %v9272 = vpack.c.bf16 %v9208, %v9207
  %v9273 = vpack.c.bf16 %v9210, %v9209
  %v9274 = vpack.c.bf16 %v9212, %v9211
  %v9275 = vpack.c.bf16 %v9214, %v9213
  %v9276 = vpack.c.bf16 %v9216, %v9215
  %v9277 = vpack.c.bf16 %v9218, %v9217
  %v9278 = vpack.c.bf16 %v9220, %v9219
  %v9279 = vpack.c.bf16 %v9222, %v9221
  %v9280 = vpack.c.bf16 %v9224, %v9223
  %v9281 = vpack.c.bf16 %v9226, %v9225
  %v9282 = vpack.c.bf16 %v9228, %v9227
  %v9283 = vpack.c.bf16 %v9230, %v9229
  %v9284 = vpack.c.bf16 %v9232, %v9231
  %v9285 = vpack.c.bf16 %v9234, %v9233
  %v9286 = vpack.c.bf16 %v9236, %v9235
  %v9287 = vpack.c.bf16 %v9238, %v9237
  %v9288 = vpack.c.bf16 %v9240, %v9239
  %v9289 = vpack.c.bf16 %v6998, %v6995
  %v9290 = vpack.c.bf16 %v7003, %v7003
  %v9291 = vpack.c.bf16 %v7011, %v7006
  %v9292 = vpack.c.bf16 %v7014, %v7014
  %v9293 = vpack.c.bf16 %v7022, %v7019
  %v9294 = vpack.c.bf16 %v7027, %v7027
  %v9295 = vpack.c.bf16 %v7035, %v7030
  %v9296 = vpack.c.bf16 %v7038, %v7038
  %v9297 = vpack.c.bf16 %v7046, %v7043
  %v9298 = vpack.c.bf16 %v7051, %v7051
  %v9299 = vpack.c.bf16 %v7059, %v7054
  %v9300 = vpack.c.bf16 %v7062, %v7062
  %v9301 = vpack.c.bf16 %v7070, %v7067
  %v9302 = vpack.c.bf16 %v7075, %v7075
  %v9303 = vpack.c.bf16 %v7083, %v7078
  %v9304 = vpack.c.bf16 %v7086, %v7086
  %v9306 = vsel %vm2871, %v9241, 0
  %v9309 = vsel %vm2871, %v9242, 0
  %v9312 = vsel %vm2871, %v9243, 0
  %v9315 = vsel %vm2871, %v9244, 0
  %v9318 = vsel %vm2871, %v9245, 0
  %v9321 = vsel %vm2871, %v9246, 0
  %v9324 = vsel %vm4010, %v9290, 0
  %9326 = vmatprep.subr.bf16.mxu0 0
  %9327 = vmatpush1.bf16.msra.mxu0 0
  %9328 = vmatprep.subr.bf16.mxu0 0
  %9329 = vmatpush1.bf16.msra.mxu0 0
  %9330 = vmatprep.subr.bf16.mxu0 0
  %9331 = vmatpush1.bf16.msra.mxu0 0
  %9332 = vmatprep.subr.bf16.mxu0 0
  %9333 = vmatpush1.bf16.msra.mxu0 0
  %9334 = vmatprep.subr.bf16.mxu0 0
  %9335 = vmatpush1.bf16.msra.mxu0 0
  %9336 = vmatprep.subr.bf16.mxu0 0
  %9337 = vmatpush1.bf16.msra.mxu0 0
  %9338 = vmatprep.subr.bf16.mxu0 0
  %9339 = vmatpush1.bf16.msra.mxu0 %v9324
  %9340 = vmatprep.subr.bf16.mxu0 0
  %9341 = vmatpush1.bf16.msra.mxu0 %v9289
  %9342 = vmatprep.subr.bf16.mxu0 0
  %9343 = vmatpush2.bf16.msra.mxu0 0
  %9344 = vmatprep.subr.bf16.mxu0 0
  %9345 = vmatpush2.bf16.msra.mxu0 0
  %9346 = vmatprep.subr.bf16.mxu0 0
  %9347 = vmatpush2.bf16.msra.mxu0 0
  %9348 = vmatprep.subr.bf16.mxu0 0
  %9349 = vmatpush2.bf16.msra.mxu0 0
  %9350 = vmatprep.subr.bf16.mxu0 0
  %9351 = vmatpush2.bf16.msra.mxu0 0
  %9352 = vmatprep.subr.bf16.mxu0 0
  %9353 = vmatpush2.bf16.msra.mxu0 0
  %9354 = vmatprep.subr.bf16.mxu0 0
  %9355 = vmatpush2.bf16.msra.mxu0 0
  %9356 = vmatprep.subr.bf16.mxu0 0
  %9357 = vmatpush2.bf16.msra.mxu0 0
  %9358 = vmatprep.mubr.bf16.mxu0 0
  %9359 = vmatmul.mubr.bf16.gmra.mxu0 %v9306
  %v9360 = vpop.f32.mrf.mxu0
  %v9361 = vadd.f32 0.0, %v9360
  %v9362 = vpop.f32.mrf.mxu0
  %v9363 = vpop.f32.mrf.mxu0
  %v9364 = vadd.f32 0.0, %v9363
  %v9365 = vpop.f32.mrf.mxu0
  %9366 = vmatprep.mubr.bf16.mxu0 0
  %9367 = vmatmul.mubr.bf16.gmra.mxu0 %v9309
  %v9368 = vpop.f32.mrf.mxu0
  %v9369 = vadd.f32 0.0, %v9368
  %v9370 = vpop.f32.mrf.mxu0
  %v9371 = vpop.f32.mrf.mxu0
  %v9372 = vadd.f32 0.0, %v9371
  %v9373 = vpop.f32.mrf.mxu0
  %9374 = vmatprep.mubr.bf16.mxu0 0
  %9375 = vmatmul.mubr.bf16.gmra.mxu0 %v9312
  %v9376 = vpop.f32.mrf.mxu0
  %v9377 = vadd.f32 0.0, %v9376
  %v9378 = vpop.f32.mrf.mxu0
  %v9379 = vpop.f32.mrf.mxu0
  %v9380 = vadd.f32 0.0, %v9379
  %v9381 = vpop.f32.mrf.mxu0
  %9382 = vmatprep.mubr.bf16.mxu0 0
  %9383 = vmatmul.mubr.bf16.gmra.mxu0 %v9315
  %v9384 = vpop.f32.mrf.mxu0
  %v9385 = vadd.f32 0.0, %v9384
  %v9386 = vpop.f32.mrf.mxu0
  %v9387 = vpop.f32.mrf.mxu0
  %v9388 = vadd.f32 0.0, %v9387
  %v9389 = vpop.f32.mrf.mxu0
  %9390 = vmatprep.mubr.bf16.mxu0 0
  %9391 = vmatmul.mubr.bf16.gmra.mxu0 %v9318
  %v9392 = vpop.f32.mrf.mxu0
  %v9393 = vadd.f32 0.0, %v9392
  %v9394 = vpop.f32.mrf.mxu0
  %v9395 = vpop.f32.mrf.mxu0
  %v9396 = vadd.f32 0.0, %v9395
  %v9397 = vpop.f32.mrf.mxu0
  %9398 = vmatprep.mubr.bf16.mxu0 0
  %9399 = vmatmul.mubr.bf16.gmra.mxu0 %v9321
  %v9400 = vpop.f32.mrf.mxu0
  %v9401 = vadd.f32 0.0, %v9400
  %v9402 = vpop.f32.mrf.mxu0
  %v9403 = vpop.f32.mrf.mxu0
  %v9404 = vadd.f32 0.0, %v9403
  %v9405 = vpop.f32.mrf.mxu0
  %9406 = vdwg.mxu0
  %v9408 = vsel %vm2871, %v9247, 0
  %v9411 = vsel %vm2871, %v9248, 0
  %v9414 = vsel %vm2871, %v9249, 0
  %v9417 = vsel %vm2871, %v9250, 0
  %v9420 = vsel %vm2871, %v9251, 0
  %v9423 = vsel %vm2871, %v9252, 0
  %v9426 = vsel %vm4010, %v9292, 0
  %9428 = vmatprep.subr.bf16.mxu0 0
  %9429 = vmatpush1.bf16.msra.mxu0 0
  %9430 = vmatprep.subr.bf16.mxu0 0
  %9431 = vmatpush1.bf16.msra.mxu0 0
  %9432 = vmatprep.subr.bf16.mxu0 0
  %9433 = vmatpush1.bf16.msra.mxu0 0
  %9434 = vmatprep.subr.bf16.mxu0 0
  %9435 = vmatpush1.bf16.msra.mxu0 0
  %9436 = vmatprep.subr.bf16.mxu0 0
  %9437 = vmatpush1.bf16.msra.mxu0 0
  %9438 = vmatprep.subr.bf16.mxu0 0
  %9439 = vmatpush1.bf16.msra.mxu0 0
  %9440 = vmatprep.subr.bf16.mxu0 0
  %9441 = vmatpush1.bf16.msra.mxu0 %v9426
  %9442 = vmatprep.subr.bf16.mxu0 0
  %9443 = vmatpush1.bf16.msra.mxu0 %v9291
  %9444 = vmatprep.subr.bf16.mxu0 0
  %9445 = vmatpush2.bf16.msra.mxu0 0
  %9446 = vmatprep.subr.bf16.mxu0 0
  %9447 = vmatpush2.bf16.msra.mxu0 0
  %9448 = vmatprep.subr.bf16.mxu0 0
  %9449 = vmatpush2.bf16.msra.mxu0 0
  %9450 = vmatprep.subr.bf16.mxu0 0
  %9451 = vmatpush2.bf16.msra.mxu0 0
  %9452 = vmatprep.subr.bf16.mxu0 0
  %9453 = vmatpush2.bf16.msra.mxu0 0
  %9454 = vmatprep.subr.bf16.mxu0 0
  %9455 = vmatpush2.bf16.msra.mxu0 0
  %9456 = vmatprep.subr.bf16.mxu0 0
  %9457 = vmatpush2.bf16.msra.mxu0 0
  %9458 = vmatprep.subr.bf16.mxu0 0
  %9459 = vmatpush2.bf16.msra.mxu0 0
  %9460 = vmatprep.mubr.bf16.mxu0 0
  %9461 = vmatmul.mubr.bf16.gmra.mxu0 %v9408
  %v9462 = vpop.f32.mrf.mxu0
  %v9463 = vadd.f32 0.0, %v9462
  %v9464 = vpop.f32.mrf.mxu0
  %v9465 = vpop.f32.mrf.mxu0
  %v9466 = vadd.f32 0.0, %v9465
  %v9467 = vpop.f32.mrf.mxu0
  %9468 = vmatprep.mubr.bf16.mxu0 0
  %9469 = vmatmul.mubr.bf16.gmra.mxu0 %v9411
  %v9470 = vpop.f32.mrf.mxu0
  %v9471 = vadd.f32 0.0, %v9470
  %v9472 = vpop.f32.mrf.mxu0
  %v9473 = vpop.f32.mrf.mxu0
  %v9474 = vadd.f32 0.0, %v9473
  %v9475 = vpop.f32.mrf.mxu0
  %9476 = vmatprep.mubr.bf16.mxu0 0
  %9477 = vmatmul.mubr.bf16.gmra.mxu0 %v9414
  %v9478 = vpop.f32.mrf.mxu0
  %v9479 = vadd.f32 0.0, %v9478
  %v9480 = vpop.f32.mrf.mxu0
  %v9481 = vpop.f32.mrf.mxu0
  %v9482 = vadd.f32 0.0, %v9481
  %v9483 = vpop.f32.mrf.mxu0
  %9484 = vmatprep.mubr.bf16.mxu0 0
  %9485 = vmatmul.mubr.bf16.gmra.mxu0 %v9417
  %v9486 = vpop.f32.mrf.mxu0
  %v9487 = vadd.f32 0.0, %v9486
  %v9488 = vpop.f32.mrf.mxu0
  %v9489 = vpop.f32.mrf.mxu0
  %v9490 = vadd.f32 0.0, %v9489
  %v9491 = vpop.f32.mrf.mxu0
  %9492 = vmatprep.mubr.bf16.mxu0 0
  %9493 = vmatmul.mubr.bf16.gmra.mxu0 %v9420
  %v9494 = vpop.f32.mrf.mxu0
  %v9495 = vadd.f32 0.0, %v9494
  %v9496 = vpop.f32.mrf.mxu0
  %v9497 = vpop.f32.mrf.mxu0
  %v9498 = vadd.f32 0.0, %v9497
  %v9499 = vpop.f32.mrf.mxu0
  %9500 = vmatprep.mubr.bf16.mxu0 0
  %9501 = vmatmul.mubr.bf16.gmra.mxu0 %v9423
  %v9502 = vpop.f32.mrf.mxu0
  %v9503 = vadd.f32 0.0, %v9502
  %v9504 = vpop.f32.mrf.mxu0
  %v9505 = vpop.f32.mrf.mxu0
  %v9506 = vadd.f32 0.0, %v9505
  %v9507 = vpop.f32.mrf.mxu0
  %9508 = vdwg.mxu0
  %v9510 = vsel %vm2871, %v9253, 0
  %v9513 = vsel %vm2871, %v9254, 0
  %v9516 = vsel %vm2871, %v9255, 0
  %v9519 = vsel %vm2871, %v9256, 0
  %v9522 = vsel %vm2871, %v9257, 0
  %v9525 = vsel %vm2871, %v9258, 0
  %v9528 = vsel %vm4010, %v9294, 0
  %9530 = vmatprep.subr.bf16.mxu0 0
  %9531 = vmatpush1.bf16.msra.mxu0 0
  %9532 = vmatprep.subr.bf16.mxu0 0
  %9533 = vmatpush1.bf16.msra.mxu0 0
  %9534 = vmatprep.subr.bf16.mxu0 0
  %9535 = vmatpush1.bf16.msra.mxu0 0
  %9536 = vmatprep.subr.bf16.mxu0 0
  %9537 = vmatpush1.bf16.msra.mxu0 0
  %9538 = vmatprep.subr.bf16.mxu0 0
  %9539 = vmatpush1.bf16.msra.mxu0 0
  %9540 = vmatprep.subr.bf16.mxu0 0
  %9541 = vmatpush1.bf16.msra.mxu0 0
  %9542 = vmatprep.subr.bf16.mxu0 0
  %9543 = vmatpush1.bf16.msra.mxu0 %v9528
  %9544 = vmatprep.subr.bf16.mxu0 0
  %9545 = vmatpush1.bf16.msra.mxu0 %v9293
  %9546 = vmatprep.subr.bf16.mxu0 0
  %9547 = vmatpush2.bf16.msra.mxu0 0
  %9548 = vmatprep.subr.bf16.mxu0 0
  %9549 = vmatpush2.bf16.msra.mxu0 0
  %9550 = vmatprep.subr.bf16.mxu0 0
  %9551 = vmatpush2.bf16.msra.mxu0 0
  %9552 = vmatprep.subr.bf16.mxu0 0
  %9553 = vmatpush2.bf16.msra.mxu0 0
  %9554 = vmatprep.subr.bf16.mxu0 0
  %9555 = vmatpush2.bf16.msra.mxu0 0
  %9556 = vmatprep.subr.bf16.mxu0 0
  %9557 = vmatpush2.bf16.msra.mxu0 0
  %9558 = vmatprep.subr.bf16.mxu0 0
  %9559 = vmatpush2.bf16.msra.mxu0 0
  %9560 = vmatprep.subr.bf16.mxu0 0
  %9561 = vmatpush2.bf16.msra.mxu0 0
  %9562 = vmatprep.mubr.bf16.mxu0 0
  %9563 = vmatmul.mubr.bf16.gmra.mxu0 %v9510
  %v9564 = vpop.f32.mrf.mxu0
  %v9565 = vadd.f32 0.0, %v9564
  %v9566 = vpop.f32.mrf.mxu0
  %v9567 = vpop.f32.mrf.mxu0
  %v9568 = vadd.f32 0.0, %v9567
  %v9569 = vpop.f32.mrf.mxu0
  %9570 = vmatprep.mubr.bf16.mxu0 0
  %9571 = vmatmul.mubr.bf16.gmra.mxu0 %v9513
  %v9572 = vpop.f32.mrf.mxu0
  %v9573 = vadd.f32 0.0, %v9572
  %v9574 = vpop.f32.mrf.mxu0
  %v9575 = vpop.f32.mrf.mxu0
  %v9576 = vadd.f32 0.0, %v9575
  %v9577 = vpop.f32.mrf.mxu0
  %9578 = vmatprep.mubr.bf16.mxu0 0
  %9579 = vmatmul.mubr.bf16.gmra.mxu0 %v9516
  %v9580 = vpop.f32.mrf.mxu0
  %v9581 = vadd.f32 0.0, %v9580
  %v9582 = vpop.f32.mrf.mxu0
  %v9583 = vpop.f32.mrf.mxu0
  %v9584 = vadd.f32 0.0, %v9583
  %v9585 = vpop.f32.mrf.mxu0
  %9586 = vmatprep.mubr.bf16.mxu0 0
  %9587 = vmatmul.mubr.bf16.gmra.mxu0 %v9519
  %v9588 = vpop.f32.mrf.mxu0
  %v9589 = vadd.f32 0.0, %v9588
  %v9590 = vpop.f32.mrf.mxu0
  %v9591 = vpop.f32.mrf.mxu0
  %v9592 = vadd.f32 0.0, %v9591
  %v9593 = vpop.f32.mrf.mxu0
  %9594 = vmatprep.mubr.bf16.mxu0 0
  %9595 = vmatmul.mubr.bf16.gmra.mxu0 %v9522
  %v9596 = vpop.f32.mrf.mxu0
  %v9597 = vadd.f32 0.0, %v9596
  %v9598 = vpop.f32.mrf.mxu0
  %v9599 = vpop.f32.mrf.mxu0
  %v9600 = vadd.f32 0.0, %v9599
  %v9601 = vpop.f32.mrf.mxu0
  %9602 = vmatprep.mubr.bf16.mxu0 0
  %9603 = vmatmul.mubr.bf16.gmra.mxu0 %v9525
  %v9604 = vpop.f32.mrf.mxu0
  %v9605 = vadd.f32 0.0, %v9604
  %v9606 = vpop.f32.mrf.mxu0
  %v9607 = vpop.f32.mrf.mxu0
  %v9608 = vadd.f32 0.0, %v9607
  %v9609 = vpop.f32.mrf.mxu0
  %9610 = vdwg.mxu0
  %v9612 = vsel %vm2871, %v9259, 0
  %v9615 = vsel %vm2871, %v9260, 0
  %v9618 = vsel %vm2871, %v9261, 0
  %v9621 = vsel %vm2871, %v9262, 0
  %v9624 = vsel %vm2871, %v9263, 0
  %v9627 = vsel %vm2871, %v9264, 0
  %v9630 = vsel %vm4010, %v9296, 0
  %9632 = vmatprep.subr.bf16.mxu0 0
  %9633 = vmatpush1.bf16.msra.mxu0 0
  %9634 = vmatprep.subr.bf16.mxu0 0
  %9635 = vmatpush1.bf16.msra.mxu0 0
  %9636 = vmatprep.subr.bf16.mxu0 0
  %9637 = vmatpush1.bf16.msra.mxu0 0
  %9638 = vmatprep.subr.bf16.mxu0 0
  %9639 = vmatpush1.bf16.msra.mxu0 0
  %9640 = vmatprep.subr.bf16.mxu0 0
  %9641 = vmatpush1.bf16.msra.mxu0 0
  %9642 = vmatprep.subr.bf16.mxu0 0
  %9643 = vmatpush1.bf16.msra.mxu0 0
  %9644 = vmatprep.subr.bf16.mxu0 0
  %9645 = vmatpush1.bf16.msra.mxu0 %v9630
  %9646 = vmatprep.subr.bf16.mxu0 0
  %9647 = vmatpush1.bf16.msra.mxu0 %v9295
  %9648 = vmatprep.subr.bf16.mxu0 0
  %9649 = vmatpush2.bf16.msra.mxu0 0
  %9650 = vmatprep.subr.bf16.mxu0 0
  %9651 = vmatpush2.bf16.msra.mxu0 0
  %9652 = vmatprep.subr.bf16.mxu0 0
  %9653 = vmatpush2.bf16.msra.mxu0 0
  %9654 = vmatprep.subr.bf16.mxu0 0
  %9655 = vmatpush2.bf16.msra.mxu0 0
  %9656 = vmatprep.subr.bf16.mxu0 0
  %9657 = vmatpush2.bf16.msra.mxu0 0
  %9658 = vmatprep.subr.bf16.mxu0 0
  %9659 = vmatpush2.bf16.msra.mxu0 0
  %9660 = vmatprep.subr.bf16.mxu0 0
  %9661 = vmatpush2.bf16.msra.mxu0 0
  %9662 = vmatprep.subr.bf16.mxu0 0
  %9663 = vmatpush2.bf16.msra.mxu0 0
  %9664 = vmatprep.mubr.bf16.mxu0 0
  %9665 = vmatmul.mubr.bf16.gmra.mxu0 %v9612
  %v9666 = vpop.f32.mrf.mxu0
  %v9667 = vadd.f32 0.0, %v9666
  %v9668 = vpop.f32.mrf.mxu0
  %v9669 = vpop.f32.mrf.mxu0
  %v9670 = vadd.f32 0.0, %v9669
  %v9671 = vpop.f32.mrf.mxu0
  %9672 = vmatprep.mubr.bf16.mxu0 0
  %9673 = vmatmul.mubr.bf16.gmra.mxu0 %v9615
  %v9674 = vpop.f32.mrf.mxu0
  %v9675 = vadd.f32 0.0, %v9674
  %v9676 = vpop.f32.mrf.mxu0
  %v9677 = vpop.f32.mrf.mxu0
  %v9678 = vadd.f32 0.0, %v9677
  %v9679 = vpop.f32.mrf.mxu0
  %9680 = vmatprep.mubr.bf16.mxu0 0
  %9681 = vmatmul.mubr.bf16.gmra.mxu0 %v9618
  %v9682 = vpop.f32.mrf.mxu0
  %v9683 = vadd.f32 0.0, %v9682
  %v9684 = vpop.f32.mrf.mxu0
  %v9685 = vpop.f32.mrf.mxu0
  %v9686 = vadd.f32 0.0, %v9685
  %v9687 = vpop.f32.mrf.mxu0
  %9688 = vmatprep.mubr.bf16.mxu0 0
  %9689 = vmatmul.mubr.bf16.gmra.mxu0 %v9621
  %v9690 = vpop.f32.mrf.mxu0
  %v9691 = vadd.f32 0.0, %v9690
  %v9692 = vpop.f32.mrf.mxu0
  %v9693 = vpop.f32.mrf.mxu0
  %v9694 = vadd.f32 0.0, %v9693
  %v9695 = vpop.f32.mrf.mxu0
  %9696 = vmatprep.mubr.bf16.mxu0 0
  %9697 = vmatmul.mubr.bf16.gmra.mxu0 %v9624
  %v9698 = vpop.f32.mrf.mxu0
  %v9699 = vadd.f32 0.0, %v9698
  %v9700 = vpop.f32.mrf.mxu0
  %v9701 = vpop.f32.mrf.mxu0
  %v9702 = vadd.f32 0.0, %v9701
  %v9703 = vpop.f32.mrf.mxu0
  %9704 = vmatprep.mubr.bf16.mxu0 0
  %9705 = vmatmul.mubr.bf16.gmra.mxu0 %v9627
  %v9706 = vpop.f32.mrf.mxu0
  %v9707 = vadd.f32 0.0, %v9706
  %v9708 = vpop.f32.mrf.mxu0
  %v9709 = vpop.f32.mrf.mxu0
  %v9710 = vadd.f32 0.0, %v9709
  %v9711 = vpop.f32.mrf.mxu0
  %9712 = vdwg.mxu0
  %v9714 = vsel %vm2871, %v9265, 0
  %v9717 = vsel %vm2871, %v9266, 0
  %v9720 = vsel %vm2871, %v9267, 0
  %v9723 = vsel %vm2871, %v9268, 0
  %v9726 = vsel %vm2871, %v9269, 0
  %v9729 = vsel %vm2871, %v9270, 0
  %v9732 = vsel %vm4010, %v9298, 0
  %9734 = vmatprep.subr.bf16.mxu0 0
  %9735 = vmatpush1.bf16.msra.mxu0 0
  %9736 = vmatprep.subr.bf16.mxu0 0
  %9737 = vmatpush1.bf16.msra.mxu0 0
  %9738 = vmatprep.subr.bf16.mxu0 0
  %9739 = vmatpush1.bf16.msra.mxu0 0
  %9740 = vmatprep.subr.bf16.mxu0 0
  %9741 = vmatpush1.bf16.msra.mxu0 0
  %9742 = vmatprep.subr.bf16.mxu0 0
  %9743 = vmatpush1.bf16.msra.mxu0 0
  %9744 = vmatprep.subr.bf16.mxu0 0
  %9745 = vmatpush1.bf16.msra.mxu0 0
  %9746 = vmatprep.subr.bf16.mxu0 0
  %9747 = vmatpush1.bf16.msra.mxu0 %v9732
  %9748 = vmatprep.subr.bf16.mxu0 0
  %9749 = vmatpush1.bf16.msra.mxu0 %v9297
  %9750 = vmatprep.subr.bf16.mxu0 0
  %9751 = vmatpush2.bf16.msra.mxu0 0
  %9752 = vmatprep.subr.bf16.mxu0 0
  %9753 = vmatpush2.bf16.msra.mxu0 0
  %9754 = vmatprep.subr.bf16.mxu0 0
  %9755 = vmatpush2.bf16.msra.mxu0 0
  %9756 = vmatprep.subr.bf16.mxu0 0
  %9757 = vmatpush2.bf16.msra.mxu0 0
  %9758 = vmatprep.subr.bf16.mxu0 0
  %9759 = vmatpush2.bf16.msra.mxu0 0
  %9760 = vmatprep.subr.bf16.mxu0 0
  %9761 = vmatpush2.bf16.msra.mxu0 0
  %9762 = vmatprep.subr.bf16.mxu0 0
  %9763 = vmatpush2.bf16.msra.mxu0 0
  %9764 = vmatprep.subr.bf16.mxu0 0
  %9765 = vmatpush2.bf16.msra.mxu0 0
  %9766 = vmatprep.mubr.bf16.mxu0 0
  %9767 = vmatmul.mubr.bf16.gmra.mxu0 %v9714
  %v9768 = vpop.f32.mrf.mxu0
  %v9769 = vadd.f32 0.0, %v9768
  %v9770 = vpop.f32.mrf.mxu0
  %v9771 = vpop.f32.mrf.mxu0
  %v9772 = vadd.f32 0.0, %v9771
  %v9773 = vpop.f32.mrf.mxu0
  %9774 = vmatprep.mubr.bf16.mxu0 0
  %9775 = vmatmul.mubr.bf16.gmra.mxu0 %v9717
  %v9776 = vpop.f32.mrf.mxu0
  %v9777 = vadd.f32 0.0, %v9776
  %v9778 = vpop.f32.mrf.mxu0
  %v9779 = vpop.f32.mrf.mxu0
  %v9780 = vadd.f32 0.0, %v9779
  %v9781 = vpop.f32.mrf.mxu0
  %9782 = vmatprep.mubr.bf16.mxu0 0
  %9783 = vmatmul.mubr.bf16.gmra.mxu0 %v9720
  %v9784 = vpop.f32.mrf.mxu0
  %v9785 = vadd.f32 0.0, %v9784
  %v9786 = vpop.f32.mrf.mxu0
  %v9787 = vpop.f32.mrf.mxu0
  %v9788 = vadd.f32 0.0, %v9787
  %v9789 = vpop.f32.mrf.mxu0
  %9790 = vmatprep.mubr.bf16.mxu0 0
  %9791 = vmatmul.mubr.bf16.gmra.mxu0 %v9723
  %v9792 = vpop.f32.mrf.mxu0
  %v9793 = vadd.f32 0.0, %v9792
  %v9794 = vpop.f32.mrf.mxu0
  %v9795 = vpop.f32.mrf.mxu0
  %v9796 = vadd.f32 0.0, %v9795
  %v9797 = vpop.f32.mrf.mxu0
  %9798 = vmatprep.mubr.bf16.mxu0 0
  %9799 = vmatmul.mubr.bf16.gmra.mxu0 %v9726
  %v9800 = vpop.f32.mrf.mxu0
  %v9801 = vadd.f32 0.0, %v9800
  %v9802 = vpop.f32.mrf.mxu0
  %v9803 = vpop.f32.mrf.mxu0
  %v9804 = vadd.f32 0.0, %v9803
  %v9805 = vpop.f32.mrf.mxu0
  %9806 = vmatprep.mubr.bf16.mxu0 0
  %9807 = vmatmul.mubr.bf16.gmra.mxu0 %v9729
  %v9808 = vpop.f32.mrf.mxu0
  %v9809 = vadd.f32 0.0, %v9808
  %v9810 = vpop.f32.mrf.mxu0
  %v9811 = vpop.f32.mrf.mxu0
  %v9812 = vadd.f32 0.0, %v9811
  %v9813 = vpop.f32.mrf.mxu0
  %9814 = vdwg.mxu0
  %v9816 = vsel %vm2871, %v9271, 0
  %v9819 = vsel %vm2871, %v9272, 0
  %v9822 = vsel %vm2871, %v9273, 0
  %v9825 = vsel %vm2871, %v9274, 0
  %v9828 = vsel %vm2871, %v9275, 0
  %v9831 = vsel %vm2871, %v9276, 0
  %v9834 = vsel %vm4010, %v9300, 0
  %9836 = vmatprep.subr.bf16.mxu0 0
  %9837 = vmatpush1.bf16.msra.mxu0 0
  %9838 = vmatprep.subr.bf16.mxu0 0
  %9839 = vmatpush1.bf16.msra.mxu0 0
  %9840 = vmatprep.subr.bf16.mxu0 0
  %9841 = vmatpush1.bf16.msra.mxu0 0
  %9842 = vmatprep.subr.bf16.mxu0 0
  %9843 = vmatpush1.bf16.msra.mxu0 0
  %9844 = vmatprep.subr.bf16.mxu0 0
  %9845 = vmatpush1.bf16.msra.mxu0 0
  %9846 = vmatprep.subr.bf16.mxu0 0
  %9847 = vmatpush1.bf16.msra.mxu0 0
  %9848 = vmatprep.subr.bf16.mxu0 0
  %9849 = vmatpush1.bf16.msra.mxu0 %v9834
  %9850 = vmatprep.subr.bf16.mxu0 0
  %9851 = vmatpush1.bf16.msra.mxu0 %v9299
  %9852 = vmatprep.subr.bf16.mxu0 0
  %9853 = vmatpush2.bf16.msra.mxu0 0
  %9854 = vmatprep.subr.bf16.mxu0 0
  %9855 = vmatpush2.bf16.msra.mxu0 0
  %9856 = vmatprep.subr.bf16.mxu0 0
  %9857 = vmatpush2.bf16.msra.mxu0 0
  %9858 = vmatprep.subr.bf16.mxu0 0
  %9859 = vmatpush2.bf16.msra.mxu0 0
  %9860 = vmatprep.subr.bf16.mxu0 0
  %9861 = vmatpush2.bf16.msra.mxu0 0
  %9862 = vmatprep.subr.bf16.mxu0 0
  %9863 = vmatpush2.bf16.msra.mxu0 0
  %9864 = vmatprep.subr.bf16.mxu0 0
  %9865 = vmatpush2.bf16.msra.mxu0 0
  %9866 = vmatprep.subr.bf16.mxu0 0
  %9867 = vmatpush2.bf16.msra.mxu0 0
  %9868 = vmatprep.mubr.bf16.mxu0 0
  %9869 = vmatmul.mubr.bf16.gmra.mxu0 %v9816
  %v9870 = vpop.f32.mrf.mxu0
  %v9871 = vadd.f32 0.0, %v9870
  %v9872 = vpop.f32.mrf.mxu0
  %v9873 = vpop.f32.mrf.mxu0
  %v9874 = vadd.f32 0.0, %v9873
  %v9875 = vpop.f32.mrf.mxu0
  %9876 = vmatprep.mubr.bf16.mxu0 0
  %9877 = vmatmul.mubr.bf16.gmra.mxu0 %v9819
  %v9878 = vpop.f32.mrf.mxu0
  %v9879 = vadd.f32 0.0, %v9878
  %v9880 = vpop.f32.mrf.mxu0
  %v9881 = vpop.f32.mrf.mxu0
  %v9882 = vadd.f32 0.0, %v9881
  %v9883 = vpop.f32.mrf.mxu0
  %9884 = vmatprep.mubr.bf16.mxu0 0
  %9885 = vmatmul.mubr.bf16.gmra.mxu0 %v9822
  %v9886 = vpop.f32.mrf.mxu0
  %v9887 = vadd.f32 0.0, %v9886
  %v9888 = vpop.f32.mrf.mxu0
  %v9889 = vpop.f32.mrf.mxu0
  %v9890 = vadd.f32 0.0, %v9889
  %v9891 = vpop.f32.mrf.mxu0
  %9892 = vmatprep.mubr.bf16.mxu0 0
  %9893 = vmatmul.mubr.bf16.gmra.mxu0 %v9825
  %v9894 = vpop.f32.mrf.mxu0
  %v9895 = vadd.f32 0.0, %v9894
  %v9896 = vpop.f32.mrf.mxu0
  %v9897 = vpop.f32.mrf.mxu0
  %v9898 = vadd.f32 0.0, %v9897
  %v9899 = vpop.f32.mrf.mxu0
  %9900 = vmatprep.mubr.bf16.mxu0 0
  %9901 = vmatmul.mubr.bf16.gmra.mxu0 %v9828
  %v9902 = vpop.f32.mrf.mxu0
  %v9903 = vadd.f32 0.0, %v9902
  %v9904 = vpop.f32.mrf.mxu0
  %v9905 = vpop.f32.mrf.mxu0
  %v9906 = vadd.f32 0.0, %v9905
  %v9907 = vpop.f32.mrf.mxu0
  %9908 = vmatprep.mubr.bf16.mxu0 0
  %9909 = vmatmul.mubr.bf16.gmra.mxu0 %v9831
  %v9910 = vpop.f32.mrf.mxu0
  %v9911 = vadd.f32 0.0, %v9910
  %v9912 = vpop.f32.mrf.mxu0
  %v9913 = vpop.f32.mrf.mxu0
  %v9914 = vadd.f32 0.0, %v9913
  %v9915 = vpop.f32.mrf.mxu0
  %9916 = vdwg.mxu0
  %v9918 = vsel %vm2871, %v9277, 0
  %v9921 = vsel %vm2871, %v9278, 0
  %v9924 = vsel %vm2871, %v9279, 0
  %v9927 = vsel %vm2871, %v9280, 0
  %v9930 = vsel %vm2871, %v9281, 0
  %v9933 = vsel %vm2871, %v9282, 0
  %v9936 = vsel %vm4010, %v9302, 0
  %9938 = vmatprep.subr.bf16.mxu0 0
  %9939 = vmatpush1.bf16.msra.mxu0 0
  %9940 = vmatprep.subr.bf16.mxu0 0
  %9941 = vmatpush1.bf16.msra.mxu0 0
  %9942 = vmatprep.subr.bf16.mxu0 0
  %9943 = vmatpush1.bf16.msra.mxu0 0
  %9944 = vmatprep.subr.bf16.mxu0 0
  %9945 = vmatpush1.bf16.msra.mxu0 0
  %9946 = vmatprep.subr.bf16.mxu0 0
  %9947 = vmatpush1.bf16.msra.mxu0 0
  %9948 = vmatprep.subr.bf16.mxu0 0
  %9949 = vmatpush1.bf16.msra.mxu0 0
  %9950 = vmatprep.subr.bf16.mxu0 0
  %9951 = vmatpush1.bf16.msra.mxu0 %v9936
  %9952 = vmatprep.subr.bf16.mxu0 0
  %9953 = vmatpush1.bf16.msra.mxu0 %v9301
  %9954 = vmatprep.subr.bf16.mxu0 0
  %9955 = vmatpush2.bf16.msra.mxu0 0
  %9956 = vmatprep.subr.bf16.mxu0 0
  %9957 = vmatpush2.bf16.msra.mxu0 0
  %9958 = vmatprep.subr.bf16.mxu0 0
  %9959 = vmatpush2.bf16.msra.mxu0 0
  %9960 = vmatprep.subr.bf16.mxu0 0
  %9961 = vmatpush2.bf16.msra.mxu0 0
  %9962 = vmatprep.subr.bf16.mxu0 0
  %9963 = vmatpush2.bf16.msra.mxu0 0
  %9964 = vmatprep.subr.bf16.mxu0 0
  %9965 = vmatpush2.bf16.msra.mxu0 0
  %9966 = vmatprep.subr.bf16.mxu0 0
  %9967 = vmatpush2.bf16.msra.mxu0 0
  %9968 = vmatprep.subr.bf16.mxu0 0
  %9969 = vmatpush2.bf16.msra.mxu0 0
  %9970 = vmatprep.mubr.bf16.mxu0 0
  %9971 = vmatmul.mubr.bf16.gmra.mxu0 %v9918
  %v9972 = vpop.f32.mrf.mxu0
  %v9973 = vadd.f32 0.0, %v9972
  %v9974 = vpop.f32.mrf.mxu0
  %v9975 = vpop.f32.mrf.mxu0
  %v9976 = vadd.f32 0.0, %v9975
  %v9977 = vpop.f32.mrf.mxu0
  %9978 = vmatprep.mubr.bf16.mxu0 0
  %9979 = vmatmul.mubr.bf16.gmra.mxu0 %v9921
  %v9980 = vpop.f32.mrf.mxu0
  %v9981 = vadd.f32 0.0, %v9980
  %v9982 = vpop.f32.mrf.mxu0
  %v9983 = vpop.f32.mrf.mxu0
  %v9984 = vadd.f32 0.0, %v9983
  %v9985 = vpop.f32.mrf.mxu0
  %9986 = vmatprep.mubr.bf16.mxu0 0
  %9987 = vmatmul.mubr.bf16.gmra.mxu0 %v9924
  %v9988 = vpop.f32.mrf.mxu0
  %v9989 = vadd.f32 0.0, %v9988
  %v9990 = vpop.f32.mrf.mxu0
  %v9991 = vpop.f32.mrf.mxu0
  %v9992 = vadd.f32 0.0, %v9991
  %v9993 = vpop.f32.mrf.mxu0
  %9994 = vmatprep.mubr.bf16.mxu0 0
  %9995 = vmatmul.mubr.bf16.gmra.mxu0 %v9927
  %v9996 = vpop.f32.mrf.mxu0
  %v9997 = vadd.f32 0.0, %v9996
  %v9998 = vpop.f32.mrf.mxu0
  %v9999 = vpop.f32.mrf.mxu0
  %v10000 = vadd.f32 0.0, %v9999
  %v10001 = vpop.f32.mrf.mxu0
  %10002 = vmatprep.mubr.bf16.mxu0 0
  %10003 = vmatmul.mubr.bf16.gmra.mxu0 %v9930
  %v10004 = vpop.f32.mrf.mxu0
  %v10005 = vadd.f32 0.0, %v10004
  %v10006 = vpop.f32.mrf.mxu0
  %v10007 = vpop.f32.mrf.mxu0
  %v10008 = vadd.f32 0.0, %v10007
  %v10009 = vpop.f32.mrf.mxu0
  %10010 = vmatprep.mubr.bf16.mxu0 0
  %10011 = vmatmul.mubr.bf16.gmra.mxu0 %v9933
  %v10012 = vpop.f32.mrf.mxu0
  %v10013 = vadd.f32 0.0, %v10012
  %v10014 = vpop.f32.mrf.mxu0
  %v10015 = vpop.f32.mrf.mxu0
  %v10016 = vadd.f32 0.0, %v10015
  %v10017 = vpop.f32.mrf.mxu0
  %10018 = vdwg.mxu0
  %v10020 = vsel %vm2871, %v9283, 0
  %v10023 = vsel %vm2871, %v9284, 0
  %v10026 = vsel %vm2871, %v9285, 0
  %v10029 = vsel %vm2871, %v9286, 0
  %v10032 = vsel %vm2871, %v9287, 0
  %v10035 = vsel %vm2871, %v9288, 0
  %v10038 = vsel %vm4010, %v9304, 0
  %10040 = vmatprep.subr.bf16.mxu0 0
  %10041 = vmatpush1.bf16.msra.mxu0 0
  %10042 = vmatprep.subr.bf16.mxu0 0
  %10043 = vmatpush1.bf16.msra.mxu0 0
  %10044 = vmatprep.subr.bf16.mxu0 0
  %10045 = vmatpush1.bf16.msra.mxu0 0
  %10046 = vmatprep.subr.bf16.mxu0 0
  %10047 = vmatpush1.bf16.msra.mxu0 0
  %10048 = vmatprep.subr.bf16.mxu0 0
  %10049 = vmatpush1.bf16.msra.mxu0 0
  %10050 = vmatprep.subr.bf16.mxu0 0
  %10051 = vmatpush1.bf16.msra.mxu0 0
  %10052 = vmatprep.subr.bf16.mxu0 0
  %10053 = vmatpush1.bf16.msra.mxu0 %v10038
  %10054 = vmatprep.subr.bf16.mxu0 0
  %10055 = vmatpush1.bf16.msra.mxu0 %v9303
  %10056 = vmatprep.subr.bf16.mxu0 0
  %10057 = vmatpush2.bf16.msra.mxu0 0
  %10058 = vmatprep.subr.bf16.mxu0 0
  %10059 = vmatpush2.bf16.msra.mxu0 0
  %10060 = vmatprep.subr.bf16.mxu0 0
  %10061 = vmatpush2.bf16.msra.mxu0 0
  %10062 = vmatprep.subr.bf16.mxu0 0
  %10063 = vmatpush2.bf16.msra.mxu0 0
  %10064 = vmatprep.subr.bf16.mxu0 0
  %10065 = vmatpush2.bf16.msra.mxu0 0
  %10066 = vmatprep.subr.bf16.mxu0 0
  %10067 = vmatpush2.bf16.msra.mxu0 0
  %10068 = vmatprep.subr.bf16.mxu0 0
  %10069 = vmatpush2.bf16.msra.mxu0 0
  %10070 = vmatprep.subr.bf16.mxu0 0
  %10071 = vmatpush2.bf16.msra.mxu0 0
  %10072 = vmatprep.mubr.bf16.mxu0 0
  %10073 = vmatmul.mubr.bf16.gmra.mxu0 %v10020
  %v10074 = vpop.f32.mrf.mxu0
  %v10075 = vadd.f32 0.0, %v10074
  %v10076 = vpop.f32.mrf.mxu0
  %v10077 = vpop.f32.mrf.mxu0
  %v10078 = vadd.f32 0.0, %v10077
  %v10079 = vpop.f32.mrf.mxu0
  %10080 = vmatprep.mubr.bf16.mxu0 0
  %10081 = vmatmul.mubr.bf16.gmra.mxu0 %v10023
  %v10082 = vpop.f32.mrf.mxu0
  %v10083 = vadd.f32 0.0, %v10082
  %v10084 = vpop.f32.mrf.mxu0
  %v10085 = vpop.f32.mrf.mxu0
  %v10086 = vadd.f32 0.0, %v10085
  %v10087 = vpop.f32.mrf.mxu0
  %10088 = vmatprep.mubr.bf16.mxu0 0
  %10089 = vmatmul.mubr.bf16.gmra.mxu0 %v10026
  %v10090 = vpop.f32.mrf.mxu0
  %v10091 = vadd.f32 0.0, %v10090
  %v10092 = vpop.f32.mrf.mxu0
  %v10093 = vpop.f32.mrf.mxu0
  %v10094 = vadd.f32 0.0, %v10093
  %v10095 = vpop.f32.mrf.mxu0
  %10096 = vmatprep.mubr.bf16.mxu0 0
  %10097 = vmatmul.mubr.bf16.gmra.mxu0 %v10029
  %v10098 = vpop.f32.mrf.mxu0
  %v10099 = vadd.f32 0.0, %v10098
  %v10100 = vpop.f32.mrf.mxu0
  %v10101 = vpop.f32.mrf.mxu0
  %v10102 = vadd.f32 0.0, %v10101
  %v10103 = vpop.f32.mrf.mxu0
  %10104 = vmatprep.mubr.bf16.mxu0 0
  %10105 = vmatmul.mubr.bf16.gmra.mxu0 %v10032
  %v10106 = vpop.f32.mrf.mxu0
  %v10107 = vadd.f32 0.0, %v10106
  %v10108 = vpop.f32.mrf.mxu0
  %v10109 = vpop.f32.mrf.mxu0
  %v10110 = vadd.f32 0.0, %v10109
  %v10111 = vpop.f32.mrf.mxu0
  %10112 = vmatprep.mubr.bf16.mxu0 0
  %10113 = vmatmul.mubr.bf16.gmra.mxu0 %v10035
  %v10114 = vpop.f32.mrf.mxu0
  %v10115 = vadd.f32 0.0, %v10114
  %v10116 = vpop.f32.mrf.mxu0
  %v10117 = vpop.f32.mrf.mxu0
  %v10118 = vadd.f32 0.0, %v10117
  %v10119 = vpop.f32.mrf.mxu0
  %10120 = vdwg.mxu0
  %v10121 = vsel %vm1769, %v9361, 0.0
  %v10122 = vsel %vm1769, %v9364, 0.0
  %v10123 = vsel %vm1769, %v9369, 0.0
  %v10124 = vsel %vm1770, %v9372, 0.0
  %v10125 = vsel %vm1770, %v9377, 0.0
  %v10126 = vsel %vm1770, %v9380, 0.0
  %v10127 = vsel %vm1771, %v9385, 0.0
  %v10128 = vsel %vm1771, %v9388, 0.0
  %v10129 = vsel %vm1771, %v9393, 0.0
  %v10130 = vsel %vm1772, %v9396, 0.0
  %v10131 = vsel %vm1772, %v9401, 0.0
  %v10132 = vsel %vm1772, %v9404, 0.0
  %v10133 = vsel %vm1769, %v9463, 0.0
  %v10134 = vsel %vm1769, %v9466, 0.0
  %v10135 = vsel %vm1769, %v9471, 0.0
  %v10136 = vsel %vm1770, %v9474, 0.0
  %v10137 = vsel %vm1770, %v9479, 0.0
  %v10138 = vsel %vm1770, %v9482, 0.0
  %v10139 = vsel %vm1771, %v9487, 0.0
  %v10140 = vsel %vm1771, %v9490, 0.0
  %v10141 = vsel %vm1771, %v9495, 0.0
  %v10142 = vsel %vm1772, %v9498, 0.0
  %v10143 = vsel %vm1772, %v9503, 0.0
  %v10144 = vsel %vm1772, %v9506, 0.0
  %v10145 = vsel %vm1769, %v9565, 0.0
  %v10146 = vsel %vm1769, %v9568, 0.0
  %v10147 = vsel %vm1769, %v9573, 0.0
  %v10148 = vsel %vm1770, %v9576, 0.0
  %v10149 = vsel %vm1770, %v9581, 0.0
  %v10150 = vsel %vm1770, %v9584, 0.0
  %v10151 = vsel %vm1771, %v9589, 0.0
  %v10152 = vsel %vm1771, %v9592, 0.0
  %v10153 = vsel %vm1771, %v9597, 0.0
  %v10154 = vsel %vm1772, %v9600, 0.0
  %v10155 = vsel %vm1772, %v9605, 0.0
  %v10156 = vsel %vm1772, %v9608, 0.0
  %v10157 = vsel %vm1769, %v9667, 0.0
  %v10158 = vsel %vm1769, %v9670, 0.0
  %v10159 = vsel %vm1769, %v9675, 0.0
  %v10160 = vsel %vm1770, %v9678, 0.0
  %v10161 = vsel %vm1770, %v9683, 0.0
  %v10162 = vsel %vm1770, %v9686, 0.0
  %v10163 = vsel %vm1771, %v9691, 0.0
  %v10164 = vsel %vm1771, %v9694, 0.0
  %v10165 = vsel %vm1771, %v9699, 0.0
  %v10166 = vsel %vm1772, %v9702, 0.0
  %v10167 = vsel %vm1772, %v9707, 0.0
  %v10168 = vsel %vm1772, %v9710, 0.0
  %v10169 = vsel %vm1769, %v9769, 0.0
  %v10170 = vsel %vm1769, %v9772, 0.0
  %v10171 = vsel %vm1769, %v9777, 0.0
  %v10172 = vsel %vm1770, %v9780, 0.0
  %v10173 = vsel %vm1770, %v9785, 0.0
  %v10174 = vsel %vm1770, %v9788, 0.0
  %v10175 = vsel %vm1771, %v9793, 0.0
  %v10176 = vsel %vm1771, %v9796, 0.0
  %v10177 = vsel %vm1771, %v9801, 0.0
  %v10178 = vsel %vm1772, %v9804, 0.0
  %v10179 = vsel %vm1772, %v9809, 0.0
  %v10180 = vsel %vm1772, %v9812, 0.0
  %v10181 = vsel %vm1769, %v9871, 0.0
  %v10182 = vsel %vm1769, %v9874, 0.0
  %v10183 = vsel %vm1769, %v9879, 0.0
  %v10184 = vsel %vm1770, %v9882, 0.0
  %v10185 = vsel %vm1770, %v9887, 0.0
  %v10186 = vsel %vm1770, %v9890, 0.0
  %v10187 = vsel %vm1771, %v9895, 0.0
  %v10188 = vsel %vm1771, %v9898, 0.0
  %v10189 = vsel %vm1771, %v9903, 0.0
  %v10190 = vsel %vm1772, %v9906, 0.0
  %v10191 = vsel %vm1772, %v9911, 0.0
  %v10192 = vsel %vm1772, %v9914, 0.0
  %v10193 = vsel %vm1769, %v9973, 0.0
  %v10194 = vsel %vm1769, %v9976, 0.0
  %v10195 = vsel %vm1769, %v9981, 0.0
  %v10196 = vsel %vm1770, %v9984, 0.0
  %v10197 = vsel %vm1770, %v9989, 0.0
  %v10198 = vsel %vm1770, %v9992, 0.0
  %v10199 = vsel %vm1771, %v9997, 0.0
  %v10200 = vsel %vm1771, %v10000, 0.0
  %v10201 = vsel %vm1771, %v10005, 0.0
  %v10202 = vsel %vm1772, %v10008, 0.0
  %v10203 = vsel %vm1772, %v10013, 0.0
  %v10204 = vsel %vm1772, %v10016, 0.0
  %v10205 = vsel %vm1769, %v10075, 0.0
  %v10206 = vsel %vm1769, %v10078, 0.0
  %v10207 = vsel %vm1769, %v10083, 0.0
  %v10208 = vsel %vm1770, %v10086, 0.0
  %v10209 = vsel %vm1770, %v10091, 0.0
  %v10210 = vsel %vm1770, %v10094, 0.0
  %v10211 = vsel %vm1771, %v10099, 0.0
  %v10212 = vsel %vm1771, %v10102, 0.0
  %v10213 = vsel %vm1771, %v10107, 0.0
  %v10214 = vsel %vm1772, %v10110, 0.0
  %v10215 = vsel %vm1772, %v10115, 0.0
  %v10216 = vsel %vm1772, %v10118, 0.0
  %v10217 = vadd.f32 %v10121, %v10124
  %v10218 = vadd.f32 %v10122, %v10125
  %v10219 = vadd.f32 %v10123, %v10126
  %v10220 = vadd.f32 %v10133, %v10136
  %v10221 = vadd.f32 %v10134, %v10137
  %v10222 = vadd.f32 %v10135, %v10138
  %v10223 = vadd.f32 %v10145, %v10148
  %v10224 = vadd.f32 %v10146, %v10149
  %v10225 = vadd.f32 %v10147, %v10150
  %v10226 = vadd.f32 %v10157, %v10160
  %v10227 = vadd.f32 %v10158, %v10161
  %v10228 = vadd.f32 %v10159, %v10162
  %v10229 = vadd.f32 %v10169, %v10172
  %v10230 = vadd.f32 %v10170, %v10173
  %v10231 = vadd.f32 %v10171, %v10174
  %v10232 = vadd.f32 %v10181, %v10184
  %v10233 = vadd.f32 %v10182, %v10185
  %v10234 = vadd.f32 %v10183, %v10186
  %v10235 = vadd.f32 %v10193, %v10196
  %v10236 = vadd.f32 %v10194, %v10197
  %v10237 = vadd.f32 %v10195, %v10198
  %v10238 = vadd.f32 %v10205, %v10208
  %v10239 = vadd.f32 %v10206, %v10209
  %v10240 = vadd.f32 %v10207, %v10210
  %v10241 = vadd.f32 %v10217, %v10127
  %v10242 = vadd.f32 %v10218, %v10128
  %v10243 = vadd.f32 %v10219, %v10129
  %v10244 = vadd.f32 %v10220, %v10139
  %v10245 = vadd.f32 %v10221, %v10140
  %v10246 = vadd.f32 %v10222, %v10141
  %v10247 = vadd.f32 %v10223, %v10151
  %v10248 = vadd.f32 %v10224, %v10152
  %v10249 = vadd.f32 %v10225, %v10153
  %v10250 = vadd.f32 %v10226, %v10163
  %v10251 = vadd.f32 %v10227, %v10164
  %v10252 = vadd.f32 %v10228, %v10165
  %v10253 = vadd.f32 %v10229, %v10175
  %v10254 = vadd.f32 %v10230, %v10176
  %v10255 = vadd.f32 %v10231, %v10177
  %v10256 = vadd.f32 %v10232, %v10187
  %v10257 = vadd.f32 %v10233, %v10188
  %v10258 = vadd.f32 %v10234, %v10189
  %v10259 = vadd.f32 %v10235, %v10199
  %v10260 = vadd.f32 %v10236, %v10200
  %v10261 = vadd.f32 %v10237, %v10201
  %v10262 = vadd.f32 %v10238, %v10211
  %v10263 = vadd.f32 %v10239, %v10212
  %v10264 = vadd.f32 %v10240, %v10213
  %v10265 = vadd.f32 %v10241, %v10130
  %v10266 = vadd.f32 %v10242, %v10131
  %v10267 = vadd.f32 %v10243, %v10132
  %v10268 = vadd.f32 %v10244, %v10142
  %v10269 = vadd.f32 %v10245, %v10143
  %v10270 = vadd.f32 %v10246, %v10144
  %v10271 = vadd.f32 %v10247, %v10154
  %v10272 = vadd.f32 %v10248, %v10155
  %v10273 = vadd.f32 %v10249, %v10156
  %v10274 = vadd.f32 %v10250, %v10166
  %v10275 = vadd.f32 %v10251, %v10167
  %v10276 = vadd.f32 %v10252, %v10168
  %v10277 = vadd.f32 %v10253, %v10178
  %v10278 = vadd.f32 %v10254, %v10179
  %v10279 = vadd.f32 %v10255, %v10180
  %v10280 = vadd.f32 %v10256, %v10190
  %v10281 = vadd.f32 %v10257, %v10191
  %v10282 = vadd.f32 %v10258, %v10192
  %v10283 = vadd.f32 %v10259, %v10202
  %v10284 = vadd.f32 %v10260, %v10203
  %v10285 = vadd.f32 %v10261, %v10204
  %v10286 = vadd.f32 %v10262, %v10214
  %v10287 = vadd.f32 %v10263, %v10215
  %v10288 = vadd.f32 %v10264, %v10216
  %v10289 = vpack.c.bf16 %v10266, %v10265
  %v10290 = vpack.c.bf16 %v10268, %v10267
  %v10291 = vpack.c.bf16 %v10270, %v10269
  %v10292 = vpack.c.bf16 %v10272, %v10271
  %v10293 = vpack.c.bf16 %v10274, %v10273
  %v10294 = vpack.c.bf16 %v10276, %v10275
  %v10295 = vpack.c.bf16 %v10278, %v10277
  %v10296 = vpack.c.bf16 %v10280, %v10279
  %v10297 = vpack.c.bf16 %v10282, %v10281
  %v10298 = vpack.c.bf16 %v10284, %v10283
  %v10299 = vpack.c.bf16 %v10286, %v10285
  %v10300 = vpack.c.bf16 %v10288, %v10287
  %s10301 = scalar_lea.vmem %s11, 16
  %v10302 = vld [vmem:[%s10301] sm:$0xf]
  %v10303 = vld [vmem:[%s10301 + $0x4] sm:$0xf]
  %v10304 = vld [vmem:[%s10301 + $0x8] sm:$0xf]
  %v10305 = vld [vmem:[%s10301 + $0xc] sm:$0xf]
  %s10306 = scalar_lea.vmem %s12, 1
  %v10307 = vld [vmem:[%s10306] sm:$0x1]
  %v10309 = vlaneseq
  %v10310 = vshrl.u32 %v10309, 7
  %v10311 = vsub.s32 0, %v10310
  %v10312 = vrot.slane %v10307, %v10311
  %v10318 = vunpack.c.l.b16 %v10302
  %v10319 = vunpack.c.l.b16 %v10303
  %v10320 = vunpack.c.l.b16 %v10304
  %v10321 = vunpack.c.l.b16 %v10305
  %v10322 = vpack.c.b16 %v10319, %v10318
  %v10323 = vpack.c.b16 %v10321, %v10320
  %v10327 = vsel %vm498, %v10289, 0
  %v10330 = vsel %vm498, %v10290, 0
  %v10333 = vsel %vm498, %v10291, 0
  %v10336 = vsel %vm498, %v10292, 0
  %v10339 = vsel %vm498, %v10293, 0
  %v10342 = vsel %vm498, %v10294, 0
  %v10345 = vsel %vm498, %v10295, 0
  %v10348 = vsel %vm498, %v10296, 0
  %v10351 = vsel %vm498, %v10297, 0
  %v10354 = vsel %vm498, %v10298, 0
  %v10357 = vsel %vm498, %v10299, 0
  %v10360 = vsel %vm498, %v10300, 0
  %10362 = vmatprep.subr.bf16.mxu0 0
  %10363 = vmatpush1.bf16.msra.mxu0 0
  %10364 = vmatprep.subr.bf16.mxu0 0
  %10365 = vmatpush1.bf16.msra.mxu0 0
  %10366 = vmatprep.subr.bf16.mxu0 0
  %10367 = vmatpush1.bf16.msra.mxu0 0
  %10368 = vmatprep.subr.bf16.mxu0 0
  %10369 = vmatpush1.bf16.msra.mxu0 0
  %10370 = vmatprep.subr.bf16.mxu0 0
  %10371 = vmatpush1.bf16.msra.mxu0 0
  %10372 = vmatprep.subr.bf16.mxu0 0
  %10373 = vmatpush1.bf16.msra.mxu0 0
  %10374 = vmatprep.subr.bf16.mxu0 0
  %10375 = vmatpush1.bf16.msra.mxu0 %v10323
  %10376 = vmatprep.subr.bf16.mxu0 0
  %10377 = vmatpush1.bf16.msra.mxu0 %v10322
  %10378 = vmatprep.subr.bf16.mxu0 0
  %10379 = vmatpush2.bf16.msra.mxu0 0
  %10380 = vmatprep.subr.bf16.mxu0 0
  %10381 = vmatpush2.bf16.msra.mxu0 0
  %10382 = vmatprep.subr.bf16.mxu0 0
  %10383 = vmatpush2.bf16.msra.mxu0 0
  %10384 = vmatprep.subr.bf16.mxu0 0
  %10385 = vmatpush2.bf16.msra.mxu0 0
  %10386 = vmatprep.subr.bf16.mxu0 0
  %10387 = vmatpush2.bf16.msra.mxu0 0
  %10388 = vmatprep.subr.bf16.mxu0 0
  %10389 = vmatpush2.bf16.msra.mxu0 0
  %10390 = vmatprep.subr.bf16.mxu0 0
  %10391 = vmatpush2.bf16.msra.mxu0 0
  %10392 = vmatprep.subr.bf16.mxu0 0
  %10393 = vmatpush2.bf16.msra.mxu0 0
  %10394 = vmatprep.mubr.bf16.mxu0 0
  %10395 = vmatmul.mubr.bf16.gmra.mxu0 %v10327
  %v10396 = vpop.f32.mrf.mxu0
  %v10397 = vadd.f32 %v10312, %v10396
  %v10398 = vpop.f32.mrf.mxu0
  %v10399 = vpop.f32.mrf.mxu0
  %v10400 = vadd.f32 %v10312, %v10399
  %v10401 = vpop.f32.mrf.mxu0
  %10402 = vmatprep.mubr.bf16.mxu0 0
  %10403 = vmatmul.mubr.bf16.gmra.mxu0 %v10330
  %v10404 = vpop.f32.mrf.mxu0
  %v10405 = vadd.f32 %v10312, %v10404
  %v10406 = vpop.f32.mrf.mxu0
  %v10407 = vpop.f32.mrf.mxu0
  %v10408 = vadd.f32 %v10312, %v10407
  %v10409 = vpop.f32.mrf.mxu0
  %10410 = vmatprep.mubr.bf16.mxu0 0
  %10411 = vmatmul.mubr.bf16.gmra.mxu0 %v10333
  %v10412 = vpop.f32.mrf.mxu0
  %v10413 = vadd.f32 %v10312, %v10412
  %v10414 = vpop.f32.mrf.mxu0
  %v10415 = vpop.f32.mrf.mxu0
  %v10416 = vadd.f32 %v10312, %v10415
  %v10417 = vpop.f32.mrf.mxu0
  %10418 = vmatprep.mubr.bf16.mxu0 0
  %10419 = vmatmul.mubr.bf16.gmra.mxu0 %v10336
  %v10420 = vpop.f32.mrf.mxu0
  %v10421 = vadd.f32 %v10312, %v10420
  %v10422 = vpop.f32.mrf.mxu0
  %v10423 = vpop.f32.mrf.mxu0
  %v10424 = vadd.f32 %v10312, %v10423
  %v10425 = vpop.f32.mrf.mxu0
  %10426 = vmatprep.mubr.bf16.mxu0 0
  %10427 = vmatmul.mubr.bf16.gmra.mxu0 %v10339
  %v10428 = vpop.f32.mrf.mxu0
  %v10429 = vadd.f32 %v10312, %v10428
  %v10430 = vpop.f32.mrf.mxu0
  %v10431 = vpop.f32.mrf.mxu0
  %v10432 = vadd.f32 %v10312, %v10431
  %v10433 = vpop.f32.mrf.mxu0
  %10434 = vmatprep.mubr.bf16.mxu0 0
  %10435 = vmatmul.mubr.bf16.gmra.mxu0 %v10342
  %v10436 = vpop.f32.mrf.mxu0
  %v10437 = vadd.f32 %v10312, %v10436
  %v10438 = vpop.f32.mrf.mxu0
  %v10439 = vpop.f32.mrf.mxu0
  %v10440 = vadd.f32 %v10312, %v10439
  %v10441 = vpop.f32.mrf.mxu0
  %10442 = vmatprep.mubr.bf16.mxu0 0
  %10443 = vmatmul.mubr.bf16.gmra.mxu0 %v10345
  %v10444 = vpop.f32.mrf.mxu0
  %v10445 = vadd.f32 %v10312, %v10444
  %v10446 = vpop.f32.mrf.mxu0
  %v10447 = vpop.f32.mrf.mxu0
  %v10448 = vadd.f32 %v10312, %v10447
  %v10449 = vpop.f32.mrf.mxu0
  %10450 = vmatprep.mubr.bf16.mxu0 0
  %10451 = vmatmul.mubr.bf16.gmra.mxu0 %v10348
  %v10452 = vpop.f32.mrf.mxu0
  %v10453 = vadd.f32 %v10312, %v10452
  %v10454 = vpop.f32.mrf.mxu0
  %v10455 = vpop.f32.mrf.mxu0
  %v10456 = vadd.f32 %v10312, %v10455
  %v10457 = vpop.f32.mrf.mxu0
  %10458 = vmatprep.mubr.bf16.mxu0 0
  %10459 = vmatmul.mubr.bf16.gmra.mxu0 %v10351
  %v10460 = vpop.f32.mrf.mxu0
  %v10461 = vadd.f32 %v10312, %v10460
  %v10462 = vpop.f32.mrf.mxu0
  %v10463 = vpop.f32.mrf.mxu0
  %v10464 = vadd.f32 %v10312, %v10463
  %v10465 = vpop.f32.mrf.mxu0
  %10466 = vmatprep.mubr.bf16.mxu0 0
  %10467 = vmatmul.mubr.bf16.gmra.mxu0 %v10354
  %v10468 = vpop.f32.mrf.mxu0
  %v10469 = vadd.f32 %v10312, %v10468
  %v10470 = vpop.f32.mrf.mxu0
  %v10471 = vpop.f32.mrf.mxu0
  %v10472 = vadd.f32 %v10312, %v10471
  %v10473 = vpop.f32.mrf.mxu0
  %10474 = vmatprep.mubr.bf16.mxu0 0
  %10475 = vmatmul.mubr.bf16.gmra.mxu0 %v10357
  %v10476 = vpop.f32.mrf.mxu0
  %v10477 = vadd.f32 %v10312, %v10476
  %v10478 = vpop.f32.mrf.mxu0
  %v10479 = vpop.f32.mrf.mxu0
  %v10480 = vadd.f32 %v10312, %v10479
  %v10481 = vpop.f32.mrf.mxu0
  %10482 = vmatprep.mubr.bf16.mxu0 0
  %10483 = vmatmul.mubr.bf16.gmra.mxu0 %v10360
  %v10484 = vpop.f32.mrf.mxu0
  %v10485 = vadd.f32 %v10312, %v10484
  %v10486 = vpop.f32.mrf.mxu0
  %v10487 = vpop.f32.mrf.mxu0
  %v10488 = vadd.f32 %v10312, %v10487
  %v10489 = vpop.f32.mrf.mxu0
  %10490 = vdwg.mxu0
  %v10491 = vadd.f32 %v6179, %v10397
  %v10492 = vadd.f32 %v6180, %v10400
  %v10493 = vadd.f32 %v6181, %v10405
  %v10494 = vadd.f32 %v6182, %v10408
  %v10495 = vadd.f32 %v6183, %v10413
  %v10496 = vadd.f32 %v6184, %v10416
  %v10497 = vadd.f32 %v6185, %v10421
  %v10498 = vadd.f32 %v6186, %v10424
  %v10499 = vadd.f32 %v6187, %v10429
  %v10500 = vadd.f32 %v6188, %v10432
  %v10501 = vadd.f32 %v6189, %v10437
  %v10502 = vadd.f32 %v6190, %v10440
  %v10503 = vadd.f32 %v6191, %v10445
  %v10504 = vadd.f32 %v6192, %v10448
  %v10505 = vadd.f32 %v6193, %v10453
  %v10506 = vadd.f32 %v6194, %v10456
  %v10507 = vadd.f32 %v6195, %v10461
  %v10508 = vadd.f32 %v6196, %v10464
  %v10509 = vadd.f32 %v6197, %v10469
  %v10510 = vadd.f32 %v6198, %v10472
  %v10511 = vadd.f32 %v6199, %v10477
  %v10512 = vadd.f32 %v6200, %v10480
  %v10513 = vadd.f32 %v6201, %v10485
  %v10514 = vadd.f32 %v6202, %v10488
  %s10515 = scalar_lea.vmem %s15, 1
  %v10516 = vld [vmem:[%s10515] sm:$0x1]
  %s10517 = scalar_lea.vmem %s16, 1
  %v10518 = vld [vmem:[%s10517] sm:$0x1]
  %v10519 = vsel %vm498, %v10491, 0.0
  %10520 = vadd.xlane.f32.xlu0 %v10519
  %v10521 = vpop.xlane.xlu0 %10520
  %v10522 = vsel %vm498, %v10492, 0.0
  %10523 = vadd.xlane.f32.xlu0 %v10522
  %v10524 = vpop.xlane.xlu0 %10523
  %v10525 = vsel %vm498, %v10493, 0.0
  %10526 = vadd.xlane.f32.xlu0 %v10525
  %v10527 = vpop.xlane.xlu0 %10526
  %v10528 = vsel %vm498, %v10494, 0.0
  %10529 = vadd.xlane.f32.xlu0 %v10528
  %v10530 = vpop.xlane.xlu0 %10529
  %v10531 = vsel %vm498, %v10495, 0.0
  %10532 = vadd.xlane.f32.xlu0 %v10531
  %v10533 = vpop.xlane.xlu0 %10532
  %v10534 = vsel %vm498, %v10496, 0.0
  %10535 = vadd.xlane.f32.xlu0 %v10534
  %v10536 = vpop.xlane.xlu0 %10535
  %v10537 = vsel %vm498, %v10497, 0.0
  %10538 = vadd.xlane.f32.xlu0 %v10537
  %v10539 = vpop.xlane.xlu0 %10538
  %v10540 = vsel %vm498, %v10498, 0.0
  %10541 = vadd.xlane.f32.xlu0 %v10540
  %v10542 = vpop.xlane.xlu0 %10541
  %v10543 = vsel %vm498, %v10499, 0.0
  %10544 = vadd.xlane.f32.xlu0 %v10543
  %v10545 = vpop.xlane.xlu0 %10544
  %v10546 = vsel %vm498, %v10500, 0.0
  %10547 = vadd.xlane.f32.xlu0 %v10546
  %v10548 = vpop.xlane.xlu0 %10547
  %v10549 = vsel %vm498, %v10501, 0.0
  %10550 = vadd.xlane.f32.xlu0 %v10549
  %v10551 = vpop.xlane.xlu0 %10550
  %v10552 = vsel %vm498, %v10502, 0.0
  %10553 = vadd.xlane.f32.xlu0 %v10552
  %v10554 = vpop.xlane.xlu0 %10553
  %v10555 = vsel %vm498, %v10503, 0.0
  %10556 = vadd.xlane.f32.xlu0 %v10555
  %v10557 = vpop.xlane.xlu0 %10556
  %v10558 = vsel %vm498, %v10504, 0.0
  %10559 = vadd.xlane.f32.xlu0 %v10558
  %v10560 = vpop.xlane.xlu0 %10559
  %v10561 = vsel %vm498, %v10505, 0.0
  %10562 = vadd.xlane.f32.xlu0 %v10561
  %v10563 = vpop.xlane.xlu0 %10562
  %v10564 = vsel %vm498, %v10506, 0.0
  %10565 = vadd.xlane.f32.xlu0 %v10564
  %v10566 = vpop.xlane.xlu0 %10565
  %v10567 = vsel %vm498, %v10507, 0.0
  %10568 = vadd.xlane.f32.xlu0 %v10567
  %v10569 = vpop.xlane.xlu0 %10568
  %v10570 = vsel %vm498, %v10508, 0.0
  %10571 = vadd.xlane.f32.xlu0 %v10570
  %v10572 = vpop.xlane.xlu0 %10571
  %v10573 = vsel %vm498, %v10509, 0.0
  %10574 = vadd.xlane.f32.xlu0 %v10573
  %v10575 = vpop.xlane.xlu0 %10574
  %v10576 = vsel %vm498, %v10510, 0.0
  %10577 = vadd.xlane.f32.xlu0 %v10576
  %v10578 = vpop.xlane.xlu0 %10577
  %v10579 = vsel %vm498, %v10511, 0.0
  %10580 = vadd.xlane.f32.xlu0 %v10579
  %v10581 = vpop.xlane.xlu0 %10580
  %v10582 = vsel %vm498, %v10512, 0.0
  %10583 = vadd.xlane.f32.xlu0 %v10582
  %v10584 = vpop.xlane.xlu0 %10583
  %v10585 = vsel %vm498, %v10513, 0.0
  %10586 = vadd.xlane.f32.xlu0 %v10585
  %v10587 = vpop.xlane.xlu0 %10586
  %v10588 = vsel %vm498, %v10514, 0.0
  %10589 = vadd.xlane.f32.xlu0 %v10588
  %v10590 = vpop.xlane.xlu0 %10589
  %v10591 = vmul.f32 %v10521, %v571
  %v10592 = vmul.f32 %v10524, %v571
  %v10593 = vmul.f32 %v10527, %v571
  %v10594 = vmul.f32 %v10530, %v571
  %v10595 = vmul.f32 %v10533, %v571
  %v10596 = vmul.f32 %v10536, %v571
  %v10597 = vmul.f32 %v10539, %v571
  %v10598 = vmul.f32 %v10542, %v571
  %v10599 = vmul.f32 %v10545, %v571
  %v10600 = vmul.f32 %v10548, %v571
  %v10601 = vmul.f32 %v10551, %v571
  %v10602 = vmul.f32 %v10554, %v571
  %v10603 = vmul.f32 %v10557, %v571
  %v10604 = vmul.f32 %v10560, %v571
  %v10605 = vmul.f32 %v10563, %v571
  %v10606 = vmul.f32 %v10566, %v571
  %v10607 = vmul.f32 %v10569, %v571
  %v10608 = vmul.f32 %v10572, %v571
  %v10609 = vmul.f32 %v10575, %v571
  %v10610 = vmul.f32 %v10578, %v571
  %v10611 = vmul.f32 %v10581, %v571
  %v10612 = vmul.f32 %v10584, %v571
  %v10613 = vmul.f32 %v10587, %v571
  %v10614 = vmul.f32 %v10590, %v571
  %v10615 = vsub.f32 %v10491, %v10591
  %v10616 = vsub.f32 %v10492, %v10592
  %v10617 = vsub.f32 %v10493, %v10593
  %v10618 = vsub.f32 %v10494, %v10594
  %v10619 = vsub.f32 %v10495, %v10595
  %v10620 = vsub.f32 %v10496, %v10596
  %v10621 = vsub.f32 %v10497, %v10597
  %v10622 = vsub.f32 %v10498, %v10598
  %v10623 = vsub.f32 %v10499, %v10599
  %v10624 = vsub.f32 %v10500, %v10600
  %v10625 = vsub.f32 %v10501, %v10601
  %v10626 = vsub.f32 %v10502, %v10602
  %v10627 = vsub.f32 %v10503, %v10603
  %v10628 = vsub.f32 %v10504, %v10604
  %v10629 = vsub.f32 %v10505, %v10605
  %v10630 = vsub.f32 %v10506, %v10606
  %v10631 = vsub.f32 %v10507, %v10607
  %v10632 = vsub.f32 %v10508, %v10608
  %v10633 = vsub.f32 %v10509, %v10609
  %v10634 = vsub.f32 %v10510, %v10610
  %v10635 = vsub.f32 %v10511, %v10611
  %v10636 = vsub.f32 %v10512, %v10612
  %v10637 = vsub.f32 %v10513, %v10613
  %v10638 = vsub.f32 %v10514, %v10614
  %v10639 = vmul.f32 %v10615, %v10615
  %v10640 = vmul.f32 %v10616, %v10616
  %v10641 = vmul.f32 %v10617, %v10617
  %v10642 = vmul.f32 %v10618, %v10618
  %v10643 = vmul.f32 %v10619, %v10619
  %v10644 = vmul.f32 %v10620, %v10620
  %v10645 = vmul.f32 %v10621, %v10621
  %v10646 = vmul.f32 %v10622, %v10622
  %v10647 = vmul.f32 %v10623, %v10623
  %v10648 = vmul.f32 %v10624, %v10624
  %v10649 = vmul.f32 %v10625, %v10625
  %v10650 = vmul.f32 %v10626, %v10626
  %v10651 = vmul.f32 %v10627, %v10627
  %v10652 = vmul.f32 %v10628, %v10628
  %v10653 = vmul.f32 %v10629, %v10629
  %v10654 = vmul.f32 %v10630, %v10630
  %v10655 = vmul.f32 %v10631, %v10631
  %v10656 = vmul.f32 %v10632, %v10632
  %v10657 = vmul.f32 %v10633, %v10633
  %v10658 = vmul.f32 %v10634, %v10634
  %v10659 = vmul.f32 %v10635, %v10635
  %v10660 = vmul.f32 %v10636, %v10636
  %v10661 = vmul.f32 %v10637, %v10637
  %v10662 = vmul.f32 %v10638, %v10638
  %v10663 = vsel %vm498, %v10639, 0.0
  %10664 = vadd.xlane.f32.xlu0 %v10663
  %v10665 = vpop.xlane.xlu0 %10664
  %v10666 = vsel %vm498, %v10640, 0.0
  %10667 = vadd.xlane.f32.xlu0 %v10666
  %v10668 = vpop.xlane.xlu0 %10667
  %v10669 = vsel %vm498, %v10641, 0.0
  %10670 = vadd.xlane.f32.xlu0 %v10669
  %v10671 = vpop.xlane.xlu0 %10670
  %v10672 = vsel %vm498, %v10642, 0.0
  %10673 = vadd.xlane.f32.xlu0 %v10672
  %v10674 = vpop.xlane.xlu0 %10673
  %v10675 = vsel %vm498, %v10643, 0.0
  %10676 = vadd.xlane.f32.xlu0 %v10675
  %v10677 = vpop.xlane.xlu0 %10676
  %v10678 = vsel %vm498, %v10644, 0.0
  %10679 = vadd.xlane.f32.xlu0 %v10678
  %v10680 = vpop.xlane.xlu0 %10679
  %v10681 = vsel %vm498, %v10645, 0.0
  %10682 = vadd.xlane.f32.xlu0 %v10681
  %v10683 = vpop.xlane.xlu0 %10682
  %v10684 = vsel %vm498, %v10646, 0.0
  %10685 = vadd.xlane.f32.xlu0 %v10684
  %v10686 = vpop.xlane.xlu0 %10685
  %v10687 = vsel %vm498, %v10647, 0.0
  %10688 = vadd.xlane.f32.xlu0 %v10687
  %v10689 = vpop.xlane.xlu0 %10688
  %v10690 = vsel %vm498, %v10648, 0.0
  %10691 = vadd.xlane.f32.xlu0 %v10690
  %v10692 = vpop.xlane.xlu0 %10691
  %v10693 = vsel %vm498, %v10649, 0.0
  %10694 = vadd.xlane.f32.xlu0 %v10693
  %v10695 = vpop.xlane.xlu0 %10694
  %v10696 = vsel %vm498, %v10650, 0.0
  %10697 = vadd.xlane.f32.xlu0 %v10696
  %v10698 = vpop.xlane.xlu0 %10697
  %v10699 = vsel %vm498, %v10651, 0.0
  %10700 = vadd.xlane.f32.xlu0 %v10699
  %v10701 = vpop.xlane.xlu0 %10700
  %v10702 = vsel %vm498, %v10652, 0.0
  %10703 = vadd.xlane.f32.xlu0 %v10702
  %v10704 = vpop.xlane.xlu0 %10703
  %v10705 = vsel %vm498, %v10653, 0.0
  %10706 = vadd.xlane.f32.xlu0 %v10705
  %v10707 = vpop.xlane.xlu0 %10706
  %v10708 = vsel %vm498, %v10654, 0.0
  %10709 = vadd.xlane.f32.xlu0 %v10708
  %v10710 = vpop.xlane.xlu0 %10709
  %v10711 = vsel %vm498, %v10655, 0.0
  %10712 = vadd.xlane.f32.xlu0 %v10711
  %v10713 = vpop.xlane.xlu0 %10712
  %v10714 = vsel %vm498, %v10656, 0.0
  %10715 = vadd.xlane.f32.xlu0 %v10714
  %v10716 = vpop.xlane.xlu0 %10715
  %v10717 = vsel %vm498, %v10657, 0.0
  %10718 = vadd.xlane.f32.xlu0 %v10717
  %v10719 = vpop.xlane.xlu0 %10718
  %v10720 = vsel %vm498, %v10658, 0.0
  %10721 = vadd.xlane.f32.xlu0 %v10720
  %v10722 = vpop.xlane.xlu0 %10721
  %v10723 = vsel %vm498, %v10659, 0.0
  %10724 = vadd.xlane.f32.xlu0 %v10723
  %v10725 = vpop.xlane.xlu0 %10724
  %v10726 = vsel %vm498, %v10660, 0.0
  %10727 = vadd.xlane.f32.xlu0 %v10726
  %v10728 = vpop.xlane.xlu0 %10727
  %v10729 = vsel %vm498, %v10661, 0.0
  %10730 = vadd.xlane.f32.xlu0 %v10729
  %v10731 = vpop.xlane.xlu0 %10730
  %v10732 = vsel %vm498, %v10662, 0.0
  %10733 = vadd.xlane.f32.xlu0 %v10732
  %v10734 = vpop.xlane.xlu0 %10733
  %v10735 = vmul.f32 %v10665, %v571
  %v10736 = vmul.f32 %v10668, %v571
  %v10737 = vmul.f32 %v10671, %v571
  %v10738 = vmul.f32 %v10674, %v571
  %v10739 = vmul.f32 %v10677, %v571
  %v10740 = vmul.f32 %v10680, %v571
  %v10741 = vmul.f32 %v10683, %v571
  %v10742 = vmul.f32 %v10686, %v571
  %v10743 = vmul.f32 %v10689, %v571
  %v10744 = vmul.f32 %v10692, %v571
  %v10745 = vmul.f32 %v10695, %v571
  %v10746 = vmul.f32 %v10698, %v571
  %v10747 = vmul.f32 %v10701, %v571
  %v10748 = vmul.f32 %v10704, %v571
  %v10749 = vmul.f32 %v10707, %v571
  %v10750 = vmul.f32 %v10710, %v571
  %v10751 = vmul.f32 %v10713, %v571
  %v10752 = vmul.f32 %v10716, %v571
  %v10753 = vmul.f32 %v10719, %v571
  %v10754 = vmul.f32 %v10722, %v571
  %v10755 = vmul.f32 %v10725, %v571
  %v10756 = vmul.f32 %v10728, %v571
  %v10757 = vmul.f32 %v10731, %v571
  %v10758 = vmul.f32 %v10734, %v571
  %v10759 = vadd.f32 %v10735, 1e-05
  %v10760 = vadd.f32 %v10736, 1e-05
  %v10761 = vadd.f32 %v10737, 1e-05
  %v10762 = vadd.f32 %v10738, 1e-05
  %v10763 = vadd.f32 %v10739, 1e-05
  %v10764 = vadd.f32 %v10740, 1e-05
  %v10765 = vadd.f32 %v10741, 1e-05
  %v10766 = vadd.f32 %v10742, 1e-05
  %v10767 = vadd.f32 %v10743, 1e-05
  %v10768 = vadd.f32 %v10744, 1e-05
  %v10769 = vadd.f32 %v10745, 1e-05
  %v10770 = vadd.f32 %v10746, 1e-05
  %v10771 = vadd.f32 %v10747, 1e-05
  %v10772 = vadd.f32 %v10748, 1e-05
  %v10773 = vadd.f32 %v10749, 1e-05
  %v10774 = vadd.f32 %v10750, 1e-05
  %v10775 = vadd.f32 %v10751, 1e-05
  %v10776 = vadd.f32 %v10752, 1e-05
  %v10777 = vadd.f32 %v10753, 1e-05
  %v10778 = vadd.f32 %v10754, 1e-05
  %v10779 = vadd.f32 %v10755, 1e-05
  %v10780 = vadd.f32 %v10756, 1e-05
  %v10781 = vadd.f32 %v10757, 1e-05
  %v10782 = vadd.f32 %v10758, 1e-05
  %v10783 = vrsqrt.pop %v10759
  %v10784 = vrsqrt.pop %v10760
  %v10785 = vrsqrt.pop %v10761
  %v10786 = vrsqrt.pop %v10762
  %v10787 = vrsqrt.pop %v10763
  %v10788 = vrsqrt.pop %v10764
  %v10789 = vrsqrt.pop %v10765
  %v10790 = vrsqrt.pop %v10766
  %v10791 = vrsqrt.pop %v10767
  %v10792 = vrsqrt.pop %v10768
  %v10793 = vrsqrt.pop %v10769
  %v10794 = vrsqrt.pop %v10770
  %v10795 = vrsqrt.pop %v10771
  %v10796 = vrsqrt.pop %v10772
  %v10797 = vrsqrt.pop %v10773
  %v10798 = vrsqrt.pop %v10774
  %v10799 = vrsqrt.pop %v10775
  %v10800 = vrsqrt.pop %v10776
  %v10801 = vrsqrt.pop %v10777
  %v10802 = vrsqrt.pop %v10778
  %v10803 = vrsqrt.pop %v10779
  %v10804 = vrsqrt.pop %v10780
  %v10805 = vrsqrt.pop %v10781
  %v10806 = vrsqrt.pop %v10782
  %v10807 = vmul.f32 %v10615, %v10783
  %v10808 = vmul.f32 %v10616, %v10784
  %v10809 = vmul.f32 %v10617, %v10785
  %v10810 = vmul.f32 %v10618, %v10786
  %v10811 = vmul.f32 %v10619, %v10787
  %v10812 = vmul.f32 %v10620, %v10788
  %v10813 = vmul.f32 %v10621, %v10789
  %v10814 = vmul.f32 %v10622, %v10790
  %v10815 = vmul.f32 %v10623, %v10791
  %v10816 = vmul.f32 %v10624, %v10792
  %v10817 = vmul.f32 %v10625, %v10793
  %v10818 = vmul.f32 %v10626, %v10794
  %v10819 = vmul.f32 %v10627, %v10795
  %v10820 = vmul.f32 %v10628, %v10796
  %v10821 = vmul.f32 %v10629, %v10797
  %v10822 = vmul.f32 %v10630, %v10798
  %v10823 = vmul.f32 %v10631, %v10799
  %v10824 = vmul.f32 %v10632, %v10800
  %v10825 = vmul.f32 %v10633, %v10801
  %v10826 = vmul.f32 %v10634, %v10802
  %v10827 = vmul.f32 %v10635, %v10803
  %v10828 = vmul.f32 %v10636, %v10804
  %v10829 = vmul.f32 %v10637, %v10805
  %v10830 = vmul.f32 %v10638, %v10806
  %v10832 = vlaneseq
  %v10833 = vshrl.u32 %v10832, 7
  %v10834 = vsub.s32 0, %v10833
  %v10835 = vrot.slane %v10516, %v10834
  %v10837 = vmul.f32 %v10807, %v10835
  %v10838 = vmul.f32 %v10808, %v10835
  %v10839 = vmul.f32 %v10809, %v10835
  %v10840 = vmul.f32 %v10810, %v10835
  %v10841 = vmul.f32 %v10811, %v10835
  %v10842 = vmul.f32 %v10812, %v10835
  %v10843 = vmul.f32 %v10813, %v10835
  %v10844 = vmul.f32 %v10814, %v10835
  %v10845 = vmul.f32 %v10815, %v10835
  %v10846 = vmul.f32 %v10816, %v10835
  %v10847 = vmul.f32 %v10817, %v10835
  %v10848 = vmul.f32 %v10818, %v10835
  %v10849 = vmul.f32 %v10819, %v10835
  %v10850 = vmul.f32 %v10820, %v10835
  %v10851 = vmul.f32 %v10821, %v10835
  %v10852 = vmul.f32 %v10822, %v10835
  %v10853 = vmul.f32 %v10823, %v10835
  %v10854 = vmul.f32 %v10824, %v10835
  %v10855 = vmul.f32 %v10825, %v10835
  %v10856 = vmul.f32 %v10826, %v10835
  %v10857 = vmul.f32 %v10827, %v10835
  %v10858 = vmul.f32 %v10828, %v10835
  %v10859 = vmul.f32 %v10829, %v10835
  %v10860 = vmul.f32 %v10830, %v10835
  %v10862 = vlaneseq
  %v10863 = vshrl.u32 %v10862, 7
  %v10864 = vsub.s32 0, %v10863
  %v10865 = vrot.slane %v10518, %v10864
  %v10867 = vadd.f32 %v10837, %v10865
  %v10868 = vadd.f32 %v10838, %v10865
  %v10869 = vadd.f32 %v10839, %v10865
  %v10870 = vadd.f32 %v10840, %v10865
  %v10871 = vadd.f32 %v10841, %v10865
  %v10872 = vadd.f32 %v10842, %v10865
  %v10873 = vadd.f32 %v10843, %v10865
  %v10874 = vadd.f32 %v10844, %v10865
  %v10875 = vadd.f32 %v10845, %v10865
  %v10876 = vadd.f32 %v10846, %v10865
  %v10877 = vadd.f32 %v10847, %v10865
  %v10878 = vadd.f32 %v10848, %v10865
  %v10879 = vadd.f32 %v10849, %v10865
  %v10880 = vadd.f32 %v10850, %v10865
  %v10881 = vadd.f32 %v10851, %v10865
  %v10882 = vadd.f32 %v10852, %v10865
  %v10883 = vadd.f32 %v10853, %v10865
  %v10884 = vadd.f32 %v10854, %v10865
  %v10885 = vadd.f32 %v10855, %v10865
  %v10886 = vadd.f32 %v10856, %v10865
  %v10887 = vadd.f32 %v10857, %v10865
  %v10888 = vadd.f32 %v10858, %v10865
  %v10889 = vadd.f32 %v10859, %v10865
  %v10890 = vadd.f32 %v10860, %v10865
  %v10891 = vpack.c.bf16 %v10868, %v10867
  %v10892 = vpack.c.bf16 %v10870, %v10869
  %v10893 = vpack.c.bf16 %v10872, %v10871
  %v10894 = vpack.c.bf16 %v10874, %v10873
  %v10895 = vpack.c.bf16 %v10876, %v10875
  %v10896 = vpack.c.bf16 %v10878, %v10877
  %v10897 = vpack.c.bf16 %v10880, %v10879
  %v10898 = vpack.c.bf16 %v10882, %v10881
  %v10899 = vpack.c.bf16 %v10884, %v10883
  %v10900 = vpack.c.bf16 %v10886, %v10885
  %v10901 = vpack.c.bf16 %v10888, %v10887
  %v10902 = vpack.c.bf16 %v10890, %v10889
  %s10903 = scalar_lea.vmem %s17, 16
  %v10904 = vld [vmem:[%s10903] sm:$0xf]
  %v10905 = vld [vmem:[%s10903 + $0x4] sm:$0xf]
  %v10906 = vld [vmem:[%s10903 + $0x8] sm:$0xf]
  %v10907 = vld [vmem:[%s10903 + $0xc] sm:$0xf]
  %s10908 = scalar_lea.vmem %s18, 1
  %v10909 = vld [vmem:[%s10908] sm:$0x1]
  %v10911 = vlaneseq
  %v10912 = vshrl.u32 %v10911, 7
  %v10913 = vsub.s32 0, %v10912
  %v10914 = vrot.slane %v10909, %v10913
  %v10920 = vunpack.c.l.b16 %v10904
  %v10921 = vunpack.c.l.b16 %v10905
  %v10922 = vunpack.c.l.b16 %v10906
  %v10923 = vunpack.c.l.b16 %v10907
  %v10924 = vpack.c.b16 %v10921, %v10920
  %v10925 = vpack.c.b16 %v10923, %v10922
  %v10929 = vsel %vm498, %v10891, 0
  %v10932 = vsel %vm498, %v10892, 0
  %v10935 = vsel %vm498, %v10893, 0
  %v10938 = vsel %vm498, %v10894, 0
  %v10941 = vsel %vm498, %v10895, 0
  %v10944 = vsel %vm498, %v10896, 0
  %v10947 = vsel %vm498, %v10897, 0
  %v10950 = vsel %vm498, %v10898, 0
  %v10953 = vsel %vm498, %v10899, 0
  %v10956 = vsel %vm498, %v10900, 0
  %v10959 = vsel %vm498, %v10901, 0
  %v10962 = vsel %vm498, %v10902, 0
  %10964 = vmatprep.subr.bf16.mxu0 0
  %10965 = vmatpush1.bf16.msra.mxu0 0
  %10966 = vmatprep.subr.bf16.mxu0 0
  %10967 = vmatpush1.bf16.msra.mxu0 0
  %10968 = vmatprep.subr.bf16.mxu0 0
  %10969 = vmatpush1.bf16.msra.mxu0 0
  %10970 = vmatprep.subr.bf16.mxu0 0
  %10971 = vmatpush1.bf16.msra.mxu0 0
  %10972 = vmatprep.subr.bf16.mxu0 0
  %10973 = vmatpush1.bf16.msra.mxu0 0
  %10974 = vmatprep.subr.bf16.mxu0 0
  %10975 = vmatpush1.bf16.msra.mxu0 0
  %10976 = vmatprep.subr.bf16.mxu0 0
  %10977 = vmatpush1.bf16.msra.mxu0 %v10925
  %10978 = vmatprep.subr.bf16.mxu0 0
  %10979 = vmatpush1.bf16.msra.mxu0 %v10924
  %10980 = vmatprep.subr.bf16.mxu0 0
  %10981 = vmatpush2.bf16.msra.mxu0 0
  %10982 = vmatprep.subr.bf16.mxu0 0
  %10983 = vmatpush2.bf16.msra.mxu0 0
  %10984 = vmatprep.subr.bf16.mxu0 0
  %10985 = vmatpush2.bf16.msra.mxu0 0
  %10986 = vmatprep.subr.bf16.mxu0 0
  %10987 = vmatpush2.bf16.msra.mxu0 0
  %10988 = vmatprep.subr.bf16.mxu0 0
  %10989 = vmatpush2.bf16.msra.mxu0 0
  %10990 = vmatprep.subr.bf16.mxu0 0
  %10991 = vmatpush2.bf16.msra.mxu0 0
  %10992 = vmatprep.subr.bf16.mxu0 0
  %10993 = vmatpush2.bf16.msra.mxu0 0
  %10994 = vmatprep.subr.bf16.mxu0 0
  %10995 = vmatpush2.bf16.msra.mxu0 0
  %10996 = vmatprep.mubr.bf16.mxu0 0
  %10997 = vmatmul.mubr.bf16.gmra.mxu0 %v10929
  %v10998 = vpop.f32.mrf.mxu0
  %v10999 = vadd.f32 %v10914, %v10998
  %v11000 = vpop.f32.mrf.mxu0
  %v11001 = vpop.f32.mrf.mxu0
  %v11002 = vadd.f32 %v10914, %v11001
  %v11003 = vpop.f32.mrf.mxu0
  %11004 = vmatprep.mubr.bf16.mxu0 0
  %11005 = vmatmul.mubr.bf16.gmra.mxu0 %v10932
  %v11006 = vpop.f32.mrf.mxu0
  %v11007 = vadd.f32 %v10914, %v11006
  %v11008 = vpop.f32.mrf.mxu0
  %v11009 = vpop.f32.mrf.mxu0
  %v11010 = vadd.f32 %v10914, %v11009
  %v11011 = vpop.f32.mrf.mxu0
  %11012 = vmatprep.mubr.bf16.mxu0 0
  %11013 = vmatmul.mubr.bf16.gmra.mxu0 %v10935
  %v11014 = vpop.f32.mrf.mxu0
  %v11015 = vadd.f32 %v10914, %v11014
  %v11016 = vpop.f32.mrf.mxu0
  %v11017 = vpop.f32.mrf.mxu0
  %v11018 = vadd.f32 %v10914, %v11017
  %v11019 = vpop.f32.mrf.mxu0
  %11020 = vmatprep.mubr.bf16.mxu0 0
  %11021 = vmatmul.mubr.bf16.gmra.mxu0 %v10938
  %v11022 = vpop.f32.mrf.mxu0
  %v11023 = vadd.f32 %v10914, %v11022
  %v11024 = vpop.f32.mrf.mxu0
  %v11025 = vpop.f32.mrf.mxu0
  %v11026 = vadd.f32 %v10914, %v11025
  %v11027 = vpop.f32.mrf.mxu0
  %11028 = vmatprep.mubr.bf16.mxu0 0
  %11029 = vmatmul.mubr.bf16.gmra.mxu0 %v10941
  %v11030 = vpop.f32.mrf.mxu0
  %v11031 = vadd.f32 %v10914, %v11030
  %v11032 = vpop.f32.mrf.mxu0
  %v11033 = vpop.f32.mrf.mxu0
  %v11034 = vadd.f32 %v10914, %v11033
  %v11035 = vpop.f32.mrf.mxu0
  %11036 = vmatprep.mubr.bf16.mxu0 0
  %11037 = vmatmul.mubr.bf16.gmra.mxu0 %v10944
  %v11038 = vpop.f32.mrf.mxu0
  %v11039 = vadd.f32 %v10914, %v11038
  %v11040 = vpop.f32.mrf.mxu0
  %v11041 = vpop.f32.mrf.mxu0
  %v11042 = vadd.f32 %v10914, %v11041
  %v11043 = vpop.f32.mrf.mxu0
  %11044 = vmatprep.mubr.bf16.mxu0 0
  %11045 = vmatmul.mubr.bf16.gmra.mxu0 %v10947
  %v11046 = vpop.f32.mrf.mxu0
  %v11047 = vadd.f32 %v10914, %v11046
  %v11048 = vpop.f32.mrf.mxu0
  %v11049 = vpop.f32.mrf.mxu0
  %v11050 = vadd.f32 %v10914, %v11049
  %v11051 = vpop.f32.mrf.mxu0
  %11052 = vmatprep.mubr.bf16.mxu0 0
  %11053 = vmatmul.mubr.bf16.gmra.mxu0 %v10950
  %v11054 = vpop.f32.mrf.mxu0
  %v11055 = vadd.f32 %v10914, %v11054
  %v11056 = vpop.f32.mrf.mxu0
  %v11057 = vpop.f32.mrf.mxu0
  %v11058 = vadd.f32 %v10914, %v11057
  %v11059 = vpop.f32.mrf.mxu0
  %11060 = vmatprep.mubr.bf16.mxu0 0
  %11061 = vmatmul.mubr.bf16.gmra.mxu0 %v10953
  %v11062 = vpop.f32.mrf.mxu0
  %v11063 = vadd.f32 %v10914, %v11062
  %v11064 = vpop.f32.mrf.mxu0
  %v11065 = vpop.f32.mrf.mxu0
  %v11066 = vadd.f32 %v10914, %v11065
  %v11067 = vpop.f32.mrf.mxu0
  %11068 = vmatprep.mubr.bf16.mxu0 0
  %11069 = vmatmul.mubr.bf16.gmra.mxu0 %v10956
  %v11070 = vpop.f32.mrf.mxu0
  %v11071 = vadd.f32 %v10914, %v11070
  %v11072 = vpop.f32.mrf.mxu0
  %v11073 = vpop.f32.mrf.mxu0
  %v11074 = vadd.f32 %v10914, %v11073
  %v11075 = vpop.f32.mrf.mxu0
  %11076 = vmatprep.mubr.bf16.mxu0 0
  %11077 = vmatmul.mubr.bf16.gmra.mxu0 %v10959
  %v11078 = vpop.f32.mrf.mxu0
  %v11079 = vadd.f32 %v10914, %v11078
  %v11080 = vpop.f32.mrf.mxu0
  %v11081 = vpop.f32.mrf.mxu0
  %v11082 = vadd.f32 %v10914, %v11081
  %v11083 = vpop.f32.mrf.mxu0
  %11084 = vmatprep.mubr.bf16.mxu0 0
  %11085 = vmatmul.mubr.bf16.gmra.mxu0 %v10962
  %v11086 = vpop.f32.mrf.mxu0
  %v11087 = vadd.f32 %v10914, %v11086
  %v11088 = vpop.f32.mrf.mxu0
  %v11089 = vpop.f32.mrf.mxu0
  %v11090 = vadd.f32 %v10914, %v11089
  %v11091 = vpop.f32.mrf.mxu0
  %11092 = vdwg.mxu0
  %v11093 = vmul.f32 %v10999, 1.702
  %v11094 = vmul.f32 %v11002, 1.702
  %v11095 = vmul.f32 %v11007, 1.702
  %v11096 = vmul.f32 %v11010, 1.702
  %v11097 = vmul.f32 %v11015, 1.702
  %v11098 = vmul.f32 %v11018, 1.702
  %v11099 = vmul.f32 %v11023, 1.702
  %v11100 = vmul.f32 %v11026, 1.702
  %v11101 = vmul.f32 %v11031, 1.702
  %v11102 = vmul.f32 %v11034, 1.702
  %v11103 = vmul.f32 %v11039, 1.702
  %v11104 = vmul.f32 %v11042, 1.702
  %v11105 = vmul.f32 %v11047, 1.702
  %v11106 = vmul.f32 %v11050, 1.702
  %v11107 = vmul.f32 %v11055, 1.702
  %v11108 = vmul.f32 %v11058, 1.702
  %v11109 = vmul.f32 %v11063, 1.702
  %v11110 = vmul.f32 %v11066, 1.702
  %v11111 = vmul.f32 %v11071, 1.702
  %v11112 = vmul.f32 %v11074, 1.702
  %v11113 = vmul.f32 %v11079, 1.702
  %v11114 = vmul.f32 %v11082, 1.702
  %v11115 = vmul.f32 %v11087, 1.702
  %v11116 = vmul.f32 %v11090, 1.702
  %v11117 = vxor.u32 %v11093, 2147483648
  %v11118 = vxor.u32 %v11094, 2147483648
  %v11119 = vxor.u32 %v11095, 2147483648
  %v11120 = vxor.u32 %v11096, 2147483648
  %v11121 = vxor.u32 %v11097, 2147483648
  %v11122 = vxor.u32 %v11098, 2147483648
  %v11123 = vxor.u32 %v11099, 2147483648
  %v11124 = vxor.u32 %v11100, 2147483648
  %v11125 = vxor.u32 %v11101, 2147483648
  %v11126 = vxor.u32 %v11102, 2147483648
  %v11127 = vxor.u32 %v11103, 2147483648
  %v11128 = vxor.u32 %v11104, 2147483648
  %v11129 = vxor.u32 %v11105, 2147483648
  %v11130 = vxor.u32 %v11106, 2147483648
  %v11131 = vxor.u32 %v11107, 2147483648
  %v11132 = vxor.u32 %v11108, 2147483648
  %v11133 = vxor.u32 %v11109, 2147483648
  %v11134 = vxor.u32 %v11110, 2147483648
  %v11135 = vxor.u32 %v11111, 2147483648
  %v11136 = vxor.u32 %v11112, 2147483648
  %v11137 = vxor.u32 %v11113, 2147483648
  %v11138 = vxor.u32 %v11114, 2147483648
  %v11139 = vxor.u32 %v11115, 2147483648
  %v11140 = vxor.u32 %v11116, 2147483648
  %v11141 = vmul.f32 %v11117, 1.442695
  %v11142 = vpow.pop %v11141
  %v11143 = vmul.f32 %v11118, 1.442695
  %v11144 = vpow.pop %v11143
  %v11145 = vmul.f32 %v11119, 1.442695
  %v11146 = vpow.pop %v11145
  %v11147 = vmul.f32 %v11120, 1.442695
  %v11148 = vpow.pop %v11147
  %v11149 = vmul.f32 %v11121, 1.442695
  %v11150 = vpow.pop %v11149
  %v11151 = vmul.f32 %v11122, 1.442695
  %v11152 = vpow.pop %v11151
  %v11153 = vmul.f32 %v11123, 1.442695
  %v11154 = vpow.pop %v11153
  %v11155 = vmul.f32 %v11124, 1.442695
  %v11156 = vpow.pop %v11155
  %v11157 = vmul.f32 %v11125, 1.442695
  %v11158 = vpow.pop %v11157
  %v11159 = vmul.f32 %v11126, 1.442695
  %v11160 = vpow.pop %v11159
  %v11161 = vmul.f32 %v11127, 1.442695
  %v11162 = vpow.pop %v11161
  %v11163 = vmul.f32 %v11128, 1.442695
  %v11164 = vpow.pop %v11163
  %v11165 = vmul.f32 %v11129, 1.442695
  %v11166 = vpow.pop %v11165
  %v11167 = vmul.f32 %v11130, 1.442695
  %v11168 = vpow.pop %v11167
  %v11169 = vmul.f32 %v11131, 1.442695
  %v11170 = vpow.pop %v11169
  %v11171 = vmul.f32 %v11132, 1.442695
  %v11172 = vpow.pop %v11171
  %v11173 = vmul.f32 %v11133, 1.442695
  %v11174 = vpow.pop %v11173
  %v11175 = vmul.f32 %v11134, 1.442695
  %v11176 = vpow.pop %v11175
  %v11177 = vmul.f32 %v11135, 1.442695
  %v11178 = vpow.pop %v11177
  %v11179 = vmul.f32 %v11136, 1.442695
  %v11180 = vpow.pop %v11179
  %v11181 = vmul.f32 %v11137, 1.442695
  %v11182 = vpow.pop %v11181
  %v11183 = vmul.f32 %v11138, 1.442695
  %v11184 = vpow.pop %v11183
  %v11185 = vmul.f32 %v11139, 1.442695
  %v11186 = vpow.pop %v11185
  %v11187 = vmul.f32 %v11140, 1.442695
  %v11188 = vpow.pop %v11187
  %v11189 = vadd.f32 %v11142, 1.0
  %v11190 = vadd.f32 %v11144, 1.0
  %v11191 = vadd.f32 %v11146, 1.0
  %v11192 = vadd.f32 %v11148, 1.0
  %v11193 = vadd.f32 %v11150, 1.0
  %v11194 = vadd.f32 %v11152, 1.0
  %v11195 = vadd.f32 %v11154, 1.0
  %v11196 = vadd.f32 %v11156, 1.0
  %v11197 = vadd.f32 %v11158, 1.0
  %v11198 = vadd.f32 %v11160, 1.0
  %v11199 = vadd.f32 %v11162, 1.0
  %v11200 = vadd.f32 %v11164, 1.0
  %v11201 = vadd.f32 %v11166, 1.0
  %v11202 = vadd.f32 %v11168, 1.0
  %v11203 = vadd.f32 %v11170, 1.0
  %v11204 = vadd.f32 %v11172, 1.0
  %v11205 = vadd.f32 %v11174, 1.0
  %v11206 = vadd.f32 %v11176, 1.0
  %v11207 = vadd.f32 %v11178, 1.0
  %v11208 = vadd.f32 %v11180, 1.0
  %v11209 = vadd.f32 %v11182, 1.0
  %v11210 = vadd.f32 %v11184, 1.0
  %v11211 = vadd.f32 %v11186, 1.0
  %v11212 = vadd.f32 %v11188, 1.0
  %v11213 = vrcp.pop %v11189
  %v11214 = vmul.f32 1.0, %v11213
  %v11215 = vrcp.pop %v11190
  %v11216 = vmul.f32 1.0, %v11215
  %v11217 = vrcp.pop %v11191
  %v11218 = vmul.f32 1.0, %v11217
  %v11219 = vrcp.pop %v11192
  %v11220 = vmul.f32 1.0, %v11219
  %v11221 = vrcp.pop %v11193
  %v11222 = vmul.f32 1.0, %v11221
  %v11223 = vrcp.pop %v11194
  %v11224 = vmul.f32 1.0, %v11223
  %v11225 = vrcp.pop %v11195
  %v11226 = vmul.f32 1.0, %v11225
  %v11227 = vrcp.pop %v11196
  %v11228 = vmul.f32 1.0, %v11227
  %v11229 = vrcp.pop %v11197
  %v11230 = vmul.f32 1.0, %v11229
  %v11231 = vrcp.pop %v11198
  %v11232 = vmul.f32 1.0, %v11231
  %v11233 = vrcp.pop %v11199
  %v11234 = vmul.f32 1.0, %v11233
  %v11235 = vrcp.pop %v11200
  %v11236 = vmul.f32 1.0, %v11235
  %v11237 = vrcp.pop %v11201
  %v11238 = vmul.f32 1.0, %v11237
  %v11239 = vrcp.pop %v11202
  %v11240 = vmul.f32 1.0, %v11239
  %v11241 = vrcp.pop %v11203
  %v11242 = vmul.f32 1.0, %v11241
  %v11243 = vrcp.pop %v11204
  %v11244 = vmul.f32 1.0, %v11243
  %v11245 = vrcp.pop %v11205
  %v11246 = vmul.f32 1.0, %v11245
  %v11247 = vrcp.pop %v11206
  %v11248 = vmul.f32 1.0, %v11247
  %v11249 = vrcp.pop %v11207
  %v11250 = vmul.f32 1.0, %v11249
  %v11251 = vrcp.pop %v11208
  %v11252 = vmul.f32 1.0, %v11251
  %v11253 = vrcp.pop %v11209
  %v11254 = vmul.f32 1.0, %v11253
  %v11255 = vrcp.pop %v11210
  %v11256 = vmul.f32 1.0, %v11255
  %v11257 = vrcp.pop %v11211
  %v11258 = vmul.f32 1.0, %v11257
  %v11259 = vrcp.pop %v11212
  %v11260 = vmul.f32 1.0, %v11259
  %v11261 = vmul.f32 %v10999, %v11214
  %v11262 = vmul.f32 %v11002, %v11216
  %v11263 = vmul.f32 %v11007, %v11218
  %v11264 = vmul.f32 %v11010, %v11220
  %v11265 = vmul.f32 %v11015, %v11222
  %v11266 = vmul.f32 %v11018, %v11224
  %v11267 = vmul.f32 %v11023, %v11226
  %v11268 = vmul.f32 %v11026, %v11228
  %v11269 = vmul.f32 %v11031, %v11230
  %v11270 = vmul.f32 %v11034, %v11232
  %v11271 = vmul.f32 %v11039, %v11234
  %v11272 = vmul.f32 %v11042, %v11236
  %v11273 = vmul.f32 %v11047, %v11238
  %v11274 = vmul.f32 %v11050, %v11240
  %v11275 = vmul.f32 %v11055, %v11242
  %v11276 = vmul.f32 %v11058, %v11244
  %v11277 = vmul.f32 %v11063, %v11246
  %v11278 = vmul.f32 %v11066, %v11248
  %v11279 = vmul.f32 %v11071, %v11250
  %v11280 = vmul.f32 %v11074, %v11252
  %v11281 = vmul.f32 %v11079, %v11254
  %v11282 = vmul.f32 %v11082, %v11256
  %v11283 = vmul.f32 %v11087, %v11258
  %v11284 = vmul.f32 %v11090, %v11260
  %v11285 = vpack.c.bf16 %v11262, %v11261
  %v11286 = vpack.c.bf16 %v11264, %v11263
  %v11287 = vpack.c.bf16 %v11266, %v11265
  %v11288 = vpack.c.bf16 %v11268, %v11267
  %v11289 = vpack.c.bf16 %v11270, %v11269
  %v11290 = vpack.c.bf16 %v11272, %v11271
  %v11291 = vpack.c.bf16 %v11274, %v11273
  %v11292 = vpack.c.bf16 %v11276, %v11275
  %v11293 = vpack.c.bf16 %v11278, %v11277
  %v11294 = vpack.c.bf16 %v11280, %v11279
  %v11295 = vpack.c.bf16 %v11282, %v11281
  %v11296 = vpack.c.bf16 %v11284, %v11283
  %s11297 = scalar_lea.vmem %s19, 64
  %v11298 = vld [vmem:[%s11297] sm:$0xf]
  %v11299 = vld [vmem:[%s11297 + $0x4] sm:$0xf]
  %v11300 = vld [vmem:[%s11297 + $0x8] sm:$0xf]
  %v11301 = vld [vmem:[%s11297 + $0xc] sm:$0xf]
  %v11302 = vld [vmem:[%s11297 + $0x10] sm:$0xf]
  %v11303 = vld [vmem:[%s11297 + $0x14] sm:$0xf]
  %v11304 = vld [vmem:[%s11297 + $0x18] sm:$0xf]
  %v11305 = vld [vmem:[%s11297 + $0x1c] sm:$0xf]
  %v11306 = vld [vmem:[%s11297 + $0x20] sm:$0xf]
  %v11307 = vld [vmem:[%s11297 + $0x24] sm:$0xf]
  %v11308 = vld [vmem:[%s11297 + $0x28] sm:$0xf]
  %v11309 = vld [vmem:[%s11297 + $0x2c] sm:$0xf]
  %v11310 = vld [vmem:[%s11297 + $0x30] sm:$0xf]
  %v11311 = vld [vmem:[%s11297 + $0x34] sm:$0xf]
  %v11312 = vld [vmem:[%s11297 + $0x38] sm:$0xf]
  %v11313 = vld [vmem:[%s11297 + $0x3c] sm:$0xf]
  %s11314 = scalar_lea.vmem %s20, 1
  %v11315 = vld [vmem:[%s11314] sm:$0x1]
  %v11317 = vlaneseq
  %v11318 = vshrl.u32 %v11317, 7
  %v11319 = vsub.s32 0, %v11318
  %v11320 = vrot.slane %v11315, %v11319
  %v11338 = vunpack.c.l.b16 %v11298
  %v11339 = vunpack.c.l.b16 %v11299
  %v11340 = vunpack.c.l.b16 %v11300
  %v11341 = vunpack.c.l.b16 %v11301
  %v11342 = vunpack.c.l.b16 %v11302
  %v11343 = vunpack.c.l.b16 %v11303
  %v11344 = vunpack.c.l.b16 %v11304
  %v11345 = vunpack.c.l.b16 %v11305
  %v11346 = vunpack.c.l.b16 %v11306
  %v11347 = vunpack.c.l.b16 %v11307
  %v11348 = vunpack.c.l.b16 %v11308
  %v11349 = vunpack.c.l.b16 %v11309
  %v11350 = vunpack.c.l.b16 %v11310
  %v11351 = vunpack.c.l.b16 %v11311
  %v11352 = vunpack.c.l.b16 %v11312
  %v11353 = vunpack.c.l.b16 %v11313
  %v11354 = vpack.c.b16 %v11339, %v11338
  %v11355 = vpack.c.b16 %v11341, %v11340
  %v11356 = vpack.c.b16 %v11343, %v11342
  %v11357 = vpack.c.b16 %v11345, %v11344
  %v11358 = vpack.c.b16 %v11347, %v11346
  %v11359 = vpack.c.b16 %v11349, %v11348
  %v11360 = vpack.c.b16 %v11351, %v11350
  %v11361 = vpack.c.b16 %v11353, %v11352
  %11370 = vmatprep.subr.bf16.mxu0 0
  %11371 = vmatpush1.bf16.msra.mxu0 %v11361
  %11372 = vmatprep.subr.bf16.mxu0 0
  %11373 = vmatpush1.bf16.msra.mxu0 %v11360
  %11374 = vmatprep.subr.bf16.mxu0 0
  %11375 = vmatpush1.bf16.msra.mxu0 %v11359
  %11376 = vmatprep.subr.bf16.mxu0 0
  %11377 = vmatpush1.bf16.msra.mxu0 %v11358
  %11378 = vmatprep.subr.bf16.mxu0 0
  %11379 = vmatpush1.bf16.msra.mxu0 %v11357
  %11380 = vmatprep.subr.bf16.mxu0 0
  %11381 = vmatpush1.bf16.msra.mxu0 %v11356
  %11382 = vmatprep.subr.bf16.mxu0 0
  %11383 = vmatpush1.bf16.msra.mxu0 %v11355
  %11384 = vmatprep.subr.bf16.mxu0 0
  %11385 = vmatpush1.bf16.msra.mxu0 %v11354
  %11386 = vmatprep.subr.bf16.mxu0 0
  %11387 = vmatpush2.bf16.msra.mxu0 0
  %11388 = vmatprep.subr.bf16.mxu0 0
  %11389 = vmatpush2.bf16.msra.mxu0 0
  %11390 = vmatprep.subr.bf16.mxu0 0
  %11391 = vmatpush2.bf16.msra.mxu0 0
  %11392 = vmatprep.subr.bf16.mxu0 0
  %11393 = vmatpush2.bf16.msra.mxu0 0
  %11394 = vmatprep.subr.bf16.mxu0 0
  %11395 = vmatpush2.bf16.msra.mxu0 0
  %11396 = vmatprep.subr.bf16.mxu0 0
  %11397 = vmatpush2.bf16.msra.mxu0 0
  %11398 = vmatprep.subr.bf16.mxu0 0
  %11399 = vmatpush2.bf16.msra.mxu0 0
  %11400 = vmatprep.subr.bf16.mxu0 0
  %11401 = vmatpush2.bf16.msra.mxu0 0
  %11402 = vmatprep.mubr.bf16.mxu0 0
  %11403 = vmatmul.mubr.bf16.gmra.mxu0 %v11285
  %v11404 = vpop.f32.mrf.mxu0
  %v11405 = vadd.f32 %v11320, %v11404
  %v11406 = vpop.f32.mrf.mxu0
  %v11407 = vpop.f32.mrf.mxu0
  %v11408 = vadd.f32 %v11320, %v11407
  %v11409 = vpop.f32.mrf.mxu0
  %11410 = vmatprep.mubr.bf16.mxu0 0
  %11411 = vmatmul.mubr.bf16.gmra.mxu0 %v11286
  %v11412 = vpop.f32.mrf.mxu0
  %v11413 = vadd.f32 %v11320, %v11412
  %v11414 = vpop.f32.mrf.mxu0
  %v11415 = vpop.f32.mrf.mxu0
  %v11416 = vadd.f32 %v11320, %v11415
  %v11417 = vpop.f32.mrf.mxu0
  %11418 = vmatprep.mubr.bf16.mxu0 0
  %11419 = vmatmul.mubr.bf16.gmra.mxu0 %v11287
  %v11420 = vpop.f32.mrf.mxu0
  %v11421 = vadd.f32 %v11320, %v11420
  %v11422 = vpop.f32.mrf.mxu0
  %v11423 = vpop.f32.mrf.mxu0
  %v11424 = vadd.f32 %v11320, %v11423
  %v11425 = vpop.f32.mrf.mxu0
  %11426 = vmatprep.mubr.bf16.mxu0 0
  %11427 = vmatmul.mubr.bf16.gmra.mxu0 %v11288
  %v11428 = vpop.f32.mrf.mxu0
  %v11429 = vadd.f32 %v11320, %v11428
  %v11430 = vpop.f32.mrf.mxu0
  %v11431 = vpop.f32.mrf.mxu0
  %v11432 = vadd.f32 %v11320, %v11431
  %v11433 = vpop.f32.mrf.mxu0
  %11434 = vmatprep.mubr.bf16.mxu0 0
  %11435 = vmatmul.mubr.bf16.gmra.mxu0 %v11289
  %v11436 = vpop.f32.mrf.mxu0
  %v11437 = vadd.f32 %v11320, %v11436
  %v11438 = vpop.f32.mrf.mxu0
  %v11439 = vpop.f32.mrf.mxu0
  %v11440 = vadd.f32 %v11320, %v11439
  %v11441 = vpop.f32.mrf.mxu0
  %11442 = vmatprep.mubr.bf16.mxu0 0
  %11443 = vmatmul.mubr.bf16.gmra.mxu0 %v11290
  %v11444 = vpop.f32.mrf.mxu0
  %v11445 = vadd.f32 %v11320, %v11444
  %v11446 = vpop.f32.mrf.mxu0
  %v11447 = vpop.f32.mrf.mxu0
  %v11448 = vadd.f32 %v11320, %v11447
  %v11449 = vpop.f32.mrf.mxu0
  %11450 = vmatprep.mubr.bf16.mxu0 0
  %11451 = vmatmul.mubr.bf16.gmra.mxu0 %v11291
  %v11452 = vpop.f32.mrf.mxu0
  %v11453 = vadd.f32 %v11320, %v11452
  %v11454 = vpop.f32.mrf.mxu0
  %v11455 = vpop.f32.mrf.mxu0
  %v11456 = vadd.f32 %v11320, %v11455
  %v11457 = vpop.f32.mrf.mxu0
  %11458 = vmatprep.mubr.bf16.mxu0 0
  %11459 = vmatmul.mubr.bf16.gmra.mxu0 %v11292
  %v11460 = vpop.f32.mrf.mxu0
  %v11461 = vadd.f32 %v11320, %v11460
  %v11462 = vpop.f32.mrf.mxu0
  %v11463 = vpop.f32.mrf.mxu0
  %v11464 = vadd.f32 %v11320, %v11463
  %v11465 = vpop.f32.mrf.mxu0
  %11466 = vmatprep.mubr.bf16.mxu0 0
  %11467 = vmatmul.mubr.bf16.gmra.mxu0 %v11293
  %v11468 = vpop.f32.mrf.mxu0
  %v11469 = vadd.f32 %v11320, %v11468
  %v11470 = vpop.f32.mrf.mxu0
  %v11471 = vpop.f32.mrf.mxu0
  %v11472 = vadd.f32 %v11320, %v11471
  %v11473 = vpop.f32.mrf.mxu0
  %11474 = vmatprep.mubr.bf16.mxu0 0
  %11475 = vmatmul.mubr.bf16.gmra.mxu0 %v11294
  %v11476 = vpop.f32.mrf.mxu0
  %v11477 = vadd.f32 %v11320, %v11476
  %v11478 = vpop.f32.mrf.mxu0
  %v11479 = vpop.f32.mrf.mxu0
  %v11480 = vadd.f32 %v11320, %v11479
  %v11481 = vpop.f32.mrf.mxu0
  %11482 = vmatprep.mubr.bf16.mxu0 0
  %11483 = vmatmul.mubr.bf16.gmra.mxu0 %v11295
  %v11484 = vpop.f32.mrf.mxu0
  %v11485 = vadd.f32 %v11320, %v11484
  %v11486 = vpop.f32.mrf.mxu0
  %v11487 = vpop.f32.mrf.mxu0
  %v11488 = vadd.f32 %v11320, %v11487
  %v11489 = vpop.f32.mrf.mxu0
  %11490 = vmatprep.mubr.bf16.mxu0 0
  %11491 = vmatmul.mubr.bf16.gmra.mxu0 %v11296
  %v11492 = vpop.f32.mrf.mxu0
  %v11493 = vadd.f32 %v11320, %v11492
  %v11494 = vpop.f32.mrf.mxu0
  %v11495 = vpop.f32.mrf.mxu0
  %v11496 = vadd.f32 %v11320, %v11495
  %v11497 = vpop.f32.mrf.mxu0
  %11498 = vdwg.mxu0
  %v11499 = vadd.f32 %v10491, %v11405
  %v11500 = vadd.f32 %v10492, %v11408
  %v11501 = vadd.f32 %v10493, %v11413
  %v11502 = vadd.f32 %v10494, %v11416
  %v11503 = vadd.f32 %v10495, %v11421
  %v11504 = vadd.f32 %v10496, %v11424
  %v11505 = vadd.f32 %v10497, %v11429
  %v11506 = vadd.f32 %v10498, %v11432
  %v11507 = vadd.f32 %v10499, %v11437
  %v11508 = vadd.f32 %v10500, %v11440
  %v11509 = vadd.f32 %v10501, %v11445
  %v11510 = vadd.f32 %v10502, %v11448
  %v11511 = vadd.f32 %v10503, %v11453
  %v11512 = vadd.f32 %v10504, %v11456
  %v11513 = vadd.f32 %v10505, %v11461
  %v11514 = vadd.f32 %v10506, %v11464
  %v11515 = vadd.f32 %v10507, %v11469
  %v11516 = vadd.f32 %v10508, %v11472
  %v11517 = vadd.f32 %v10509, %v11477
  %v11518 = vadd.f32 %v10510, %v11480
  %v11519 = vadd.f32 %v10511, %v11485
  %v11520 = vadd.f32 %v10512, %v11488
  %v11521 = vadd.f32 %v10513, %v11493
  %v11522 = vadd.f32 %v10514, %v11496
  %v11523 = vld [vmem:[%s21] sm:$0x1]
  %v11524 = vld [vmem:[%s22] sm:$0x1]
  %v11525 = vsel %vm498, %v11499, 0.0
  %11526 = vadd.xlane.f32.xlu0 %v11525
  %v11527 = vpop.xlane.xlu0 %11526
  %v11528 = vsel %vm498, %v11500, 0.0
  %11529 = vadd.xlane.f32.xlu0 %v11528
  %v11530 = vpop.xlane.xlu0 %11529
  %v11531 = vsel %vm498, %v11501, 0.0
  %11532 = vadd.xlane.f32.xlu0 %v11531
  %v11533 = vpop.xlane.xlu0 %11532
  %v11534 = vsel %vm498, %v11502, 0.0
  %11535 = vadd.xlane.f32.xlu0 %v11534
  %v11536 = vpop.xlane.xlu0 %11535
  %v11537 = vsel %vm498, %v11503, 0.0
  %11538 = vadd.xlane.f32.xlu0 %v11537
  %v11539 = vpop.xlane.xlu0 %11538
  %v11540 = vsel %vm498, %v11504, 0.0
  %11541 = vadd.xlane.f32.xlu0 %v11540
  %v11542 = vpop.xlane.xlu0 %11541
  %v11543 = vsel %vm498, %v11505, 0.0
  %11544 = vadd.xlane.f32.xlu0 %v11543
  %v11545 = vpop.xlane.xlu0 %11544
  %v11546 = vsel %vm498, %v11506, 0.0
  %11547 = vadd.xlane.f32.xlu0 %v11546
  %v11548 = vpop.xlane.xlu0 %11547
  %v11549 = vsel %vm498, %v11507, 0.0
  %11550 = vadd.xlane.f32.xlu0 %v11549
  %v11551 = vpop.xlane.xlu0 %11550
  %v11552 = vsel %vm498, %v11508, 0.0
  %11553 = vadd.xlane.f32.xlu0 %v11552
  %v11554 = vpop.xlane.xlu0 %11553
  %v11555 = vsel %vm498, %v11509, 0.0
  %11556 = vadd.xlane.f32.xlu0 %v11555
  %v11557 = vpop.xlane.xlu0 %11556
  %v11558 = vsel %vm498, %v11510, 0.0
  %11559 = vadd.xlane.f32.xlu0 %v11558
  %v11560 = vpop.xlane.xlu0 %11559
  %v11561 = vsel %vm498, %v11511, 0.0
  %11562 = vadd.xlane.f32.xlu0 %v11561
  %v11563 = vpop.xlane.xlu0 %11562
  %v11564 = vsel %vm498, %v11512, 0.0
  %11565 = vadd.xlane.f32.xlu0 %v11564
  %v11566 = vpop.xlane.xlu0 %11565
  %v11567 = vsel %vm498, %v11513, 0.0
  %11568 = vadd.xlane.f32.xlu0 %v11567
  %v11569 = vpop.xlane.xlu0 %11568
  %v11570 = vsel %vm498, %v11514, 0.0
  %11571 = vadd.xlane.f32.xlu0 %v11570
  %v11572 = vpop.xlane.xlu0 %11571
  %v11573 = vsel %vm498, %v11515, 0.0
  %11574 = vadd.xlane.f32.xlu0 %v11573
  %v11575 = vpop.xlane.xlu0 %11574
  %v11576 = vsel %vm498, %v11516, 0.0
  %11577 = vadd.xlane.f32.xlu0 %v11576
  %v11578 = vpop.xlane.xlu0 %11577
  %v11579 = vsel %vm498, %v11517, 0.0
  %11580 = vadd.xlane.f32.xlu0 %v11579
  %v11581 = vpop.xlane.xlu0 %11580
  %v11582 = vsel %vm498, %v11518, 0.0
  %11583 = vadd.xlane.f32.xlu0 %v11582
  %v11584 = vpop.xlane.xlu0 %11583
  %v11585 = vsel %vm498, %v11519, 0.0
  %11586 = vadd.xlane.f32.xlu0 %v11585
  %v11587 = vpop.xlane.xlu0 %11586
  %v11588 = vsel %vm498, %v11520, 0.0
  %11589 = vadd.xlane.f32.xlu0 %v11588
  %v11590 = vpop.xlane.xlu0 %11589
  %v11591 = vsel %vm498, %v11521, 0.0
  %11592 = vadd.xlane.f32.xlu0 %v11591
  %v11593 = vpop.xlane.xlu0 %11592
  %v11594 = vsel %vm498, %v11522, 0.0
  %11595 = vadd.xlane.f32.xlu0 %v11594
  %v11596 = vpop.xlane.xlu0 %11595
  %v11597 = vmul.f32 %v11527, %v571
  %v11598 = vmul.f32 %v11530, %v571
  %v11599 = vmul.f32 %v11533, %v571
  %v11600 = vmul.f32 %v11536, %v571
  %v11601 = vmul.f32 %v11539, %v571
  %v11602 = vmul.f32 %v11542, %v571
  %v11603 = vmul.f32 %v11545, %v571
  %v11604 = vmul.f32 %v11548, %v571
  %v11605 = vmul.f32 %v11551, %v571
  %v11606 = vmul.f32 %v11554, %v571
  %v11607 = vmul.f32 %v11557, %v571
  %v11608 = vmul.f32 %v11560, %v571
  %v11609 = vmul.f32 %v11563, %v571
  %v11610 = vmul.f32 %v11566, %v571
  %v11611 = vmul.f32 %v11569, %v571
  %v11612 = vmul.f32 %v11572, %v571
  %v11613 = vmul.f32 %v11575, %v571
  %v11614 = vmul.f32 %v11578, %v571
  %v11615 = vmul.f32 %v11581, %v571
  %v11616 = vmul.f32 %v11584, %v571
  %v11617 = vmul.f32 %v11587, %v571
  %v11618 = vmul.f32 %v11590, %v571
  %v11619 = vmul.f32 %v11593, %v571
  %v11620 = vmul.f32 %v11596, %v571
  %v11621 = vsub.f32 %v11499, %v11597
  %v11622 = vsub.f32 %v11500, %v11598
  %v11623 = vsub.f32 %v11501, %v11599
  %v11624 = vsub.f32 %v11502, %v11600
  %v11625 = vsub.f32 %v11503, %v11601
  %v11626 = vsub.f32 %v11504, %v11602
  %v11627 = vsub.f32 %v11505, %v11603
  %v11628 = vsub.f32 %v11506, %v11604
  %v11629 = vsub.f32 %v11507, %v11605
  %v11630 = vsub.f32 %v11508, %v11606
  %v11631 = vsub.f32 %v11509, %v11607
  %v11632 = vsub.f32 %v11510, %v11608
  %v11633 = vsub.f32 %v11511, %v11609
  %v11634 = vsub.f32 %v11512, %v11610
  %v11635 = vsub.f32 %v11513, %v11611
  %v11636 = vsub.f32 %v11514, %v11612
  %v11637 = vsub.f32 %v11515, %v11613
  %v11638 = vsub.f32 %v11516, %v11614
  %v11639 = vsub.f32 %v11517, %v11615
  %v11640 = vsub.f32 %v11518, %v11616
  %v11641 = vsub.f32 %v11519, %v11617
  %v11642 = vsub.f32 %v11520, %v11618
  %v11643 = vsub.f32 %v11521, %v11619
  %v11644 = vsub.f32 %v11522, %v11620
  %v11645 = vmul.f32 %v11621, %v11621
  %v11646 = vmul.f32 %v11622, %v11622
  %v11647 = vmul.f32 %v11623, %v11623
  %v11648 = vmul.f32 %v11624, %v11624
  %v11649 = vmul.f32 %v11625, %v11625
  %v11650 = vmul.f32 %v11626, %v11626
  %v11651 = vmul.f32 %v11627, %v11627
  %v11652 = vmul.f32 %v11628, %v11628
  %v11653 = vmul.f32 %v11629, %v11629
  %v11654 = vmul.f32 %v11630, %v11630
  %v11655 = vmul.f32 %v11631, %v11631
  %v11656 = vmul.f32 %v11632, %v11632
  %v11657 = vmul.f32 %v11633, %v11633
  %v11658 = vmul.f32 %v11634, %v11634
  %v11659 = vmul.f32 %v11635, %v11635
  %v11660 = vmul.f32 %v11636, %v11636
  %v11661 = vmul.f32 %v11637, %v11637
  %v11662 = vmul.f32 %v11638, %v11638
  %v11663 = vmul.f32 %v11639, %v11639
  %v11664 = vmul.f32 %v11640, %v11640
  %v11665 = vmul.f32 %v11641, %v11641
  %v11666 = vmul.f32 %v11642, %v11642
  %v11667 = vmul.f32 %v11643, %v11643
  %v11668 = vmul.f32 %v11644, %v11644
  %v11669 = vsel %vm498, %v11645, 0.0
  %11670 = vadd.xlane.f32.xlu0 %v11669
  %v11671 = vpop.xlane.xlu0 %11670
  %v11672 = vsel %vm498, %v11646, 0.0
  %11673 = vadd.xlane.f32.xlu0 %v11672
  %v11674 = vpop.xlane.xlu0 %11673
  %v11675 = vsel %vm498, %v11647, 0.0
  %11676 = vadd.xlane.f32.xlu0 %v11675
  %v11677 = vpop.xlane.xlu0 %11676
  %v11678 = vsel %vm498, %v11648, 0.0
  %11679 = vadd.xlane.f32.xlu0 %v11678
  %v11680 = vpop.xlane.xlu0 %11679
  %v11681 = vsel %vm498, %v11649, 0.0
  %11682 = vadd.xlane.f32.xlu0 %v11681
  %v11683 = vpop.xlane.xlu0 %11682
  %v11684 = vsel %vm498, %v11650, 0.0
  %11685 = vadd.xlane.f32.xlu0 %v11684
  %v11686 = vpop.xlane.xlu0 %11685
  %v11687 = vsel %vm498, %v11651, 0.0
  %11688 = vadd.xlane.f32.xlu0 %v11687
  %v11689 = vpop.xlane.xlu0 %11688
  %v11690 = vsel %vm498, %v11652, 0.0
  %11691 = vadd.xlane.f32.xlu0 %v11690
  %v11692 = vpop.xlane.xlu0 %11691
  %v11693 = vsel %vm498, %v11653, 0.0
  %11694 = vadd.xlane.f32.xlu0 %v11693
  %v11695 = vpop.xlane.xlu0 %11694
  %v11696 = vsel %vm498, %v11654, 0.0
  %11697 = vadd.xlane.f32.xlu0 %v11696
  %v11698 = vpop.xlane.xlu0 %11697
  %v11699 = vsel %vm498, %v11655, 0.0
  %11700 = vadd.xlane.f32.xlu0 %v11699
  %v11701 = vpop.xlane.xlu0 %11700
  %v11702 = vsel %vm498, %v11656, 0.0
  %11703 = vadd.xlane.f32.xlu0 %v11702
  %v11704 = vpop.xlane.xlu0 %11703
  %v11705 = vsel %vm498, %v11657, 0.0
  %11706 = vadd.xlane.f32.xlu0 %v11705
  %v11707 = vpop.xlane.xlu0 %11706
  %v11708 = vsel %vm498, %v11658, 0.0
  %11709 = vadd.xlane.f32.xlu0 %v11708
  %v11710 = vpop.xlane.xlu0 %11709
  %v11711 = vsel %vm498, %v11659, 0.0
  %11712 = vadd.xlane.f32.xlu0 %v11711
  %v11713 = vpop.xlane.xlu0 %11712
  %v11714 = vsel %vm498, %v11660, 0.0
  %11715 = vadd.xlane.f32.xlu0 %v11714
  %v11716 = vpop.xlane.xlu0 %11715
  %v11717 = vsel %vm498, %v11661, 0.0
  %11718 = vadd.xlane.f32.xlu0 %v11717
  %v11719 = vpop.xlane.xlu0 %11718
  %v11720 = vsel %vm498, %v11662, 0.0
  %11721 = vadd.xlane.f32.xlu0 %v11720
  %v11722 = vpop.xlane.xlu0 %11721
  %v11723 = vsel %vm498, %v11663, 0.0
  %11724 = vadd.xlane.f32.xlu0 %v11723
  %v11725 = vpop.xlane.xlu0 %11724
  %v11726 = vsel %vm498, %v11664, 0.0
  %11727 = vadd.xlane.f32.xlu0 %v11726
  %v11728 = vpop.xlane.xlu0 %11727
  %v11729 = vsel %vm498, %v11665, 0.0
  %11730 = vadd.xlane.f32.xlu0 %v11729
  %v11731 = vpop.xlane.xlu0 %11730
  %v11732 = vsel %vm498, %v11666, 0.0
  %11733 = vadd.xlane.f32.xlu0 %v11732
  %v11734 = vpop.xlane.xlu0 %11733
  %v11735 = vsel %vm498, %v11667, 0.0
  %11736 = vadd.xlane.f32.xlu0 %v11735
  %v11737 = vpop.xlane.xlu0 %11736
  %v11738 = vsel %vm498, %v11668, 0.0
  %11739 = vadd.xlane.f32.xlu0 %v11738
  %v11740 = vpop.xlane.xlu0 %11739
  %v11741 = vmul.f32 %v11671, %v571
  %v11742 = vmul.f32 %v11674, %v571
  %v11743 = vmul.f32 %v11677, %v571
  %v11744 = vmul.f32 %v11680, %v571
  %v11745 = vmul.f32 %v11683, %v571
  %v11746 = vmul.f32 %v11686, %v571
  %v11747 = vmul.f32 %v11689, %v571
  %v11748 = vmul.f32 %v11692, %v571
  %v11749 = vmul.f32 %v11695, %v571
  %v11750 = vmul.f32 %v11698, %v571
  %v11751 = vmul.f32 %v11701, %v571
  %v11752 = vmul.f32 %v11704, %v571
  %v11753 = vmul.f32 %v11707, %v571
  %v11754 = vmul.f32 %v11710, %v571
  %v11755 = vmul.f32 %v11713, %v571
  %v11756 = vmul.f32 %v11716, %v571
  %v11757 = vmul.f32 %v11719, %v571
  %v11758 = vmul.f32 %v11722, %v571
  %v11759 = vmul.f32 %v11725, %v571
  %v11760 = vmul.f32 %v11728, %v571
  %v11761 = vmul.f32 %v11731, %v571
  %v11762 = vmul.f32 %v11734, %v571
  %v11763 = vmul.f32 %v11737, %v571
  %v11764 = vmul.f32 %v11740, %v571
  %v11765 = vadd.f32 %v11741, 1e-05
  %v11766 = vadd.f32 %v11742, 1e-05
  %v11767 = vadd.f32 %v11743, 1e-05
  %v11768 = vadd.f32 %v11744, 1e-05
  %v11769 = vadd.f32 %v11745, 1e-05
  %v11770 = vadd.f32 %v11746, 1e-05
  %v11771 = vadd.f32 %v11747, 1e-05
  %v11772 = vadd.f32 %v11748, 1e-05
  %v11773 = vadd.f32 %v11749, 1e-05
  %v11774 = vadd.f32 %v11750, 1e-05
  %v11775 = vadd.f32 %v11751, 1e-05
  %v11776 = vadd.f32 %v11752, 1e-05
  %v11777 = vadd.f32 %v11753, 1e-05
  %v11778 = vadd.f32 %v11754, 1e-05
  %v11779 = vadd.f32 %v11755, 1e-05
  %v11780 = vadd.f32 %v11756, 1e-05
  %v11781 = vadd.f32 %v11757, 1e-05
  %v11782 = vadd.f32 %v11758, 1e-05
  %v11783 = vadd.f32 %v11759, 1e-05
  %v11784 = vadd.f32 %v11760, 1e-05
  %v11785 = vadd.f32 %v11761, 1e-05
  %v11786 = vadd.f32 %v11762, 1e-05
  %v11787 = vadd.f32 %v11763, 1e-05
  %v11788 = vadd.f32 %v11764, 1e-05
  %v11789 = vrsqrt.pop %v11765
  %v11790 = vrsqrt.pop %v11766
  %v11791 = vrsqrt.pop %v11767
  %v11792 = vrsqrt.pop %v11768
  %v11793 = vrsqrt.pop %v11769
  %v11794 = vrsqrt.pop %v11770
  %v11795 = vrsqrt.pop %v11771
  %v11796 = vrsqrt.pop %v11772
  %v11797 = vrsqrt.pop %v11773
  %v11798 = vrsqrt.pop %v11774
  %v11799 = vrsqrt.pop %v11775
  %v11800 = vrsqrt.pop %v11776
  %v11801 = vrsqrt.pop %v11777
  %v11802 = vrsqrt.pop %v11778
  %v11803 = vrsqrt.pop %v11779
  %v11804 = vrsqrt.pop %v11780
  %v11805 = vrsqrt.pop %v11781
  %v11806 = vrsqrt.pop %v11782
  %v11807 = vrsqrt.pop %v11783
  %v11808 = vrsqrt.pop %v11784
  %v11809 = vrsqrt.pop %v11785
  %v11810 = vrsqrt.pop %v11786
  %v11811 = vrsqrt.pop %v11787
  %v11812 = vrsqrt.pop %v11788
  %v11813 = vmul.f32 %v11621, %v11789
  %v11814 = vmul.f32 %v11622, %v11790
  %v11815 = vmul.f32 %v11623, %v11791
  %v11816 = vmul.f32 %v11624, %v11792
  %v11817 = vmul.f32 %v11625, %v11793
  %v11818 = vmul.f32 %v11626, %v11794
  %v11819 = vmul.f32 %v11627, %v11795
  %v11820 = vmul.f32 %v11628, %v11796
  %v11821 = vmul.f32 %v11629, %v11797
  %v11822 = vmul.f32 %v11630, %v11798
  %v11823 = vmul.f32 %v11631, %v11799
  %v11824 = vmul.f32 %v11632, %v11800
  %v11825 = vmul.f32 %v11633, %v11801
  %v11826 = vmul.f32 %v11634, %v11802
  %v11827 = vmul.f32 %v11635, %v11803
  %v11828 = vmul.f32 %v11636, %v11804
  %v11829 = vmul.f32 %v11637, %v11805
  %v11830 = vmul.f32 %v11638, %v11806
  %v11831 = vmul.f32 %v11639, %v11807
  %v11832 = vmul.f32 %v11640, %v11808
  %v11833 = vmul.f32 %v11641, %v11809
  %v11834 = vmul.f32 %v11642, %v11810
  %v11835 = vmul.f32 %v11643, %v11811
  %v11836 = vmul.f32 %v11644, %v11812
  %v11838 = vlaneseq
  %v11839 = vshrl.u32 %v11838, 7
  %v11840 = vsub.s32 0, %v11839
  %v11841 = vrot.slane %v11523, %v11840
  %v11843 = vmul.f32 %v11813, %v11841
  %v11844 = vmul.f32 %v11814, %v11841
  %v11845 = vmul.f32 %v11815, %v11841
  %v11846 = vmul.f32 %v11816, %v11841
  %v11847 = vmul.f32 %v11817, %v11841
  %v11848 = vmul.f32 %v11818, %v11841
  %v11849 = vmul.f32 %v11819, %v11841
  %v11850 = vmul.f32 %v11820, %v11841
  %v11851 = vmul.f32 %v11821, %v11841
  %v11852 = vmul.f32 %v11822, %v11841
  %v11853 = vmul.f32 %v11823, %v11841
  %v11854 = vmul.f32 %v11824, %v11841
  %v11855 = vmul.f32 %v11825, %v11841
  %v11856 = vmul.f32 %v11826, %v11841
  %v11857 = vmul.f32 %v11827, %v11841
  %v11858 = vmul.f32 %v11828, %v11841
  %v11859 = vmul.f32 %v11829, %v11841
  %v11860 = vmul.f32 %v11830, %v11841
  %v11861 = vmul.f32 %v11831, %v11841
  %v11862 = vmul.f32 %v11832, %v11841
  %v11863 = vmul.f32 %v11833, %v11841
  %v11864 = vmul.f32 %v11834, %v11841
  %v11865 = vmul.f32 %v11835, %v11841
  %v11866 = vmul.f32 %v11836, %v11841
  %v11868 = vlaneseq
  %v11869 = vshrl.u32 %v11868, 7
  %v11870 = vsub.s32 0, %v11869
  %v11871 = vrot.slane %v11524, %v11870
  %v11873 = vadd.f32 %v11843, %v11871
  %v11874 = vadd.f32 %v11844, %v11871
  %v11875 = vadd.f32 %v11845, %v11871
  %v11876 = vadd.f32 %v11846, %v11871
  %v11877 = vadd.f32 %v11847, %v11871
  %v11878 = vadd.f32 %v11848, %v11871
  %v11879 = vadd.f32 %v11849, %v11871
  %v11880 = vadd.f32 %v11850, %v11871
  %v11881 = vadd.f32 %v11851, %v11871
  %v11882 = vadd.f32 %v11852, %v11871
  %v11883 = vadd.f32 %v11853, %v11871
  %v11884 = vadd.f32 %v11854, %v11871
  %v11885 = vadd.f32 %v11855, %v11871
  %v11886 = vadd.f32 %v11856, %v11871
  %v11887 = vadd.f32 %v11857, %v11871
  %v11888 = vadd.f32 %v11858, %v11871
  %v11889 = vadd.f32 %v11859, %v11871
  %v11890 = vadd.f32 %v11860, %v11871
  %v11891 = vadd.f32 %v11861, %v11871
  %v11892 = vadd.f32 %v11862, %v11871
  %v11893 = vadd.f32 %v11863, %v11871
  %v11894 = vadd.f32 %v11864, %v11871
  %v11895 = vadd.f32 %v11865, %v11871
  %v11896 = vadd.f32 %v11866, %v11871
  %11897 = vst.msk [vmem:[%s23] sm:$0xff] %vm498, %v11873
  %11898 = vst.msk [vmem:[%s23 + $0x8] sm:$0xff] %vm498, %v11874
  %11899 = vst.msk [vmem:[%s23 + $0x10] sm:$0xff] %vm498, %v11875
  %11900 = vst.msk [vmem:[%s23 + $0x18] sm:$0xff] %vm498, %v11876
  %11901 = vst.msk [vmem:[%s23 + $0x20] sm:$0xff] %vm498, %v11877
  %11902 = vst.msk [vmem:[%s23 + $0x28] sm:$0xff] %vm498, %v11878
  %11903 = vst.msk [vmem:[%s23 + $0x30] sm:$0xff] %vm498, %v11879
  %11904 = vst.msk [vmem:[%s23 + $0x38] sm:$0xff] %vm498, %v11880
  %11905 = vst.msk [vmem:[%s23 + $0x40] sm:$0xff] %vm498, %v11881
  %11906 = vst.msk [vmem:[%s23 + $0x48] sm:$0xff] %vm498, %v11882
  %11907 = vst.msk [vmem:[%s23 + $0x50] sm:$0xff] %vm498, %v11883
  %11908 = vst.msk [vmem:[%s23 + $0x58] sm:$0xff] %vm498, %v11884
  %11909 = vst.msk [vmem:[%s23 + $0x60] sm:$0xff] %vm498, %v11885
  %11910 = vst.msk [vmem:[%s23 + $0x68] sm:$0xff] %vm498, %v11886
  %11911 = vst.msk [vmem:[%s23 + $0x70] sm:$0xff] %vm498, %v11887
  %11912 = vst.msk [vmem:[%s23 + $0x78] sm:$0xff] %vm498, %v11888
  %11913 = vst.msk [vmem:[%s23 + $0x80] sm:$0xff] %vm498, %v11889
  %11914 = vst.msk [vmem:[%s23 + $0x88] sm:$0xff] %vm498, %v11890
  %11915 = vst.msk [vmem:[%s23 + $0x90] sm:$0xff] %vm498, %v11891
  %11916 = vst.msk [vmem:[%s23 + $0x98] sm:$0xff] %vm498, %v11892
  %11917 = vst.msk [vmem:[%s23 + $0xa0] sm:$0xff] %vm498, %v11893
  %11918 = vst.msk [vmem:[%s23 + $0xa8] sm:$0xff] %vm498, %v11894
  %11919 = vst.msk [vmem:[%s23 + $0xb0] sm:$0xff] %vm498, %v11895
  %11920 = vst.msk [vmem:[%s23 + $0xb8] sm:$0xff] %vm498, %v11896
  // Predicated region
  $region94: #{_forward_impl.1} parent=0 // pred_check
    _
  $region95: #{_forward_impl.1} parent=0 // pred_check_branch
    %11922 = sbr.rel (0) target = $region97
  $region96: #{_forward_impl.1} parent=0 // pred_region
    _
  $region97: #{_forward_impl.1} parent=0 // pred_fallthru
    _
  // Predicated region
  $region98: #{_forward_impl.1} parent=0 // pred_check
    _
  $region99: #{_forward_impl.1} parent=0 // pred_check_branch
    %11924 = sbr.rel (0) target = $region101
  $region100: #{_forward_impl.1} parent=0 // pred_region
    _
  $region101: #{_forward_impl.1} parent=0 // pred_fallthru
    _

</llo_original>
